<compile_context>
chip_gen: v5e
topology: v5e:2x2
jax: 0.10.0
libtpu: 0.0.40
codegen_flags: <defaults>
</compile_context>

<pallas_src>
import math

import jax
import jax.numpy as jnp
from jax.experimental import pallas as pl
from jax.experimental.pallas import tpu as pltpu

D_MODEL = 128                  # d_model (divisible by 32 for GroupNorm, 128-lane aligned)
N_HEADS = 8
HEAD_DIM = D_MODEL // N_HEADS
D_FFN = 256
NUM_LAYERS = 2
NUM_PROMPTS = 20               # num_prompts in __init__
L_PAD = 32                     # prompts padded to a multiple of 8 sublanes
NUM_GROUPS = 32                # GroupNorm(32, d_model)
NUM_FEATURE_LEVELS = 4
TRANSFORMER_IN_FEATURES = ("res4", "res5")
GN_EPS = 1e-5
LN_EPS = 1e-5
NEG_INF = -1e9

_CONST_ORDER = (
    "sbias", "hmask",
    "w5", "b5", "g5", "be5",
    "w4", "b4", "g4", "be4", "gavg",
    "w_memkv", "b_memkv",
    "sa_wqkv", "sa_bqkv", "sa_wo", "sa_bo",
    "ca_wq", "ca_bq", "ca_wo", "ca_bo",
    "ffn_w1", "ffn_b1", "ffn_w2", "ffn_b2",
    "ln_g", "ln_b", "norm_g", "norm_b",
)


# ------------------------------ fused Pallas kernel ------------------------------

def _fused_forward_kernel(
        # per-batch inputs
        x5_ref, x4_ref, tgt_ref, cbias_ref,
        # batch-invariant constants
        sbias_ref, hmask_ref,
        w5_ref, b5_ref, g5_ref, be5_ref,
        w4_ref, b4_ref, g4_ref, be4_ref, gavg_ref,
        w_memkv_ref, b_memkv_ref,
        sa_wqkv_ref, sa_bqkv_ref, sa_wo_ref, sa_bo_ref,
        ca_wq_ref, ca_bq_ref, ca_wo_ref, ca_bo_ref,
        ffn_w1_ref, ffn_b1_ref, ffn_w2_ref, ffn_b2_ref,
        ln_g_ref, ln_b_ref, norm_g_ref, norm_b_ref,
        # output
        o_ref,
        # scratch
        mem_scr):
    gavg = gavg_ref[...]                                            # (D, D) group-average matrix

    def matmul(x_f32, w_bf16, bias_f32):
        # bf16 MXU inputs, f32 accumulation + bias (bias may be per-row: pos folded in).
        return jnp.dot(x_f32.astype(jnp.bfloat16), w_bf16,
                       preferred_element_type=jnp.float32) + bias_f32

    def layer_norm(x, g, b):
        mu = jnp.mean(x, axis=-1, keepdims=True)
        xc = x - mu
        var = jnp.mean(xc * xc, axis=-1, keepdims=True)
        return xc * jax.lax.rsqrt(var + LN_EPS) * g + b

    def proj_gn(x, w, b, gamma, beta):
        # 1x1 conv (channel matmul) + GroupNorm(32, D), centered variance (two-pass).
        y = jnp.dot(x.astype(jnp.bfloat16), w, preferred_element_type=jnp.float32) + b
        mean_c = jnp.mean(y, axis=0, keepdims=True)                 # (1, D) per-channel mean
        mean_g = jnp.dot(mean_c, gavg, preferred_element_type=jnp.float32)
        yc = y - mean_g
        var_c = jnp.mean(yc * yc, axis=0, keepdims=True)
        var_g = jnp.dot(var_c, gavg, preferred_element_type=jnp.float32)
        return yc * jax.lax.rsqrt(var_g + GN_EPS) * gamma + beta

    hm = hmask_ref[...]                                             # (H, 1, D) head-lane masks

    def mha(q, k_bf, v_bf, bias):
        # q: (Lq, D) f32 (already 1/sqrt(dh)-scaled via weights); k/v: (Lk, D) bf16;
        # bias: (1, Lk) additive key mask.  Heads via a block-masked Q stacked along
        # sublanes: rows [h*Lq,(h+1)*Lq) carry Q with only head-h lanes non-zero, so one
        # full-width K=128 GEMM yields per-head scores with no 16-lane slicing/concat.
        lq = q.shape[0]
        qb = (q[None, :, :] * hm).reshape(N_HEADS * lq, D_MODEL)
        s = jax.lax.dot_general(qb.astype(jnp.bfloat16), k_bf,
                                (((1,), (1,)), ((), ())),
                                preferred_element_type=jnp.float32)
        s = s + bias                                                # (H*Lq, Lk)
        m = jnp.max(s, axis=-1, keepdims=True)
        e = jnp.exp(s - m)                                          # f32 softmax math
        p = e * pl.reciprocal(jnp.sum(e, axis=-1, keepdims=True), approx=True)
        o = jnp.dot(p.astype(jnp.bfloat16), v_bf,
                    preferred_element_type=jnp.float32)             # (H*Lq, D)
        o = o.reshape(N_HEADS, lq, D_MODEL) * hm                    # keep only own-head lanes
        return jnp.sum(o, axis=0)                                   # (Lq, D)

    # ---- input projection + GroupNorm for both levels, assembled into padded memory ----
    s5 = x5_ref.shape[1]
    s4 = x4_ref.shape[1]
    s_real = s5 + s4
    s_pad = mem_scr.shape[0]
    mem_scr[0:s5, :] = proj_gn(x5_ref[0], w5_ref[...], b5_ref[...], g5_ref[...], be5_ref[...])
    mem_scr[s5:s_real, :] = proj_gn(x4_ref[0], w4_ref[...], b4_ref[...], g4_ref[...], be4_ref[...])
    if s_real < s_pad:                                              # zero padded key rows
        mem_scr[s_real:, :] = jnp.zeros((s_pad - s_real, D_MODEL), jnp.float32)

    # ---- cross-attention K/V for ALL layers in one wide GEMM (pos + bias pre-folded) ----
    mem_kv = (jnp.dot(mem_scr[...].astype(jnp.bfloat16), w_memkv_ref[...],
                      preferred_element_type=jnp.float32)
              + b_memkv_ref[...]).astype(jnp.bfloat16)              # (S_pad, NUM_LAYERS*2*D)

    tgt = tgt_ref[0]                                                # (Lp, D) f32 padded prompts
    sbias = sbias_ref[...]                                          # (1, Lp) self-attn pad bias
    cbias = cbias_ref[0]                                            # (1, S_pad) key-padding bias

    for l in range(NUM_LAYERS):                                     # static unroll (NUM_LAYERS=2)
        lng = ln_g_ref[l]                                           # (3, D): ln1/ln2/ln3 gammas
        lnb = ln_b_ref[l]

        # --- self attention: ONE fused QKV GEMM, query-pos folded into the bias rows ---
        qkv = matmul(tgt, sa_wqkv_ref[l], sa_bqkv_ref[l])           # (Lp, 3D)
        a = mha(qkv[:, :D_MODEL],
                qkv[:, D_MODEL:2 * D_MODEL].astype(jnp.bfloat16),
                qkv[:, 2 * D_MODEL:].astype(jnp.bfloat16),
                sbias)
        a = matmul(a, sa_wo_ref[l], sa_bo_ref[l])
        tgt = layer_norm(tgt + a, lng[0:1, :], lnb[0:1, :])

        # --- cross attention: memory K/V precomputed above, query-pos folded into bias ---
        q = matmul(tgt, ca_wq_ref[l], ca_bq_ref[l])                 # (Lp, D)
        k = mem_kv[:, 2 * l * D_MODEL:(2 * l + 1) * D_MODEL]
        v = mem_kv[:, (2 * l + 1) * D_MODEL:(2 * l + 2) * D_MODEL]
        a = mha(q, k, v, cbias)
        a = matmul(a, ca_wo_ref[l], ca_bo_ref[l])
        tgt = layer_norm(tgt + a, lng[1:2, :], lnb[1:2, :])

        # --- FFN (hidden never leaves VMEM, ReLU fused) ---
        h1 = jnp.maximum(matmul(tgt, ffn_w1_ref[l], ffn_b1_ref[l]), 0.0)
        tgt = layer_norm(tgt + matmul(h1, ffn_w2_ref[l], ffn_b2_ref[l]),
                         lng[2:3, :], lnb[2:3, :])

    # forward() returns intermediate[-1] == self.norm(output of last layer)
    o_ref[0] = layer_norm(tgt, norm_g_ref[...], norm_b_ref[...])


def fused_decoder_forward(x5_flat, x4_flat, tgt_pad, cross_bias, consts):
    B = tgt_pad.shape[0]
    s_pad = cross_bias.shape[-1]

    def bspec(shape):
        nd = len(shape)
        return pl.BlockSpec((1,) + tuple(shape[1:]),
                            lambda b, _n=nd: (b,) + (0,) * (_n - 1))

    def cspec(a):
        zeros = (0,) * a.ndim
        return pl.BlockSpec(a.shape, lambda b, _z=zeros: _z)

    const_arrays = [consts[k] for k in _CONST_ORDER]
    in_specs = ([bspec(x5_flat.shape), bspec(x4_flat.shape),
                 bspec(tgt_pad.shape), bspec(cross_bias.shape)]
                + [cspec(a) for a in const_arrays])

    # Batch axis marked "parallel" so v7x can shard it over its 2 TensorCores.
    # (If a v7x profile shows both batch elements on one core, switch this axis to
    #  pltpu.CORE_PARALLEL; on single-core v5e/v6e it is simply a 2-step serial loop.)
    return pl.pallas_call(
        _fused_forward_kernel,
        out_shape=jax.ShapeDtypeStruct((B, L_PAD, D_MODEL), jnp.float32),
        grid=(B,),
        in_specs=in_specs,
        out_specs=pl.BlockSpec((1, L_PAD, D_MODEL), lambda b: (b, 0, 0)),
        scratch_shapes=[pltpu.VMEM((s_pad, D_MODEL), jnp.float32)],
        compiler_params=pltpu.CompilerParams(dimension_semantics=("parallel",)),
    )(x5_flat, x4_flat, tgt_pad, cross_bias, *const_arrays)


# ------------------------------ host-side helpers (non-hot-path) ------------------------------

def position_embedding_sine(H, W, num_pos_feats, temperature=10000.0):
    # pe_layer(x) is called WITHOUT a mask in the reference forward, so cumsum(not_mask)
    # degenerates to arange(1..H/W).  Returns channels-last (H, W, d_model), batch-invariant.
    eps = 1e-6
    scale = 2.0 * math.pi
    y_embed = jnp.broadcast_to(jnp.arange(1, H + 1, dtype=jnp.float32)[:, None], (H, W))
    x_embed = jnp.broadcast_to(jnp.arange(1, W + 1, dtype=jnp.float32)[None, :], (H, W))
    y_embed = y_embed / (y_embed[-1:, :] + eps) * scale
    x_embed = x_embed / (x_embed[:, -1:] + eps) * scale
    dim_t = jnp.arange(num_pos_feats, dtype=jnp.float32)
    dim_t = temperature ** (2.0 * jnp.floor(dim_t / 2.0) / num_pos_feats)
    pos_x = x_embed[:, :, None] / dim_t
    pos_y = y_embed[:, :, None] / dim_t
    pos_x = jnp.stack([jnp.sin(pos_x[:, :, 0::2]), jnp.cos(pos_x[:, :, 1::2])],
                      axis=3).reshape(H, W, num_pos_feats)
    pos_y = jnp.stack([jnp.sin(pos_y[:, :, 0::2]), jnp.cos(pos_y[:, :, 1::2])],
                      axis=3).reshape(H, W, num_pos_feats)
    return jnp.concatenate([pos_y, pos_x], axis=2)                  # (H, W, d_model)


def nearest_interpolate(mask, h, w):
    # F.interpolate(..., mode='nearest'): src = floor(dst * in/out)
    B, Hm, Wm = mask.shape
    ri = jnp.minimum((jnp.arange(h, dtype=jnp.float32) * (Hm / h)).astype(jnp.int32), Hm - 1)
    ci = jnp.minimum((jnp.arange(w, dtype=jnp.float32) * (Wm / w)).astype(jnp.int32), Wm - 1)
    return mask[:, ri][:, :, ci]


def prepare_decoder(params, feature_shapes):
    """One-time, batch-invariant packing.  feature_shapes: ((C,H,W), ...) in REVERSED
    transformer_in_features order (res5 first, then res4)."""
    scale = 1.0 / math.sqrt(HEAD_DIM)
    bf = jnp.bfloat16
    layers = params["layers"]

    # memory positional embedding (sine pos + level embed), padded to a 128-multiple
    mpos_list, sizes = [], []
    for lvl, (_, h, w) in enumerate(feature_shapes):
        pe = position_embedding_sine(h, w, D_MODEL // 2).reshape(h * w, D_MODEL)
        mpos_list.append(pe + params["level_embed"][lvl][None, :])
        sizes.append(h * w)
    s_real = sum(sizes)
    s_pad = ((s_real + 127) // 128) * 128
    mpos_pad = jnp.pad(jnp.concatenate(mpos_list, axis=0), ((0, s_pad - s_real), (0, 0)))

    # padded query positional embedding (rows 20..31 zero; masked out as keys)
    qpos_pad = jnp.pad(params["vis_prompts_pos"], ((0, L_PAD - NUM_PROMPTS), (0, 0)))

    sa_wqkv, sa_bqkv, sa_wo, sa_bo = [], [], [], []
    ca_wq, ca_bq, ca_wo, ca_bo = [], [], [], []
    memkv_w, memkv_b = [], []
    ffn_w1, ffn_b1, ffn_w2, ffn_b2 = [], [], [], []
    ln_g, ln_b = [], []
    for lp in layers:
        sa, ca = lp["self_attn"], lp["cross_attn"]
        # fold 1/sqrt(dh) into Q weights/biases; fold (x+pos)@W into per-row biases
        wq_s, bq_s = sa["wq"] * scale, sa["bq"] * scale
        sa_wqkv.append(jnp.concatenate([wq_s, sa["wk"], sa["wv"]], axis=1))
        sa_bqkv.append(jnp.concatenate(
            [qpos_pad @ wq_s + bq_s,
             qpos_pad @ sa["wk"] + sa["bk"],
             jnp.broadcast_to(sa["bv"], (L_PAD, D_MODEL))], axis=1))
        sa_wo.append(sa["wo"]); sa_bo.append(sa["bo"])

        cq_s = ca["wq"] * scale
        ca_wq.append(cq_s)
        ca_bq.append(qpos_pad @ cq_s + ca["bq"] * scale)
        ca_wo.append(ca["wo"]); ca_bo.append(ca["bo"])

        memkv_w.append(jnp.concatenate([ca["wk"], ca["wv"]], axis=1))
        memkv_b.append(jnp.concatenate(
            [mpos_pad @ ca["wk"] + ca["bk"],
             jnp.broadcast_to(ca["bv"], (s_pad, D_MODEL))], axis=1))

        ffn_w1.append(lp["ffn_w1"]); ffn_b1.append(lp["ffn_b1"])
        ffn_w2.append(lp["ffn_w2"]); ffn_b2.append(lp["ffn_b2"])
        ln_g.append(jnp.concatenate([lp["ln1_g"], lp["ln2_g"], lp["ln3_g"]], axis=0))
        ln_b.append(jnp.concatenate([lp["ln1_b"], lp["ln2_b"], lp["ln3_b"]], axis=0))

    # GroupNorm group-averaging matrix (block-diagonal) and per-head lane masks
    cg = D_MODEL // NUM_GROUPS
    gid = jnp.arange(D_MODEL) // cg
    gavg = (gid[:, None] == gid[None, :]).astype(jnp.float32) / cg
    hid = jnp.arange(D_MODEL) // HEAD_DIM
    hmask = (jnp.arange(N_HEADS)[:, None, None] == hid[None, None, :]).astype(jnp.float32)

    self_bias = jnp.where(jnp.arange(L_PAD) < NUM_PROMPTS, 0.0,
                          NEG_INF).astype(jnp.float32)[None, :]     # (1, Lp)

    ip = params["input_proj"]
    consts = dict(
        sbias=self_bias, hmask=hmask,
        w5=ip[0]["w"].astype(bf), b5=ip[0]["b"], g5=ip[0]["gamma"], be5=ip[0]["beta"],
        w4=ip[1]["w"].astype(bf), b4=ip[1]["b"], g4=ip[1]["gamma"], be4=ip[1]["beta"],
        gavg=gavg,
        w_memkv=jnp.concatenate(memkv_w, axis=1).astype(bf),        # (D, NUM_LAYERS*2*D)
        b_memkv=jnp.concatenate(memkv_b, axis=1),                   # (S_pad, NUM_LAYERS*2*D)
        sa_wqkv=jnp.stack(sa_wqkv).astype(bf), sa_bqkv=jnp.stack(sa_bqkv),
        sa_wo=jnp.stack(sa_wo).astype(bf), sa_bo=jnp.stack(sa_bo),
        ca_wq=jnp.stack(ca_wq).astype(bf), ca_bq=jnp.stack(ca_bq),
        ca_wo=jnp.stack(ca_wo).astype(bf), ca_bo=jnp.stack(ca_bo),
        ffn_w1=jnp.stack(ffn_w1).astype(bf), ffn_b1=jnp.stack(ffn_b1),
        ffn_w2=jnp.stack(ffn_w2).astype(bf), ffn_b2=jnp.stack(ffn_b2),
        ln_g=jnp.stack(ln_g), ln_b=jnp.stack(ln_b),
        norm_g=params["norm_g"], norm_b=params["norm_b"],
    )
    return dict(consts=consts, s_real=s_real, s_pad=s_pad, sizes=tuple(sizes))


def transformer_decoder_forward(prepared, supp_features, supp_masks, target):
    # TODO(synk): the real decoder_layer is constructed externally (MSDeformAttn-based DINO
    # layer); a standard self-attn + cross-attn + FFN stand-in is used, so valid_ratios /
    # reference_points / spatial_shapes / level_start_index are not consumed by the kernel.
    consts = prepared["consts"]
    s_real, s_pad, sizes = prepared["s_real"], prepared["s_pad"], prepared["sizes"]

    x_flat, mask_bits = [], []
    for lvl, f in enumerate(TRANSFORMER_IN_FEATURES[::-1]):
        x = supp_features[f].astype(jnp.float32)                    # NCHW input
        B, C, H, W = x.shape
        assert H * W == sizes[lvl]
        x_flat.append(jnp.transpose(x, (0, 2, 3, 1)).reshape(B, H * W, C))   # NHWC flattened
        m = nearest_interpolate(supp_masks.astype(jnp.float32), H, W)
        mask_bits.append((m > 0.5).reshape(B, H * W))

    B = x_flat[0].shape[0]
    valid = jnp.concatenate(mask_bits, axis=1)                      # True = keep this key
    valid = jnp.pad(valid, ((0, 0), (0, s_pad - s_real)))           # padded keys masked out
    cross_bias = jnp.where(valid, 0.0, NEG_INF).astype(jnp.float32)[:, None, :]

    # pad prompts 20 -> 32 for clean (8,128) tiling; padded rows masked out of self-attn keys
    tgt_pad = jnp.pad(target.astype(jnp.float32),
                      ((0, 0), (0, L_PAD - NUM_PROMPTS), (0, 0)))

    out = fused_decoder_forward(x_flat[0], x_flat[1], tgt_pad, cross_bias, consts)
    return out[:, :NUM_PROMPTS]


# ------------------------------ deterministic parameter init ------------------------------

def _xavier_uniform(key, fan_in, fan_out):
    bound = math.sqrt(6.0 / (fan_in + fan_out))
    return jax.random.uniform(key, (fan_in, fan_out), jnp.float32, -bound, bound)


def make_params(key, in_channels_reversed):
    keys = iter(jax.random.split(key, 256))
    params = {}
    params["input_proj"] = []
    for cin in in_channels_reversed:
        params["input_proj"].append(dict(
            w=_xavier_uniform(next(keys), cin, D_MODEL),             # Conv2d 1x1 -> (Cin, D)
            b=jnp.zeros((1, D_MODEL), jnp.float32),                  # constant_(bias, 0)
            gamma=jnp.ones((1, D_MODEL), jnp.float32),
            beta=jnp.zeros((1, D_MODEL), jnp.float32),
        ))
    params["level_embed"] = jax.random.normal(next(keys), (NUM_FEATURE_LEVELS, D_MODEL), jnp.float32)
    params["vis_prompts_pos"] = jax.random.normal(next(keys), (NUM_PROMPTS, D_MODEL), jnp.float32)
    # Parameters below exist in __init__ but are never used by forward:
    params["refpoint_embed"] = jax.random.normal(next(keys), (NUM_PROMPTS, 4), jnp.float32)
    params["reference_points_param"] = jax.random.uniform(next(keys), (NUM_PROMPTS, 4, 2), jnp.float32)
    params["ref_point_head"] = [
        dict(w=_xavier_uniform(next(keys), 2 * D_MODEL, D_MODEL), b=jnp.zeros((1, D_MODEL), jnp.float32)),
        dict(w=_xavier_uniform(next(keys), D_MODEL, D_MODEL), b=jnp.zeros((1, D_MODEL), jnp.float32)),
    ]
    params["norm_g"] = jnp.ones((1, D_MODEL), jnp.float32)
    params["norm_b"] = jnp.zeros((1, D_MODEL), jnp.float32)

    def attn_params():
        return dict(
            wq=_xavier_uniform(next(keys), D_MODEL, D_MODEL), bq=jnp.zeros((1, D_MODEL), jnp.float32),
            wk=_xavier_uniform(next(keys), D_MODEL, D_MODEL), bk=jnp.zeros((1, D_MODEL), jnp.float32),
            wv=_xavier_uniform(next(keys), D_MODEL, D_MODEL), bv=jnp.zeros((1, D_MODEL), jnp.float32),
            wo=_xavier_uniform(next(keys), D_MODEL, D_MODEL), bo=jnp.zeros((1, D_MODEL), jnp.float32),
        )

    params["layers"] = []
    for _ in range(NUM_LAYERS):
        params["layers"].append(dict(
            self_attn=attn_params(),
            cross_attn=attn_params(),
            ffn_w1=_xavier_uniform(next(keys), D_MODEL, D_FFN), ffn_b1=jnp.zeros((1, D_FFN), jnp.float32),
            ffn_w2=_xavier_uniform(next(keys), D_FFN, D_MODEL), ffn_b2=jnp.zeros((1, D_MODEL), jnp.float32),
            ln1_g=jnp.ones((1, D_MODEL), jnp.float32), ln1_b=jnp.zeros((1, D_MODEL), jnp.float32),
            ln2_g=jnp.ones((1, D_MODEL), jnp.float32), ln2_b=jnp.zeros((1, D_MODEL), jnp.float32),
            ln3_g=jnp.ones((1, D_MODEL), jnp.float32), ln3_b=jnp.zeros((1, D_MODEL), jnp.float32),
        ))
    return params


if __name__ == "__main__":
    key = jax.random.PRNGKey(0)
    k_feat4, k_feat5, k_tgt, k_params = jax.random.split(key, 4)
    B = 2
    supp_features = {
        "res4": jax.random.normal(k_feat4, (B, 16, 16, 16), jnp.float32),  # NCHW
        "res5": jax.random.normal(k_feat5, (B, 32, 8, 8), jnp.float32),    # NCHW
    }
    rows = jnp.arange(32)
    supp_masks = ((rows[:, None] < 20) & (rows[None, :] < 24)).astype(jnp.float32)
    supp_masks = jnp.broadcast_to(supp_masks[None], (B, 32, 32))
    target = jax.random.normal(k_tgt, (B, NUM_PROMPTS, D_MODEL), jnp.float32)

    # transformer_in_channels reversed: res5 first (C=32), then res4 (C=16)
    params = make_params(k_params, in_channels_reversed=(32, 16))
    feature_shapes = ((32, 8, 8), (16, 16, 16))                      # (C, H, W), reversed order
    prepared = prepare_decoder(params, feature_shapes)               # one-time packing

    out = transformer_decoder_forward(prepared, supp_features, supp_masks, target)
    out = jax.block_until_ready(out)
    assert out.shape == (B, NUM_PROMPTS, D_MODEL)
    assert bool(jnp.all(jnp.isfinite(out)))
    print("KERNEL_OK")
</pallas_src>

<mosaic_0001>
module attributes {stable_mosaic.version = 11 : i64} {
  func.func @_fused_forward_kernel(%arg0: i32, %arg1: memref<1x64x32xf32, #tpu.memory_space<vmem>>, %arg2: memref<1x256x16xf32, #tpu.memory_space<vmem>>, %arg3: memref<1x32x128xf32, #tpu.memory_space<vmem>>, %arg4: memref<1x1x384xf32, #tpu.memory_space<vmem>>, %arg5: memref<1x32xf32, #tpu.memory_space<vmem>>, %arg6: memref<8x1x128xf32, #tpu.memory_space<vmem>>, %arg7: memref<32x128xbf16, #tpu.memory_space<vmem>>, %arg8: memref<1x128xf32, #tpu.memory_space<vmem>>, %arg9: memref<1x128xf32, #tpu.memory_space<vmem>>, %arg10: memref<1x128xf32, #tpu.memory_space<vmem>>, %arg11: memref<16x128xbf16, #tpu.memory_space<vmem>>, %arg12: memref<1x128xf32, #tpu.memory_space<vmem>>, %arg13: memref<1x128xf32, #tpu.memory_space<vmem>>, %arg14: memref<1x128xf32, #tpu.memory_space<vmem>>, %arg15: memref<128x128xf32, #tpu.memory_space<vmem>>, %arg16: memref<128x512xbf16, #tpu.memory_space<vmem>>, %arg17: memref<384x512xf32, #tpu.memory_space<vmem>>, %arg18: memref<2x128x384xbf16, #tpu.memory_space<vmem>>, %arg19: memref<2x32x384xf32, #tpu.memory_space<vmem>>, %arg20: memref<2x128x128xbf16, #tpu.memory_space<vmem>>, %arg21: memref<2x1x128xf32, #tpu.memory_space<vmem>>, %arg22: memref<2x128x128xbf16, #tpu.memory_space<vmem>>, %arg23: memref<2x32x128xf32, #tpu.memory_space<vmem>>, %arg24: memref<2x128x128xbf16, #tpu.memory_space<vmem>>, %arg25: memref<2x1x128xf32, #tpu.memory_space<vmem>>, %arg26: memref<2x128x256xbf16, #tpu.memory_space<vmem>>, %arg27: memref<2x1x256xf32, #tpu.memory_space<vmem>>, %arg28: memref<2x256x128xbf16, #tpu.memory_space<vmem>>, %arg29: memref<2x1x128xf32, #tpu.memory_space<vmem>>, %arg30: memref<2x3x128xf32, #tpu.memory_space<vmem>>, %arg31: memref<2x3x128xf32, #tpu.memory_space<vmem>>, %arg32: memref<1x128xf32, #tpu.memory_space<vmem>>, %arg33: memref<1x128xf32, #tpu.memory_space<vmem>>, %arg34: memref<1x32x128xf32, #tpu.memory_space<vmem>>, %arg35: memref<384x128xf32, #tpu.memory_space<vmem>>) attributes {dimension_semantics = [#tpu.dimension_semantics<parallel>], iteration_bounds = array<i64: 2>, scalar_prefetch = 0 : i64, scratch_operands = 1 : i64, tpu.core_type = #tpu.core_type<tc>, window_params = [{transform_indices = @transform_0, window_bounds = array<i64: 1, 64, 32>}, {transform_indices = @transform_1, window_bounds = array<i64: 1, 256, 16>}, {transform_indices = @transform_2, window_bounds = array<i64: 1, 32, 128>}, {transform_indices = @transform_3, window_bounds = array<i64: 1, 1, 384>}, {pipeline_mode = #tpu.pipeline_mode<synchronous>, transform_indices = @transform_4, window_bounds = array<i64: 1, 32>}, {pipeline_mode = #tpu.pipeline_mode<synchronous>, transform_indices = @transform_5, window_bounds = array<i64: 8, 1, 128>}, {pipeline_mode = #tpu.pipeline_mode<synchronous>, transform_indices = @transform_6, window_bounds = array<i64: 32, 128>}, {pipeline_mode = #tpu.pipeline_mode<synchronous>, transform_indices = @transform_7, window_bounds = array<i64: 1, 128>}, {pipeline_mode = #tpu.pipeline_mode<synchronous>, transform_indices = @transform_8, window_bounds = array<i64: 1, 128>}, {pipeline_mode = #tpu.pipeline_mode<synchronous>, transform_indices = @transform_9, window_bounds = array<i64: 1, 128>}, {pipeline_mode = #tpu.pipeline_mode<synchronous>, transform_indices = @transform_10, window_bounds = array<i64: 16, 128>}, {pipeline_mode = #tpu.pipeline_mode<synchronous>, transform_indices = @transform_11, window_bounds = array<i64: 1, 128>}, {pipeline_mode = #tpu.pipeline_mode<synchronous>, transform_indices = @transform_12, window_bounds = array<i64: 1, 128>}, {pipeline_mode = #tpu.pipeline_mode<synchronous>, transform_indices = @transform_13, window_bounds = array<i64: 1, 128>}, {pipeline_mode = #tpu.pipeline_mode<synchronous>, transform_indices = @transform_14, window_bounds = array<i64: 128, 128>}, {pipeline_mode = #tpu.pipeline_mode<synchronous>, transform_indices = @transform_15, window_bounds = array<i64: 128, 512>}, {pipeline_mode = #tpu.pipeline_mode<synchronous>, transform_indices = @transform_16, window_bounds = array<i64: 384, 512>}, {pipeline_mode = #tpu.pipeline_mode<synchronous>, transform_indices = @transform_17, window_bounds = array<i64: 2, 128, 384>}, {pipeline_mode = #tpu.pipeline_mode<synchronous>, transform_indices = @transform_18, window_bounds = array<i64: 2, 32, 384>}, {pipeline_mode = #tpu.pipeline_mode<synchronous>, transform_indices = @transform_19, window_bounds = array<i64: 2, 128, 128>}, {pipeline_mode = #tpu.pipeline_mode<synchronous>, transform_indices = @transform_20, window_bounds = array<i64: 2, 1, 128>}, {pipeline_mode = #tpu.pipeline_mode<synchronous>, transform_indices = @transform_21, window_bounds = array<i64: 2, 128, 128>}, {pipeline_mode = #tpu.pipeline_mode<synchronous>, transform_indices = @transform_22, window_bounds = array<i64: 2, 32, 128>}, {pipeline_mode = #tpu.pipeline_mode<synchronous>, transform_indices = @transform_23, window_bounds = array<i64: 2, 128, 128>}, {pipeline_mode = #tpu.pipeline_mode<synchronous>, transform_indices = @transform_24, window_bounds = array<i64: 2, 1, 128>}, {pipeline_mode = #tpu.pipeline_mode<synchronous>, transform_indices = @transform_25, window_bounds = array<i64: 2, 128, 256>}, {pipeline_mode = #tpu.pipeline_mode<synchronous>, transform_indices = @transform_26, window_bounds = array<i64: 2, 1, 256>}, {pipeline_mode = #tpu.pipeline_mode<synchronous>, transform_indices = @transform_27, window_bounds = array<i64: 2, 256, 128>}, {pipeline_mode = #tpu.pipeline_mode<synchronous>, transform_indices = @transform_28, window_bounds = array<i64: 2, 1, 128>}, {pipeline_mode = #tpu.pipeline_mode<synchronous>, transform_indices = @transform_29, window_bounds = array<i64: 2, 3, 128>}, {pipeline_mode = #tpu.pipeline_mode<synchronous>, transform_indices = @transform_30, window_bounds = array<i64: 2, 3, 128>}, {pipeline_mode = #tpu.pipeline_mode<synchronous>, transform_indices = @transform_31, window_bounds = array<i64: 1, 128>}, {pipeline_mode = #tpu.pipeline_mode<synchronous>, transform_indices = @transform_32, window_bounds = array<i64: 1, 128>}, {transform_indices = @transform_33, window_bounds = array<i64: 1, 32, 128>}]} {
    %c0 = arith.constant 0 : index
    %c0_0 = arith.constant 0 : index
    %0 = vector.load %arg15[%c0, %c0_0] : memref<128x128xf32, #tpu.memory_space<vmem>>, vector<128x128xf32>
    %c0_1 = arith.constant 0 : index
    %c0_2 = arith.constant 0 : index
    %c0_3 = arith.constant 0 : index
    %1 = vector.load %arg6[%c0_1, %c0_2, %c0_3] : memref<8x1x128xf32, #tpu.memory_space<vmem>>, vector<8x1x128xf32>
    %c0_4 = arith.constant 0 : index
    %c0_5 = arith.constant 0 : index
    %c0_6 = arith.constant 0 : index
    %2 = vector.load %arg1[%c0_4, %c0_5, %c0_6] : memref<1x64x32xf32, #tpu.memory_space<vmem>>, vector<1x64x32xf32>
    %3 = vector.shape_cast %2 : vector<1x64x32xf32> to vector<64x32xf32>
    %c0_7 = arith.constant 0 : index
    %c0_8 = arith.constant 0 : index
    %4 = vector.load %arg7[%c0_7, %c0_8] : memref<32x128xbf16, #tpu.memory_space<vmem>>, vector<32x128xbf16>
    %c0_9 = arith.constant 0 : index
    %c0_10 = arith.constant 0 : index
    %5 = vector.load %arg8[%c0_9, %c0_10] : memref<1x128xf32, #tpu.memory_space<vmem>>, vector<1x128xf32>
    %c0_11 = arith.constant 0 : index
    %c0_12 = arith.constant 0 : index
    %6 = vector.load %arg9[%c0_11, %c0_12] : memref<1x128xf32, #tpu.memory_space<vmem>>, vector<1x128xf32>
    %c0_13 = arith.constant 0 : index
    %c0_14 = arith.constant 0 : index
    %7 = vector.load %arg10[%c0_13, %c0_14] : memref<1x128xf32, #tpu.memory_space<vmem>>, vector<1x128xf32>
    %8 = arith.truncf %3 : vector<64x32xf32> to vector<64x32xbf16>
    %cst = arith.constant dense<0.000000e+00> : vector<64x128xf32>
    %9 = tpu.matmul %8, %4, %cst {dimension_numbers = #tpu.dot_dimension_numbers<[1], [0], [0], [1], [0, 0, 1, 1], [], []>} : vector<64x32xbf16>, vector<32x128xbf16>, vector<64x128xf32> -> vector<64x128xf32>
    %10 = vector.broadcast %5 : vector<1x128xf32> to vector<64x128xf32>
    %11 = arith.addf %9, %10 : vector<64x128xf32>
    %cst_15 = arith.constant dense<0.000000e+00> : vector<128xf32>
    %12 = vector.multi_reduction <add>, %11, %cst_15 [0] : vector<64x128xf32> to vector<128xf32>
    %13 = vector.shape_cast %12 : vector<128xf32> to vector<1x128xf32>
    %cst_16 = arith.constant 6.400000e+01 : f32
    %14 = vector.broadcast %cst_16 : f32 to vector<1x128xf32>
    %15 = arith.divf %13, %14 : vector<1x128xf32>
    %cst_17 = arith.constant dense<0.000000e+00> : vector<1x128xf32>
    %16 = tpu.matmul %15, %0, %cst_17 {dimension_numbers = #tpu.dot_dimension_numbers<[1], [0], [0], [1], [0, 0, 1, 1], [], []>} : vector<1x128xf32>, vector<128x128xf32>, vector<1x128xf32> -> vector<1x128xf32>
    %17 = vector.broadcast %16 : vector<1x128xf32> to vector<64x128xf32>
    %18 = arith.subf %11, %17 : vector<64x128xf32>
    %19 = arith.mulf %18, %18 : vector<64x128xf32>
    %cst_18 = arith.constant dense<0.000000e+00> : vector<128xf32>
    %20 = vector.multi_reduction <add>, %19, %cst_18 [0] : vector<64x128xf32> to vector<128xf32>
    %21 = vector.shape_cast %20 : vector<128xf32> to vector<1x128xf32>
    %cst_19 = arith.constant 6.400000e+01 : f32
    %22 = vector.broadcast %cst_19 : f32 to vector<1x128xf32>
    %23 = arith.divf %21, %22 : vector<1x128xf32>
    %cst_20 = arith.constant dense<0.000000e+00> : vector<1x128xf32>
    %24 = tpu.matmul %23, %0, %cst_20 {dimension_numbers = #tpu.dot_dimension_numbers<[1], [0], [0], [1], [0, 0, 1, 1], [], []>} : vector<1x128xf32>, vector<128x128xf32>, vector<1x128xf32> -> vector<1x128xf32>
    %cst_21 = arith.constant 9.99999974E-6 : f32
    %25 = vector.broadcast %cst_21 : f32 to vector<1x128xf32>
    %26 = arith.addf %24, %25 : vector<1x128xf32>
    %27 = math.rsqrt %26 : vector<1x128xf32>
    %28 = vector.broadcast %27 : vector<1x128xf32> to vector<64x128xf32>
    %29 = arith.mulf %18, %28 : vector<64x128xf32>
    %30 = vector.broadcast %6 : vector<1x128xf32> to vector<64x128xf32>
    %31 = arith.mulf %29, %30 : vector<64x128xf32>
    %32 = vector.broadcast %7 : vector<1x128xf32> to vector<64x128xf32>
    %33 = arith.addf %31, %32 : vector<64x128xf32>
    %c0_22 = arith.constant 0 : index
    %c0_23 = arith.constant 0 : index
    %34 = vector.load %arg35[%c0_22, %c0_23] : memref<384x128xf32, #tpu.memory_space<vmem>>, vector<64x128xf32>
    tpu.vector_store %arg35[%c0_22, %c0_23], %33 {strides = array<i32>} : memref<384x128xf32, #tpu.memory_space<vmem>>, vector<64x128xf32>,
    %c0_24 = arith.constant 0 : index
    %c0_25 = arith.constant 0 : index
    %c0_26 = arith.constant 0 : index
    %35 = vector.load %arg2[%c0_24, %c0_25, %c0_26] : memref<1x256x16xf32, #tpu.memory_space<vmem>>, vector<1x256x16xf32>
    %36 = vector.shape_cast %35 : vector<1x256x16xf32> to vector<256x16xf32>
    %c0_27 = arith.constant 0 : index
    %c0_28 = arith.constant 0 : index
    %37 = vector.load %arg11[%c0_27, %c0_28] : memref<16x128xbf16, #tpu.memory_space<vmem>>, vector<16x128xbf16>
    %c0_29 = arith.constant 0 : index
    %c0_30 = arith.constant 0 : index
    %38 = vector.load %arg12[%c0_29, %c0_30] : memref<1x128xf32, #tpu.memory_space<vmem>>, vector<1x128xf32>
    %c0_31 = arith.constant 0 : index
    %c0_32 = arith.constant 0 : index
    %39 = vector.load %arg13[%c0_31, %c0_32] : memref<1x128xf32, #tpu.memory_space<vmem>>, vector<1x128xf32>
    %c0_33 = arith.constant 0 : index
    %c0_34 = arith.constant 0 : index
    %40 = vector.load %arg14[%c0_33, %c0_34] : memref<1x128xf32, #tpu.memory_space<vmem>>, vector<1x128xf32>
    %41 = arith.truncf %36 : vector<256x16xf32> to vector<256x16xbf16>
    %cst_35 = arith.constant dense<0.000000e+00> : vector<256x128xf32>
    %42 = tpu.matmul %41, %37, %cst_35 {dimension_numbers = #tpu.dot_dimension_numbers<[1], [0], [0], [1], [0, 0, 1, 1], [], []>} : vector<256x16xbf16>, vector<16x128xbf16>, vector<256x128xf32> -> vector<256x128xf32>
    %43 = vector.broadcast %38 : vector<1x128xf32> to vector<256x128xf32>
    %44 = arith.addf %42, %43 : vector<256x128xf32>
    %cst_36 = arith.constant dense<0.000000e+00> : vector<128xf32>
    %45 = vector.multi_reduction <add>, %44, %cst_36 [0] : vector<256x128xf32> to vector<128xf32>
    %46 = vector.shape_cast %45 : vector<128xf32> to vector<1x128xf32>
    %cst_37 = arith.constant 2.560000e+02 : f32
    %47 = vector.broadcast %cst_37 : f32 to vector<1x128xf32>
    %48 = arith.divf %46, %47 : vector<1x128xf32>
    %cst_38 = arith.constant dense<0.000000e+00> : vector<1x128xf32>
    %49 = tpu.matmul %48, %0, %cst_38 {dimension_numbers = #tpu.dot_dimension_numbers<[1], [0], [0], [1], [0, 0, 1, 1], [], []>} : vector<1x128xf32>, vector<128x128xf32>, vector<1x128xf32> -> vector<1x128xf32>
    %50 = vector.broadcast %49 : vector<1x128xf32> to vector<256x128xf32>
    %51 = arith.subf %44, %50 : vector<256x128xf32>
    %52 = arith.mulf %51, %51 : vector<256x128xf32>
    %cst_39 = arith.constant dense<0.000000e+00> : vector<128xf32>
    %53 = vector.multi_reduction <add>, %52, %cst_39 [0] : vector<256x128xf32> to vector<128xf32>
    %54 = vector.shape_cast %53 : vector<128xf32> to vector<1x128xf32>
    %cst_40 = arith.constant 2.560000e+02 : f32
    %55 = vector.broadcast %cst_40 : f32 to vector<1x128xf32>
    %56 = arith.divf %54, %55 : vector<1x128xf32>
    %cst_41 = arith.constant dense<0.000000e+00> : vector<1x128xf32>
    %57 = tpu.matmul %56, %0, %cst_41 {dimension_numbers = #tpu.dot_dimension_numbers<[1], [0], [0], [1], [0, 0, 1, 1], [], []>} : vector<1x128xf32>, vector<128x128xf32>, vector<1x128xf32> -> vector<1x128xf32>
    %cst_42 = arith.constant 9.99999974E-6 : f32
    %58 = vector.broadcast %cst_42 : f32 to vector<1x128xf32>
    %59 = arith.addf %57, %58 : vector<1x128xf32>
    %60 = math.rsqrt %59 : vector<1x128xf32>
    %61 = vector.broadcast %60 : vector<1x128xf32> to vector<256x128xf32>
    %62 = arith.mulf %51, %61 : vector<256x128xf32>
    %63 = vector.broadcast %39 : vector<1x128xf32> to vector<256x128xf32>
    %64 = arith.mulf %62, %63 : vector<256x128xf32>
    %65 = vector.broadcast %40 : vector<1x128xf32> to vector<256x128xf32>
    %66 = arith.addf %64, %65 : vector<256x128xf32>
    %c64 = arith.constant 64 : index
    %c0_43 = arith.constant 0 : index
    %67 = vector.load %arg35[%c64, %c0_43] : memref<384x128xf32, #tpu.memory_space<vmem>>, vector<256x128xf32>
    tpu.vector_store %arg35[%c64, %c0_43], %66 {strides = array<i32>} : memref<384x128xf32, #tpu.memory_space<vmem>>, vector<256x128xf32>,
    %cst_44 = arith.constant 0.000000e+00 : f32
    %68 = vector.broadcast %cst_44 : f32 to vector<64x128xf32>
    %c320 = arith.constant 320 : index
    %c0_45 = arith.constant 0 : index
    %69 = vector.load %arg35[%c320, %c0_45] : memref<384x128xf32, #tpu.memory_space<vmem>>, vector<64x128xf32>
    tpu.vector_store %arg35[%c320, %c0_45], %68 {strides = array<i32>} : memref<384x128xf32, #tpu.memory_space<vmem>>, vector<64x128xf32>,
    %c0_46 = arith.constant 0 : index
    %c0_47 = arith.constant 0 : index
    %70 = vector.load %arg35[%c0_46, %c0_47] : memref<384x128xf32, #tpu.memory_space<vmem>>, vector<384x128xf32>
    %71 = arith.truncf %70 : vector<384x128xf32> to vector<384x128xbf16>
    %c0_48 = arith.constant 0 : index
    %c0_49 = arith.constant 0 : index
    %72 = vector.load %arg16[%c0_48, %c0_49] : memref<128x512xbf16, #tpu.memory_space<vmem>>, vector<128x512xbf16>
    %cst_50 = arith.constant dense<0.000000e+00> : vector<384x512xf32>
    %73 = tpu.matmul %71, %72, %cst_50 {dimension_numbers = #tpu.dot_dimension_numbers<[1], [0], [0], [1], [0, 0, 1, 1], [], []>} : vector<384x128xbf16>, vector<128x512xbf16>, vector<384x512xf32> -> vector<384x512xf32>
    %c0_51 = arith.constant 0 : index
    %c0_52 = arith.constant 0 : index
    %74 = vector.load %arg17[%c0_51, %c0_52] : memref<384x512xf32, #tpu.memory_space<vmem>>, vector<384x512xf32>
    %75 = arith.addf %73, %74 : vector<384x512xf32>
    %76 = arith.truncf %75 : vector<384x512xf32> to vector<384x512xbf16>
    %c0_53 = arith.constant 0 : index
    %c0_54 = arith.constant 0 : index
    %c0_55 = arith.constant 0 : index
    %77 = vector.load %arg3[%c0_53, %c0_54, %c0_55] : memref<1x32x128xf32, #tpu.memory_space<vmem>>, vector<1x32x128xf32>
    %78 = vector.shape_cast %77 : vector<1x32x128xf32> to vector<32x128xf32>
    %c0_56 = arith.constant 0 : index
    %c0_57 = arith.constant 0 : index
    %79 = vector.load %arg5[%c0_56, %c0_57] : memref<1x32xf32, #tpu.memory_space<vmem>>, vector<1x32xf32>
    %c0_58 = arith.constant 0 : index
    %c0_59 = arith.constant 0 : index
    %c0_60 = arith.constant 0 : index
    %80 = vector.load %arg4[%c0_58, %c0_59, %c0_60] : memref<1x1x384xf32, #tpu.memory_space<vmem>>, vector<1x1x384xf32>
    %81 = vector.shape_cast %80 : vector<1x1x384xf32> to vector<1x384xf32>
    %c0_61 = arith.constant 0 : index
    %c0_62 = arith.constant 0 : index
    %c0_63 = arith.constant 0 : index
    %82 = vector.load %arg30[%c0_61, %c0_62, %c0_63] : memref<2x3x128xf32, #tpu.memory_space<vmem>>, vector<1x3x128xf32>
    %83 = vector.shape_cast %82 : vector<1x3x128xf32> to vector<3x128xf32>
    %c0_64 = arith.constant 0 : index
    %c0_65 = arith.constant 0 : index
    %c0_66 = arith.constant 0 : index
    %84 = vector.load %arg31[%c0_64, %c0_65, %c0_66] : memref<2x3x128xf32, #tpu.memory_space<vmem>>, vector<1x3x128xf32>
    %85 = vector.shape_cast %84 : vector<1x3x128xf32> to vector<3x128xf32>
    %c0_67 = arith.constant 0 : index
    %c0_68 = arith.constant 0 : index
    %c0_69 = arith.constant 0 : index
    %86 = vector.load %arg18[%c0_67, %c0_68, %c0_69] : memref<2x128x384xbf16, #tpu.memory_space<vmem>>, vector<1x128x384xbf16>
    %87 = vector.shape_cast %86 : vector<1x128x384xbf16> to vector<128x384xbf16>
    %c0_70 = arith.constant 0 : index
    %c0_71 = arith.constant 0 : index
    %c0_72 = arith.constant 0 : index
    %88 = vector.load %arg19[%c0_70, %c0_71, %c0_72] : memref<2x32x384xf32, #tpu.memory_space<vmem>>, vector<1x32x384xf32>
    %89 = vector.shape_cast %88 : vector<1x32x384xf32> to vector<32x384xf32>
    %90 = arith.truncf %78 : vector<32x128xf32> to vector<32x128xbf16>
    %cst_73 = arith.constant dense<0.000000e+00> : vector<32x384xf32>
    %91 = tpu.matmul %90, %87, %cst_73 {dimension_numbers = #tpu.dot_dimension_numbers<[1], [0], [0], [1], [0, 0, 1, 1], [], []>} : vector<32x128xbf16>, vector<128x384xbf16>, vector<32x384xf32> -> vector<32x384xf32>
    %92 = arith.addf %91, %89 : vector<32x384xf32>
    %93 = vector.extract_strided_slice %92 {offsets = [0, 0], sizes = [32, 128], strides = [1, 1]} : vector<32x384xf32> to vector<32x128xf32>
    %94 = vector.extract_strided_slice %92 {offsets = [0, 128], sizes = [32, 128], strides = [1, 1]} : vector<32x384xf32> to vector<32x128xf32>
    %95 = arith.truncf %94 : vector<32x128xf32> to vector<32x128xbf16>
    %96 = vector.extract_strided_slice %92 {offsets = [0, 256], sizes = [32, 128], strides = [1, 1]} : vector<32x384xf32> to vector<32x128xf32>
    %97 = arith.truncf %96 : vector<32x128xf32> to vector<32x128xbf16>
    %98 = vector.shape_cast %93 : vector<32x128xf32> to vector<1x32x128xf32>
    %99 = vector.broadcast %98 : vector<1x32x128xf32> to vector<8x32x128xf32>
    %100 = vector.broadcast %1 : vector<8x1x128xf32> to vector<8x32x128xf32>
    %101 = arith.mulf %99, %100 : vector<8x32x128xf32>
    %102 = vector.shape_cast %101 : vector<8x32x128xf32> to vector<256x128xf32>
    %103 = arith.truncf %102 : vector<256x128xf32> to vector<256x128xbf16>
    %cst_74 = arith.constant dense<0.000000e+00> : vector<256x32xf32>
    %104 = tpu.matmul %103, %95, %cst_74 {dimension_numbers = #tpu.dot_dimension_numbers<[1], [1], [0], [0], [0, 0, 1, 0], [], []>} : vector<256x128xbf16>, vector<32x128xbf16>, vector<256x32xf32> -> vector<256x32xf32>
    %105 = vector.broadcast %79 : vector<1x32xf32> to vector<256x32xf32>
    %106 = arith.addf %104, %105 : vector<256x32xf32>
    %cst_75 = arith.constant dense<0xFF800000> : vector<256xf32>
    %107 = vector.multi_reduction <maximumf>, %106, %cst_75 [1] : vector<256x32xf32> to vector<256xf32>
    %108 = vector.shape_cast %107 : vector<256xf32> to vector<256x1xf32>
    %109 = vector.broadcast %108 : vector<256x1xf32> to vector<256x32xf32>
    %110 = arith.subf %106, %109 : vector<256x32xf32>
    %111 = math.exp %110 : vector<256x32xf32>
    %cst_76 = arith.constant dense<0.000000e+00> : vector<256xf32>
    %112 = vector.multi_reduction <add>, %111, %cst_76 [1] : vector<256x32xf32> to vector<256xf32>
    %113 = vector.shape_cast %112 : vector<256xf32> to vector<256x1xf32>
    %114 = tpu.reciprocal %113 {approx = true} : vector<256x1xf32> -> vector<256x1xf32>
    %115 = vector.broadcast %114 : vector<256x1xf32> to vector<256x32xf32>
    %116 = arith.mulf %111, %115 : vector<256x32xf32>
    %117 = arith.truncf %116 : vector<256x32xf32> to vector<256x32xbf16>
    %cst_77 = arith.constant dense<0.000000e+00> : vector<256x128xf32>
    %118 = tpu.matmul %117, %97, %cst_77 {dimension_numbers = #tpu.dot_dimension_numbers<[1], [0], [0], [1], [0, 0, 1, 1], [], []>} : vector<256x32xbf16>, vector<32x128xbf16>, vector<256x128xf32> -> vector<256x128xf32>
    %119 = vector.shape_cast %118 : vector<256x128xf32> to vector<8x32x128xf32>
    %120 = vector.broadcast %1 : vector<8x1x128xf32> to vector<8x32x128xf32>
    %121 = arith.mulf %119, %120 : vector<8x32x128xf32>
    %cst_78 = arith.constant dense<0.000000e+00> : vector<32x128xf32>
    %122 = vector.multi_reduction <add>, %121, %cst_78 [0] : vector<8x32x128xf32> to vector<32x128xf32>
    %c0_79 = arith.constant 0 : index
    %c0_80 = arith.constant 0 : index
    %c0_81 = arith.constant 0 : index
    %123 = vector.load %arg20[%c0_79, %c0_80, %c0_81] : memref<2x128x128xbf16, #tpu.memory_space<vmem>>, vector<1x128x128xbf16>
    %124 = vector.shape_cast %123 : vector<1x128x128xbf16> to vector<128x128xbf16>
    %c0_82 = arith.constant 0 : index
    %c0_83 = arith.constant 0 : index
    %c0_84 = arith.constant 0 : index
    %125 = vector.load %arg21[%c0_82, %c0_83, %c0_84] : memref<2x1x128xf32, #tpu.memory_space<vmem>>, vector<1x1x128xf32>
    %126 = vector.shape_cast %125 : vector<1x1x128xf32> to vector<1x128xf32>
    %127 = arith.truncf %122 : vector<32x128xf32> to vector<32x128xbf16>
    %cst_85 = arith.constant dense<0.000000e+00> : vector<32x128xf32>
    %128 = tpu.matmul %127, %124, %cst_85 {dimension_numbers = #tpu.dot_dimension_numbers<[1], [0], [0], [1], [0, 0, 1, 1], [], []>} : vector<32x128xbf16>, vector<128x128xbf16>, vector<32x128xf32> -> vector<32x128xf32>
    %129 = vector.broadcast %126 : vector<1x128xf32> to vector<32x128xf32>
    %130 = arith.addf %128, %129 : vector<32x128xf32>
    %131 = arith.addf %78, %130 : vector<32x128xf32>
    %132 = vector.extract_strided_slice %83 {offsets = [0, 0], sizes = [1, 128], strides = [1, 1]} : vector<3x128xf32> to vector<1x128xf32>
    %133 = vector.extract_strided_slice %85 {offsets = [0, 0], sizes = [1, 128], strides = [1, 1]} : vector<3x128xf32> to vector<1x128xf32>
    %cst_86 = arith.constant dense<0.000000e+00> : vector<32xf32>
    %134 = vector.multi_reduction <add>, %131, %cst_86 [1] : vector<32x128xf32> to vector<32xf32>
    %135 = vector.shape_cast %134 : vector<32xf32> to vector<32x1xf32>
    %cst_87 = arith.constant 1.280000e+02 : f32
    %136 = vector.broadcast %cst_87 : f32 to vector<32x1xf32>
    %137 = arith.divf %135, %136 : vector<32x1xf32>
    %138 = vector.broadcast %137 : vector<32x1xf32> to vector<32x128xf32>
    %139 = arith.subf %131, %138 : vector<32x128xf32>
    %140 = arith.mulf %139, %139 : vector<32x128xf32>
    %cst_88 = arith.constant dense<0.000000e+00> : vector<32xf32>
    %141 = vector.multi_reduction <add>, %140, %cst_88 [1] : vector<32x128xf32> to vector<32xf32>
    %142 = vector.shape_cast %141 : vector<32xf32> to vector<32x1xf32>
    %cst_89 = arith.constant 1.280000e+02 : f32
    %143 = vector.broadcast %cst_89 : f32 to vector<32x1xf32>
    %144 = arith.divf %142, %143 : vector<32x1xf32>
    %cst_90 = arith.constant 9.99999974E-6 : f32
    %145 = vector.broadcast %cst_90 : f32 to vector<32x1xf32>
    %146 = arith.addf %144, %145 : vector<32x1xf32>
    %147 = math.rsqrt %146 : vector<32x1xf32>
    %148 = vector.broadcast %147 : vector<32x1xf32> to vector<32x128xf32>
    %149 = arith.mulf %139, %148 : vector<32x128xf32>
    %150 = vector.broadcast %132 : vector<1x128xf32> to vector<32x128xf32>
    %151 = arith.mulf %149, %150 : vector<32x128xf32>
    %152 = vector.broadcast %133 : vector<1x128xf32> to vector<32x128xf32>
    %153 = arith.addf %151, %152 : vector<32x128xf32>
    %c0_91 = arith.constant 0 : index
    %c0_92 = arith.constant 0 : index
    %c0_93 = arith.constant 0 : index
    %154 = vector.load %arg22[%c0_91, %c0_92, %c0_93] : memref<2x128x128xbf16, #tpu.memory_space<vmem>>, vector<1x128x128xbf16>
    %155 = vector.shape_cast %154 : vector<1x128x128xbf16> to vector<128x128xbf16>
    %c0_94 = arith.constant 0 : index
    %c0_95 = arith.constant 0 : index
    %c0_96 = arith.constant 0 : index
    %156 = vector.load %arg23[%c0_94, %c0_95, %c0_96] : memref<2x32x128xf32, #tpu.memory_space<vmem>>, vector<1x32x128xf32>
    %157 = vector.shape_cast %156 : vector<1x32x128xf32> to vector<32x128xf32>
    %158 = arith.truncf %153 : vector<32x128xf32> to vector<32x128xbf16>
    %cst_97 = arith.constant dense<0.000000e+00> : vector<32x128xf32>
    %159 = tpu.matmul %158, %155, %cst_97 {dimension_numbers = #tpu.dot_dimension_numbers<[1], [0], [0], [1], [0, 0, 1, 1], [], []>} : vector<32x128xbf16>, vector<128x128xbf16>, vector<32x128xf32> -> vector<32x128xf32>
    %160 = arith.addf %159, %157 : vector<32x128xf32>
    %161 = vector.extract_strided_slice %76 {offsets = [0, 0], sizes = [384, 128], strides = [1, 1]} : vector<384x512xbf16> to vector<384x128xbf16>
    %162 = vector.extract_strided_slice %76 {offsets = [0, 128], sizes = [384, 128], strides = [1, 1]} : vector<384x512xbf16> to vector<384x128xbf16>
    %163 = vector.shape_cast %160 : vector<32x128xf32> to vector<1x32x128xf32>
    %164 = vector.broadcast %163 : vector<1x32x128xf32> to vector<8x32x128xf32>
    %165 = vector.broadcast %1 : vector<8x1x128xf32> to vector<8x32x128xf32>
    %166 = arith.mulf %164, %165 : vector<8x32x128xf32>
    %167 = vector.shape_cast %166 : vector<8x32x128xf32> to vector<256x128xf32>
    %168 = arith.truncf %167 : vector<256x128xf32> to vector<256x128xbf16>
    %cst_98 = arith.constant dense<0.000000e+00> : vector<256x384xf32>
    %169 = tpu.matmul %168, %161, %cst_98 {dimension_numbers = #tpu.dot_dimension_numbers<[1], [1], [0], [0], [0, 0, 1, 0], [], []>} : vector<256x128xbf16>, vector<384x128xbf16>, vector<256x384xf32> -> vector<256x384xf32>
    %170 = vector.broadcast %81 : vector<1x384xf32> to vector<256x384xf32>
    %171 = arith.addf %169, %170 : vector<256x384xf32>
    %cst_99 = arith.constant dense<0xFF800000> : vector<256xf32>
    %172 = vector.multi_reduction <maximumf>, %171, %cst_99 [1] : vector<256x384xf32> to vector<256xf32>
    %173 = vector.shape_cast %172 : vector<256xf32> to vector<256x1xf32>
    %174 = vector.broadcast %173 : vector<256x1xf32> to vector<256x384xf32>
    %175 = arith.subf %171, %174 : vector<256x384xf32>
    %176 = math.exp %175 : vector<256x384xf32>
    %cst_100 = arith.constant dense<0.000000e+00> : vector<256xf32>
    %177 = vector.multi_reduction <add>, %176, %cst_100 [1] : vector<256x384xf32> to vector<256xf32>
    %178 = vector.shape_cast %177 : vector<256xf32> to vector<256x1xf32>
    %179 = tpu.reciprocal %178 {approx = true} : vector<256x1xf32> -> vector<256x1xf32>
    %180 = vector.broadcast %179 : vector<256x1xf32> to vector<256x384xf32>
    %181 = arith.mulf %176, %180 : vector<256x384xf32>
    %182 = arith.truncf %181 : vector<256x384xf32> to vector<256x384xbf16>
    %cst_101 = arith.constant dense<0.000000e+00> : vector<256x128xf32>
    %183 = tpu.matmul %182, %162, %cst_101 {dimension_numbers = #tpu.dot_dimension_numbers<[1], [0], [0], [1], [0, 0, 1, 1], [], []>} : vector<256x384xbf16>, vector<384x128xbf16>, vector<256x128xf32> -> vector<256x128xf32>
    %184 = vector.shape_cast %183 : vector<256x128xf32> to vector<8x32x128xf32>
    %185 = vector.broadcast %1 : vector<8x1x128xf32> to vector<8x32x128xf32>
    %186 = arith.mulf %184, %185 : vector<8x32x128xf32>
    %cst_102 = arith.constant dense<0.000000e+00> : vector<32x128xf32>
    %187 = vector.multi_reduction <add>, %186, %cst_102 [0] : vector<8x32x128xf32> to vector<32x128xf32>
    %c0_103 = arith.constant 0 : index
    %c0_104 = arith.constant 0 : index
    %c0_105 = arith.constant 0 : index
    %188 = vector.load %arg24[%c0_103, %c0_104, %c0_105] : memref<2x128x128xbf16, #tpu.memory_space<vmem>>, vector<1x128x128xbf16>
    %189 = vector.shape_cast %188 : vector<1x128x128xbf16> to vector<128x128xbf16>
    %c0_106 = arith.constant 0 : index
    %c0_107 = arith.constant 0 : index
    %c0_108 = arith.constant 0 : index
    %190 = vector.load %arg25[%c0_106, %c0_107, %c0_108] : memref<2x1x128xf32, #tpu.memory_space<vmem>>, vector<1x1x128xf32>
    %191 = vector.shape_cast %190 : vector<1x1x128xf32> to vector<1x128xf32>
    %192 = arith.truncf %187 : vector<32x128xf32> to vector<32x128xbf16>
    %cst_109 = arith.constant dense<0.000000e+00> : vector<32x128xf32>
    %193 = tpu.matmul %192, %189, %cst_109 {dimension_numbers = #tpu.dot_dimension_numbers<[1], [0], [0], [1], [0, 0, 1, 1], [], []>} : vector<32x128xbf16>, vector<128x128xbf16>, vector<32x128xf32> -> vector<32x128xf32>
    %194 = vector.broadcast %191 : vector<1x128xf32> to vector<32x128xf32>
    %195 = arith.addf %193, %194 : vector<32x128xf32>
    %196 = arith.addf %153, %195 : vector<32x128xf32>
    %197 = vector.extract_strided_slice %83 {offsets = [1, 0], sizes = [1, 128], strides = [1, 1]} : vector<3x128xf32> to vector<1x128xf32>
    %198 = vector.extract_strided_slice %85 {offsets = [1, 0], sizes = [1, 128], strides = [1, 1]} : vector<3x128xf32> to vector<1x128xf32>
    %cst_110 = arith.constant dense<0.000000e+00> : vector<32xf32>
    %199 = vector.multi_reduction <add>, %196, %cst_110 [1] : vector<32x128xf32> to vector<32xf32>
    %200 = vector.shape_cast %199 : vector<32xf32> to vector<32x1xf32>
    %cst_111 = arith.constant 1.280000e+02 : f32
    %201 = vector.broadcast %cst_111 : f32 to vector<32x1xf32>
    %202 = arith.divf %200, %201 : vector<32x1xf32>
    %203 = vector.broadcast %202 : vector<32x1xf32> to vector<32x128xf32>
    %204 = arith.subf %196, %203 : vector<32x128xf32>
    %205 = arith.mulf %204, %204 : vector<32x128xf32>
    %cst_112 = arith.constant dense<0.000000e+00> : vector<32xf32>
    %206 = vector.multi_reduction <add>, %205, %cst_112 [1] : vector<32x128xf32> to vector<32xf32>
    %207 = vector.shape_cast %206 : vector<32xf32> to vector<32x1xf32>
    %cst_113 = arith.constant 1.280000e+02 : f32
    %208 = vector.broadcast %cst_113 : f32 to vector<32x1xf32>
    %209 = arith.divf %207, %208 : vector<32x1xf32>
    %cst_114 = arith.constant 9.99999974E-6 : f32
    %210 = vector.broadcast %cst_114 : f32 to vector<32x1xf32>
    %211 = arith.addf %209, %210 : vector<32x1xf32>
    %212 = math.rsqrt %211 : vector<32x1xf32>
    %213 = vector.broadcast %212 : vector<32x1xf32> to vector<32x128xf32>
    %214 = arith.mulf %204, %213 : vector<32x128xf32>
    %215 = vector.broadcast %197 : vector<1x128xf32> to vector<32x128xf32>
    %216 = arith.mulf %214, %215 : vector<32x128xf32>
    %217 = vector.broadcast %198 : vector<1x128xf32> to vector<32x128xf32>
    %218 = arith.addf %216, %217 : vector<32x128xf32>
    %c0_115 = arith.constant 0 : index
    %c0_116 = arith.constant 0 : index
    %c0_117 = arith.constant 0 : index
    %219 = vector.load %arg26[%c0_115, %c0_116, %c0_117] : memref<2x128x256xbf16, #tpu.memory_space<vmem>>, vector<1x128x256xbf16>
    %220 = vector.shape_cast %219 : vector<1x128x256xbf16> to vector<128x256xbf16>
    %c0_118 = arith.constant 0 : index
    %c0_119 = arith.constant 0 : index
    %c0_120 = arith.constant 0 : index
    %221 = vector.load %arg27[%c0_118, %c0_119, %c0_120] : memref<2x1x256xf32, #tpu.memory_space<vmem>>, vector<1x1x256xf32>
    %222 = vector.shape_cast %221 : vector<1x1x256xf32> to vector<1x256xf32>
    %223 = arith.truncf %218 : vector<32x128xf32> to vector<32x128xbf16>
    %cst_121 = arith.constant dense<0.000000e+00> : vector<32x256xf32>
    %224 = tpu.matmul %223, %220, %cst_121 {dimension_numbers = #tpu.dot_dimension_numbers<[1], [0], [0], [1], [0, 0, 1, 1], [], []>} : vector<32x128xbf16>, vector<128x256xbf16>, vector<32x256xf32> -> vector<32x256xf32>
    %225 = vector.broadcast %222 : vector<1x256xf32> to vector<32x256xf32>
    %226 = arith.addf %224, %225 : vector<32x256xf32>
    %cst_122 = arith.constant 0.000000e+00 : f32
    %227 = vector.broadcast %cst_122 : f32 to vector<32x256xf32>
    %228 = arith.maximumf %226, %227 : vector<32x256xf32>
    %c0_123 = arith.constant 0 : index
    %c0_124 = arith.constant 0 : index
    %c0_125 = arith.constant 0 : index
    %229 = vector.load %arg28[%c0_123, %c0_124, %c0_125] : memref<2x256x128xbf16, #tpu.memory_space<vmem>>, vector<1x256x128xbf16>
    %230 = vector.shape_cast %229 : vector<1x256x128xbf16> to vector<256x128xbf16>
    %c0_126 = arith.constant 0 : index
    %c0_127 = arith.constant 0 : index
    %c0_128 = arith.constant 0 : index
    %231 = vector.load %arg29[%c0_126, %c0_127, %c0_128] : memref<2x1x128xf32, #tpu.memory_space<vmem>>, vector<1x1x128xf32>
    %232 = vector.shape_cast %231 : vector<1x1x128xf32> to vector<1x128xf32>
    %233 = arith.truncf %228 : vector<32x256xf32> to vector<32x256xbf16>
    %cst_129 = arith.constant dense<0.000000e+00> : vector<32x128xf32>
    %234 = tpu.matmul %233, %230, %cst_129 {dimension_numbers = #tpu.dot_dimension_numbers<[1], [0], [0], [1], [0, 0, 1, 1], [], []>} : vector<32x256xbf16>, vector<256x128xbf16>, vector<32x128xf32> -> vector<32x128xf32>
    %235 = vector.broadcast %232 : vector<1x128xf32> to vector<32x128xf32>
    %236 = arith.addf %234, %235 : vector<32x128xf32>
    %237 = arith.addf %218, %236 : vector<32x128xf32>
    %238 = vector.extract_strided_slice %83 {offsets = [2, 0], sizes = [1, 128], strides = [1, 1]} : vector<3x128xf32> to vector<1x128xf32>
    %239 = vector.extract_strided_slice %85 {offsets = [2, 0], sizes = [1, 128], strides = [1, 1]} : vector<3x128xf32> to vector<1x128xf32>
    %cst_130 = arith.constant dense<0.000000e+00> : vector<32xf32>
    %240 = vector.multi_reduction <add>, %237, %cst_130 [1] : vector<32x128xf32> to vector<32xf32>
    %241 = vector.shape_cast %240 : vector<32xf32> to vector<32x1xf32>
    %cst_131 = arith.constant 1.280000e+02 : f32
    %242 = vector.broadcast %cst_131 : f32 to vector<32x1xf32>
    %243 = arith.divf %241, %242 : vector<32x1xf32>
    %244 = vector.broadcast %243 : vector<32x1xf32> to vector<32x128xf32>
    %245 = arith.subf %237, %244 : vector<32x128xf32>
    %246 = arith.mulf %245, %245 : vector<32x128xf32>
    %cst_132 = arith.constant dense<0.000000e+00> : vector<32xf32>
    %247 = vector.multi_reduction <add>, %246, %cst_132 [1] : vector<32x128xf32> to vector<32xf32>
    %248 = vector.shape_cast %247 : vector<32xf32> to vector<32x1xf32>
    %cst_133 = arith.constant 1.280000e+02 : f32
    %249 = vector.broadcast %cst_133 : f32 to vector<32x1xf32>
    %250 = arith.divf %248, %249 : vector<32x1xf32>
    %cst_134 = arith.constant 9.99999974E-6 : f32
    %251 = vector.broadcast %cst_134 : f32 to vector<32x1xf32>
    %252 = arith.addf %250, %251 : vector<32x1xf32>
    %253 = math.rsqrt %252 : vector<32x1xf32>
    %254 = vector.broadcast %253 : vector<32x1xf32> to vector<32x128xf32>
    %255 = arith.mulf %245, %254 : vector<32x128xf32>
    %256 = vector.broadcast %238 : vector<1x128xf32> to vector<32x128xf32>
    %257 = arith.mulf %255, %256 : vector<32x128xf32>
    %258 = vector.broadcast %239 : vector<1x128xf32> to vector<32x128xf32>
    %259 = arith.addf %257, %258 : vector<32x128xf32>
    %c1 = arith.constant 1 : index
    %c0_135 = arith.constant 0 : index
    %c0_136 = arith.constant 0 : index
    %260 = vector.load %arg30[%c1, %c0_135, %c0_136] : memref<2x3x128xf32, #tpu.memory_space<vmem>>, vector<1x3x128xf32>
    %261 = vector.shape_cast %260 : vector<1x3x128xf32> to vector<3x128xf32>
    %c1_137 = arith.constant 1 : index
    %c0_138 = arith.constant 0 : index
    %c0_139 = arith.constant 0 : index
    %262 = vector.load %arg31[%c1_137, %c0_138, %c0_139] : memref<2x3x128xf32, #tpu.memory_space<vmem>>, vector<1x3x128xf32>
    %263 = vector.shape_cast %262 : vector<1x3x128xf32> to vector<3x128xf32>
    %c1_140 = arith.constant 1 : index
    %c0_141 = arith.constant 0 : index
    %c0_142 = arith.constant 0 : index
    %264 = vector.load %arg18[%c1_140, %c0_141, %c0_142] : memref<2x128x384xbf16, #tpu.memory_space<vmem>>, vector<1x128x384xbf16>
    %265 = vector.shape_cast %264 : vector<1x128x384xbf16> to vector<128x384xbf16>
    %c1_143 = arith.constant 1 : index
    %c0_144 = arith.constant 0 : index
    %c0_145 = arith.constant 0 : index
    %266 = vector.load %arg19[%c1_143, %c0_144, %c0_145] : memref<2x32x384xf32, #tpu.memory_space<vmem>>, vector<1x32x384xf32>
    %267 = vector.shape_cast %266 : vector<1x32x384xf32> to vector<32x384xf32>
    %268 = arith.truncf %259 : vector<32x128xf32> to vector<32x128xbf16>
    %cst_146 = arith.constant dense<0.000000e+00> : vector<32x384xf32>
    %269 = tpu.matmul %268, %265, %cst_146 {dimension_numbers = #tpu.dot_dimension_numbers<[1], [0], [0], [1], [0, 0, 1, 1], [], []>} : vector<32x128xbf16>, vector<128x384xbf16>, vector<32x384xf32> -> vector<32x384xf32>
    %270 = arith.addf %269, %267 : vector<32x384xf32>
    %271 = vector.extract_strided_slice %270 {offsets = [0, 0], sizes = [32, 128], strides = [1, 1]} : vector<32x384xf32> to vector<32x128xf32>
    %272 = vector.extract_strided_slice %270 {offsets = [0, 128], sizes = [32, 128], strides = [1, 1]} : vector<32x384xf32> to vector<32x128xf32>
    %273 = arith.truncf %272 : vector<32x128xf32> to vector<32x128xbf16>
    %274 = vector.extract_strided_slice %270 {offsets = [0, 256], sizes = [32, 128], strides = [1, 1]} : vector<32x384xf32> to vector<32x128xf32>
    %275 = arith.truncf %274 : vector<32x128xf32> to vector<32x128xbf16>
    %276 = vector.shape_cast %271 : vector<32x128xf32> to vector<1x32x128xf32>
    %277 = vector.broadcast %276 : vector<1x32x128xf32> to vector<8x32x128xf32>
    %278 = vector.broadcast %1 : vector<8x1x128xf32> to vector<8x32x128xf32>
    %279 = arith.mulf %277, %278 : vector<8x32x128xf32>
    %280 = vector.shape_cast %279 : vector<8x32x128xf32> to vector<256x128xf32>
    %281 = arith.truncf %280 : vector<256x128xf32> to vector<256x128xbf16>
    %cst_147 = arith.constant dense<0.000000e+00> : vector<256x32xf32>
    %282 = tpu.matmul %281, %273, %cst_147 {dimension_numbers = #tpu.dot_dimension_numbers<[1], [1], [0], [0], [0, 0, 1, 0], [], []>} : vector<256x128xbf16>, vector<32x128xbf16>, vector<256x32xf32> -> vector<256x32xf32>
    %283 = vector.broadcast %79 : vector<1x32xf32> to vector<256x32xf32>
    %284 = arith.addf %282, %283 : vector<256x32xf32>
    %cst_148 = arith.constant dense<0xFF800000> : vector<256xf32>
    %285 = vector.multi_reduction <maximumf>, %284, %cst_148 [1] : vector<256x32xf32> to vector<256xf32>
    %286 = vector.shape_cast %285 : vector<256xf32> to vector<256x1xf32>
    %287 = vector.broadcast %286 : vector<256x1xf32> to vector<256x32xf32>
    %288 = arith.subf %284, %287 : vector<256x32xf32>
    %289 = math.exp %288 : vector<256x32xf32>
    %cst_149 = arith.constant dense<0.000000e+00> : vector<256xf32>
    %290 = vector.multi_reduction <add>, %289, %cst_149 [1] : vector<256x32xf32> to vector<256xf32>
    %291 = vector.shape_cast %290 : vector<256xf32> to vector<256x1xf32>
    %292 = tpu.reciprocal %291 {approx = true} : vector<256x1xf32> -> vector<256x1xf32>
    %293 = vector.broadcast %292 : vector<256x1xf32> to vector<256x32xf32>
    %294 = arith.mulf %289, %293 : vector<256x32xf32>
    %295 = arith.truncf %294 : vector<256x32xf32> to vector<256x32xbf16>
    %cst_150 = arith.constant dense<0.000000e+00> : vector<256x128xf32>
    %296 = tpu.matmul %295, %275, %cst_150 {dimension_numbers = #tpu.dot_dimension_numbers<[1], [0], [0], [1], [0, 0, 1, 1], [], []>} : vector<256x32xbf16>, vector<32x128xbf16>, vector<256x128xf32> -> vector<256x128xf32>
    %297 = vector.shape_cast %296 : vector<256x128xf32> to vector<8x32x128xf32>
    %298 = vector.broadcast %1 : vector<8x1x128xf32> to vector<8x32x128xf32>
    %299 = arith.mulf %297, %298 : vector<8x32x128xf32>
    %cst_151 = arith.constant dense<0.000000e+00> : vector<32x128xf32>
    %300 = vector.multi_reduction <add>, %299, %cst_151 [0] : vector<8x32x128xf32> to vector<32x128xf32>
    %c1_152 = arith.constant 1 : index
    %c0_153 = arith.constant 0 : index
    %c0_154 = arith.constant 0 : index
    %301 = vector.load %arg20[%c1_152, %c0_153, %c0_154] : memref<2x128x128xbf16, #tpu.memory_space<vmem>>, vector<1x128x128xbf16>
    %302 = vector.shape_cast %301 : vector<1x128x128xbf16> to vector<128x128xbf16>
    %c1_155 = arith.constant 1 : index
    %c0_156 = arith.constant 0 : index
    %c0_157 = arith.constant 0 : index
    %303 = vector.load %arg21[%c1_155, %c0_156, %c0_157] : memref<2x1x128xf32, #tpu.memory_space<vmem>>, vector<1x1x128xf32>
    %304 = vector.shape_cast %303 : vector<1x1x128xf32> to vector<1x128xf32>
    %305 = arith.truncf %300 : vector<32x128xf32> to vector<32x128xbf16>
    %cst_158 = arith.constant dense<0.000000e+00> : vector<32x128xf32>
    %306 = tpu.matmul %305, %302, %cst_158 {dimension_numbers = #tpu.dot_dimension_numbers<[1], [0], [0], [1], [0, 0, 1, 1], [], []>} : vector<32x128xbf16>, vector<128x128xbf16>, vector<32x128xf32> -> vector<32x128xf32>
    %307 = vector.broadcast %304 : vector<1x128xf32> to vector<32x128xf32>
    %308 = arith.addf %306, %307 : vector<32x128xf32>
    %309 = arith.addf %259, %308 : vector<32x128xf32>
    %310 = vector.extract_strided_slice %261 {offsets = [0, 0], sizes = [1, 128], strides = [1, 1]} : vector<3x128xf32> to vector<1x128xf32>
    %311 = vector.extract_strided_slice %263 {offsets = [0, 0], sizes = [1, 128], strides = [1, 1]} : vector<3x128xf32> to vector<1x128xf32>
    %cst_159 = arith.constant dense<0.000000e+00> : vector<32xf32>
    %312 = vector.multi_reduction <add>, %309, %cst_159 [1] : vector<32x128xf32> to vector<32xf32>
    %313 = vector.shape_cast %312 : vector<32xf32> to vector<32x1xf32>
    %cst_160 = arith.constant 1.280000e+02 : f32
    %314 = vector.broadcast %cst_160 : f32 to vector<32x1xf32>
    %315 = arith.divf %313, %314 : vector<32x1xf32>
    %316 = vector.broadcast %315 : vector<32x1xf32> to vector<32x128xf32>
    %317 = arith.subf %309, %316 : vector<32x128xf32>
    %318 = arith.mulf %317, %317 : vector<32x128xf32>
    %cst_161 = arith.constant dense<0.000000e+00> : vector<32xf32>
    %319 = vector.multi_reduction <add>, %318, %cst_161 [1] : vector<32x128xf32> to vector<32xf32>
    %320 = vector.shape_cast %319 : vector<32xf32> to vector<32x1xf32>
    %cst_162 = arith.constant 1.280000e+02 : f32
    %321 = vector.broadcast %cst_162 : f32 to vector<32x1xf32>
    %322 = arith.divf %320, %321 : vector<32x1xf32>
    %cst_163 = arith.constant 9.99999974E-6 : f32
    %323 = vector.broadcast %cst_163 : f32 to vector<32x1xf32>
    %324 = arith.addf %322, %323 : vector<32x1xf32>
    %325 = math.rsqrt %324 : vector<32x1xf32>
    %326 = vector.broadcast %325 : vector<32x1xf32> to vector<32x128xf32>
    %327 = arith.mulf %317, %326 : vector<32x128xf32>
    %328 = vector.broadcast %310 : vector<1x128xf32> to vector<32x128xf32>
    %329 = arith.mulf %327, %328 : vector<32x128xf32>
    %330 = vector.broadcast %311 : vector<1x128xf32> to vector<32x128xf32>
    %331 = arith.addf %329, %330 : vector<32x128xf32>
    %c1_164 = arith.constant 1 : index
    %c0_165 = arith.constant 0 : index
    %c0_166 = arith.constant 0 : index
    %332 = vector.load %arg22[%c1_164, %c0_165, %c0_166] : memref<2x128x128xbf16, #tpu.memory_space<vmem>>, vector<1x128x128xbf16>
    %333 = vector.shape_cast %332 : vector<1x128x128xbf16> to vector<128x128xbf16>
    %c1_167 = arith.constant 1 : index
    %c0_168 = arith.constant 0 : index
    %c0_169 = arith.constant 0 : index
    %334 = vector.load %arg23[%c1_167, %c0_168, %c0_169] : memref<2x32x128xf32, #tpu.memory_space<vmem>>, vector<1x32x128xf32>
    %335 = vector.shape_cast %334 : vector<1x32x128xf32> to vector<32x128xf32>
    %336 = arith.truncf %331 : vector<32x128xf32> to vector<32x128xbf16>
    %cst_170 = arith.constant dense<0.000000e+00> : vector<32x128xf32>
    %337 = tpu.matmul %336, %333, %cst_170 {dimension_numbers = #tpu.dot_dimension_numbers<[1], [0], [0], [1], [0, 0, 1, 1], [], []>} : vector<32x128xbf16>, vector<128x128xbf16>, vector<32x128xf32> -> vector<32x128xf32>
    %338 = arith.addf %337, %335 : vector<32x128xf32>
    %339 = vector.extract_strided_slice %76 {offsets = [0, 256], sizes = [384, 128], strides = [1, 1]} : vector<384x512xbf16> to vector<384x128xbf16>
    %340 = vector.extract_strided_slice %76 {offsets = [0, 384], sizes = [384, 128], strides = [1, 1]} : vector<384x512xbf16> to vector<384x128xbf16>
    %341 = vector.shape_cast %338 : vector<32x128xf32> to vector<1x32x128xf32>
    %342 = vector.broadcast %341 : vector<1x32x128xf32> to vector<8x32x128xf32>
    %343 = vector.broadcast %1 : vector<8x1x128xf32> to vector<8x32x128xf32>
    %344 = arith.mulf %342, %343 : vector<8x32x128xf32>
    %345 = vector.shape_cast %344 : vector<8x32x128xf32> to vector<256x128xf32>
    %346 = arith.truncf %345 : vector<256x128xf32> to vector<256x128xbf16>
    %cst_171 = arith.constant dense<0.000000e+00> : vector<256x384xf32>
    %347 = tpu.matmul %346, %339, %cst_171 {dimension_numbers = #tpu.dot_dimension_numbers<[1], [1], [0], [0], [0, 0, 1, 0], [], []>} : vector<256x128xbf16>, vector<384x128xbf16>, vector<256x384xf32> -> vector<256x384xf32>
    %348 = vector.broadcast %81 : vector<1x384xf32> to vector<256x384xf32>
    %349 = arith.addf %347, %348 : vector<256x384xf32>
    %cst_172 = arith.constant dense<0xFF800000> : vector<256xf32>
    %350 = vector.multi_reduction <maximumf>, %349, %cst_172 [1] : vector<256x384xf32> to vector<256xf32>
    %351 = vector.shape_cast %350 : vector<256xf32> to vector<256x1xf32>
    %352 = vector.broadcast %351 : vector<256x1xf32> to vector<256x384xf32>
    %353 = arith.subf %349, %352 : vector<256x384xf32>
    %354 = math.exp %353 : vector<256x384xf32>
    %cst_173 = arith.constant dense<0.000000e+00> : vector<256xf32>
    %355 = vector.multi_reduction <add>, %354, %cst_173 [1] : vector<256x384xf32> to vector<256xf32>
    %356 = vector.shape_cast %355 : vector<256xf32> to vector<256x1xf32>
    %357 = tpu.reciprocal %356 {approx = true} : vector<256x1xf32> -> vector<256x1xf32>
    %358 = vector.broadcast %357 : vector<256x1xf32> to vector<256x384xf32>
    %359 = arith.mulf %354, %358 : vector<256x384xf32>
    %360 = arith.truncf %359 : vector<256x384xf32> to vector<256x384xbf16>
    %cst_174 = arith.constant dense<0.000000e+00> : vector<256x128xf32>
    %361 = tpu.matmul %360, %340, %cst_174 {dimension_numbers = #tpu.dot_dimension_numbers<[1], [0], [0], [1], [0, 0, 1, 1], [], []>} : vector<256x384xbf16>, vector<384x128xbf16>, vector<256x128xf32> -> vector<256x128xf32>
    %362 = vector.shape_cast %361 : vector<256x128xf32> to vector<8x32x128xf32>
    %363 = vector.broadcast %1 : vector<8x1x128xf32> to vector<8x32x128xf32>
    %364 = arith.mulf %362, %363 : vector<8x32x128xf32>
    %cst_175 = arith.constant dense<0.000000e+00> : vector<32x128xf32>
    %365 = vector.multi_reduction <add>, %364, %cst_175 [0] : vector<8x32x128xf32> to vector<32x128xf32>
    %c1_176 = arith.constant 1 : index
    %c0_177 = arith.constant 0 : index
    %c0_178 = arith.constant 0 : index
    %366 = vector.load %arg24[%c1_176, %c0_177, %c0_178] : memref<2x128x128xbf16, #tpu.memory_space<vmem>>, vector<1x128x128xbf16>
    %367 = vector.shape_cast %366 : vector<1x128x128xbf16> to vector<128x128xbf16>
    %c1_179 = arith.constant 1 : index
    %c0_180 = arith.constant 0 : index
    %c0_181 = arith.constant 0 : index
    %368 = vector.load %arg25[%c1_179, %c0_180, %c0_181] : memref<2x1x128xf32, #tpu.memory_space<vmem>>, vector<1x1x128xf32>
    %369 = vector.shape_cast %368 : vector<1x1x128xf32> to vector<1x128xf32>
    %370 = arith.truncf %365 : vector<32x128xf32> to vector<32x128xbf16>
    %cst_182 = arith.constant dense<0.000000e+00> : vector<32x128xf32>
    %371 = tpu.matmul %370, %367, %cst_182 {dimension_numbers = #tpu.dot_dimension_numbers<[1], [0], [0], [1], [0, 0, 1, 1], [], []>} : vector<32x128xbf16>, vector<128x128xbf16>, vector<32x128xf32> -> vector<32x128xf32>
    %372 = vector.broadcast %369 : vector<1x128xf32> to vector<32x128xf32>
    %373 = arith.addf %371, %372 : vector<32x128xf32>
    %374 = arith.addf %331, %373 : vector<32x128xf32>
    %375 = vector.extract_strided_slice %261 {offsets = [1, 0], sizes = [1, 128], strides = [1, 1]} : vector<3x128xf32> to vector<1x128xf32>
    %376 = vector.extract_strided_slice %263 {offsets = [1, 0], sizes = [1, 128], strides = [1, 1]} : vector<3x128xf32> to vector<1x128xf32>
    %cst_183 = arith.constant dense<0.000000e+00> : vector<32xf32>
    %377 = vector.multi_reduction <add>, %374, %cst_183 [1] : vector<32x128xf32> to vector<32xf32>
    %378 = vector.shape_cast %377 : vector<32xf32> to vector<32x1xf32>
    %cst_184 = arith.constant 1.280000e+02 : f32
    %379 = vector.broadcast %cst_184 : f32 to vector<32x1xf32>
    %380 = arith.divf %378, %379 : vector<32x1xf32>
    %381 = vector.broadcast %380 : vector<32x1xf32> to vector<32x128xf32>
    %382 = arith.subf %374, %381 : vector<32x128xf32>
    %383 = arith.mulf %382, %382 : vector<32x128xf32>
    %cst_185 = arith.constant dense<0.000000e+00> : vector<32xf32>
    %384 = vector.multi_reduction <add>, %383, %cst_185 [1] : vector<32x128xf32> to vector<32xf32>
    %385 = vector.shape_cast %384 : vector<32xf32> to vector<32x1xf32>
    %cst_186 = arith.constant 1.280000e+02 : f32
    %386 = vector.broadcast %cst_186 : f32 to vector<32x1xf32>
    %387 = arith.divf %385, %386 : vector<32x1xf32>
    %cst_187 = arith.constant 9.99999974E-6 : f32
    %388 = vector.broadcast %cst_187 : f32 to vector<32x1xf32>
    %389 = arith.addf %387, %388 : vector<32x1xf32>
    %390 = math.rsqrt %389 : vector<32x1xf32>
    %391 = vector.broadcast %390 : vector<32x1xf32> to vector<32x128xf32>
    %392 = arith.mulf %382, %391 : vector<32x128xf32>
    %393 = vector.broadcast %375 : vector<1x128xf32> to vector<32x128xf32>
    %394 = arith.mulf %392, %393 : vector<32x128xf32>
    %395 = vector.broadcast %376 : vector<1x128xf32> to vector<32x128xf32>
    %396 = arith.addf %394, %395 : vector<32x128xf32>
    %c1_188 = arith.constant 1 : index
    %c0_189 = arith.constant 0 : index
    %c0_190 = arith.constant 0 : index
    %397 = vector.load %arg26[%c1_188, %c0_189, %c0_190] : memref<2x128x256xbf16, #tpu.memory_space<vmem>>, vector<1x128x256xbf16>
    %398 = vector.shape_cast %397 : vector<1x128x256xbf16> to vector<128x256xbf16>
    %c1_191 = arith.constant 1 : index
    %c0_192 = arith.constant 0 : index
    %c0_193 = arith.constant 0 : index
    %399 = vector.load %arg27[%c1_191, %c0_192, %c0_193] : memref<2x1x256xf32, #tpu.memory_space<vmem>>, vector<1x1x256xf32>
    %400 = vector.shape_cast %399 : vector<1x1x256xf32> to vector<1x256xf32>
    %401 = arith.truncf %396 : vector<32x128xf32> to vector<32x128xbf16>
    %cst_194 = arith.constant dense<0.000000e+00> : vector<32x256xf32>
    %402 = tpu.matmul %401, %398, %cst_194 {dimension_numbers = #tpu.dot_dimension_numbers<[1], [0], [0], [1], [0, 0, 1, 1], [], []>} : vector<32x128xbf16>, vector<128x256xbf16>, vector<32x256xf32> -> vector<32x256xf32>
    %403 = vector.broadcast %400 : vector<1x256xf32> to vector<32x256xf32>
    %404 = arith.addf %402, %403 : vector<32x256xf32>
    %cst_195 = arith.constant 0.000000e+00 : f32
    %405 = vector.broadcast %cst_195 : f32 to vector<32x256xf32>
    %406 = arith.maximumf %404, %405 : vector<32x256xf32>
    %c1_196 = arith.constant 1 : index
    %c0_197 = arith.constant 0 : index
    %c0_198 = arith.constant 0 : index
    %407 = vector.load %arg28[%c1_196, %c0_197, %c0_198] : memref<2x256x128xbf16, #tpu.memory_space<vmem>>, vector<1x256x128xbf16>
    %408 = vector.shape_cast %407 : vector<1x256x128xbf16> to vector<256x128xbf16>
    %c1_199 = arith.constant 1 : index
    %c0_200 = arith.constant 0 : index
    %c0_201 = arith.constant 0 : index
    %409 = vector.load %arg29[%c1_199, %c0_200, %c0_201] : memref<2x1x128xf32, #tpu.memory_space<vmem>>, vector<1x1x128xf32>
    %410 = vector.shape_cast %409 : vector<1x1x128xf32> to vector<1x128xf32>
    %411 = arith.truncf %406 : vector<32x256xf32> to vector<32x256xbf16>
    %cst_202 = arith.constant dense<0.000000e+00> : vector<32x128xf32>
    %412 = tpu.matmul %411, %408, %cst_202 {dimension_numbers = #tpu.dot_dimension_numbers<[1], [0], [0], [1], [0, 0, 1, 1], [], []>} : vector<32x256xbf16>, vector<256x128xbf16>, vector<32x128xf32> -> vector<32x128xf32>
    %413 = vector.broadcast %410 : vector<1x128xf32> to vector<32x128xf32>
    %414 = arith.addf %412, %413 : vector<32x128xf32>
    %415 = arith.addf %396, %414 : vector<32x128xf32>
    %416 = vector.extract_strided_slice %261 {offsets = [2, 0], sizes = [1, 128], strides = [1, 1]} : vector<3x128xf32> to vector<1x128xf32>
    %417 = vector.extract_strided_slice %263 {offsets = [2, 0], sizes = [1, 128], strides = [1, 1]} : vector<3x128xf32> to vector<1x128xf32>
    %cst_203 = arith.constant dense<0.000000e+00> : vector<32xf32>
    %418 = vector.multi_reduction <add>, %415, %cst_203 [1] : vector<32x128xf32> to vector<32xf32>
    %419 = vector.shape_cast %418 : vector<32xf32> to vector<32x1xf32>
    %cst_204 = arith.constant 1.280000e+02 : f32
    %420 = vector.broadcast %cst_204 : f32 to vector<32x1xf32>
    %421 = arith.divf %419, %420 : vector<32x1xf32>
    %422 = vector.broadcast %421 : vector<32x1xf32> to vector<32x128xf32>
    %423 = arith.subf %415, %422 : vector<32x128xf32>
    %424 = arith.mulf %423, %423 : vector<32x128xf32>
    %cst_205 = arith.constant dense<0.000000e+00> : vector<32xf32>
    %425 = vector.multi_reduction <add>, %424, %cst_205 [1] : vector<32x128xf32> to vector<32xf32>
    %426 = vector.shape_cast %425 : vector<32xf32> to vector<32x1xf32>
    %cst_206 = arith.constant 1.280000e+02 : f32
    %427 = vector.broadcast %cst_206 : f32 to vector<32x1xf32>
    %428 = arith.divf %426, %427 : vector<32x1xf32>
    %cst_207 = arith.constant 9.99999974E-6 : f32
    %429 = vector.broadcast %cst_207 : f32 to vector<32x1xf32>
    %430 = arith.addf %428, %429 : vector<32x1xf32>
    %431 = math.rsqrt %430 : vector<32x1xf32>
    %432 = vector.broadcast %431 : vector<32x1xf32> to vector<32x128xf32>
    %433 = arith.mulf %423, %432 : vector<32x128xf32>
    %434 = vector.broadcast %416 : vector<1x128xf32> to vector<32x128xf32>
    %435 = arith.mulf %433, %434 : vector<32x128xf32>
    %436 = vector.broadcast %417 : vector<1x128xf32> to vector<32x128xf32>
    %437 = arith.addf %435, %436 : vector<32x128xf32>
    %c0_208 = arith.constant 0 : index
    %c0_209 = arith.constant 0 : index
    %438 = vector.load %arg32[%c0_208, %c0_209] : memref<1x128xf32, #tpu.memory_space<vmem>>, vector<1x128xf32>
    %c0_210 = arith.constant 0 : index
    %c0_211 = arith.constant 0 : index
    %439 = vector.load %arg33[%c0_210, %c0_211] : memref<1x128xf32, #tpu.memory_space<vmem>>, vector<1x128xf32>
    %cst_212 = arith.constant dense<0.000000e+00> : vector<32xf32>
    %440 = vector.multi_reduction <add>, %437, %cst_212 [1] : vector<32x128xf32> to vector<32xf32>
    %441 = vector.shape_cast %440 : vector<32xf32> to vector<32x1xf32>
    %cst_213 = arith.constant 1.280000e+02 : f32
    %442 = vector.broadcast %cst_213 : f32 to vector<32x1xf32>
    %443 = arith.divf %441, %442 : vector<32x1xf32>
    %444 = vector.broadcast %443 : vector<32x1xf32> to vector<32x128xf32>
    %445 = arith.subf %437, %444 : vector<32x128xf32>
    %446 = arith.mulf %445, %445 : vector<32x128xf32>
    %cst_214 = arith.constant dense<0.000000e+00> : vector<32xf32>
    %447 = vector.multi_reduction <add>, %446, %cst_214 [1] : vector<32x128xf32> to vector<32xf32>
    %448 = vector.shape_cast %447 : vector<32xf32> to vector<32x1xf32>
    %cst_215 = arith.constant 1.280000e+02 : f32
    %449 = vector.broadcast %cst_215 : f32 to vector<32x1xf32>
    %450 = arith.divf %448, %449 : vector<32x1xf32>
    %cst_216 = arith.constant 9.99999974E-6 : f32
    %451 = vector.broadcast %cst_216 : f32 to vector<32x1xf32>
    %452 = arith.addf %450, %451 : vector<32x1xf32>
    %453 = math.rsqrt %452 : vector<32x1xf32>
    %454 = vector.broadcast %453 : vector<32x1xf32> to vector<32x128xf32>
    %455 = arith.mulf %445, %454 : vector<32x128xf32>
    %456 = vector.broadcast %438 : vector<1x128xf32> to vector<32x128xf32>
    %457 = arith.mulf %455, %456 : vector<32x128xf32>
    %458 = vector.broadcast %439 : vector<1x128xf32> to vector<32x128xf32>
    %459 = arith.addf %457, %458 : vector<32x128xf32>
    %c0_217 = arith.constant 0 : index
    %c0_218 = arith.constant 0 : index
    %c0_219 = arith.constant 0 : index
    %460 = vector.load %arg34[%c0_217, %c0_218, %c0_219] : memref<1x32x128xf32, #tpu.memory_space<vmem>>, vector<1x32x128xf32>
    %461 = vector.shape_cast %460 : vector<1x32x128xf32> to vector<32x128xf32>
    %462 = vector.shape_cast %459 : vector<32x128xf32> to vector<1x32x128xf32>
    tpu.vector_store %arg34[%c0_217, %c0_218, %c0_219], %462 {strides = array<i32>} : memref<1x32x128xf32, #tpu.memory_space<vmem>>, vector<1x32x128xf32>,
    return
  }
  func.func @transform_0(%arg0: i32) -> (i32, i32, i32) {
    %c0_i32 = arith.constant 0 : i32
    %c0_i32_0 = arith.constant 0 : i32
    %c0_i32_1 = arith.constant 0 : i32
    return %arg0, %c0_i32, %c0_i32_0 : i32, i32, i32
  }
  func.func @transform_1(%arg0: i32) -> (i32, i32, i32) {
    %c0_i32 = arith.constant 0 : i32
    %c0_i32_0 = arith.constant 0 : i32
    %c0_i32_1 = arith.constant 0 : i32
    return %arg0, %c0_i32, %c0_i32_0 : i32, i32, i32
  }
  func.func @transform_2(%arg0: i32) -> (i32, i32, i32) {
    %c0_i32 = arith.constant 0 : i32
    %c0_i32_0 = arith.constant 0 : i32
    %c0_i32_1 = arith.constant 0 : i32
    return %arg0, %c0_i32, %c0_i32_0 : i32, i32, i32
  }
  func.func @transform_3(%arg0: i32) -> (i32, i32, i32) {
    %c0_i32 = arith.constant 0 : i32
    %c0_i32_0 = arith.constant 0 : i32
    %c0_i32_1 = arith.constant 0 : i32
    return %arg0, %c0_i32, %c0_i32_0 : i32, i32, i32
  }
  func.func @transform_4(%arg0: i32) -> (i32, i32) {
    %c0_i32 = arith.constant 0 : i32
    %c0_i32_0 = arith.constant 0 : i32
    %c0_i32_1 = arith.constant 0 : i32
    return %c0_i32, %c0_i32_0 : i32, i32
  }
  func.func @transform_5(%arg0: i32) -> (i32, i32, i32) {
    %c0_i32 = arith.constant 0 : i32
    %c0_i32_0 = arith.constant 0 : i32
    %c0_i32_1 = arith.constant 0 : i32
    %c0_i32_2 = arith.constant 0 : i32
    return %c0_i32, %c0_i32_0, %c0_i32_1 : i32, i32, i32
  }
  func.func @transform_6(%arg0: i32) -> (i32, i32) {
    %c0_i32 = arith.constant 0 : i32
    %c0_i32_0 = arith.constant 0 : i32
    %c0_i32_1 = arith.constant 0 : i32
    return %c0_i32, %c0_i32_0 : i32, i32
  }
  func.func @transform_7(%arg0: i32) -> (i32, i32) {
    %c0_i32 = arith.constant 0 : i32
    %c0_i32_0 = arith.constant 0 : i32
    %c0_i32_1 = arith.constant 0 : i32
    return %c0_i32, %c0_i32_0 : i32, i32
  }
  func.func @transform_8(%arg0: i32) -> (i32, i32) {
    %c0_i32 = arith.constant 0 : i32
    %c0_i32_0 = arith.constant 0 : i32
    %c0_i32_1 = arith.constant 0 : i32
    return %c0_i32, %c0_i32_0 : i32, i32
  }
  func.func @transform_9(%arg0: i32) -> (i32, i32) {
    %c0_i32 = arith.constant 0 : i32
    %c0_i32_0 = arith.constant 0 : i32
    %c0_i32_1 = arith.constant 0 : i32
    return %c0_i32, %c0_i32_0 : i32, i32
  }
  func.func @transform_10(%arg0: i32) -> (i32, i32) {
    %c0_i32 = arith.constant 0 : i32
    %c0_i32_0 = arith.constant 0 : i32
    %c0_i32_1 = arith.constant 0 : i32
    return %c0_i32, %c0_i32_0 : i32, i32
  }
  func.func @transform_11(%arg0: i32) -> (i32, i32) {
    %c0_i32 = arith.constant 0 : i32
    %c0_i32_0 = arith.constant 0 : i32
    %c0_i32_1 = arith.constant 0 : i32
    return %c0_i32, %c0_i32_0 : i32, i32
  }
  func.func @transform_12(%arg0: i32) -> (i32, i32) {
    %c0_i32 = arith.constant 0 : i32
    %c0_i32_0 = arith.constant 0 : i32
    %c0_i32_1 = arith.constant 0 : i32
    return %c0_i32, %c0_i32_0 : i32, i32
  }
  func.func @transform_13(%arg0: i32) -> (i32, i32) {
    %c0_i32 = arith.constant 0 : i32
    %c0_i32_0 = arith.constant 0 : i32
    %c0_i32_1 = arith.constant 0 : i32
    return %c0_i32, %c0_i32_0 : i32, i32
  }
  func.func @transform_14(%arg0: i32) -> (i32, i32) {
    %c0_i32 = arith.constant 0 : i32
    %c0_i32_0 = arith.constant 0 : i32
    %c0_i32_1 = arith.constant 0 : i32
    return %c0_i32, %c0_i32_0 : i32, i32
  }
  func.func @transform_15(%arg0: i32) -> (i32, i32) {
    %c0_i32 = arith.constant 0 : i32
    %c0_i32_0 = arith.constant 0 : i32
    %c0_i32_1 = arith.constant 0 : i32
    return %c0_i32, %c0_i32_0 : i32, i32
  }
  func.func @transform_16(%arg0: i32) -> (i32, i32) {
    %c0_i32 = arith.constant 0 : i32
    %c0_i32_0 = arith.constant 0 : i32
    %c0_i32_1 = arith.constant 0 : i32
    return %c0_i32, %c0_i32_0 : i32, i32
  }
  func.func @transform_17(%arg0: i32) -> (i32, i32, i32) {
    %c0_i32 = arith.constant 0 : i32
    %c0_i32_0 = arith.constant 0 : i32
    %c0_i32_1 = arith.constant 0 : i32
    %c0_i32_2 = arith.constant 0 : i32
    return %c0_i32, %c0_i32_0, %c0_i32_1 : i32, i32, i32
  }
  func.func @transform_18(%arg0: i32) -> (i32, i32, i32) {
    %c0_i32 = arith.constant 0 : i32
    %c0_i32_0 = arith.constant 0 : i32
    %c0_i32_1 = arith.constant 0 : i32
    %c0_i32_2 = arith.constant 0 : i32
    return %c0_i32, %c0_i32_0, %c0_i32_1 : i32, i32, i32
  }
  func.func @transform_19(%arg0: i32) -> (i32, i32, i32) {
    %c0_i32 = arith.constant 0 : i32
    %c0_i32_0 = arith.constant 0 : i32
    %c0_i32_1 = arith.constant 0 : i32
    %c0_i32_2 = arith.constant 0 : i32
    return %c0_i32, %c0_i32_0, %c0_i32_1 : i32, i32, i32
  }
  func.func @transform_20(%arg0: i32) -> (i32, i32, i32) {
    %c0_i32 = arith.constant 0 : i32
    %c0_i32_0 = arith.constant 0 : i32
    %c0_i32_1 = arith.constant 0 : i32
    %c0_i32_2 = arith.constant 0 : i32
    return %c0_i32, %c0_i32_0, %c0_i32_1 : i32, i32, i32
  }
  func.func @transform_21(%arg0: i32) -> (i32, i32, i32) {
    %c0_i32 = arith.constant 0 : i32
    %c0_i32_0 = arith.constant 0 : i32
    %c0_i32_1 = arith.constant 0 : i32
    %c0_i32_2 = arith.constant 0 : i32
    return %c0_i32, %c0_i32_0, %c0_i32_1 : i32, i32, i32
  }
  func.func @transform_22(%arg0: i32) -> (i32, i32, i32) {
    %c0_i32 = arith.constant 0 : i32
    %c0_i32_0 = arith.constant 0 : i32
    %c0_i32_1 = arith.constant 0 : i32
    %c0_i32_2 = arith.constant 0 : i32
    return %c0_i32, %c0_i32_0, %c0_i32_1 : i32, i32, i32
  }
  func.func @transform_23(%arg0: i32) -> (i32, i32, i32) {
    %c0_i32 = arith.constant 0 : i32
    %c0_i32_0 = arith.constant 0 : i32
    %c0_i32_1 = arith.constant 0 : i32
    %c0_i32_2 = arith.constant 0 : i32
    return %c0_i32, %c0_i32_0, %c0_i32_1 : i32, i32, i32
  }
  func.func @transform_24(%arg0: i32) -> (i32, i32, i32) {
    %c0_i32 = arith.constant 0 : i32
    %c0_i32_0 = arith.constant 0 : i32
    %c0_i32_1 = arith.constant 0 : i32
    %c0_i32_2 = arith.constant 0 : i32
    return %c0_i32, %c0_i32_0, %c0_i32_1 : i32, i32, i32
  }
  func.func @transform_25(%arg0: i32) -> (i32, i32, i32) {
    %c0_i32 = arith.constant 0 : i32
    %c0_i32_0 = arith.constant 0 : i32
    %c0_i32_1 = arith.constant 0 : i32
    %c0_i32_2 = arith.constant 0 : i32
    return %c0_i32, %c0_i32_0, %c0_i32_1 : i32, i32, i32
  }
  func.func @transform_26(%arg0: i32) -> (i32, i32, i32) {
    %c0_i32 = arith.constant 0 : i32
    %c0_i32_0 = arith.constant 0 : i32
    %c0_i32_1 = arith.constant 0 : i32
    %c0_i32_2 = arith.constant 0 : i32
    return %c0_i32, %c0_i32_0, %c0_i32_1 : i32, i32, i32
  }
  func.func @transform_27(%arg0: i32) -> (i32, i32, i32) {
    %c0_i32 = arith.constant 0 : i32
    %c0_i32_0 = arith.constant 0 : i32
    %c0_i32_1 = arith.constant 0 : i32
    %c0_i32_2 = arith.constant 0 : i32
    return %c0_i32, %c0_i32_0, %c0_i32_1 : i32, i32, i32
  }
  func.func @transform_28(%arg0: i32) -> (i32, i32, i32) {
    %c0_i32 = arith.constant 0 : i32
    %c0_i32_0 = arith.constant 0 : i32
    %c0_i32_1 = arith.constant 0 : i32
    %c0_i32_2 = arith.constant 0 : i32
    return %c0_i32, %c0_i32_0, %c0_i32_1 : i32, i32, i32
  }
  func.func @transform_29(%arg0: i32) -> (i32, i32, i32) {
    %c0_i32 = arith.constant 0 : i32
    %c0_i32_0 = arith.constant 0 : i32
    %c0_i32_1 = arith.constant 0 : i32
    %c0_i32_2 = arith.constant 0 : i32
    return %c0_i32, %c0_i32_0, %c0_i32_1 : i32, i32, i32
  }
  func.func @transform_30(%arg0: i32) -> (i32, i32, i32) {
    %c0_i32 = arith.constant 0 : i32
    %c0_i32_0 = arith.constant 0 : i32
    %c0_i32_1 = arith.constant 0 : i32
    %c0_i32_2 = arith.constant 0 : i32
    return %c0_i32, %c0_i32_0, %c0_i32_1 : i32, i32, i32
  }
  func.func @transform_31(%arg0: i32) -> (i32, i32) {
    %c0_i32 = arith.constant 0 : i32
    %c0_i32_0 = arith.constant 0 : i32
    %c0_i32_1 = arith.constant 0 : i32
    return %c0_i32, %c0_i32_0 : i32, i32
  }
  func.func @transform_32(%arg0: i32) -> (i32, i32) {
    %c0_i32 = arith.constant 0 : i32
    %c0_i32_0 = arith.constant 0 : i32
    %c0_i32_1 = arith.constant 0 : i32
    return %c0_i32, %c0_i32_0 : i32, i32
  }
  func.func @transform_33(%arg0: i32) -> (i32, i32, i32) {
    %c0_i32 = arith.constant 0 : i32
    %c0_i32_0 = arith.constant 0 : i32
    %c0_i32_1 = arith.constant 0 : i32
    return %arg0, %c0_i32, %c0_i32_0 : i32, i32, i32
  }
}

</mosaic_0001>

<llo_original>
// kernel: tpu_custom_call.1
$region0: #{tpu_custom_call.1}
  #allocation0 [shape = 'u32[]', space=smem, size = 0x4, offset = 0x4, fixed_abs, tag = 'smem constant byte address 0x4 - core index']
  #allocation1 [shape = 'u32[72,128]{1,0:T(1,128)}', space=vmem, size = 0x9000, scoped, tag = 'internal scratch']
  #allocation2 [shape = 'f32[384,128]{1,0:T(8,128)}', space=vmem, size = 0x30000, scoped, tag = 'scratch operand']
  %s0 = inlined_call_operand.smem [shape: u32[34], index: -1, kind: input, shape index: {}]
  %s1 = sld [smem:[%s0]]
  %s2 = scalar_lea.smem %s0, 1
  %s3 = sld [smem:[%s2]]
  %s4 = scalar_lea.smem %s0, 2
  %s5 = sld [smem:[%s4]]
  %s6 = scalar_lea.smem %s0, 3
  %s7 = sld [smem:[%s6]]
  %s8 = scalar_lea.smem %s0, 4
  %s9 = sld [smem:[%s8]]
  %s10 = scalar_lea.smem %s0, 5
  %s11 = sld [smem:[%s10]]
  %s12 = scalar_lea.smem %s0, 6
  %s13 = sld [smem:[%s12]]
  %s14 = scalar_lea.smem %s0, 7
  %s15 = sld [smem:[%s14]]
  %s16 = scalar_lea.smem %s0, 8
  %s17 = sld [smem:[%s16]]
  %s18 = scalar_lea.smem %s0, 9
  %s19 = sld [smem:[%s18]]
  %s20 = scalar_lea.smem %s0, 10
  %s21 = sld [smem:[%s20]]
  %s22 = scalar_lea.smem %s0, 11
  %s23 = sld [smem:[%s22]]
  %s24 = scalar_lea.smem %s0, 12
  %s25 = sld [smem:[%s24]]
  %s26 = scalar_lea.smem %s0, 13
  %s27 = sld [smem:[%s26]]
  %s28 = scalar_lea.smem %s0, 14
  %s29 = sld [smem:[%s28]]
  %s30 = scalar_lea.smem %s0, 15
  %s31 = sld [smem:[%s30]]
  %s32 = scalar_lea.smem %s0, 16
  %s33 = sld [smem:[%s32]]
  %s34 = scalar_lea.smem %s0, 17
  %s35 = sld [smem:[%s34]]
  %s36 = scalar_lea.smem %s0, 18
  %s37 = sld [smem:[%s36]]
  %s38 = scalar_lea.smem %s0, 19
  %s39 = sld [smem:[%s38]]
  %s40 = scalar_lea.smem %s0, 20
  %s41 = sld [smem:[%s40]]
  %s42 = scalar_lea.smem %s0, 21
  %s43 = sld [smem:[%s42]]
  %s44 = scalar_lea.smem %s0, 22
  %s45 = sld [smem:[%s44]]
  %s46 = scalar_lea.smem %s0, 23
  %s47 = sld [smem:[%s46]]
  %s48 = scalar_lea.smem %s0, 24
  %s49 = sld [smem:[%s48]]
  %s50 = scalar_lea.smem %s0, 25
  %s51 = sld [smem:[%s50]]
  %s52 = scalar_lea.smem %s0, 26
  %s53 = sld [smem:[%s52]]
  %s54 = scalar_lea.smem %s0, 27
  %s55 = sld [smem:[%s54]]
  %s56 = scalar_lea.smem %s0, 28
  %s57 = sld [smem:[%s56]]
  %s58 = scalar_lea.smem %s0, 29
  %s59 = sld [smem:[%s58]]
  %s60 = scalar_lea.smem %s0, 30
  %s61 = sld [smem:[%s60]]
  %s62 = scalar_lea.smem %s0, 31
  %s63 = sld [smem:[%s62]]
  %s64 = scalar_lea.smem %s0, 32
  %s65 = sld [smem:[%s64]]
  %s66 = scalar_lea.smem %s0, 33
  %s67 = sld [smem:[%s66]]
  %s68 = sld [smem:[#allocation0]]
  $region233: #{tpu_custom_call.1} parent=0
    _
  %s70 = ssub.s32 1, %s68
  %s71 = scalar_select 0, %s70, %s68
  $region1: #{tpu_custom_call.1} parent=0
    #allocation3 [shape = 'u8[3072]{0}', space=vmem, size = 0xc00, scoped, tag = 'input window, operand 3']
    #allocation4 [shape = 's32[2]{0}', space=sflag, size = 0x8, scoped, tag = 'scoped memory for tpu_custom_call.1']
    #allocation5 [shape = 's32[2]{0}', space=sflag, size = 0x8, scoped, tag = 'scoped memory for tpu_custom_call.1']
    #allocation6 [shape = 'u8[4096]{0}', space=vmem, size = 0x1000, scoped, tag = 'input window, operand 5, single buffered']
    #allocation7 [shape = 's32[1]{0}', space=sflag, size = 0x4, scoped, tag = 'scoped memory for tpu_custom_call.1']
    #allocation8 [shape = 'u8[512]{0}', space=vmem, size = 0x400, scoped, tag = 'input window, operand 7, single buffered']
    #allocation9 [shape = 'u8[512]{0}', space=vmem, size = 0x400, scoped, tag = 'input window, operand 8, single buffered']
    #allocation10 [shape = 's32[1]{0}', space=sflag, size = 0x4, scoped, tag = 'scoped memory for tpu_custom_call.1']
    #allocation11 [shape = 'u8[512]{0}', space=vmem, size = 0x400, scoped, tag = 'input window, operand 9, single buffered']
    #allocation12 [shape = 'u8[512]{0}', space=vmem, size = 0x400, scoped, tag = 'input window, operand 11, single buffered']
    #allocation13 [shape = 's32[1]{0}', space=sflag, size = 0x4, scoped, tag = 'scoped memory for tpu_custom_call.1']
    #allocation14 [shape = 'u8[512]{0}', space=vmem, size = 0x400, scoped, tag = 'input window, operand 12, single buffered']
    #allocation15 [shape = 'u8[512]{0}', space=vmem, size = 0x400, scoped, tag = 'input window, operand 13, single buffered']
    #allocation16 [shape = 's32[1]{0}', space=sflag, size = 0x4, scoped, tag = 'scoped memory for tpu_custom_call.1']
    #allocation17 [shape = 'u8[65536]{0}', space=vmem, size = 0x10000, scoped, tag = 'input window, operand 14, single buffered']
    #allocation18 [shape = 'u8[786432]{0}', space=vmem, size = 0xc0000, scoped, tag = 'input window, operand 16, single buffered']
    #allocation19 [shape = 's32[1]{0}', space=sflag, size = 0x4, scoped, tag = 'scoped memory for tpu_custom_call.1']
    #allocation20 [shape = 'u8[98304]{0}', space=vmem, size = 0x18000, scoped, tag = 'input window, operand 18, single buffered']
    #allocation21 [shape = 'u8[65536]{0}', space=vmem, size = 0x10000, scoped, tag = 'input window, operand 19, single buffered']
    #allocation22 [shape = 's32[1]{0}', space=sflag, size = 0x4, scoped, tag = 'scoped memory for tpu_custom_call.1']
    #allocation23 [shape = 'u8[65536]{0}', space=vmem, size = 0x10000, scoped, tag = 'input window, operand 21, single buffered']
    #allocation24 [shape = 'u8[32768]{0}', space=vmem, size = 0x8000, scoped, tag = 'input window, operand 22, single buffered']
    #allocation25 [shape = 's32[1]{0}', space=sflag, size = 0x4, scoped, tag = 'scoped memory for tpu_custom_call.1']
    #allocation26 [shape = 'u8[65536]{0}', space=vmem, size = 0x10000, scoped, tag = 'input window, operand 23, single buffered']
    #allocation27 [shape = 'u8[131072]{0}', space=vmem, size = 0x20000, scoped, tag = 'input window, operand 25, single buffered']
    #allocation28 [shape = 's32[1]{0}', space=sflag, size = 0x4, scoped, tag = 'scoped memory for tpu_custom_call.1']
    #allocation29 [shape = 'u8[131072]{0}', space=vmem, size = 0x20000, scoped, tag = 'input window, operand 27, single buffered']
    #allocation30 [shape = 'u8[32768]{0}', space=vmem, size = 0x8000, scoped, tag = 'output window, operand 0']
    %72 = vsyncpa [#allocation4], 0
    %s73 = scalar_lea.sflag [#allocation4], 1
    %74 = vsyncpa %s73, 0
    %75 = vsyncpa [#allocation7], 0
    %76 = vsyncpa [#allocation10], 0
    %77 = vsyncpa [#allocation13], 0
    %78 = vsyncpa [#allocation16], 0
    %79 = vsyncpa [#allocation19], 0
    %80 = vsyncpa [#allocation22], 0
    %81 = vsyncpa [#allocation25], 0
    %82 = vsyncpa [#allocation28], 0
    %83 = vsyncpa [#allocation5], 0
    %s84 = scalar_lea.sflag [#allocation5], 1
    %85 = vsyncpa %s84, 0
    loop: start=0, step=1, limit=4
    $region2: #{tpu_custom_call.1} parent=1 // loop_pre_header
      _
    $region3: #{tpu_custom_call.1} parent=1 // loop_header
      %s87 = sphi 0, %s91
      %p88 = scmp.ge.s32.totalorder %s87, 4
      %s97 = sphi 0, %s99
      %s100 = sphi 0, %s97
      %s101 = sphi 0, %s100
      %s117 = sphi 0, %s101
      %s123 = sphi 0, %s125
      %s126 = sphi 0, %s123
      %s127 = sphi 0, %s126
      %s143 = sphi 0, %s127
      %s149 = sphi 0, %s151
      %s152 = sphi 0, %s149
      %s153 = sphi 0, %s152
      %s169 = sphi 0, %s153
      %s175 = sphi 0, %s177
      %s178 = sphi 0, %s175
      %s179 = sphi 0, %s178
      %s195 = sphi 0, %s179
      %s199 = sphi 0, %s199
      %s201 = sphi 0, %s199
      %s202 = sphi 0, %s201
      %s216 = sphi 0, %s202
      %s220 = sphi 0, %s220
      %s222 = sphi 0, %s220
      %s223 = sphi 0, %s222
      %s237 = sphi 0, %s223
      %s241 = sphi 0, %s241
      %s243 = sphi 0, %s241
      %s244 = sphi 0, %s243
      %s258 = sphi 0, %s244
      %s262 = sphi 0, %s262
      %s264 = sphi 0, %s262
      %s265 = sphi 0, %s264
      %s279 = sphi 0, %s265
      %s283 = sphi 0, %s283
      %s285 = sphi 0, %s283
      %s286 = sphi 0, %s285
      %s300 = sphi 0, %s286
      %s304 = sphi 0, %s304
      %s306 = sphi 0, %s304
      %s307 = sphi 0, %s306
      %s321 = sphi 0, %s307
      %s325 = sphi 0, %s325
      %s327 = sphi 0, %s325
      %s328 = sphi 0, %s327
      %s342 = sphi 0, %s328
      %s346 = sphi 0, %s346
      %s348 = sphi 0, %s346
      %s349 = sphi 0, %s348
      %s363 = sphi 0, %s349
      %s367 = sphi 0, %s367
      %s369 = sphi 0, %s367
      %s370 = sphi 0, %s369
      %s384 = sphi 0, %s370
      %s388 = sphi 0, %s388
      %s390 = sphi 0, %s388
      %s391 = sphi 0, %s390
      %s405 = sphi 0, %s391
      %s409 = sphi 0, %s409
      %s411 = sphi 0, %s409
      %s412 = sphi 0, %s411
      %s426 = sphi 0, %s412
      %s430 = sphi 0, %s430
      %s432 = sphi 0, %s430
      %s433 = sphi 0, %s432
      %s447 = sphi 0, %s433
      %s451 = sphi 0, %s451
      %s453 = sphi 0, %s451
      %s454 = sphi 0, %s453
      %s468 = sphi 0, %s454
      %s472 = sphi 0, %s472
      %s474 = sphi 0, %s472
      %s475 = sphi 0, %s474
      %s489 = sphi 0, %s475
      %s493 = sphi 0, %s493
      %s495 = sphi 0, %s493
      %s496 = sphi 0, %s495
      %s510 = sphi 0, %s496
      %s514 = sphi 0, %s514
      %s516 = sphi 0, %s514
      %s517 = sphi 0, %s516
      %s531 = sphi 0, %s517
      %s535 = sphi 0, %s535
      %s537 = sphi 0, %s535
      %s538 = sphi 0, %s537
      %s552 = sphi 0, %s538
      %s556 = sphi 0, %s556
      %s558 = sphi 0, %s556
      %s559 = sphi 0, %s558
      %s573 = sphi 0, %s559
      %s577 = sphi 0, %s577
      %s579 = sphi 0, %s577
      %s580 = sphi 0, %s579
      %s594 = sphi 0, %s580
      %s598 = sphi 0, %s598
      %s600 = sphi 0, %s598
      %s601 = sphi 0, %s600
      %s615 = sphi 0, %s601
      %s619 = sphi 0, %s619
      %s621 = sphi 0, %s619
      %s622 = sphi 0, %s621
      %s636 = sphi 0, %s622
      %s640 = sphi 0, %s640
      %s642 = sphi 0, %s640
      %s643 = sphi 0, %s642
      %s657 = sphi 0, %s643
      %s661 = sphi 0, %s661
      %s663 = sphi 0, %s661
      %s664 = sphi 0, %s663
      %s678 = sphi 0, %s664
      %s682 = sphi 0, %s682
      %s684 = sphi 0, %s682
      %s685 = sphi 0, %s684
      %s699 = sphi 0, %s685
      %s703 = sphi 0, %s703
      %s705 = sphi 0, %s703
      %s706 = sphi 0, %s705
      %s720 = sphi 0, %s706
      %s724 = sphi 0, %s724
      %s726 = sphi 0, %s724
      %s727 = sphi 0, %s726
      %s741 = sphi 0, %s727
      %s745 = sphi 0, %s745
      %s747 = sphi 0, %s745
      %s748 = sphi 0, %s747
      %s762 = sphi 0, %s748
      %s766 = sphi 0, %s766
      %s768 = sphi 0, %s766
      %s769 = sphi 0, %s768
      %s783 = sphi 0, %s769
      %s787 = sphi 0, %s787
      %s789 = sphi 0, %s787
      %s790 = sphi 0, %s789
      %s804 = sphi 0, %s790
      %s810 = sphi 0, %s812
      %s813 = sphi 0, %s810
      %s814 = sphi 0, %s813
      %s830 = sphi 0, %s814
    $region4: #{tpu_custom_call.1} parent=1 // loop_header_branch
      %90 = sbr.rel (%p88) target = $region8
    $region5: #{tpu_custom_call.1} parent=1 // loop_body
      %s92 = ssub.s32 %s87, 1
      %s93 = ssub.s32 %s87, 2
      %s94 = sadd.s32 %s87, 1
      %s95 = ssub.s32 %s87, %s94
      %p96 = scmp.eq.s32.totalorder %s95, 0
      %s98 = sadd.s32 %s97, 1
      %s99 = scalar_select %p96, %s97, %s98
      %p102 = pneg %p96
      %p103 = scmp.eq.s32.totalorder %s87, 1
      %p104 = por %p102, %p103
      %p105 = scmp.ne.s32.totalorder %s97, %s100
      %p106 = scmp.eq.s32.totalorder %s87, 0
      %p107 = por %p105, %p106
      %p108 = scmp.ne.s32.totalorder %s97, %s100
      %p109 = scmp.eq.s32.totalorder %s92, 1
      %p110 = por %p108, %p109
      %p111 = scmp.ne.s32.totalorder %s100, %s101
      %p112 = scmp.eq.s32.totalorder %s92, 0
      %p113 = por %p111, %p112
      %p114 = scmp.ne.s32.totalorder %s100, %s101
      %p115 = scmp.eq.s32.totalorder %s93, 1
      %p116 = por %p114, %p115
      %p118 = scmp.ne.s32.totalorder %s101, %s117
      %p119 = scmp.eq.s32.totalorder %s93, 0
      %p120 = por %p118, %p119
      %s121 = ssub.s32 %s87, %s94
      %p122 = scmp.eq.s32.totalorder %s121, 0
      %s124 = sadd.s32 %s123, 1
      %s125 = scalar_select %p122, %s123, %s124
      %p128 = pneg %p122
      %p129 = scmp.eq.s32.totalorder %s87, 1
      %p130 = por %p128, %p129
      %p131 = scmp.ne.s32.totalorder %s123, %s126
      %p132 = scmp.eq.s32.totalorder %s87, 0
      %p133 = por %p131, %p132
      %p134 = scmp.ne.s32.totalorder %s123, %s126
      %p135 = scmp.eq.s32.totalorder %s92, 1
      %p136 = por %p134, %p135
      %p137 = scmp.ne.s32.totalorder %s126, %s127
      %p138 = scmp.eq.s32.totalorder %s92, 0
      %p139 = por %p137, %p138
      %p140 = scmp.ne.s32.totalorder %s126, %s127
      %p141 = scmp.eq.s32.totalorder %s93, 1
      %p142 = por %p140, %p141
      %p144 = scmp.ne.s32.totalorder %s127, %s143
      %p145 = scmp.eq.s32.totalorder %s93, 0
      %p146 = por %p144, %p145
      %s147 = ssub.s32 %s87, %s94
      %p148 = scmp.eq.s32.totalorder %s147, 0
      %s150 = sadd.s32 %s149, 1
      %s151 = scalar_select %p148, %s149, %s150
      %p154 = pneg %p148
      %p155 = scmp.eq.s32.totalorder %s87, 1
      %p156 = por %p154, %p155
      %p157 = scmp.ne.s32.totalorder %s149, %s152
      %p158 = scmp.eq.s32.totalorder %s87, 0
      %p159 = por %p157, %p158
      %p160 = scmp.ne.s32.totalorder %s149, %s152
      %p161 = scmp.eq.s32.totalorder %s92, 1
      %p162 = por %p160, %p161
      %p163 = scmp.ne.s32.totalorder %s152, %s153
      %p164 = scmp.eq.s32.totalorder %s92, 0
      %p165 = por %p163, %p164
      %p166 = scmp.ne.s32.totalorder %s152, %s153
      %p167 = scmp.eq.s32.totalorder %s93, 1
      %p168 = por %p166, %p167
      %p170 = scmp.ne.s32.totalorder %s153, %s169
      %p171 = scmp.eq.s32.totalorder %s93, 0
      %p172 = por %p170, %p171
      %s173 = ssub.s32 %s87, %s94
      %p174 = scmp.eq.s32.totalorder %s173, 0
      %s176 = sadd.s32 %s175, 1
      %s177 = scalar_select %p174, %s175, %s176
      %p180 = pneg %p174
      %p181 = scmp.eq.s32.totalorder %s87, 1
      %p182 = por %p180, %p181
      %p183 = scmp.ne.s32.totalorder %s175, %s178
      %p184 = scmp.eq.s32.totalorder %s87, 0
      %p185 = por %p183, %p184
      %p186 = scmp.ne.s32.totalorder %s175, %s178
      %p187 = scmp.eq.s32.totalorder %s92, 1
      %p188 = por %p186, %p187
      %p189 = scmp.ne.s32.totalorder %s178, %s179
      %p190 = scmp.eq.s32.totalorder %s92, 0
      %p191 = por %p189, %p190
      %p192 = scmp.ne.s32.totalorder %s178, %s179
      %p193 = scmp.eq.s32.totalorder %s93, 1
      %p194 = por %p192, %p193
      %p196 = scmp.ne.s32.totalorder %s179, %s195
      %p197 = scmp.eq.s32.totalorder %s93, 0
      %p198 = por %p196, %p197
      %s200 = sadd.s32 %s199, 1
      %p203 = scmp.eq.s32.totalorder %s87, 1
      %p204 = scmp.ne.s32.totalorder %s199, %s201
      %p205 = scmp.eq.s32.totalorder %s87, 0
      %p206 = por %p204, %p205
      %p207 = scmp.ne.s32.totalorder %s199, %s201
      %p208 = scmp.eq.s32.totalorder %s92, 1
      %p209 = por %p207, %p208
      %p210 = scmp.ne.s32.totalorder %s201, %s202
      %p211 = scmp.eq.s32.totalorder %s92, 0
      %p212 = por %p210, %p211
      %p213 = scmp.ne.s32.totalorder %s201, %s202
      %p214 = scmp.eq.s32.totalorder %s93, 1
      %p215 = por %p213, %p214
      %p217 = scmp.ne.s32.totalorder %s202, %s216
      %p218 = scmp.eq.s32.totalorder %s93, 0
      %p219 = por %p217, %p218
      %s221 = sadd.s32 %s220, 1
      %p224 = scmp.eq.s32.totalorder %s87, 1
      %p225 = scmp.ne.s32.totalorder %s220, %s222
      %p226 = scmp.eq.s32.totalorder %s87, 0
      %p227 = por %p225, %p226
      %p228 = scmp.ne.s32.totalorder %s220, %s222
      %p229 = scmp.eq.s32.totalorder %s92, 1
      %p230 = por %p228, %p229
      %p231 = scmp.ne.s32.totalorder %s222, %s223
      %p232 = scmp.eq.s32.totalorder %s92, 0
      %p233 = por %p231, %p232
      %p234 = scmp.ne.s32.totalorder %s222, %s223
      %p235 = scmp.eq.s32.totalorder %s93, 1
      %p236 = por %p234, %p235
      %p238 = scmp.ne.s32.totalorder %s223, %s237
      %p239 = scmp.eq.s32.totalorder %s93, 0
      %p240 = por %p238, %p239
      %s242 = sadd.s32 %s241, 1
      %p245 = scmp.eq.s32.totalorder %s87, 1
      %p246 = scmp.ne.s32.totalorder %s241, %s243
      %p247 = scmp.eq.s32.totalorder %s87, 0
      %p248 = por %p246, %p247
      %p249 = scmp.ne.s32.totalorder %s241, %s243
      %p250 = scmp.eq.s32.totalorder %s92, 1
      %p251 = por %p249, %p250
      %p252 = scmp.ne.s32.totalorder %s243, %s244
      %p253 = scmp.eq.s32.totalorder %s92, 0
      %p254 = por %p252, %p253
      %p255 = scmp.ne.s32.totalorder %s243, %s244
      %p256 = scmp.eq.s32.totalorder %s93, 1
      %p257 = por %p255, %p256
      %p259 = scmp.ne.s32.totalorder %s244, %s258
      %p260 = scmp.eq.s32.totalorder %s93, 0
      %p261 = por %p259, %p260
      %s263 = sadd.s32 %s262, 1
      %p266 = scmp.eq.s32.totalorder %s87, 1
      %p267 = scmp.ne.s32.totalorder %s262, %s264
      %p268 = scmp.eq.s32.totalorder %s87, 0
      %p269 = por %p267, %p268
      %p270 = scmp.ne.s32.totalorder %s262, %s264
      %p271 = scmp.eq.s32.totalorder %s92, 1
      %p272 = por %p270, %p271
      %p273 = scmp.ne.s32.totalorder %s264, %s265
      %p274 = scmp.eq.s32.totalorder %s92, 0
      %p275 = por %p273, %p274
      %p276 = scmp.ne.s32.totalorder %s264, %s265
      %p277 = scmp.eq.s32.totalorder %s93, 1
      %p278 = por %p276, %p277
      %p280 = scmp.ne.s32.totalorder %s265, %s279
      %p281 = scmp.eq.s32.totalorder %s93, 0
      %p282 = por %p280, %p281
      %s284 = sadd.s32 %s283, 1
      %p287 = scmp.eq.s32.totalorder %s87, 1
      %p288 = scmp.ne.s32.totalorder %s283, %s285
      %p289 = scmp.eq.s32.totalorder %s87, 0
      %p290 = por %p288, %p289
      %p291 = scmp.ne.s32.totalorder %s283, %s285
      %p292 = scmp.eq.s32.totalorder %s92, 1
      %p293 = por %p291, %p292
      %p294 = scmp.ne.s32.totalorder %s285, %s286
      %p295 = scmp.eq.s32.totalorder %s92, 0
      %p296 = por %p294, %p295
      %p297 = scmp.ne.s32.totalorder %s285, %s286
      %p298 = scmp.eq.s32.totalorder %s93, 1
      %p299 = por %p297, %p298
      %p301 = scmp.ne.s32.totalorder %s286, %s300
      %p302 = scmp.eq.s32.totalorder %s93, 0
      %p303 = por %p301, %p302
      %s305 = sadd.s32 %s304, 1
      %p308 = scmp.eq.s32.totalorder %s87, 1
      %p309 = scmp.ne.s32.totalorder %s304, %s306
      %p310 = scmp.eq.s32.totalorder %s87, 0
      %p311 = por %p309, %p310
      %p312 = scmp.ne.s32.totalorder %s304, %s306
      %p313 = scmp.eq.s32.totalorder %s92, 1
      %p314 = por %p312, %p313
      %p315 = scmp.ne.s32.totalorder %s306, %s307
      %p316 = scmp.eq.s32.totalorder %s92, 0
      %p317 = por %p315, %p316
      %p318 = scmp.ne.s32.totalorder %s306, %s307
      %p319 = scmp.eq.s32.totalorder %s93, 1
      %p320 = por %p318, %p319
      %p322 = scmp.ne.s32.totalorder %s307, %s321
      %p323 = scmp.eq.s32.totalorder %s93, 0
      %p324 = por %p322, %p323
      %s326 = sadd.s32 %s325, 1
      %p329 = scmp.eq.s32.totalorder %s87, 1
      %p330 = scmp.ne.s32.totalorder %s325, %s327
      %p331 = scmp.eq.s32.totalorder %s87, 0
      %p332 = por %p330, %p331
      %p333 = scmp.ne.s32.totalorder %s325, %s327
      %p334 = scmp.eq.s32.totalorder %s92, 1
      %p335 = por %p333, %p334
      %p336 = scmp.ne.s32.totalorder %s327, %s328
      %p337 = scmp.eq.s32.totalorder %s92, 0
      %p338 = por %p336, %p337
      %p339 = scmp.ne.s32.totalorder %s327, %s328
      %p340 = scmp.eq.s32.totalorder %s93, 1
      %p341 = por %p339, %p340
      %p343 = scmp.ne.s32.totalorder %s328, %s342
      %p344 = scmp.eq.s32.totalorder %s93, 0
      %p345 = por %p343, %p344
      %s347 = sadd.s32 %s346, 1
      %p350 = scmp.eq.s32.totalorder %s87, 1
      %p351 = scmp.ne.s32.totalorder %s346, %s348
      %p352 = scmp.eq.s32.totalorder %s87, 0
      %p353 = por %p351, %p352
      %p354 = scmp.ne.s32.totalorder %s346, %s348
      %p355 = scmp.eq.s32.totalorder %s92, 1
      %p356 = por %p354, %p355
      %p357 = scmp.ne.s32.totalorder %s348, %s349
      %p358 = scmp.eq.s32.totalorder %s92, 0
      %p359 = por %p357, %p358
      %p360 = scmp.ne.s32.totalorder %s348, %s349
      %p361 = scmp.eq.s32.totalorder %s93, 1
      %p362 = por %p360, %p361
      %p364 = scmp.ne.s32.totalorder %s349, %s363
      %p365 = scmp.eq.s32.totalorder %s93, 0
      %p366 = por %p364, %p365
      %s368 = sadd.s32 %s367, 1
      %p371 = scmp.eq.s32.totalorder %s87, 1
      %p372 = scmp.ne.s32.totalorder %s367, %s369
      %p373 = scmp.eq.s32.totalorder %s87, 0
      %p374 = por %p372, %p373
      %p375 = scmp.ne.s32.totalorder %s367, %s369
      %p376 = scmp.eq.s32.totalorder %s92, 1
      %p377 = por %p375, %p376
      %p378 = scmp.ne.s32.totalorder %s369, %s370
      %p379 = scmp.eq.s32.totalorder %s92, 0
      %p380 = por %p378, %p379
      %p381 = scmp.ne.s32.totalorder %s369, %s370
      %p382 = scmp.eq.s32.totalorder %s93, 1
      %p383 = por %p381, %p382
      %p385 = scmp.ne.s32.totalorder %s370, %s384
      %p386 = scmp.eq.s32.totalorder %s93, 0
      %p387 = por %p385, %p386
      %s389 = sadd.s32 %s388, 1
      %p392 = scmp.eq.s32.totalorder %s87, 1
      %p393 = scmp.ne.s32.totalorder %s388, %s390
      %p394 = scmp.eq.s32.totalorder %s87, 0
      %p395 = por %p393, %p394
      %p396 = scmp.ne.s32.totalorder %s388, %s390
      %p397 = scmp.eq.s32.totalorder %s92, 1
      %p398 = por %p396, %p397
      %p399 = scmp.ne.s32.totalorder %s390, %s391
      %p400 = scmp.eq.s32.totalorder %s92, 0
      %p401 = por %p399, %p400
      %p402 = scmp.ne.s32.totalorder %s390, %s391
      %p403 = scmp.eq.s32.totalorder %s93, 1
      %p404 = por %p402, %p403
      %p406 = scmp.ne.s32.totalorder %s391, %s405
      %p407 = scmp.eq.s32.totalorder %s93, 0
      %p408 = por %p406, %p407
      %s410 = sadd.s32 %s409, 1
      %p413 = scmp.eq.s32.totalorder %s87, 1
      %p414 = scmp.ne.s32.totalorder %s409, %s411
      %p415 = scmp.eq.s32.totalorder %s87, 0
      %p416 = por %p414, %p415
      %p417 = scmp.ne.s32.totalorder %s409, %s411
      %p418 = scmp.eq.s32.totalorder %s92, 1
      %p419 = por %p417, %p418
      %p420 = scmp.ne.s32.totalorder %s411, %s412
      %p421 = scmp.eq.s32.totalorder %s92, 0
      %p422 = por %p420, %p421
      %p423 = scmp.ne.s32.totalorder %s411, %s412
      %p424 = scmp.eq.s32.totalorder %s93, 1
      %p425 = por %p423, %p424
      %p427 = scmp.ne.s32.totalorder %s412, %s426
      %p428 = scmp.eq.s32.totalorder %s93, 0
      %p429 = por %p427, %p428
      %s431 = sadd.s32 %s430, 1
      %p434 = scmp.eq.s32.totalorder %s87, 1
      %p435 = scmp.ne.s32.totalorder %s430, %s432
      %p436 = scmp.eq.s32.totalorder %s87, 0
      %p437 = por %p435, %p436
      %p438 = scmp.ne.s32.totalorder %s430, %s432
      %p439 = scmp.eq.s32.totalorder %s92, 1
      %p440 = por %p438, %p439
      %p441 = scmp.ne.s32.totalorder %s432, %s433
      %p442 = scmp.eq.s32.totalorder %s92, 0
      %p443 = por %p441, %p442
      %p444 = scmp.ne.s32.totalorder %s432, %s433
      %p445 = scmp.eq.s32.totalorder %s93, 1
      %p446 = por %p444, %p445
      %p448 = scmp.ne.s32.totalorder %s433, %s447
      %p449 = scmp.eq.s32.totalorder %s93, 0
      %p450 = por %p448, %p449
      %s452 = sadd.s32 %s451, 1
      %p455 = scmp.eq.s32.totalorder %s87, 1
      %p456 = scmp.ne.s32.totalorder %s451, %s453
      %p457 = scmp.eq.s32.totalorder %s87, 0
      %p458 = por %p456, %p457
      %p459 = scmp.ne.s32.totalorder %s451, %s453
      %p460 = scmp.eq.s32.totalorder %s92, 1
      %p461 = por %p459, %p460
      %p462 = scmp.ne.s32.totalorder %s453, %s454
      %p463 = scmp.eq.s32.totalorder %s92, 0
      %p464 = por %p462, %p463
      %p465 = scmp.ne.s32.totalorder %s453, %s454
      %p466 = scmp.eq.s32.totalorder %s93, 1
      %p467 = por %p465, %p466
      %p469 = scmp.ne.s32.totalorder %s454, %s468
      %p470 = scmp.eq.s32.totalorder %s93, 0
      %p471 = por %p469, %p470
      %s473 = sadd.s32 %s472, 1
      %p476 = scmp.eq.s32.totalorder %s87, 1
      %p477 = scmp.ne.s32.totalorder %s472, %s474
      %p478 = scmp.eq.s32.totalorder %s87, 0
      %p479 = por %p477, %p478
      %p480 = scmp.ne.s32.totalorder %s472, %s474
      %p481 = scmp.eq.s32.totalorder %s92, 1
      %p482 = por %p480, %p481
      %p483 = scmp.ne.s32.totalorder %s474, %s475
      %p484 = scmp.eq.s32.totalorder %s92, 0
      %p485 = por %p483, %p484
      %p486 = scmp.ne.s32.totalorder %s474, %s475
      %p487 = scmp.eq.s32.totalorder %s93, 1
      %p488 = por %p486, %p487
      %p490 = scmp.ne.s32.totalorder %s475, %s489
      %p491 = scmp.eq.s32.totalorder %s93, 0
      %p492 = por %p490, %p491
      %s494 = sadd.s32 %s493, 1
      %p497 = scmp.eq.s32.totalorder %s87, 1
      %p498 = scmp.ne.s32.totalorder %s493, %s495
      %p499 = scmp.eq.s32.totalorder %s87, 0
      %p500 = por %p498, %p499
      %p501 = scmp.ne.s32.totalorder %s493, %s495
      %p502 = scmp.eq.s32.totalorder %s92, 1
      %p503 = por %p501, %p502
      %p504 = scmp.ne.s32.totalorder %s495, %s496
      %p505 = scmp.eq.s32.totalorder %s92, 0
      %p506 = por %p504, %p505
      %p507 = scmp.ne.s32.totalorder %s495, %s496
      %p508 = scmp.eq.s32.totalorder %s93, 1
      %p509 = por %p507, %p508
      %p511 = scmp.ne.s32.totalorder %s496, %s510
      %p512 = scmp.eq.s32.totalorder %s93, 0
      %p513 = por %p511, %p512
      %s515 = sadd.s32 %s514, 1
      %p518 = scmp.eq.s32.totalorder %s87, 1
      %p519 = scmp.ne.s32.totalorder %s514, %s516
      %p520 = scmp.eq.s32.totalorder %s87, 0
      %p521 = por %p519, %p520
      %p522 = scmp.ne.s32.totalorder %s514, %s516
      %p523 = scmp.eq.s32.totalorder %s92, 1
      %p524 = por %p522, %p523
      %p525 = scmp.ne.s32.totalorder %s516, %s517
      %p526 = scmp.eq.s32.totalorder %s92, 0
      %p527 = por %p525, %p526
      %p528 = scmp.ne.s32.totalorder %s516, %s517
      %p529 = scmp.eq.s32.totalorder %s93, 1
      %p530 = por %p528, %p529
      %p532 = scmp.ne.s32.totalorder %s517, %s531
      %p533 = scmp.eq.s32.totalorder %s93, 0
      %p534 = por %p532, %p533
      %s536 = sadd.s32 %s535, 1
      %p539 = scmp.eq.s32.totalorder %s87, 1
      %p540 = scmp.ne.s32.totalorder %s535, %s537
      %p541 = scmp.eq.s32.totalorder %s87, 0
      %p542 = por %p540, %p541
      %p543 = scmp.ne.s32.totalorder %s535, %s537
      %p544 = scmp.eq.s32.totalorder %s92, 1
      %p545 = por %p543, %p544
      %p546 = scmp.ne.s32.totalorder %s537, %s538
      %p547 = scmp.eq.s32.totalorder %s92, 0
      %p548 = por %p546, %p547
      %p549 = scmp.ne.s32.totalorder %s537, %s538
      %p550 = scmp.eq.s32.totalorder %s93, 1
      %p551 = por %p549, %p550
      %p553 = scmp.ne.s32.totalorder %s538, %s552
      %p554 = scmp.eq.s32.totalorder %s93, 0
      %p555 = por %p553, %p554
      %s557 = sadd.s32 %s556, 1
      %p560 = scmp.eq.s32.totalorder %s87, 1
      %p561 = scmp.ne.s32.totalorder %s556, %s558
      %p562 = scmp.eq.s32.totalorder %s87, 0
      %p563 = por %p561, %p562
      %p564 = scmp.ne.s32.totalorder %s556, %s558
      %p565 = scmp.eq.s32.totalorder %s92, 1
      %p566 = por %p564, %p565
      %p567 = scmp.ne.s32.totalorder %s558, %s559
      %p568 = scmp.eq.s32.totalorder %s92, 0
      %p569 = por %p567, %p568
      %p570 = scmp.ne.s32.totalorder %s558, %s559
      %p571 = scmp.eq.s32.totalorder %s93, 1
      %p572 = por %p570, %p571
      %p574 = scmp.ne.s32.totalorder %s559, %s573
      %p575 = scmp.eq.s32.totalorder %s93, 0
      %p576 = por %p574, %p575
      %s578 = sadd.s32 %s577, 1
      %p581 = scmp.eq.s32.totalorder %s87, 1
      %p582 = scmp.ne.s32.totalorder %s577, %s579
      %p583 = scmp.eq.s32.totalorder %s87, 0
      %p584 = por %p582, %p583
      %p585 = scmp.ne.s32.totalorder %s577, %s579
      %p586 = scmp.eq.s32.totalorder %s92, 1
      %p587 = por %p585, %p586
      %p588 = scmp.ne.s32.totalorder %s579, %s580
      %p589 = scmp.eq.s32.totalorder %s92, 0
      %p590 = por %p588, %p589
      %p591 = scmp.ne.s32.totalorder %s579, %s580
      %p592 = scmp.eq.s32.totalorder %s93, 1
      %p593 = por %p591, %p592
      %p595 = scmp.ne.s32.totalorder %s580, %s594
      %p596 = scmp.eq.s32.totalorder %s93, 0
      %p597 = por %p595, %p596
      %s599 = sadd.s32 %s598, 1
      %p602 = scmp.eq.s32.totalorder %s87, 1
      %p603 = scmp.ne.s32.totalorder %s598, %s600
      %p604 = scmp.eq.s32.totalorder %s87, 0
      %p605 = por %p603, %p604
      %p606 = scmp.ne.s32.totalorder %s598, %s600
      %p607 = scmp.eq.s32.totalorder %s92, 1
      %p608 = por %p606, %p607
      %p609 = scmp.ne.s32.totalorder %s600, %s601
      %p610 = scmp.eq.s32.totalorder %s92, 0
      %p611 = por %p609, %p610
      %p612 = scmp.ne.s32.totalorder %s600, %s601
      %p613 = scmp.eq.s32.totalorder %s93, 1
      %p614 = por %p612, %p613
      %p616 = scmp.ne.s32.totalorder %s601, %s615
      %p617 = scmp.eq.s32.totalorder %s93, 0
      %p618 = por %p616, %p617
      %s620 = sadd.s32 %s619, 1
      %p623 = scmp.eq.s32.totalorder %s87, 1
      %p624 = scmp.ne.s32.totalorder %s619, %s621
      %p625 = scmp.eq.s32.totalorder %s87, 0
      %p626 = por %p624, %p625
      %p627 = scmp.ne.s32.totalorder %s619, %s621
      %p628 = scmp.eq.s32.totalorder %s92, 1
      %p629 = por %p627, %p628
      %p630 = scmp.ne.s32.totalorder %s621, %s622
      %p631 = scmp.eq.s32.totalorder %s92, 0
      %p632 = por %p630, %p631
      %p633 = scmp.ne.s32.totalorder %s621, %s622
      %p634 = scmp.eq.s32.totalorder %s93, 1
      %p635 = por %p633, %p634
      %p637 = scmp.ne.s32.totalorder %s622, %s636
      %p638 = scmp.eq.s32.totalorder %s93, 0
      %p639 = por %p637, %p638
      %s641 = sadd.s32 %s640, 1
      %p644 = scmp.eq.s32.totalorder %s87, 1
      %p645 = scmp.ne.s32.totalorder %s640, %s642
      %p646 = scmp.eq.s32.totalorder %s87, 0
      %p647 = por %p645, %p646
      %p648 = scmp.ne.s32.totalorder %s640, %s642
      %p649 = scmp.eq.s32.totalorder %s92, 1
      %p650 = por %p648, %p649
      %p651 = scmp.ne.s32.totalorder %s642, %s643
      %p652 = scmp.eq.s32.totalorder %s92, 0
      %p653 = por %p651, %p652
      %p654 = scmp.ne.s32.totalorder %s642, %s643
      %p655 = scmp.eq.s32.totalorder %s93, 1
      %p656 = por %p654, %p655
      %p658 = scmp.ne.s32.totalorder %s643, %s657
      %p659 = scmp.eq.s32.totalorder %s93, 0
      %p660 = por %p658, %p659
      %s662 = sadd.s32 %s661, 1
      %p665 = scmp.eq.s32.totalorder %s87, 1
      %p666 = scmp.ne.s32.totalorder %s661, %s663
      %p667 = scmp.eq.s32.totalorder %s87, 0
      %p668 = por %p666, %p667
      %p669 = scmp.ne.s32.totalorder %s661, %s663
      %p670 = scmp.eq.s32.totalorder %s92, 1
      %p671 = por %p669, %p670
      %p672 = scmp.ne.s32.totalorder %s663, %s664
      %p673 = scmp.eq.s32.totalorder %s92, 0
      %p674 = por %p672, %p673
      %p675 = scmp.ne.s32.totalorder %s663, %s664
      %p676 = scmp.eq.s32.totalorder %s93, 1
      %p677 = por %p675, %p676
      %p679 = scmp.ne.s32.totalorder %s664, %s678
      %p680 = scmp.eq.s32.totalorder %s93, 0
      %p681 = por %p679, %p680
      %s683 = sadd.s32 %s682, 1
      %p686 = scmp.eq.s32.totalorder %s87, 1
      %p687 = scmp.ne.s32.totalorder %s682, %s684
      %p688 = scmp.eq.s32.totalorder %s87, 0
      %p689 = por %p687, %p688
      %p690 = scmp.ne.s32.totalorder %s682, %s684
      %p691 = scmp.eq.s32.totalorder %s92, 1
      %p692 = por %p690, %p691
      %p693 = scmp.ne.s32.totalorder %s684, %s685
      %p694 = scmp.eq.s32.totalorder %s92, 0
      %p695 = por %p693, %p694
      %p696 = scmp.ne.s32.totalorder %s684, %s685
      %p697 = scmp.eq.s32.totalorder %s93, 1
      %p698 = por %p696, %p697
      %p700 = scmp.ne.s32.totalorder %s685, %s699
      %p701 = scmp.eq.s32.totalorder %s93, 0
      %p702 = por %p700, %p701
      %s704 = sadd.s32 %s703, 1
      %p707 = scmp.eq.s32.totalorder %s87, 1
      %p708 = scmp.ne.s32.totalorder %s703, %s705
      %p709 = scmp.eq.s32.totalorder %s87, 0
      %p710 = por %p708, %p709
      %p711 = scmp.ne.s32.totalorder %s703, %s705
      %p712 = scmp.eq.s32.totalorder %s92, 1
      %p713 = por %p711, %p712
      %p714 = scmp.ne.s32.totalorder %s705, %s706
      %p715 = scmp.eq.s32.totalorder %s92, 0
      %p716 = por %p714, %p715
      %p717 = scmp.ne.s32.totalorder %s705, %s706
      %p718 = scmp.eq.s32.totalorder %s93, 1
      %p719 = por %p717, %p718
      %p721 = scmp.ne.s32.totalorder %s706, %s720
      %p722 = scmp.eq.s32.totalorder %s93, 0
      %p723 = por %p721, %p722
      %s725 = sadd.s32 %s724, 1
      %p728 = scmp.eq.s32.totalorder %s87, 1
      %p729 = scmp.ne.s32.totalorder %s724, %s726
      %p730 = scmp.eq.s32.totalorder %s87, 0
      %p731 = por %p729, %p730
      %p732 = scmp.ne.s32.totalorder %s724, %s726
      %p733 = scmp.eq.s32.totalorder %s92, 1
      %p734 = por %p732, %p733
      %p735 = scmp.ne.s32.totalorder %s726, %s727
      %p736 = scmp.eq.s32.totalorder %s92, 0
      %p737 = por %p735, %p736
      %p738 = scmp.ne.s32.totalorder %s726, %s727
      %p739 = scmp.eq.s32.totalorder %s93, 1
      %p740 = por %p738, %p739
      %p742 = scmp.ne.s32.totalorder %s727, %s741
      %p743 = scmp.eq.s32.totalorder %s93, 0
      %p744 = por %p742, %p743
      %s746 = sadd.s32 %s745, 1
      %p749 = scmp.eq.s32.totalorder %s87, 1
      %p750 = scmp.ne.s32.totalorder %s745, %s747
      %p751 = scmp.eq.s32.totalorder %s87, 0
      %p752 = por %p750, %p751
      %p753 = scmp.ne.s32.totalorder %s745, %s747
      %p754 = scmp.eq.s32.totalorder %s92, 1
      %p755 = por %p753, %p754
      %p756 = scmp.ne.s32.totalorder %s747, %s748
      %p757 = scmp.eq.s32.totalorder %s92, 0
      %p758 = por %p756, %p757
      %p759 = scmp.ne.s32.totalorder %s747, %s748
      %p760 = scmp.eq.s32.totalorder %s93, 1
      %p761 = por %p759, %p760
      %p763 = scmp.ne.s32.totalorder %s748, %s762
      %p764 = scmp.eq.s32.totalorder %s93, 0
      %p765 = por %p763, %p764
      %s767 = sadd.s32 %s766, 1
      %p770 = scmp.eq.s32.totalorder %s87, 1
      %p771 = scmp.ne.s32.totalorder %s766, %s768
      %p772 = scmp.eq.s32.totalorder %s87, 0
      %p773 = por %p771, %p772
      %p774 = scmp.ne.s32.totalorder %s766, %s768
      %p775 = scmp.eq.s32.totalorder %s92, 1
      %p776 = por %p774, %p775
      %p777 = scmp.ne.s32.totalorder %s768, %s769
      %p778 = scmp.eq.s32.totalorder %s92, 0
      %p779 = por %p777, %p778
      %p780 = scmp.ne.s32.totalorder %s768, %s769
      %p781 = scmp.eq.s32.totalorder %s93, 1
      %p782 = por %p780, %p781
      %p784 = scmp.ne.s32.totalorder %s769, %s783
      %p785 = scmp.eq.s32.totalorder %s93, 0
      %p786 = por %p784, %p785
      %s788 = sadd.s32 %s787, 1
      %p791 = scmp.eq.s32.totalorder %s87, 1
      %p792 = scmp.ne.s32.totalorder %s787, %s789
      %p793 = scmp.eq.s32.totalorder %s87, 0
      %p794 = por %p792, %p793
      %p795 = scmp.ne.s32.totalorder %s787, %s789
      %p796 = scmp.eq.s32.totalorder %s92, 1
      %p797 = por %p795, %p796
      %p798 = scmp.ne.s32.totalorder %s789, %s790
      %p799 = scmp.eq.s32.totalorder %s92, 0
      %p800 = por %p798, %p799
      %p801 = scmp.ne.s32.totalorder %s789, %s790
      %p802 = scmp.eq.s32.totalorder %s93, 1
      %p803 = por %p801, %p802
      %p805 = scmp.ne.s32.totalorder %s790, %s804
      %p806 = scmp.eq.s32.totalorder %s93, 0
      %p807 = por %p805, %p806
      %s808 = ssub.s32 %s87, %s94
      %p809 = scmp.eq.s32.totalorder %s808, 0
      %s811 = sadd.s32 %s810, 1
      %s812 = scalar_select %p809, %s810, %s811
      %p815 = pneg %p809
      %p816 = scmp.eq.s32.totalorder %s87, 1
      %p817 = por %p815, %p816
      %p818 = scmp.ne.s32.totalorder %s810, %s813
      %p819 = scmp.eq.s32.totalorder %s87, 0
      %p820 = por %p818, %p819
      %p821 = scmp.ne.s32.totalorder %s810, %s813
      %p822 = scmp.eq.s32.totalorder %s92, 1
      %p823 = por %p821, %p822
      %p824 = scmp.ne.s32.totalorder %s813, %s814
      %p825 = scmp.eq.s32.totalorder %s92, 0
      %p826 = por %p824, %p825
      %p827 = scmp.ne.s32.totalorder %s813, %s814
      %p828 = scmp.eq.s32.totalorder %s93, 1
      %p829 = por %p827, %p828
      %p831 = scmp.ne.s32.totalorder %s814, %s830
      %p832 = scmp.eq.s32.totalorder %s93, 0
      %p833 = por %p831, %p832
      %p834 = scmp.le.s32.totalorder 1, %s87
      %p835 = scmp.lt.s32.totalorder %s87, 3
      %p836 = pnand %p834, %p835
      %p837 = pneg %p836
      // Predicated region
      $region9: #{tpu_custom_call.1} parent=5 // pred_check
        _
      $region10: #{tpu_custom_call.1} parent=5 // pred_check_branch
        %839 = sbr.rel (%p836) target = $region12
      $region11: #{tpu_custom_call.1} parent=5 // pred_region
        %s840 = ssub.s32 %s87, 1
        // Predicated region
        $region13: #{tpu_custom_call.1} parent=11 // pred_check
          %p841 = pneg %p212
        $region14: #{tpu_custom_call.1} parent=11 // pred_check_branch
          %843 = sbr.rel (%p841) target = $region16
        $region15: #{tpu_custom_call.1} parent=11 // pred_region
          _
        $region16: #{tpu_custom_call.1} parent=11 // pred_fallthru
          _
        // Predicated region
        $region17: #{tpu_custom_call.1} parent=11 // pred_check
          %p844 = pneg %p233
        $region18: #{tpu_custom_call.1} parent=11 // pred_check_branch
          %846 = sbr.rel (%p844) target = $region20
        $region19: #{tpu_custom_call.1} parent=11 // pred_region
          %848 = vsyncadd [#allocation7], 0
          %s849 = sshll.u32 %s11, 4
          %s850 = int_to_ptr.hbm [resolvable:$true] %s849
          %s851 = sshll.u32 [#allocation6], 4
          %s852 = int_to_ptr.vmem [resolvable:$true] %s851
          %857 = dma.hbm_to_vmem [thread:$0]  %s850, 128, %s852, [#allocation7], 16, 16, 1
        $region20: #{tpu_custom_call.1} parent=11 // pred_fallthru
          _
        // Predicated region
        $region21: #{tpu_custom_call.1} parent=11 // pred_check
          %p858 = pneg %p254
        $region22: #{tpu_custom_call.1} parent=11 // pred_check_branch
          %860 = sbr.rel (%p858) target = $region24
        $region23: #{tpu_custom_call.1} parent=11 // pred_region
          _
        $region24: #{tpu_custom_call.1} parent=11 // pred_fallthru
          _
        // Predicated region
        $region25: #{tpu_custom_call.1} parent=11 // pred_check
          %p861 = pneg %p275
        $region26: #{tpu_custom_call.1} parent=11 // pred_check_branch
          %863 = sbr.rel (%p861) target = $region28
        $region27: #{tpu_custom_call.1} parent=11 // pred_region
          %865 = vsyncadd [#allocation7], 0
          %s867 = sshll.u32 %s15, 4
          %s868 = int_to_ptr.hbm [resolvable:$true] %s867
          %s869 = sshll.u32 [#allocation8], 4
          %s870 = int_to_ptr.vmem [resolvable:$true] %s869
          %872 = dma.hbm_to_vmem [thread:$0]  %s868, 16, %s870, [#allocation7]
        $region28: #{tpu_custom_call.1} parent=11 // pred_fallthru
          _
        // Predicated region
        $region29: #{tpu_custom_call.1} parent=11 // pred_check
          %p873 = pneg %p296
        $region30: #{tpu_custom_call.1} parent=11 // pred_check_branch
          %875 = sbr.rel (%p873) target = $region32
        $region31: #{tpu_custom_call.1} parent=11 // pred_region
          %877 = vsyncadd [#allocation10], 0
          %s879 = sshll.u32 %s17, 4
          %s880 = int_to_ptr.hbm [resolvable:$true] %s879
          %s881 = sshll.u32 [#allocation9], 4
          %s882 = int_to_ptr.vmem [resolvable:$true] %s881
          %884 = dma.hbm_to_vmem [thread:$0]  %s880, 16, %s882, [#allocation10]
        $region32: #{tpu_custom_call.1} parent=11 // pred_fallthru
          _
        // Predicated region
        $region33: #{tpu_custom_call.1} parent=11 // pred_check
          %p885 = pneg %p317
        $region34: #{tpu_custom_call.1} parent=11 // pred_check_branch
          %887 = sbr.rel (%p885) target = $region36
        $region35: #{tpu_custom_call.1} parent=11 // pred_region
          %889 = vsyncadd [#allocation10], 0
          %s891 = sshll.u32 %s19, 4
          %s892 = int_to_ptr.hbm [resolvable:$true] %s891
          %s893 = sshll.u32 [#allocation11], 4
          %s894 = int_to_ptr.vmem [resolvable:$true] %s893
          %896 = dma.hbm_to_vmem [thread:$0]  %s892, 16, %s894, [#allocation10]
        $region36: #{tpu_custom_call.1} parent=11 // pred_fallthru
          _
        // Predicated region
        $region37: #{tpu_custom_call.1} parent=11 // pred_check
          %p897 = pneg %p338
        $region38: #{tpu_custom_call.1} parent=11 // pred_check_branch
          %899 = sbr.rel (%p897) target = $region40
        $region39: #{tpu_custom_call.1} parent=11 // pred_region
          _
        $region40: #{tpu_custom_call.1} parent=11 // pred_fallthru
          _
        // Predicated region
        $region41: #{tpu_custom_call.1} parent=11 // pred_check
          %p900 = pneg %p359
        $region42: #{tpu_custom_call.1} parent=11 // pred_check_branch
          %902 = sbr.rel (%p900) target = $region44
        $region43: #{tpu_custom_call.1} parent=11 // pred_region
          %904 = vsyncadd [#allocation13], 0
          %s906 = sshll.u32 %s23, 4
          %s907 = int_to_ptr.hbm [resolvable:$true] %s906
          %s908 = sshll.u32 [#allocation12], 4
          %s909 = int_to_ptr.vmem [resolvable:$true] %s908
          %911 = dma.hbm_to_vmem [thread:$0]  %s907, 16, %s909, [#allocation13]
        $region44: #{tpu_custom_call.1} parent=11 // pred_fallthru
          _
        // Predicated region
        $region45: #{tpu_custom_call.1} parent=11 // pred_check
          %p912 = pneg %p380
        $region46: #{tpu_custom_call.1} parent=11 // pred_check_branch
          %914 = sbr.rel (%p912) target = $region48
        $region47: #{tpu_custom_call.1} parent=11 // pred_region
          %916 = vsyncadd [#allocation13], 0
          %s918 = sshll.u32 %s25, 4
          %s919 = int_to_ptr.hbm [resolvable:$true] %s918
          %s920 = sshll.u32 [#allocation14], 4
          %s921 = int_to_ptr.vmem [resolvable:$true] %s920
          %923 = dma.hbm_to_vmem [thread:$0]  %s919, 16, %s921, [#allocation13]
        $region48: #{tpu_custom_call.1} parent=11 // pred_fallthru
          _
        // Predicated region
        $region49: #{tpu_custom_call.1} parent=11 // pred_check
          %p924 = pneg %p401
        $region50: #{tpu_custom_call.1} parent=11 // pred_check_branch
          %926 = sbr.rel (%p924) target = $region52
        $region51: #{tpu_custom_call.1} parent=11 // pred_region
          %928 = vsyncadd [#allocation16], 0
          %s930 = sshll.u32 %s27, 4
          %s931 = int_to_ptr.hbm [resolvable:$true] %s930
          %s932 = sshll.u32 [#allocation15], 4
          %s933 = int_to_ptr.vmem [resolvable:$true] %s932
          %935 = dma.hbm_to_vmem [thread:$0]  %s931, 16, %s933, [#allocation16]
        $region52: #{tpu_custom_call.1} parent=11 // pred_fallthru
          _
        // Predicated region
        $region53: #{tpu_custom_call.1} parent=11 // pred_check
          %p936 = pneg %p422
        $region54: #{tpu_custom_call.1} parent=11 // pred_check_branch
          %938 = sbr.rel (%p936) target = $region56
        $region55: #{tpu_custom_call.1} parent=11 // pred_region
          %940 = vsyncadd [#allocation16], 0
          %s941 = sshll.u32 %s29, 4
          %s942 = int_to_ptr.hbm [resolvable:$true] %s941
          %s943 = sshll.u32 [#allocation17], 4
          %s944 = int_to_ptr.vmem [resolvable:$true] %s943
          %949 = dma.hbm_to_vmem [thread:$0]  %s942, 2048, %s944, [#allocation16], 128, 128, 8
        $region56: #{tpu_custom_call.1} parent=11 // pred_fallthru
          _
        // Predicated region
        $region57: #{tpu_custom_call.1} parent=11 // pred_check
          %p950 = pneg %p443
        $region58: #{tpu_custom_call.1} parent=11 // pred_check_branch
          %952 = sbr.rel (%p950) target = $region60
        $region59: #{tpu_custom_call.1} parent=11 // pred_region
          _
        $region60: #{tpu_custom_call.1} parent=11 // pred_fallthru
          _
        // Predicated region
        $region61: #{tpu_custom_call.1} parent=11 // pred_check
          %p953 = pneg %p464
        $region62: #{tpu_custom_call.1} parent=11 // pred_check_branch
          %955 = sbr.rel (%p953) target = $region64
        $region63: #{tpu_custom_call.1} parent=11 // pred_region
          %957 = vsyncadd [#allocation19], 0
          %s958 = sshll.u32 %s33, 4
          %s959 = int_to_ptr.hbm [resolvable:$true] %s958
          %s960 = sshll.u32 [#allocation18], 4
          %s961 = int_to_ptr.vmem [resolvable:$true] %s960
          %966 = dma.hbm_to_vmem [thread:$0]  %s959, 24576, %s961, [#allocation19], 512, 512, 32
        $region64: #{tpu_custom_call.1} parent=11 // pred_fallthru
          _
        // Predicated region
        $region65: #{tpu_custom_call.1} parent=11 // pred_check
          %p967 = pneg %p485
        $region66: #{tpu_custom_call.1} parent=11 // pred_check_branch
          %969 = sbr.rel (%p967) target = $region68
        $region67: #{tpu_custom_call.1} parent=11 // pred_region
          _
        $region68: #{tpu_custom_call.1} parent=11 // pred_fallthru
          _
        // Predicated region
        $region69: #{tpu_custom_call.1} parent=11 // pred_check
          %p970 = pneg %p506
        $region70: #{tpu_custom_call.1} parent=11 // pred_check_branch
          %972 = sbr.rel (%p970) target = $region72
        $region71: #{tpu_custom_call.1} parent=11 // pred_region
          %974 = vsyncadd [#allocation19], 0
          %s975 = sshll.u32 %s37, 4
          %s976 = int_to_ptr.hbm [resolvable:$true] %s975
          %s977 = sshll.u32 [#allocation20], 4
          %s978 = int_to_ptr.vmem [resolvable:$true] %s977
          %983 = dma.hbm_to_vmem [thread:$0]  %s976, 3072, %s978, [#allocation19], 384, 384, 24
        $region72: #{tpu_custom_call.1} parent=11 // pred_fallthru
          _
        // Predicated region
        $region73: #{tpu_custom_call.1} parent=11 // pred_check
          %p984 = pneg %p527
        $region74: #{tpu_custom_call.1} parent=11 // pred_check_branch
          %986 = sbr.rel (%p984) target = $region76
        $region75: #{tpu_custom_call.1} parent=11 // pred_region
          %988 = vsyncadd [#allocation22], 0
          %s989 = sshll.u32 %s39, 4
          %s990 = int_to_ptr.hbm [resolvable:$true] %s989
          %s991 = sshll.u32 [#allocation21], 4
          %s992 = int_to_ptr.vmem [resolvable:$true] %s991
          %997 = dma.hbm_to_vmem [thread:$0]  %s990, 2048, %s992, [#allocation22], 64, 64, 4
        $region76: #{tpu_custom_call.1} parent=11 // pred_fallthru
          _
        // Predicated region
        $region77: #{tpu_custom_call.1} parent=11 // pred_check
          %p998 = pneg %p548
        $region78: #{tpu_custom_call.1} parent=11 // pred_check_branch
          %1000 = sbr.rel (%p998) target = $region80
        $region79: #{tpu_custom_call.1} parent=11 // pred_region
          _
        $region80: #{tpu_custom_call.1} parent=11 // pred_fallthru
          _
        // Predicated region
        $region81: #{tpu_custom_call.1} parent=11 // pred_check
          %p1001 = pneg %p569
        $region82: #{tpu_custom_call.1} parent=11 // pred_check_branch
          %1003 = sbr.rel (%p1001) target = $region84
        $region83: #{tpu_custom_call.1} parent=11 // pred_region
          %1005 = vsyncadd [#allocation22], 0
          %s1006 = sshll.u32 %s43, 4
          %s1007 = int_to_ptr.hbm [resolvable:$true] %s1006
          %s1008 = sshll.u32 [#allocation23], 4
          %s1009 = int_to_ptr.vmem [resolvable:$true] %s1008
          %1014 = dma.hbm_to_vmem [thread:$0]  %s1007, 2048, %s1009, [#allocation22], 64, 64, 4
        $region84: #{tpu_custom_call.1} parent=11 // pred_fallthru
          _
        // Predicated region
        $region85: #{tpu_custom_call.1} parent=11 // pred_check
          %p1015 = pneg %p590
        $region86: #{tpu_custom_call.1} parent=11 // pred_check_branch
          %1017 = sbr.rel (%p1015) target = $region88
        $region87: #{tpu_custom_call.1} parent=11 // pred_region
          %1019 = vsyncadd [#allocation25], 0
          %s1020 = sshll.u32 %s45, 4
          %s1021 = int_to_ptr.hbm [resolvable:$true] %s1020
          %s1022 = sshll.u32 [#allocation24], 4
          %s1023 = int_to_ptr.vmem [resolvable:$true] %s1022
          %1028 = dma.hbm_to_vmem [thread:$0]  %s1021, 1024, %s1023, [#allocation25], 128, 128, 8
        $region88: #{tpu_custom_call.1} parent=11 // pred_fallthru
          _
        // Predicated region
        $region89: #{tpu_custom_call.1} parent=11 // pred_check
          %p1029 = pneg %p611
        $region90: #{tpu_custom_call.1} parent=11 // pred_check_branch
          %1031 = sbr.rel (%p1029) target = $region92
        $region91: #{tpu_custom_call.1} parent=11 // pred_region
          %1033 = vsyncadd [#allocation25], 0
          %s1034 = sshll.u32 %s47, 4
          %s1035 = int_to_ptr.hbm [resolvable:$true] %s1034
          %s1036 = sshll.u32 [#allocation26], 4
          %s1037 = int_to_ptr.vmem [resolvable:$true] %s1036
          %1042 = dma.hbm_to_vmem [thread:$0]  %s1035, 2048, %s1037, [#allocation25], 64, 64, 4
        $region92: #{tpu_custom_call.1} parent=11 // pred_fallthru
          _
        // Predicated region
        $region93: #{tpu_custom_call.1} parent=11 // pred_check
          %p1043 = pneg %p632
        $region94: #{tpu_custom_call.1} parent=11 // pred_check_branch
          %1045 = sbr.rel (%p1043) target = $region96
        $region95: #{tpu_custom_call.1} parent=11 // pred_region
          _
        $region96: #{tpu_custom_call.1} parent=11 // pred_fallthru
          _
        // Predicated region
        $region97: #{tpu_custom_call.1} parent=11 // pred_check
          %p1046 = pneg %p653
        $region98: #{tpu_custom_call.1} parent=11 // pred_check_branch
          %1048 = sbr.rel (%p1046) target = $region100
        $region99: #{tpu_custom_call.1} parent=11 // pred_region
          %1050 = vsyncadd [#allocation28], 0
          %s1051 = sshll.u32 %s51, 4
          %s1052 = int_to_ptr.hbm [resolvable:$true] %s1051
          %s1053 = sshll.u32 [#allocation27], 4
          %s1054 = int_to_ptr.vmem [resolvable:$true] %s1053
          %1059 = dma.hbm_to_vmem [thread:$0]  %s1052, 4096, %s1054, [#allocation28], 128, 128, 8
        $region100: #{tpu_custom_call.1} parent=11 // pred_fallthru
          _
        // Predicated region
        $region101: #{tpu_custom_call.1} parent=11 // pred_check
          %p1060 = pneg %p674
        $region102: #{tpu_custom_call.1} parent=11 // pred_check_branch
          %1062 = sbr.rel (%p1060) target = $region104
        $region103: #{tpu_custom_call.1} parent=11 // pred_region
          _
        $region104: #{tpu_custom_call.1} parent=11 // pred_fallthru
          _
        // Predicated region
        $region105: #{tpu_custom_call.1} parent=11 // pred_check
          %p1063 = pneg %p695
        $region106: #{tpu_custom_call.1} parent=11 // pred_check_branch
          %1065 = sbr.rel (%p1063) target = $region108
        $region107: #{tpu_custom_call.1} parent=11 // pred_region
          %1067 = vsyncadd [#allocation28], 0
          %s1068 = sshll.u32 %s55, 4
          %s1069 = int_to_ptr.hbm [resolvable:$true] %s1068
          %s1070 = sshll.u32 [#allocation29], 4
          %s1071 = int_to_ptr.vmem [resolvable:$true] %s1070
          %1076 = dma.hbm_to_vmem [thread:$0]  %s1069, 4096, %s1071, [#allocation28], 64, 64, 4
        $region108: #{tpu_custom_call.1} parent=11 // pred_fallthru
          _
        // Predicated region
        $region109: #{tpu_custom_call.1} parent=11 // pred_check
          %p1077 = pneg %p716
        $region110: #{tpu_custom_call.1} parent=11 // pred_check_branch
          %1079 = sbr.rel (%p1077) target = $region112
        $region111: #{tpu_custom_call.1} parent=11 // pred_region
          _
        $region112: #{tpu_custom_call.1} parent=11 // pred_fallthru
          _
        // Predicated region
        $region113: #{tpu_custom_call.1} parent=11 // pred_check
          %p1080 = pneg %p737
        $region114: #{tpu_custom_call.1} parent=11 // pred_check_branch
          %1082 = sbr.rel (%p1080) target = $region116
        $region115: #{tpu_custom_call.1} parent=11 // pred_region
          _
        $region116: #{tpu_custom_call.1} parent=11 // pred_fallthru
          _
        // Predicated region
        $region117: #{tpu_custom_call.1} parent=11 // pred_check
          %p1083 = pneg %p758
        $region118: #{tpu_custom_call.1} parent=11 // pred_check_branch
          %1085 = sbr.rel (%p1083) target = $region120
        $region119: #{tpu_custom_call.1} parent=11 // pred_region
          _
        $region120: #{tpu_custom_call.1} parent=11 // pred_fallthru
          _
        // Predicated region
        $region121: #{tpu_custom_call.1} parent=11 // pred_check
          %p1086 = pneg %p779
        $region122: #{tpu_custom_call.1} parent=11 // pred_check_branch
          %1088 = sbr.rel (%p1086) target = $region124
        $region123: #{tpu_custom_call.1} parent=11 // pred_region
          _
        $region124: #{tpu_custom_call.1} parent=11 // pred_fallthru
          _
        // Predicated region
        $region125: #{tpu_custom_call.1} parent=11 // pred_check
          %p1089 = pneg %p800
        $region126: #{tpu_custom_call.1} parent=11 // pred_check_branch
          %1091 = sbr.rel (%p1089) target = $region128
        $region127: #{tpu_custom_call.1} parent=11 // pred_region
          _
        $region128: #{tpu_custom_call.1} parent=11 // pred_fallthru
          _
      $region12: #{tpu_custom_call.1} parent=5 // pred_fallthru
        _
      %p1092 = scmp.lt.s32.totalorder %s87, 2
      // Predicated region
      $region129: #{tpu_custom_call.1} parent=5 // pred_check
        %p1093 = pneg %p1092
      $region130: #{tpu_custom_call.1} parent=5 // pred_check_branch
        %1095 = sbr.rel (%p1093) target = $region132
      $region131: #{tpu_custom_call.1} parent=5 // pred_region
        // Predicated region
        $region133: #{tpu_custom_call.1} parent=131 // pred_check
          %p1096 = pneg %p107
        $region134: #{tpu_custom_call.1} parent=131 // pred_check_branch
          %1098 = sbr.rel (%p1096) target = $region136
        $region135: #{tpu_custom_call.1} parent=131 // pred_region
          %p1099 = scmp.lt.s32.totalorder %s87, 1
          %s1100 = scalar_select %p1099, %s87, 1
          %s1101 = smul.addr %s1100, 8
          %s1102 = smul.addr %s1101, 8
          %s1103 = scalar_lea.vmem %s1, %s1102
        $region136: #{tpu_custom_call.1} parent=131 // pred_fallthru
          _
        // Predicated region
        $region137: #{tpu_custom_call.1} parent=131 // pred_check
          %p1104 = pneg %p133
        $region138: #{tpu_custom_call.1} parent=131 // pred_check_branch
          %1106 = sbr.rel (%p1104) target = $region140
        $region139: #{tpu_custom_call.1} parent=131 // pred_region
          %p1107 = scmp.lt.s32.totalorder %s87, 1
          %s1108 = scalar_select %p1107, %s87, 1
          %s1109 = smul.addr %s1108, 32
          %s1110 = smul.addr %s1109, 8
          %s1111 = scalar_lea.vmem %s3, %s1110
        $region140: #{tpu_custom_call.1} parent=131 // pred_fallthru
          _
        // Predicated region
        $region141: #{tpu_custom_call.1} parent=131 // pred_check
          %p1112 = pneg %p159
        $region142: #{tpu_custom_call.1} parent=131 // pred_check_branch
          %1114 = sbr.rel (%p1112) target = $region144
        $region143: #{tpu_custom_call.1} parent=131 // pred_region
          %p1115 = scmp.lt.s32.totalorder %s87, 1
          %s1116 = scalar_select %p1115, %s87, 1
          %s1117 = smul.addr %s1116, 4
          %s1118 = smul.addr %s1117, 8
          %s1119 = scalar_lea.vmem %s5, %s1118
        $region144: #{tpu_custom_call.1} parent=131 // pred_fallthru
          _
        // Predicated region
        $region145: #{tpu_custom_call.1} parent=131 // pred_check
          %p1120 = pneg %p185
        $region146: #{tpu_custom_call.1} parent=131 // pred_check_branch
          %1122 = sbr.rel (%p1120) target = $region148
        $region147: #{tpu_custom_call.1} parent=131 // pred_region
          %s1123 = sand.u32 %s175, 1
          %s1124 = scalar_lea.sflag [#allocation4], %s1123
          %s1125 = sand.u32 %s175, 1
          %s1126 = smul.addr %s1125, 3
          %s1127 = scalar_lea.vmem [#allocation3], %s1126
          %1129 = vsyncadd %s1124, 0
          %s1130 = smul.addr %s87, 3
          %s1131 = scalar_lea.hbm %s7, %s1130
          %s1133 = sshll.u32 %s1131, 4
          %s1134 = int_to_ptr.hbm [resolvable:$true] %s1133
          %s1135 = sshll.u32 %s1127, 4
          %s1136 = int_to_ptr.vmem [resolvable:$true] %s1135
          %1138 = dma.hbm_to_vmem [thread:$0]  %s1134, 48, %s1136, %s1124
        $region148: #{tpu_custom_call.1} parent=131 // pred_fallthru
          _
      $region132: #{tpu_custom_call.1} parent=5 // pred_fallthru
        _
      %p1139 = scmp.le.s32.totalorder 1, %s87
      %p1140 = scmp.lt.s32.totalorder %s87, 3
      %p1141 = pnand %p1139, %p1140
      %p1142 = pneg %p1141
      // Predicated region
      $region149: #{tpu_custom_call.1} parent=5 // pred_check
        _
      $region150: #{tpu_custom_call.1} parent=5 // pred_check_branch
        %1144 = sbr.rel (%p1141) target = $region152
      $region151: #{tpu_custom_call.1} parent=5 // pred_region
        %s1145 = ssub.s32 %s87, 1
        %s1146 = sand.u32 %s178, 1
        %s1147 = scalar_lea.sflag [#allocation4], %s1146
        %s1148 = sand.u32 %s178, 1
        %s1149 = smul.addr %s1148, 3
        %s1150 = scalar_lea.vmem [#allocation3], %s1149
        // Predicated region
        $region153: #{tpu_custom_call.1} parent=151 // pred_check
          %p1151 = pneg %p191
        $region154: #{tpu_custom_call.1} parent=151 // pred_check_branch
          %1153 = sbr.rel (%p1151) target = $region156
        $region155: #{tpu_custom_call.1} parent=151 // pred_region
          %1155 = dma.done %s1147, 48
        $region156: #{tpu_custom_call.1} parent=151 // pred_fallthru
          _
        // Predicated region
        $region157: #{tpu_custom_call.1} parent=151 // pred_check
          %p1156 = pneg %p233
        $region158: #{tpu_custom_call.1} parent=151 // pred_check_branch
          %1158 = sbr.rel (%p1156) target = $region160
        $region159: #{tpu_custom_call.1} parent=151 // pred_region
          %1160 = dma.done [#allocation7], 128
        $region160: #{tpu_custom_call.1} parent=151 // pred_fallthru
          _
        // Predicated region
        $region161: #{tpu_custom_call.1} parent=151 // pred_check
          %p1161 = pneg %p275
        $region162: #{tpu_custom_call.1} parent=151 // pred_check_branch
          %1163 = sbr.rel (%p1161) target = $region164
        $region163: #{tpu_custom_call.1} parent=151 // pred_region
          %1165 = dma.done [#allocation7], 16
        $region164: #{tpu_custom_call.1} parent=151 // pred_fallthru
          _
        // Predicated region
        $region165: #{tpu_custom_call.1} parent=151 // pred_check
          %p1166 = pneg %p296
        $region166: #{tpu_custom_call.1} parent=151 // pred_check_branch
          %1168 = sbr.rel (%p1166) target = $region168
        $region167: #{tpu_custom_call.1} parent=151 // pred_region
          %1170 = dma.done [#allocation10], 16
        $region168: #{tpu_custom_call.1} parent=151 // pred_fallthru
          _
        // Predicated region
        $region169: #{tpu_custom_call.1} parent=151 // pred_check
          %p1171 = pneg %p317
        $region170: #{tpu_custom_call.1} parent=151 // pred_check_branch
          %1173 = sbr.rel (%p1171) target = $region172
        $region171: #{tpu_custom_call.1} parent=151 // pred_region
          %1175 = dma.done [#allocation10], 16
        $region172: #{tpu_custom_call.1} parent=151 // pred_fallthru
          _
        // Predicated region
        $region173: #{tpu_custom_call.1} parent=151 // pred_check
          %p1176 = pneg %p359
        $region174: #{tpu_custom_call.1} parent=151 // pred_check_branch
          %1178 = sbr.rel (%p1176) target = $region176
        $region175: #{tpu_custom_call.1} parent=151 // pred_region
          %1180 = dma.done [#allocation13], 16
        $region176: #{tpu_custom_call.1} parent=151 // pred_fallthru
          _
        // Predicated region
        $region177: #{tpu_custom_call.1} parent=151 // pred_check
          %p1181 = pneg %p380
        $region178: #{tpu_custom_call.1} parent=151 // pred_check_branch
          %1183 = sbr.rel (%p1181) target = $region180
        $region179: #{tpu_custom_call.1} parent=151 // pred_region
          %1185 = dma.done [#allocation13], 16
        $region180: #{tpu_custom_call.1} parent=151 // pred_fallthru
          _
        // Predicated region
        $region181: #{tpu_custom_call.1} parent=151 // pred_check
          %p1186 = pneg %p401
        $region182: #{tpu_custom_call.1} parent=151 // pred_check_branch
          %1188 = sbr.rel (%p1186) target = $region184
        $region183: #{tpu_custom_call.1} parent=151 // pred_region
          %1190 = dma.done [#allocation16], 16
        $region184: #{tpu_custom_call.1} parent=151 // pred_fallthru
          _
        // Predicated region
        $region185: #{tpu_custom_call.1} parent=151 // pred_check
          %p1191 = pneg %p422
        $region186: #{tpu_custom_call.1} parent=151 // pred_check_branch
          %1193 = sbr.rel (%p1191) target = $region188
        $region187: #{tpu_custom_call.1} parent=151 // pred_region
          %1195 = dma.done [#allocation16], 2048
        $region188: #{tpu_custom_call.1} parent=151 // pred_fallthru
          _
        // Predicated region
        $region189: #{tpu_custom_call.1} parent=151 // pred_check
          %p1196 = pneg %p464
        $region190: #{tpu_custom_call.1} parent=151 // pred_check_branch
          %1198 = sbr.rel (%p1196) target = $region192
        $region191: #{tpu_custom_call.1} parent=151 // pred_region
          %1200 = dma.done [#allocation19], 24576
        $region192: #{tpu_custom_call.1} parent=151 // pred_fallthru
          _
        // Predicated region
        $region193: #{tpu_custom_call.1} parent=151 // pred_check
          %p1201 = pneg %p506
        $region194: #{tpu_custom_call.1} parent=151 // pred_check_branch
          %1203 = sbr.rel (%p1201) target = $region196
        $region195: #{tpu_custom_call.1} parent=151 // pred_region
          %1205 = dma.done [#allocation19], 3072
        $region196: #{tpu_custom_call.1} parent=151 // pred_fallthru
          _
        // Predicated region
        $region197: #{tpu_custom_call.1} parent=151 // pred_check
          %p1206 = pneg %p527
        $region198: #{tpu_custom_call.1} parent=151 // pred_check_branch
          %1208 = sbr.rel (%p1206) target = $region200
        $region199: #{tpu_custom_call.1} parent=151 // pred_region
          %1210 = dma.done [#allocation22], 2048
        $region200: #{tpu_custom_call.1} parent=151 // pred_fallthru
          _
        // Predicated region
        $region201: #{tpu_custom_call.1} parent=151 // pred_check
          %p1211 = pneg %p569
        $region202: #{tpu_custom_call.1} parent=151 // pred_check_branch
          %1213 = sbr.rel (%p1211) target = $region204
        $region203: #{tpu_custom_call.1} parent=151 // pred_region
          %1215 = dma.done [#allocation22], 2048
        $region204: #{tpu_custom_call.1} parent=151 // pred_fallthru
          _
        // Predicated region
        $region205: #{tpu_custom_call.1} parent=151 // pred_check
          %p1216 = pneg %p590
        $region206: #{tpu_custom_call.1} parent=151 // pred_check_branch
          %1218 = sbr.rel (%p1216) target = $region208
        $region207: #{tpu_custom_call.1} parent=151 // pred_region
          %1220 = dma.done [#allocation25], 1024
        $region208: #{tpu_custom_call.1} parent=151 // pred_fallthru
          _
        // Predicated region
        $region209: #{tpu_custom_call.1} parent=151 // pred_check
          %p1221 = pneg %p611
        $region210: #{tpu_custom_call.1} parent=151 // pred_check_branch
          %1223 = sbr.rel (%p1221) target = $region212
        $region211: #{tpu_custom_call.1} parent=151 // pred_region
          %1225 = dma.done [#allocation25], 2048
        $region212: #{tpu_custom_call.1} parent=151 // pred_fallthru
          _
        // Predicated region
        $region213: #{tpu_custom_call.1} parent=151 // pred_check
          %p1226 = pneg %p653
        $region214: #{tpu_custom_call.1} parent=151 // pred_check_branch
          %1228 = sbr.rel (%p1226) target = $region216
        $region215: #{tpu_custom_call.1} parent=151 // pred_region
          %1230 = dma.done [#allocation28], 4096
        $region216: #{tpu_custom_call.1} parent=151 // pred_fallthru
          _
        // Predicated region
        $region217: #{tpu_custom_call.1} parent=151 // pred_check
          %p1231 = pneg %p695
        $region218: #{tpu_custom_call.1} parent=151 // pred_check_branch
          %1233 = sbr.rel (%p1231) target = $region220
        $region219: #{tpu_custom_call.1} parent=151 // pred_region
          %1235 = dma.done [#allocation28], 4096
        $region220: #{tpu_custom_call.1} parent=151 // pred_fallthru
          _
        %p1236 = scmp.lt.s32.totalorder %s92, 1
        %s1237 = scalar_select %p1236, %s92, 1
        %s1238 = smul.addr %s1237, 8
        %s1239 = smul.addr %s1238, 8
        %s1240 = scalar_lea.vmem %s1, %s1239
        %p1241 = pneg %p113
        %p1242 = pneg %p110
        %p1243 = scmp.lt.s32.totalorder %s92, 1
        %s1244 = scalar_select %p1243, %s92, 1
        %s1245 = smul.addr %s1244, 32
        %s1246 = smul.addr %s1245, 8
        %s1247 = scalar_lea.vmem %s3, %s1246
        %p1248 = pneg %p139
        %p1249 = pneg %p136
        %p1250 = scmp.lt.s32.totalorder %s92, 1
        %s1251 = scalar_select %p1250, %s92, 1
        %s1252 = smul.addr %s1251, 4
        %s1253 = smul.addr %s1252, 8
        %s1254 = scalar_lea.vmem %s5, %s1253
        %p1255 = pneg %p165
        %p1256 = pneg %p162
        %s1257 = sand.u32 %s178, 1
        %s1258 = scalar_lea.sflag [#allocation4], %s1257
        %s1259 = sand.u32 %s178, 1
        %s1260 = smul.addr %s1259, 3
        %s1261 = scalar_lea.vmem [#allocation3], %s1260
        %p1262 = pneg %p191
        %p1263 = pneg %p188
        %p1264 = pneg %p212
        %p1265 = pneg %p209
        %p1266 = pneg %p233
        %p1267 = pneg %p230
        %p1268 = pneg %p254
        %p1269 = pneg %p251
        %p1270 = pneg %p275
        %p1271 = pneg %p272
        %p1272 = pneg %p296
        %p1273 = pneg %p293
        %p1274 = pneg %p317
        %p1275 = pneg %p314
        %p1276 = pneg %p338
        %p1277 = pneg %p335
        %p1278 = pneg %p359
        %p1279 = pneg %p356
        %p1280 = pneg %p380
        %p1281 = pneg %p377
        %p1282 = pneg %p401
        %p1283 = pneg %p398
        %p1284 = pneg %p422
        %p1285 = pneg %p419
        %p1286 = pneg %p443
        %p1287 = pneg %p440
        %p1288 = pneg %p464
        %p1289 = pneg %p461
        %p1290 = pneg %p485
        %p1291 = pneg %p482
        %p1292 = pneg %p506
        %p1293 = pneg %p503
        %p1294 = pneg %p527
        %p1295 = pneg %p524
        %p1296 = pneg %p548
        %p1297 = pneg %p545
        %p1298 = pneg %p569
        %p1299 = pneg %p566
        %p1300 = pneg %p590
        %p1301 = pneg %p587
        %p1302 = pneg %p611
        %p1303 = pneg %p608
        %p1304 = pneg %p632
        %p1305 = pneg %p629
        %p1306 = pneg %p653
        %p1307 = pneg %p650
        %p1308 = pneg %p674
        %p1309 = pneg %p671
        %p1310 = pneg %p695
        %p1311 = pneg %p692
        %p1312 = pneg %p716
        %p1313 = pneg %p713
        %p1314 = pneg %p737
        %p1315 = pneg %p734
        %p1316 = pneg %p758
        %p1317 = pneg %p755
        %p1318 = pneg %p779
        %p1319 = pneg %p776
        %p1320 = pneg %p800
        %p1321 = pneg %p797
        %p1322 = pneg %p826
        %p1323 = pneg %p823
        %s1324 = sand.u32 %s813, 1
        %s1325 = scalar_lea.sflag [#allocation5], %s1324
        %s1326 = sand.u32 %s813, 1
        %s1327 = smul.addr %s1326, 32
        %s1328 = scalar_lea.vmem [#allocation30], %s1327
        %p1329 = scmp.lt.s32.totalorder %s92, 1
        %s1330 = scalar_select %p1329, %s92, 1
        %s1331 = smul.addr %s1330, 8
        %s1332 = smul.addr %s1331, 8
        %s1333 = scalar_lea.vmem %s1, %s1332
        %p1334 = scmp.lt.s32.totalorder %s92, 1
        %s1335 = scalar_select %p1334, %s92, 1
        %s1336 = smul.addr %s1335, 32
        %s1337 = smul.addr %s1336, 8
        %s1338 = scalar_lea.vmem %s3, %s1337
        %p1339 = scmp.lt.s32.totalorder %s92, 1
        %s1340 = scalar_select %p1339, %s92, 1
        %s1341 = smul.addr %s1340, 4
        %s1342 = smul.addr %s1341, 8
        %s1343 = scalar_lea.vmem %s5, %s1342
        %v1345 = vld [vmem:[#allocation17] sm:$0xff]
        %v1346 = vld [vmem:[#allocation17 + $0x8] sm:$0xff]
        %v1347 = vld [vmem:[#allocation17 + $0x10] sm:$0xff]
        %v1348 = vld [vmem:[#allocation17 + $0x18] sm:$0xff]
        %v1349 = vld [vmem:[#allocation17 + $0x20] sm:$0xff]
        %v1350 = vld [vmem:[#allocation17 + $0x28] sm:$0xff]
        %v1351 = vld [vmem:[#allocation17 + $0x30] sm:$0xff]
        %v1352 = vld [vmem:[#allocation17 + $0x38] sm:$0xff]
        %v1353 = vld [vmem:[#allocation17 + $0x40] sm:$0xff]
        %v1354 = vld [vmem:[#allocation17 + $0x48] sm:$0xff]
        %v1355 = vld [vmem:[#allocation17 + $0x50] sm:$0xff]
        %v1356 = vld [vmem:[#allocation17 + $0x58] sm:$0xff]
        %v1357 = vld [vmem:[#allocation17 + $0x60] sm:$0xff]
        %v1358 = vld [vmem:[#allocation17 + $0x68] sm:$0xff]
        %v1359 = vld [vmem:[#allocation17 + $0x70] sm:$0xff]
        %v1360 = vld [vmem:[#allocation17 + $0x78] sm:$0xff]
        %v1361 = vld [vmem:[#allocation6] sm:$0x1]
        %v1362 = vld [vmem:[#allocation6 + $0x1] sm:$0x1]
        %v1363 = vld [vmem:[#allocation6 + $0x2] sm:$0x1]
        %v1364 = vld [vmem:[#allocation6 + $0x3] sm:$0x1]
        %v1365 = vld [vmem:[#allocation6 + $0x4] sm:$0x1]
        %v1366 = vld [vmem:[#allocation6 + $0x5] sm:$0x1]
        %v1367 = vld [vmem:[#allocation6 + $0x6] sm:$0x1]
        %v1368 = vld [vmem:[#allocation6 + $0x7] sm:$0x1]
        %v1369 = vld [vmem:[%s1333] sm:$0xff]
        %v1370 = vld [vmem:[%s1333 + $0x8] sm:$0xff]
        %v1371 = vld [vmem:[%s1333 + $0x10] sm:$0xff]
        %v1372 = vld [vmem:[%s1333 + $0x18] sm:$0xff]
        %v1373 = vld [vmem:[%s1333 + $0x20] sm:$0xff]
        %v1374 = vld [vmem:[%s1333 + $0x28] sm:$0xff]
        %v1375 = vld [vmem:[%s1333 + $0x30] sm:$0xff]
        %v1376 = vld [vmem:[%s1333 + $0x38] sm:$0xff]
        %v1377 = vld [vmem:[%s13] sm:$0xf]
        %v1378 = vld [vmem:[%s13 + $0x4] sm:$0xf]
        %v1379 = vld [vmem:[%s13 + $0x8] sm:$0xf]
        %v1380 = vld [vmem:[%s13 + $0xc] sm:$0xf]
        %v1381 = vld [vmem:[#allocation8] sm:$0x1]
        %v1382 = vld [vmem:[#allocation9] sm:$0x1]
        %v1383 = vld [vmem:[#allocation11] sm:$0x1]
        %v1384 = vpack.c.bf16 %v1370, %v1369
        %v1385 = vpack.c.bf16 %v1372, %v1371
        %v1386 = vpack.c.bf16 %v1374, %v1373
        %v1387 = vpack.c.bf16 %v1376, %v1375
        %v1389 = vperm.slane %v1381, 0
        %v1395 = vunpack.c.l.b16 %v1377
        %v1396 = vunpack.c.l.b16 %v1378
        %v1397 = vunpack.c.l.b16 %v1379
        %v1398 = vunpack.c.l.b16 %v1380
        %v1399 = vpack.c.b16 %v1396, %v1395
        %v1400 = vpack.c.b16 %v1398, %v1397
        %vm1403 = vcmask 261120
        %v1405 = vsel %vm1403, %v1384, 0
        %v1408 = vsel %vm1403, %v1385, 0
        %v1411 = vsel %vm1403, %v1386, 0
        %v1414 = vsel %vm1403, %v1387, 0
        %1416 = vmatpush.bf16.msra.mxu0 0
        %1417 = vmatpush.bf16.msra.mxu0 0
        %1418 = vmatpush.bf16.msra.mxu0 0
        %1419 = vmatpush.bf16.msra.mxu0 0
        %1420 = vmatpush.bf16.msra.mxu0 0
        %1421 = vmatpush.bf16.msra.mxu0 0
        %1422 = vmatpush.bf16.msra.mxu0 %v1400
        %1423 = vmatpush.bf16.msra.mxu0 %v1399
        %1424 = vmatmul.bf16.gmra.mxu0 %v1405
        %v1425 = vpop.f32.mrf.mxu0
        %v1426 = vadd.f32 %v1389, %v1425
        %v1427 = vpop.f32.mrf.mxu0
        %v1428 = vadd.f32 %v1389, %v1427
        %1429 = vmatmul.bf16.gmra.mxu0 %v1408
        %v1430 = vpop.f32.mrf.mxu0
        %v1431 = vadd.f32 %v1389, %v1430
        %v1432 = vpop.f32.mrf.mxu0
        %v1433 = vadd.f32 %v1389, %v1432
        %1434 = vmatmul.bf16.gmra.mxu0 %v1411
        %v1435 = vpop.f32.mrf.mxu0
        %v1436 = vadd.f32 %v1389, %v1435
        %v1437 = vpop.f32.mrf.mxu0
        %v1438 = vadd.f32 %v1389, %v1437
        %1439 = vmatmul.bf16.gmra.mxu0 %v1414
        %v1440 = vpop.f32.mrf.mxu0
        %v1441 = vadd.f32 %v1389, %v1440
        %v1442 = vpop.f32.mrf.mxu0
        %v1443 = vadd.f32 %v1389, %v1442
        %1444 = vdwg.mxu0
        %v1445 = vadd.f32 %v1426, %v1428
        %v1446 = vadd.f32 %v1445, %v1431
        %v1447 = vadd.f32 %v1446, %v1433
        %v1448 = vadd.f32 %v1447, %v1436
        %v1449 = vadd.f32 %v1448, %v1438
        %v1450 = vadd.f32 %v1449, %v1441
        %v1451 = vadd.f32 %v1450, %v1443
        %v1452 = vrot.slane %v1451, 4
        %v1453 = vadd.f32 %v1451, %v1452
        %v1454 = vrot.slane %v1453, 2
        %v1455 = vadd.f32 %v1453, %v1454
        %v1456 = vrot.slane %v1455, 1
        %v1457 = vadd.f32 %v1455, %v1456
        %v1458 = vrcp.pop 64.0
        %v1459 = vmul.f32 64.0, %v1458
        %v1460 = vsub.f32 1.0, %v1459
        %v1461 = vmul.f32 %v1458, %v1460
        %v1462 = vadd.f32 %v1458, %v1461
        %vm1463 = vweird.f32 %v1458
        %v1464 = vsel %vm1463, %v1458, %v1462
        %v1465 = vmul.f32 %v1457, %v1464
        %1466 = vmatpush.msra.mxu0 %v1360
        %1467 = vmatpush.msra.mxu0 %v1359
        %1468 = vmatpush.msra.mxu0 %v1358
        %1469 = vmatpush.msra.mxu0 %v1357
        %1470 = vmatpush.msra.mxu0 %v1356
        %1471 = vmatpush.msra.mxu0 %v1355
        %1472 = vmatpush.msra.mxu0 %v1354
        %1473 = vmatpush.msra.mxu0 %v1353
        %1474 = vmatpush.msra.mxu0 %v1352
        %1475 = vmatpush.msra.mxu0 %v1351
        %1476 = vmatpush.msra.mxu0 %v1350
        %1477 = vmatpush.msra.mxu0 %v1349
        %1478 = vmatpush.msra.mxu0 %v1348
        %1479 = vmatpush.msra.mxu0 %v1347
        %1480 = vmatpush.msra.mxu0 %v1346
        %1481 = vmatpush.msra.mxu0 %v1345
        %1482 = vmatmul.f32.gmra.mxu0 %v1465
        %v1483 = vpop.f32.mrf.mxu0
        %v1484 = vadd.f32 0.0, %v1483
        %1485 = vdwg.mxu0
        %v1486 = vperm.slane %v1484, 0
        %v1487 = vsub.f32 %v1426, %v1486
        %v1488 = vsub.f32 %v1428, %v1486
        %v1489 = vsub.f32 %v1431, %v1486
        %v1490 = vsub.f32 %v1433, %v1486
        %v1491 = vsub.f32 %v1436, %v1486
        %v1492 = vsub.f32 %v1438, %v1486
        %v1493 = vsub.f32 %v1441, %v1486
        %v1494 = vsub.f32 %v1443, %v1486
        %v1495 = vmul.f32 %v1487, %v1487
        %v1496 = vmul.f32 %v1488, %v1488
        %v1497 = vmul.f32 %v1489, %v1489
        %v1498 = vmul.f32 %v1490, %v1490
        %v1499 = vmul.f32 %v1491, %v1491
        %v1500 = vmul.f32 %v1492, %v1492
        %v1501 = vmul.f32 %v1493, %v1493
        %v1502 = vmul.f32 %v1494, %v1494
        %v1503 = vadd.f32 %v1495, %v1496
        %v1504 = vadd.f32 %v1503, %v1497
        %v1505 = vadd.f32 %v1504, %v1498
        %v1506 = vadd.f32 %v1505, %v1499
        %v1507 = vadd.f32 %v1506, %v1500
        %v1508 = vadd.f32 %v1507, %v1501
        %v1509 = vadd.f32 %v1508, %v1502
        %v1510 = vrot.slane %v1509, 4
        %v1511 = vadd.f32 %v1509, %v1510
        %v1512 = vrot.slane %v1511, 2
        %v1513 = vadd.f32 %v1511, %v1512
        %v1514 = vrot.slane %v1513, 1
        %v1515 = vadd.f32 %v1513, %v1514
        %v1516 = vmul.f32 %v1515, %v1464
        %1517 = vmatpush.msra.mxu0 %v1360
        %1518 = vmatpush.msra.mxu0 %v1359
        %1519 = vmatpush.msra.mxu0 %v1358
        %1520 = vmatpush.msra.mxu0 %v1357
        %1521 = vmatpush.msra.mxu0 %v1356
        %1522 = vmatpush.msra.mxu0 %v1355
        %1523 = vmatpush.msra.mxu0 %v1354
        %1524 = vmatpush.msra.mxu0 %v1353
        %1525 = vmatpush.msra.mxu0 %v1352
        %1526 = vmatpush.msra.mxu0 %v1351
        %1527 = vmatpush.msra.mxu0 %v1350
        %1528 = vmatpush.msra.mxu0 %v1349
        %1529 = vmatpush.msra.mxu0 %v1348
        %1530 = vmatpush.msra.mxu0 %v1347
        %1531 = vmatpush.msra.mxu0 %v1346
        %1532 = vmatpush.msra.mxu0 %v1345
        %1533 = vmatmul.f32.gmra.mxu0 %v1516
        %v1534 = vpop.f32.mrf.mxu0
        %v1535 = vadd.f32 1e-05, %v1534
        %1536 = vdwg.mxu0
        %v1537 = vrsqrt.pop %v1535
        %v1538 = vmul.f32 %v1537, %v1535
        %v1539 = vmul.f32 %v1538, %v1537
        %v1540 = vmul.f32 0.5, %v1539
        %v1541 = vsub.f32 1.5, %v1540
        %v1542 = vmul.f32 %v1537, %v1541
        %vm1543 = vweird.f32 %v1535
        %vm1544 = vweird.f32 %v1537
        %vm1545 = vmor %vm1543, %vm1544
        %v1546 = vsel %vm1545, %v1537, %v1542
        %v1547 = vperm.slane %v1546, 0
        %v1548 = vmul.f32 %v1487, %v1547
        %v1549 = vmul.f32 %v1488, %v1547
        %v1550 = vmul.f32 %v1489, %v1547
        %v1551 = vmul.f32 %v1490, %v1547
        %v1552 = vmul.f32 %v1491, %v1547
        %v1553 = vmul.f32 %v1492, %v1547
        %v1554 = vmul.f32 %v1493, %v1547
        %v1555 = vmul.f32 %v1494, %v1547
        %v1557 = vperm.slane %v1382, 0
        %v1559 = vmul.f32 %v1548, %v1557
        %v1560 = vmul.f32 %v1549, %v1557
        %v1561 = vmul.f32 %v1550, %v1557
        %v1562 = vmul.f32 %v1551, %v1557
        %v1563 = vmul.f32 %v1552, %v1557
        %v1564 = vmul.f32 %v1553, %v1557
        %v1565 = vmul.f32 %v1554, %v1557
        %v1566 = vmul.f32 %v1555, %v1557
        %v1568 = vperm.slane %v1383, 0
        %v1570 = vadd.f32 %v1559, %v1568
        %v1571 = vadd.f32 %v1560, %v1568
        %v1572 = vadd.f32 %v1561, %v1568
        %v1573 = vadd.f32 %v1562, %v1568
        %v1574 = vadd.f32 %v1563, %v1568
        %v1575 = vadd.f32 %v1564, %v1568
        %v1576 = vadd.f32 %v1565, %v1568
        %v1577 = vadd.f32 %v1566, %v1568
        %1578 = vst [vmem:[#allocation2] sm:$0xff] %v1570
        %1579 = vst [vmem:[#allocation2 + $0x8] sm:$0xff] %v1571
        %1580 = vst [vmem:[#allocation2 + $0x10] sm:$0xff] %v1572
        %1581 = vst [vmem:[#allocation2 + $0x18] sm:$0xff] %v1573
        %1582 = vst [vmem:[#allocation2 + $0x20] sm:$0xff] %v1574
        %1583 = vst [vmem:[#allocation2 + $0x28] sm:$0xff] %v1575
        %1584 = vst [vmem:[#allocation2 + $0x30] sm:$0xff] %v1576
        %1585 = vst [vmem:[#allocation2 + $0x38] sm:$0xff] %v1577
        %v1586 = vld [vmem:[%s1338] sm:$0xff]
        %v1587 = vld [vmem:[%s1338 + $0x8] sm:$0xff]
        %v1588 = vld [vmem:[%s1338 + $0x10] sm:$0xff]
        %v1589 = vld [vmem:[%s1338 + $0x18] sm:$0xff]
        %v1590 = vld [vmem:[%s1338 + $0x20] sm:$0xff]
        %v1591 = vld [vmem:[%s1338 + $0x28] sm:$0xff]
        %v1592 = vld [vmem:[%s1338 + $0x30] sm:$0xff]
        %v1593 = vld [vmem:[%s1338 + $0x38] sm:$0xff]
        %v1594 = vld [vmem:[%s1338 + $0x40] sm:$0xff]
        %v1595 = vld [vmem:[%s1338 + $0x48] sm:$0xff]
        %v1596 = vld [vmem:[%s1338 + $0x50] sm:$0xff]
        %v1597 = vld [vmem:[%s1338 + $0x58] sm:$0xff]
        %v1598 = vld [vmem:[%s1338 + $0x60] sm:$0xff]
        %v1599 = vld [vmem:[%s1338 + $0x68] sm:$0xff]
        %v1600 = vld [vmem:[%s1338 + $0x70] sm:$0xff]
        %v1601 = vld [vmem:[%s1338 + $0x78] sm:$0xff]
        %v1602 = vld [vmem:[%s1338 + $0x80] sm:$0xff]
        %v1603 = vld [vmem:[%s1338 + $0x88] sm:$0xff]
        %v1604 = vld [vmem:[%s1338 + $0x90] sm:$0xff]
        %v1605 = vld [vmem:[%s1338 + $0x98] sm:$0xff]
        %v1606 = vld [vmem:[%s1338 + $0xa0] sm:$0xff]
        %v1607 = vld [vmem:[%s1338 + $0xa8] sm:$0xff]
        %v1608 = vld [vmem:[%s1338 + $0xb0] sm:$0xff]
        %v1609 = vld [vmem:[%s1338 + $0xb8] sm:$0xff]
        %v1610 = vld [vmem:[%s1338 + $0xc0] sm:$0xff]
        %v1611 = vld [vmem:[%s1338 + $0xc8] sm:$0xff]
        %v1612 = vld [vmem:[%s1338 + $0xd0] sm:$0xff]
        %v1613 = vld [vmem:[%s1338 + $0xd8] sm:$0xff]
        %v1614 = vld [vmem:[%s1338 + $0xe0] sm:$0xff]
        %v1615 = vld [vmem:[%s1338 + $0xe8] sm:$0xff]
        %v1616 = vld [vmem:[%s1338 + $0xf0] sm:$0xff]
        %v1617 = vld [vmem:[%s1338 + $0xf8] sm:$0xff]
        %v1618 = vld [vmem:[%s21] sm:$0xf]
        %v1619 = vld [vmem:[%s21 + $0x4] sm:$0xf]
        %v1620 = vld [vmem:[#allocation12] sm:$0x1]
        %v1621 = vld [vmem:[#allocation14] sm:$0x1]
        %v1622 = vld [vmem:[#allocation15] sm:$0x1]
        %v1623 = vpack.c.bf16 %v1587, %v1586
        %v1624 = vpack.c.bf16 %v1589, %v1588
        %v1625 = vpack.c.bf16 %v1591, %v1590
        %v1626 = vpack.c.bf16 %v1593, %v1592
        %v1627 = vpack.c.bf16 %v1595, %v1594
        %v1628 = vpack.c.bf16 %v1597, %v1596
        %v1629 = vpack.c.bf16 %v1599, %v1598
        %v1630 = vpack.c.bf16 %v1601, %v1600
        %v1631 = vpack.c.bf16 %v1603, %v1602
        %v1632 = vpack.c.bf16 %v1605, %v1604
        %v1633 = vpack.c.bf16 %v1607, %v1606
        %v1634 = vpack.c.bf16 %v1609, %v1608
        %v1635 = vpack.c.bf16 %v1611, %v1610
        %v1636 = vpack.c.bf16 %v1613, %v1612
        %v1637 = vpack.c.bf16 %v1615, %v1614
        %v1638 = vpack.c.bf16 %v1617, %v1616
        %v1640 = vperm.slane %v1620, 0
        %v1644 = vunpack.c.l.b16 %v1618
        %v1645 = vunpack.c.l.b16 %v1619
        %v1646 = vpack.c.b16 %v1645, %v1644
        %vm1648 = vcmask 130048
        %v1650 = vsel %vm1648, %v1623, 0
        %v1653 = vsel %vm1648, %v1624, 0
        %v1656 = vsel %vm1648, %v1625, 0
        %v1659 = vsel %vm1648, %v1626, 0
        %v1662 = vsel %vm1648, %v1627, 0
        %v1665 = vsel %vm1648, %v1628, 0
        %v1668 = vsel %vm1648, %v1629, 0
        %v1671 = vsel %vm1648, %v1630, 0
        %v1674 = vsel %vm1648, %v1631, 0
        %v1677 = vsel %vm1648, %v1632, 0
        %v1680 = vsel %vm1648, %v1633, 0
        %v1683 = vsel %vm1648, %v1634, 0
        %v1686 = vsel %vm1648, %v1635, 0
        %v1689 = vsel %vm1648, %v1636, 0
        %v1692 = vsel %vm1648, %v1637, 0
        %v1695 = vsel %vm1648, %v1638, 0
        %1697 = vmatpush.bf16.msra.mxu0 0
        %1698 = vmatpush.bf16.msra.mxu0 0
        %1699 = vmatpush.bf16.msra.mxu0 0
        %1700 = vmatpush.bf16.msra.mxu0 0
        %1701 = vmatpush.bf16.msra.mxu0 0
        %1702 = vmatpush.bf16.msra.mxu0 0
        %1703 = vmatpush.bf16.msra.mxu0 0
        %1704 = vmatpush.bf16.msra.mxu0 %v1646
        %1705 = vmatmul.bf16.gmra.mxu0 %v1650
        %v1706 = vpop.f32.mrf.mxu0
        %v1707 = vadd.f32 %v1640, %v1706
        %v1708 = vpop.f32.mrf.mxu0
        %v1709 = vadd.f32 %v1640, %v1708
        %1710 = vmatmul.bf16.gmra.mxu0 %v1653
        %v1711 = vpop.f32.mrf.mxu0
        %v1712 = vadd.f32 %v1640, %v1711
        %v1713 = vpop.f32.mrf.mxu0
        %v1714 = vadd.f32 %v1640, %v1713
        %1715 = vmatmul.bf16.gmra.mxu0 %v1656
        %v1716 = vpop.f32.mrf.mxu0
        %v1717 = vadd.f32 %v1640, %v1716
        %v1718 = vpop.f32.mrf.mxu0
        %v1719 = vadd.f32 %v1640, %v1718
        %1720 = vmatmul.bf16.gmra.mxu0 %v1659
        %v1721 = vpop.f32.mrf.mxu0
        %v1722 = vadd.f32 %v1640, %v1721
        %v1723 = vpop.f32.mrf.mxu0
        %v1724 = vadd.f32 %v1640, %v1723
        %1725 = vmatmul.bf16.gmra.mxu0 %v1662
        %v1726 = vpop.f32.mrf.mxu0
        %v1727 = vadd.f32 %v1640, %v1726
        %v1728 = vpop.f32.mrf.mxu0
        %v1729 = vadd.f32 %v1640, %v1728
        %1730 = vmatmul.bf16.gmra.mxu0 %v1665
        %v1731 = vpop.f32.mrf.mxu0
        %v1732 = vadd.f32 %v1640, %v1731
        %v1733 = vpop.f32.mrf.mxu0
        %v1734 = vadd.f32 %v1640, %v1733
        %1735 = vmatmul.bf16.gmra.mxu0 %v1668
        %v1736 = vpop.f32.mrf.mxu0
        %v1737 = vadd.f32 %v1640, %v1736
        %v1738 = vpop.f32.mrf.mxu0
        %v1739 = vadd.f32 %v1640, %v1738
        %1740 = vmatmul.bf16.gmra.mxu0 %v1671
        %v1741 = vpop.f32.mrf.mxu0
        %v1742 = vadd.f32 %v1640, %v1741
        %v1743 = vpop.f32.mrf.mxu0
        %v1744 = vadd.f32 %v1640, %v1743
        %1745 = vmatmul.bf16.gmra.mxu0 %v1674
        %v1746 = vpop.f32.mrf.mxu0
        %v1747 = vadd.f32 %v1640, %v1746
        %v1748 = vpop.f32.mrf.mxu0
        %v1749 = vadd.f32 %v1640, %v1748
        %1750 = vmatmul.bf16.gmra.mxu0 %v1677
        %v1751 = vpop.f32.mrf.mxu0
        %v1752 = vadd.f32 %v1640, %v1751
        %v1753 = vpop.f32.mrf.mxu0
        %v1754 = vadd.f32 %v1640, %v1753
        %1755 = vmatmul.bf16.gmra.mxu0 %v1680
        %v1756 = vpop.f32.mrf.mxu0
        %v1757 = vadd.f32 %v1640, %v1756
        %v1758 = vpop.f32.mrf.mxu0
        %v1759 = vadd.f32 %v1640, %v1758
        %1760 = vmatmul.bf16.gmra.mxu0 %v1683
        %v1761 = vpop.f32.mrf.mxu0
        %v1762 = vadd.f32 %v1640, %v1761
        %v1763 = vpop.f32.mrf.mxu0
        %v1764 = vadd.f32 %v1640, %v1763
        %1765 = vmatmul.bf16.gmra.mxu0 %v1686
        %v1766 = vpop.f32.mrf.mxu0
        %v1767 = vadd.f32 %v1640, %v1766
        %v1768 = vpop.f32.mrf.mxu0
        %v1769 = vadd.f32 %v1640, %v1768
        %1770 = vmatmul.bf16.gmra.mxu0 %v1689
        %v1771 = vpop.f32.mrf.mxu0
        %v1772 = vadd.f32 %v1640, %v1771
        %v1773 = vpop.f32.mrf.mxu0
        %v1774 = vadd.f32 %v1640, %v1773
        %1775 = vmatmul.bf16.gmra.mxu0 %v1692
        %v1776 = vpop.f32.mrf.mxu0
        %v1777 = vadd.f32 %v1640, %v1776
        %v1778 = vpop.f32.mrf.mxu0
        %v1779 = vadd.f32 %v1640, %v1778
        %1780 = vmatmul.bf16.gmra.mxu0 %v1695
        %v1781 = vpop.f32.mrf.mxu0
        %v1782 = vadd.f32 %v1640, %v1781
        %v1783 = vpop.f32.mrf.mxu0
        %v1784 = vadd.f32 %v1640, %v1783
        %1785 = vdwg.mxu0
        %v1786 = vadd.f32 %v1707, %v1709
        %v1787 = vadd.f32 %v1786, %v1712
        %v1788 = vadd.f32 %v1787, %v1714
        %v1789 = vadd.f32 %v1788, %v1717
        %v1790 = vadd.f32 %v1789, %v1719
        %v1791 = vadd.f32 %v1790, %v1722
        %v1792 = vadd.f32 %v1791, %v1724
        %v1793 = vadd.f32 %v1792, %v1727
        %v1794 = vadd.f32 %v1793, %v1729
        %v1795 = vadd.f32 %v1794, %v1732
        %v1796 = vadd.f32 %v1795, %v1734
        %v1797 = vadd.f32 %v1796, %v1737
        %v1798 = vadd.f32 %v1797, %v1739
        %v1799 = vadd.f32 %v1798, %v1742
        %v1800 = vadd.f32 %v1799, %v1744
        %v1801 = vadd.f32 %v1800, %v1747
        %v1802 = vadd.f32 %v1801, %v1749
        %v1803 = vadd.f32 %v1802, %v1752
        %v1804 = vadd.f32 %v1803, %v1754
        %v1805 = vadd.f32 %v1804, %v1757
        %v1806 = vadd.f32 %v1805, %v1759
        %v1807 = vadd.f32 %v1806, %v1762
        %v1808 = vadd.f32 %v1807, %v1764
        %v1809 = vadd.f32 %v1808, %v1767
        %v1810 = vadd.f32 %v1809, %v1769
        %v1811 = vadd.f32 %v1810, %v1772
        %v1812 = vadd.f32 %v1811, %v1774
        %v1813 = vadd.f32 %v1812, %v1777
        %v1814 = vadd.f32 %v1813, %v1779
        %v1815 = vadd.f32 %v1814, %v1782
        %v1816 = vadd.f32 %v1815, %v1784
        %v1817 = vrot.slane %v1816, 4
        %v1818 = vadd.f32 %v1816, %v1817
        %v1819 = vrot.slane %v1818, 2
        %v1820 = vadd.f32 %v1818, %v1819
        %v1821 = vrot.slane %v1820, 1
        %v1822 = vadd.f32 %v1820, %v1821
        %v1823 = vrcp.pop 256.0
        %v1824 = vmul.f32 256.0, %v1823
        %v1825 = vsub.f32 1.0, %v1824
        %v1826 = vmul.f32 %v1823, %v1825
        %v1827 = vadd.f32 %v1823, %v1826
        %vm1828 = vweird.f32 %v1823
        %v1829 = vsel %vm1828, %v1823, %v1827
        %v1830 = vmul.f32 %v1822, %v1829
        %1831 = vmatpush.msra.mxu0 %v1360
        %1832 = vmatpush.msra.mxu0 %v1359
        %1833 = vmatpush.msra.mxu0 %v1358
        %1834 = vmatpush.msra.mxu0 %v1357
        %1835 = vmatpush.msra.mxu0 %v1356
        %1836 = vmatpush.msra.mxu0 %v1355
        %1837 = vmatpush.msra.mxu0 %v1354
        %1838 = vmatpush.msra.mxu0 %v1353
        %1839 = vmatpush.msra.mxu0 %v1352
        %1840 = vmatpush.msra.mxu0 %v1351
        %1841 = vmatpush.msra.mxu0 %v1350
        %1842 = vmatpush.msra.mxu0 %v1349
        %1843 = vmatpush.msra.mxu0 %v1348
        %1844 = vmatpush.msra.mxu0 %v1347
        %1845 = vmatpush.msra.mxu0 %v1346
        %1846 = vmatpush.msra.mxu0 %v1345
        %1847 = vmatmul.f32.gmra.mxu0 %v1830
        %v1848 = vpop.f32.mrf.mxu0
        %v1849 = vadd.f32 0.0, %v1848
        %1850 = vdwg.mxu0
        %v1851 = vperm.slane %v1849, 0
        %v1852 = vsub.f32 %v1707, %v1851
        %v1853 = vsub.f32 %v1709, %v1851
        %v1854 = vsub.f32 %v1712, %v1851
        %v1855 = vsub.f32 %v1714, %v1851
        %v1856 = vsub.f32 %v1717, %v1851
        %v1857 = vsub.f32 %v1719, %v1851
        %v1858 = vsub.f32 %v1722, %v1851
        %v1859 = vsub.f32 %v1724, %v1851
        %v1860 = vsub.f32 %v1727, %v1851
        %v1861 = vsub.f32 %v1729, %v1851
        %v1862 = vsub.f32 %v1732, %v1851
        %v1863 = vsub.f32 %v1734, %v1851
        %v1864 = vsub.f32 %v1737, %v1851
        %v1865 = vsub.f32 %v1739, %v1851
        %v1866 = vsub.f32 %v1742, %v1851
        %v1867 = vsub.f32 %v1744, %v1851
        %v1868 = vsub.f32 %v1747, %v1851
        %v1869 = vsub.f32 %v1749, %v1851
        %v1870 = vsub.f32 %v1752, %v1851
        %v1871 = vsub.f32 %v1754, %v1851
        %v1872 = vsub.f32 %v1757, %v1851
        %v1873 = vsub.f32 %v1759, %v1851
        %v1874 = vsub.f32 %v1762, %v1851
        %v1875 = vsub.f32 %v1764, %v1851
        %v1876 = vsub.f32 %v1767, %v1851
        %v1877 = vsub.f32 %v1769, %v1851
        %v1878 = vsub.f32 %v1772, %v1851
        %v1879 = vsub.f32 %v1774, %v1851
        %v1880 = vsub.f32 %v1777, %v1851
        %v1881 = vsub.f32 %v1779, %v1851
        %v1882 = vsub.f32 %v1782, %v1851
        %v1883 = vsub.f32 %v1784, %v1851
        %v1884 = vmul.f32 %v1852, %v1852
        %v1885 = vmul.f32 %v1853, %v1853
        %v1886 = vmul.f32 %v1854, %v1854
        %v1887 = vmul.f32 %v1855, %v1855
        %v1888 = vmul.f32 %v1856, %v1856
        %v1889 = vmul.f32 %v1857, %v1857
        %v1890 = vmul.f32 %v1858, %v1858
        %v1891 = vmul.f32 %v1859, %v1859
        %v1892 = vmul.f32 %v1860, %v1860
        %v1893 = vmul.f32 %v1861, %v1861
        %v1894 = vmul.f32 %v1862, %v1862
        %v1895 = vmul.f32 %v1863, %v1863
        %v1896 = vmul.f32 %v1864, %v1864
        %v1897 = vmul.f32 %v1865, %v1865
        %v1898 = vmul.f32 %v1866, %v1866
        %v1899 = vmul.f32 %v1867, %v1867
        %v1900 = vmul.f32 %v1868, %v1868
        %v1901 = vmul.f32 %v1869, %v1869
        %v1902 = vmul.f32 %v1870, %v1870
        %v1903 = vmul.f32 %v1871, %v1871
        %v1904 = vmul.f32 %v1872, %v1872
        %v1905 = vmul.f32 %v1873, %v1873
        %v1906 = vmul.f32 %v1874, %v1874
        %v1907 = vmul.f32 %v1875, %v1875
        %v1908 = vmul.f32 %v1876, %v1876
        %v1909 = vmul.f32 %v1877, %v1877
        %v1910 = vmul.f32 %v1878, %v1878
        %v1911 = vmul.f32 %v1879, %v1879
        %v1912 = vmul.f32 %v1880, %v1880
        %v1913 = vmul.f32 %v1881, %v1881
        %v1914 = vmul.f32 %v1882, %v1882
        %v1915 = vmul.f32 %v1883, %v1883
        %v1916 = vadd.f32 %v1884, %v1885
        %v1917 = vadd.f32 %v1916, %v1886
        %v1918 = vadd.f32 %v1917, %v1887
        %v1919 = vadd.f32 %v1918, %v1888
        %v1920 = vadd.f32 %v1919, %v1889
        %v1921 = vadd.f32 %v1920, %v1890
        %v1922 = vadd.f32 %v1921, %v1891
        %v1923 = vadd.f32 %v1922, %v1892
        %v1924 = vadd.f32 %v1923, %v1893
        %v1925 = vadd.f32 %v1924, %v1894
        %v1926 = vadd.f32 %v1925, %v1895
        %v1927 = vadd.f32 %v1926, %v1896
        %v1928 = vadd.f32 %v1927, %v1897
        %v1929 = vadd.f32 %v1928, %v1898
        %v1930 = vadd.f32 %v1929, %v1899
        %v1931 = vadd.f32 %v1930, %v1900
        %v1932 = vadd.f32 %v1931, %v1901
        %v1933 = vadd.f32 %v1932, %v1902
        %v1934 = vadd.f32 %v1933, %v1903
        %v1935 = vadd.f32 %v1934, %v1904
        %v1936 = vadd.f32 %v1935, %v1905
        %v1937 = vadd.f32 %v1936, %v1906
        %v1938 = vadd.f32 %v1937, %v1907
        %v1939 = vadd.f32 %v1938, %v1908
        %v1940 = vadd.f32 %v1939, %v1909
        %v1941 = vadd.f32 %v1940, %v1910
        %v1942 = vadd.f32 %v1941, %v1911
        %v1943 = vadd.f32 %v1942, %v1912
        %v1944 = vadd.f32 %v1943, %v1913
        %v1945 = vadd.f32 %v1944, %v1914
        %v1946 = vadd.f32 %v1945, %v1915
        %v1947 = vrot.slane %v1946, 4
        %v1948 = vadd.f32 %v1946, %v1947
        %v1949 = vrot.slane %v1948, 2
        %v1950 = vadd.f32 %v1948, %v1949
        %v1951 = vrot.slane %v1950, 1
        %v1952 = vadd.f32 %v1950, %v1951
        %v1953 = vmul.f32 %v1952, %v1829
        %1954 = vmatpush.msra.mxu0 %v1360
        %1955 = vmatpush.msra.mxu0 %v1359
        %1956 = vmatpush.msra.mxu0 %v1358
        %1957 = vmatpush.msra.mxu0 %v1357
        %1958 = vmatpush.msra.mxu0 %v1356
        %1959 = vmatpush.msra.mxu0 %v1355
        %1960 = vmatpush.msra.mxu0 %v1354
        %1961 = vmatpush.msra.mxu0 %v1353
        %1962 = vmatpush.msra.mxu0 %v1352
        %1963 = vmatpush.msra.mxu0 %v1351
        %1964 = vmatpush.msra.mxu0 %v1350
        %1965 = vmatpush.msra.mxu0 %v1349
        %1966 = vmatpush.msra.mxu0 %v1348
        %1967 = vmatpush.msra.mxu0 %v1347
        %1968 = vmatpush.msra.mxu0 %v1346
        %1969 = vmatpush.msra.mxu0 %v1345
        %1970 = vmatmul.f32.gmra.mxu0 %v1953
        %v1971 = vpop.f32.mrf.mxu0
        %v1972 = vadd.f32 1e-05, %v1971
        %1973 = vdwg.mxu0
        %v1974 = vrsqrt.pop %v1972
        %v1975 = vmul.f32 %v1974, %v1972
        %v1976 = vmul.f32 %v1975, %v1974
        %v1977 = vmul.f32 0.5, %v1976
        %v1978 = vsub.f32 1.5, %v1977
        %v1979 = vmul.f32 %v1974, %v1978
        %vm1980 = vweird.f32 %v1972
        %vm1981 = vweird.f32 %v1974
        %vm1982 = vmor %vm1980, %vm1981
        %v1983 = vsel %vm1982, %v1974, %v1979
        %v1984 = vperm.slane %v1983, 0
        %v1985 = vmul.f32 %v1852, %v1984
        %v1986 = vmul.f32 %v1853, %v1984
        %v1987 = vmul.f32 %v1854, %v1984
        %v1988 = vmul.f32 %v1855, %v1984
        %v1989 = vmul.f32 %v1856, %v1984
        %v1990 = vmul.f32 %v1857, %v1984
        %v1991 = vmul.f32 %v1858, %v1984
        %v1992 = vmul.f32 %v1859, %v1984
        %v1993 = vmul.f32 %v1860, %v1984
        %v1994 = vmul.f32 %v1861, %v1984
        %v1995 = vmul.f32 %v1862, %v1984
        %v1996 = vmul.f32 %v1863, %v1984
        %v1997 = vmul.f32 %v1864, %v1984
        %v1998 = vmul.f32 %v1865, %v1984
        %v1999 = vmul.f32 %v1866, %v1984
        %v2000 = vmul.f32 %v1867, %v1984
        %v2001 = vmul.f32 %v1868, %v1984
        %v2002 = vmul.f32 %v1869, %v1984
        %v2003 = vmul.f32 %v1870, %v1984
        %v2004 = vmul.f32 %v1871, %v1984
        %v2005 = vmul.f32 %v1872, %v1984
        %v2006 = vmul.f32 %v1873, %v1984
        %v2007 = vmul.f32 %v1874, %v1984
        %v2008 = vmul.f32 %v1875, %v1984
        %v2009 = vmul.f32 %v1876, %v1984
        %v2010 = vmul.f32 %v1877, %v1984
        %v2011 = vmul.f32 %v1878, %v1984
        %v2012 = vmul.f32 %v1879, %v1984
        %v2013 = vmul.f32 %v1880, %v1984
        %v2014 = vmul.f32 %v1881, %v1984
        %v2015 = vmul.f32 %v1882, %v1984
        %v2016 = vmul.f32 %v1883, %v1984
        %v2018 = vperm.slane %v1621, 0
        %v2020 = vmul.f32 %v1985, %v2018
        %v2021 = vmul.f32 %v1986, %v2018
        %v2022 = vmul.f32 %v1987, %v2018
        %v2023 = vmul.f32 %v1988, %v2018
        %v2024 = vmul.f32 %v1989, %v2018
        %v2025 = vmul.f32 %v1990, %v2018
        %v2026 = vmul.f32 %v1991, %v2018
        %v2027 = vmul.f32 %v1992, %v2018
        %v2028 = vmul.f32 %v1993, %v2018
        %v2029 = vmul.f32 %v1994, %v2018
        %v2030 = vmul.f32 %v1995, %v2018
        %v2031 = vmul.f32 %v1996, %v2018
        %v2032 = vmul.f32 %v1997, %v2018
        %v2033 = vmul.f32 %v1998, %v2018
        %v2034 = vmul.f32 %v1999, %v2018
        %v2035 = vmul.f32 %v2000, %v2018
        %v2036 = vmul.f32 %v2001, %v2018
        %v2037 = vmul.f32 %v2002, %v2018
        %v2038 = vmul.f32 %v2003, %v2018
        %v2039 = vmul.f32 %v2004, %v2018
        %v2040 = vmul.f32 %v2005, %v2018
        %v2041 = vmul.f32 %v2006, %v2018
        %v2042 = vmul.f32 %v2007, %v2018
        %v2043 = vmul.f32 %v2008, %v2018
        %v2044 = vmul.f32 %v2009, %v2018
        %v2045 = vmul.f32 %v2010, %v2018
        %v2046 = vmul.f32 %v2011, %v2018
        %v2047 = vmul.f32 %v2012, %v2018
        %v2048 = vmul.f32 %v2013, %v2018
        %v2049 = vmul.f32 %v2014, %v2018
        %v2050 = vmul.f32 %v2015, %v2018
        %v2051 = vmul.f32 %v2016, %v2018
        %v2053 = vperm.slane %v1622, 0
        %v2055 = vadd.f32 %v2020, %v2053
        %v2056 = vadd.f32 %v2021, %v2053
        %v2057 = vadd.f32 %v2022, %v2053
        %v2058 = vadd.f32 %v2023, %v2053
        %v2059 = vadd.f32 %v2024, %v2053
        %v2060 = vadd.f32 %v2025, %v2053
        %v2061 = vadd.f32 %v2026, %v2053
        %v2062 = vadd.f32 %v2027, %v2053
        %v2063 = vadd.f32 %v2028, %v2053
        %v2064 = vadd.f32 %v2029, %v2053
        %v2065 = vadd.f32 %v2030, %v2053
        %v2066 = vadd.f32 %v2031, %v2053
        %v2067 = vadd.f32 %v2032, %v2053
        %v2068 = vadd.f32 %v2033, %v2053
        %v2069 = vadd.f32 %v2034, %v2053
        %v2070 = vadd.f32 %v2035, %v2053
        %v2071 = vadd.f32 %v2036, %v2053
        %v2072 = vadd.f32 %v2037, %v2053
        %v2073 = vadd.f32 %v2038, %v2053
        %v2074 = vadd.f32 %v2039, %v2053
        %v2075 = vadd.f32 %v2040, %v2053
        %v2076 = vadd.f32 %v2041, %v2053
        %v2077 = vadd.f32 %v2042, %v2053
        %v2078 = vadd.f32 %v2043, %v2053
        %v2079 = vadd.f32 %v2044, %v2053
        %v2080 = vadd.f32 %v2045, %v2053
        %v2081 = vadd.f32 %v2046, %v2053
        %v2082 = vadd.f32 %v2047, %v2053
        %v2083 = vadd.f32 %v2048, %v2053
        %v2084 = vadd.f32 %v2049, %v2053
        %v2085 = vadd.f32 %v2050, %v2053
        %v2086 = vadd.f32 %v2051, %v2053
        %2087 = vst [vmem:[#allocation2 + $0x40] sm:$0xff] %v2055
        %2088 = vst [vmem:[#allocation2 + $0x48] sm:$0xff] %v2056
        %2089 = vst [vmem:[#allocation2 + $0x50] sm:$0xff] %v2057
        %2090 = vst [vmem:[#allocation2 + $0x58] sm:$0xff] %v2058
        %2091 = vst [vmem:[#allocation2 + $0x60] sm:$0xff] %v2059
        %2092 = vst [vmem:[#allocation2 + $0x68] sm:$0xff] %v2060
        %2093 = vst [vmem:[#allocation2 + $0x70] sm:$0xff] %v2061
        %2094 = vst [vmem:[#allocation2 + $0x78] sm:$0xff] %v2062
        %2095 = vst [vmem:[#allocation2 + $0x80] sm:$0xff] %v2063
        %2096 = vst [vmem:[#allocation2 + $0x88] sm:$0xff] %v2064
        %2097 = vst [vmem:[#allocation2 + $0x90] sm:$0xff] %v2065
        %2098 = vst [vmem:[#allocation2 + $0x98] sm:$0xff] %v2066
        %2099 = vst [vmem:[#allocation2 + $0xa0] sm:$0xff] %v2067
        %2100 = vst [vmem:[#allocation2 + $0xa8] sm:$0xff] %v2068
        %2101 = vst [vmem:[#allocation2 + $0xb0] sm:$0xff] %v2069
        %2102 = vst [vmem:[#allocation2 + $0xb8] sm:$0xff] %v2070
        %2103 = vst [vmem:[#allocation2 + $0xc0] sm:$0xff] %v2071
        %2104 = vst [vmem:[#allocation2 + $0xc8] sm:$0xff] %v2072
        %2105 = vst [vmem:[#allocation2 + $0xd0] sm:$0xff] %v2073
        %2106 = vst [vmem:[#allocation2 + $0xd8] sm:$0xff] %v2074
        %2107 = vst [vmem:[#allocation2 + $0xe0] sm:$0xff] %v2075
        %2108 = vst [vmem:[#allocation2 + $0xe8] sm:$0xff] %v2076
        %2109 = vst [vmem:[#allocation2 + $0xf0] sm:$0xff] %v2077
        %2110 = vst [vmem:[#allocation2 + $0xf8] sm:$0xff] %v2078
        %2111 = vst [vmem:[#allocation2 + $0x100] sm:$0xff] %v2079
        %2112 = vst [vmem:[#allocation2 + $0x108] sm:$0xff] %v2080
        %2113 = vst [vmem:[#allocation2 + $0x110] sm:$0xff] %v2081
        %2114 = vst [vmem:[#allocation2 + $0x118] sm:$0xff] %v2082
        %2115 = vst [vmem:[#allocation2 + $0x120] sm:$0xff] %v2083
        %2116 = vst [vmem:[#allocation2 + $0x128] sm:$0xff] %v2084
        %2117 = vst [vmem:[#allocation2 + $0x130] sm:$0xff] %v2085
        %2118 = vst [vmem:[#allocation2 + $0x138] sm:$0xff] %v2086
        %2119 = vst [vmem:[#allocation2 + $0x140] sm:$0xff] 0.0
        %2120 = vst [vmem:[#allocation2 + $0x148] sm:$0xff] 0.0
        %2121 = vst [vmem:[#allocation2 + $0x150] sm:$0xff] 0.0
        %2122 = vst [vmem:[#allocation2 + $0x158] sm:$0xff] 0.0
        %2123 = vst [vmem:[#allocation2 + $0x160] sm:$0xff] 0.0
        %2124 = vst [vmem:[#allocation2 + $0x168] sm:$0xff] 0.0
        %2125 = vst [vmem:[#allocation2 + $0x170] sm:$0xff] 0.0
        %2126 = vst [vmem:[#allocation2 + $0x178] sm:$0xff] 0.0
        %v2127 = vld [vmem:[#allocation2] sm:$0xff]
        %v2128 = vld [vmem:[#allocation2 + $0x8] sm:$0xff]
        %v2129 = vld [vmem:[#allocation2 + $0x10] sm:$0xff]
        %v2130 = vld [vmem:[#allocation2 + $0x18] sm:$0xff]
        %v2131 = vld [vmem:[#allocation2 + $0x20] sm:$0xff]
        %v2132 = vld [vmem:[#allocation2 + $0x28] sm:$0xff]
        %v2133 = vld [vmem:[#allocation2 + $0x30] sm:$0xff]
        %v2134 = vld [vmem:[#allocation2 + $0x38] sm:$0xff]
        %v2135 = vld [vmem:[#allocation2 + $0x40] sm:$0xff]
        %v2136 = vld [vmem:[#allocation2 + $0x48] sm:$0xff]
        %v2137 = vld [vmem:[#allocation2 + $0x50] sm:$0xff]
        %v2138 = vld [vmem:[#allocation2 + $0x58] sm:$0xff]
        %v2139 = vld [vmem:[#allocation2 + $0x60] sm:$0xff]
        %v2140 = vld [vmem:[#allocation2 + $0x68] sm:$0xff]
        %v2141 = vld [vmem:[#allocation2 + $0x70] sm:$0xff]
        %v2142 = vld [vmem:[#allocation2 + $0x78] sm:$0xff]
        %v2143 = vld [vmem:[#allocation2 + $0x80] sm:$0xff]
        %v2144 = vld [vmem:[#allocation2 + $0x88] sm:$0xff]
        %v2145 = vld [vmem:[#allocation2 + $0x90] sm:$0xff]
        %v2146 = vld [vmem:[#allocation2 + $0x98] sm:$0xff]
        %v2147 = vld [vmem:[#allocation2 + $0xa0] sm:$0xff]
        %v2148 = vld [vmem:[#allocation2 + $0xa8] sm:$0xff]
        %v2149 = vld [vmem:[#allocation2 + $0xb0] sm:$0xff]
        %v2150 = vld [vmem:[#allocation2 + $0xb8] sm:$0xff]
        %v2151 = vld [vmem:[#allocation2 + $0xc0] sm:$0xff]
        %v2152 = vld [vmem:[#allocation2 + $0xc8] sm:$0xff]
        %v2153 = vld [vmem:[#allocation2 + $0xd0] sm:$0xff]
        %v2154 = vld [vmem:[#allocation2 + $0xd8] sm:$0xff]
        %v2155 = vld [vmem:[#allocation2 + $0xe0] sm:$0xff]
        %v2156 = vld [vmem:[#allocation2 + $0xe8] sm:$0xff]
        %v2157 = vld [vmem:[#allocation2 + $0xf0] sm:$0xff]
        %v2158 = vld [vmem:[#allocation2 + $0xf8] sm:$0xff]
        %v2159 = vld [vmem:[#allocation2 + $0x100] sm:$0xff]
        %v2160 = vld [vmem:[#allocation2 + $0x108] sm:$0xff]
        %v2161 = vld [vmem:[#allocation2 + $0x110] sm:$0xff]
        %v2162 = vld [vmem:[#allocation2 + $0x118] sm:$0xff]
        %v2163 = vld [vmem:[#allocation2 + $0x120] sm:$0xff]
        %v2164 = vld [vmem:[#allocation2 + $0x128] sm:$0xff]
        %v2165 = vld [vmem:[#allocation2 + $0x130] sm:$0xff]
        %v2166 = vld [vmem:[#allocation2 + $0x138] sm:$0xff]
        %v2167 = vld [vmem:[#allocation2 + $0x140] sm:$0xff]
        %v2168 = vld [vmem:[#allocation2 + $0x148] sm:$0xff]
        %v2169 = vld [vmem:[#allocation2 + $0x150] sm:$0xff]
        %v2170 = vld [vmem:[#allocation2 + $0x158] sm:$0xff]
        %v2171 = vld [vmem:[#allocation2 + $0x160] sm:$0xff]
        %v2172 = vld [vmem:[#allocation2 + $0x168] sm:$0xff]
        %v2173 = vld [vmem:[#allocation2 + $0x170] sm:$0xff]
        %v2174 = vld [vmem:[#allocation2 + $0x178] sm:$0xff]
        %v2175 = vpack.c.bf16 %v2128, %v2127
        %v2176 = vpack.c.bf16 %v2130, %v2129
        %v2177 = vpack.c.bf16 %v2132, %v2131
        %v2178 = vpack.c.bf16 %v2134, %v2133
        %v2179 = vpack.c.bf16 %v2136, %v2135
        %v2180 = vpack.c.bf16 %v2138, %v2137
        %v2181 = vpack.c.bf16 %v2140, %v2139
        %v2182 = vpack.c.bf16 %v2142, %v2141
        %v2183 = vpack.c.bf16 %v2144, %v2143
        %v2184 = vpack.c.bf16 %v2146, %v2145
        %v2185 = vpack.c.bf16 %v2148, %v2147
        %v2186 = vpack.c.bf16 %v2150, %v2149
        %v2187 = vpack.c.bf16 %v2152, %v2151
        %v2188 = vpack.c.bf16 %v2154, %v2153
        %v2189 = vpack.c.bf16 %v2156, %v2155
        %v2190 = vpack.c.bf16 %v2158, %v2157
        %v2191 = vpack.c.bf16 %v2160, %v2159
        %v2192 = vpack.c.bf16 %v2162, %v2161
        %v2193 = vpack.c.bf16 %v2164, %v2163
        %v2194 = vpack.c.bf16 %v2166, %v2165
        %v2195 = vpack.c.bf16 %v2168, %v2167
        %v2196 = vpack.c.bf16 %v2170, %v2169
        %v2197 = vpack.c.bf16 %v2172, %v2171
        %v2198 = vpack.c.bf16 %v2174, %v2173
        %v2199 = vld [vmem:[%s31] sm:$0xff]
        %v2200 = vld [vmem:[%s31 + $0x8] sm:$0xff]
        %v2201 = vld [vmem:[%s31 + $0x10] sm:$0xff]
        %v2202 = vld [vmem:[%s31 + $0x18] sm:$0xff]
        %v2203 = vld [vmem:[%s31 + $0x20] sm:$0xff]
        %v2204 = vld [vmem:[%s31 + $0x28] sm:$0xff]
        %v2205 = vld [vmem:[%s31 + $0x30] sm:$0xff]
        %v2206 = vld [vmem:[%s31 + $0x38] sm:$0xff]
        %v2207 = vld [vmem:[%s31 + $0x40] sm:$0xff]
        %v2208 = vld [vmem:[%s31 + $0x48] sm:$0xff]
        %v2209 = vld [vmem:[%s31 + $0x50] sm:$0xff]
        %v2210 = vld [vmem:[%s31 + $0x58] sm:$0xff]
        %v2211 = vld [vmem:[%s31 + $0x60] sm:$0xff]
        %v2212 = vld [vmem:[%s31 + $0x68] sm:$0xff]
        %v2213 = vld [vmem:[%s31 + $0x70] sm:$0xff]
        %v2214 = vld [vmem:[%s31 + $0x78] sm:$0xff]
        %v2215 = vld [vmem:[%s31 + $0x80] sm:$0xff]
        %v2216 = vld [vmem:[%s31 + $0x88] sm:$0xff]
        %v2217 = vld [vmem:[%s31 + $0x90] sm:$0xff]
        %v2218 = vld [vmem:[%s31 + $0x98] sm:$0xff]
        %v2219 = vld [vmem:[%s31 + $0xa0] sm:$0xff]
        %v2220 = vld [vmem:[%s31 + $0xa8] sm:$0xff]
        %v2221 = vld [vmem:[%s31 + $0xb0] sm:$0xff]
        %v2222 = vld [vmem:[%s31 + $0xb8] sm:$0xff]
        %v2223 = vld [vmem:[%s31 + $0xc0] sm:$0xff]
        %v2224 = vld [vmem:[%s31 + $0xc8] sm:$0xff]
        %v2225 = vld [vmem:[%s31 + $0xd0] sm:$0xff]
        %v2226 = vld [vmem:[%s31 + $0xd8] sm:$0xff]
        %v2227 = vld [vmem:[%s31 + $0xe0] sm:$0xff]
        %v2228 = vld [vmem:[%s31 + $0xe8] sm:$0xff]
        %v2229 = vld [vmem:[%s31 + $0xf0] sm:$0xff]
        %v2230 = vld [vmem:[%s31 + $0xf8] sm:$0xff]
        %v2231 = vld [vmem:[#allocation18] sm:$0xff]
        %v2232 = vld [vmem:[#allocation18 + $0x8] sm:$0xff]
        %v2233 = vld [vmem:[#allocation18 + $0x10] sm:$0xff]
        %v2234 = vld [vmem:[#allocation18 + $0x18] sm:$0xff]
        %v2235 = vld [vmem:[#allocation18 + $0x20] sm:$0xff]
        %v2236 = vld [vmem:[#allocation18 + $0x28] sm:$0xff]
        %v2237 = vld [vmem:[#allocation18 + $0x30] sm:$0xff]
        %v2238 = vld [vmem:[#allocation18 + $0x38] sm:$0xff]
        %v2239 = vld [vmem:[#allocation18 + $0x40] sm:$0xff]
        %v2240 = vld [vmem:[#allocation18 + $0x48] sm:$0xff]
        %v2241 = vld [vmem:[#allocation18 + $0x50] sm:$0xff]
        %v2242 = vld [vmem:[#allocation18 + $0x58] sm:$0xff]
        %v2243 = vld [vmem:[#allocation18 + $0x60] sm:$0xff]
        %v2244 = vld [vmem:[#allocation18 + $0x68] sm:$0xff]
        %v2245 = vld [vmem:[#allocation18 + $0x70] sm:$0xff]
        %v2246 = vld [vmem:[#allocation18 + $0x78] sm:$0xff]
        %v2247 = vld [vmem:[#allocation18 + $0x80] sm:$0xff]
        %v2248 = vld [vmem:[#allocation18 + $0x88] sm:$0xff]
        %v2249 = vld [vmem:[#allocation18 + $0x90] sm:$0xff]
        %v2250 = vld [vmem:[#allocation18 + $0x98] sm:$0xff]
        %v2251 = vld [vmem:[#allocation18 + $0xa0] sm:$0xff]
        %v2252 = vld [vmem:[#allocation18 + $0xa8] sm:$0xff]
        %v2253 = vld [vmem:[#allocation18 + $0xb0] sm:$0xff]
        %v2254 = vld [vmem:[#allocation18 + $0xb8] sm:$0xff]
        %v2255 = vld [vmem:[#allocation18 + $0xc0] sm:$0xff]
        %v2256 = vld [vmem:[#allocation18 + $0xc8] sm:$0xff]
        %v2257 = vld [vmem:[#allocation18 + $0xd0] sm:$0xff]
        %v2258 = vld [vmem:[#allocation18 + $0xd8] sm:$0xff]
        %v2259 = vld [vmem:[#allocation18 + $0xe0] sm:$0xff]
        %v2260 = vld [vmem:[#allocation18 + $0xe8] sm:$0xff]
        %v2261 = vld [vmem:[#allocation18 + $0xf0] sm:$0xff]
        %v2262 = vld [vmem:[#allocation18 + $0xf8] sm:$0xff]
        %v2263 = vld [vmem:[#allocation18 + $0x100] sm:$0xff]
        %v2264 = vld [vmem:[#allocation18 + $0x108] sm:$0xff]
        %v2265 = vld [vmem:[#allocation18 + $0x110] sm:$0xff]
        %v2266 = vld [vmem:[#allocation18 + $0x118] sm:$0xff]
        %v2267 = vld [vmem:[#allocation18 + $0x120] sm:$0xff]
        %v2268 = vld [vmem:[#allocation18 + $0x128] sm:$0xff]
        %v2269 = vld [vmem:[#allocation18 + $0x130] sm:$0xff]
        %v2270 = vld [vmem:[#allocation18 + $0x138] sm:$0xff]
        %v2271 = vld [vmem:[#allocation18 + $0x140] sm:$0xff]
        %v2272 = vld [vmem:[#allocation18 + $0x148] sm:$0xff]
        %v2273 = vld [vmem:[#allocation18 + $0x150] sm:$0xff]
        %v2274 = vld [vmem:[#allocation18 + $0x158] sm:$0xff]
        %v2275 = vld [vmem:[#allocation18 + $0x160] sm:$0xff]
        %v2276 = vld [vmem:[#allocation18 + $0x168] sm:$0xff]
        %v2277 = vld [vmem:[#allocation18 + $0x170] sm:$0xff]
        %v2278 = vld [vmem:[#allocation18 + $0x178] sm:$0xff]
        %v2279 = vld [vmem:[#allocation18 + $0x180] sm:$0xff]
        %v2280 = vld [vmem:[#allocation18 + $0x188] sm:$0xff]
        %v2281 = vld [vmem:[#allocation18 + $0x190] sm:$0xff]
        %v2282 = vld [vmem:[#allocation18 + $0x198] sm:$0xff]
        %v2283 = vld [vmem:[#allocation18 + $0x1a0] sm:$0xff]
        %v2284 = vld [vmem:[#allocation18 + $0x1a8] sm:$0xff]
        %v2285 = vld [vmem:[#allocation18 + $0x1b0] sm:$0xff]
        %v2286 = vld [vmem:[#allocation18 + $0x1b8] sm:$0xff]
        %v2287 = vld [vmem:[#allocation18 + $0x1c0] sm:$0xff]
        %v2288 = vld [vmem:[#allocation18 + $0x1c8] sm:$0xff]
        %v2289 = vld [vmem:[#allocation18 + $0x1d0] sm:$0xff]
        %v2290 = vld [vmem:[#allocation18 + $0x1d8] sm:$0xff]
        %v2291 = vld [vmem:[#allocation18 + $0x1e0] sm:$0xff]
        %v2292 = vld [vmem:[#allocation18 + $0x1e8] sm:$0xff]
        %v2293 = vld [vmem:[#allocation18 + $0x1f0] sm:$0xff]
        %v2294 = vld [vmem:[#allocation18 + $0x1f8] sm:$0xff]
        %v2295 = vld [vmem:[#allocation18 + $0x200] sm:$0xff]
        %v2296 = vld [vmem:[#allocation18 + $0x208] sm:$0xff]
        %v2297 = vld [vmem:[#allocation18 + $0x210] sm:$0xff]
        %v2298 = vld [vmem:[#allocation18 + $0x218] sm:$0xff]
        %v2299 = vld [vmem:[#allocation18 + $0x220] sm:$0xff]
        %v2300 = vld [vmem:[#allocation18 + $0x228] sm:$0xff]
        %v2301 = vld [vmem:[#allocation18 + $0x230] sm:$0xff]
        %v2302 = vld [vmem:[#allocation18 + $0x238] sm:$0xff]
        %v2303 = vld [vmem:[#allocation18 + $0x240] sm:$0xff]
        %v2304 = vld [vmem:[#allocation18 + $0x248] sm:$0xff]
        %v2305 = vld [vmem:[#allocation18 + $0x250] sm:$0xff]
        %v2306 = vld [vmem:[#allocation18 + $0x258] sm:$0xff]
        %v2307 = vld [vmem:[#allocation18 + $0x260] sm:$0xff]
        %v2308 = vld [vmem:[#allocation18 + $0x268] sm:$0xff]
        %v2309 = vld [vmem:[#allocation18 + $0x270] sm:$0xff]
        %v2310 = vld [vmem:[#allocation18 + $0x278] sm:$0xff]
        %v2311 = vld [vmem:[#allocation18 + $0x280] sm:$0xff]
        %v2312 = vld [vmem:[#allocation18 + $0x288] sm:$0xff]
        %v2313 = vld [vmem:[#allocation18 + $0x290] sm:$0xff]
        %v2314 = vld [vmem:[#allocation18 + $0x298] sm:$0xff]
        %v2315 = vld [vmem:[#allocation18 + $0x2a0] sm:$0xff]
        %v2316 = vld [vmem:[#allocation18 + $0x2a8] sm:$0xff]
        %v2317 = vld [vmem:[#allocation18 + $0x2b0] sm:$0xff]
        %v2318 = vld [vmem:[#allocation18 + $0x2b8] sm:$0xff]
        %v2319 = vld [vmem:[#allocation18 + $0x2c0] sm:$0xff]
        %v2320 = vld [vmem:[#allocation18 + $0x2c8] sm:$0xff]
        %v2321 = vld [vmem:[#allocation18 + $0x2d0] sm:$0xff]
        %v2322 = vld [vmem:[#allocation18 + $0x2d8] sm:$0xff]
        %v2323 = vld [vmem:[#allocation18 + $0x2e0] sm:$0xff]
        %v2324 = vld [vmem:[#allocation18 + $0x2e8] sm:$0xff]
        %v2325 = vld [vmem:[#allocation18 + $0x2f0] sm:$0xff]
        %v2326 = vld [vmem:[#allocation18 + $0x2f8] sm:$0xff]
        %v2327 = vld [vmem:[#allocation18 + $0x300] sm:$0xff]
        %v2328 = vld [vmem:[#allocation18 + $0x308] sm:$0xff]
        %v2329 = vld [vmem:[#allocation18 + $0x310] sm:$0xff]
        %v2330 = vld [vmem:[#allocation18 + $0x318] sm:$0xff]
        %v2331 = vld [vmem:[#allocation18 + $0x320] sm:$0xff]
        %v2332 = vld [vmem:[#allocation18 + $0x328] sm:$0xff]
        %v2333 = vld [vmem:[#allocation18 + $0x330] sm:$0xff]
        %v2334 = vld [vmem:[#allocation18 + $0x338] sm:$0xff]
        %v2335 = vld [vmem:[#allocation18 + $0x340] sm:$0xff]
        %v2336 = vld [vmem:[#allocation18 + $0x348] sm:$0xff]
        %v2337 = vld [vmem:[#allocation18 + $0x350] sm:$0xff]
        %v2338 = vld [vmem:[#allocation18 + $0x358] sm:$0xff]
        %v2339 = vld [vmem:[#allocation18 + $0x360] sm:$0xff]
        %v2340 = vld [vmem:[#allocation18 + $0x368] sm:$0xff]
        %v2341 = vld [vmem:[#allocation18 + $0x370] sm:$0xff]
        %v2342 = vld [vmem:[#allocation18 + $0x378] sm:$0xff]
        %v2343 = vld [vmem:[#allocation18 + $0x380] sm:$0xff]
        %v2344 = vld [vmem:[#allocation18 + $0x388] sm:$0xff]
        %v2345 = vld [vmem:[#allocation18 + $0x390] sm:$0xff]
        %v2346 = vld [vmem:[#allocation18 + $0x398] sm:$0xff]
        %v2347 = vld [vmem:[#allocation18 + $0x3a0] sm:$0xff]
        %v2348 = vld [vmem:[#allocation18 + $0x3a8] sm:$0xff]
        %v2349 = vld [vmem:[#allocation18 + $0x3b0] sm:$0xff]
        %v2350 = vld [vmem:[#allocation18 + $0x3b8] sm:$0xff]
        %v2351 = vld [vmem:[#allocation18 + $0x3c0] sm:$0xff]
        %v2352 = vld [vmem:[#allocation18 + $0x3c8] sm:$0xff]
        %v2353 = vld [vmem:[#allocation18 + $0x3d0] sm:$0xff]
        %v2354 = vld [vmem:[#allocation18 + $0x3d8] sm:$0xff]
        %v2355 = vld [vmem:[#allocation18 + $0x3e0] sm:$0xff]
        %v2356 = vld [vmem:[#allocation18 + $0x3e8] sm:$0xff]
        %v2357 = vld [vmem:[#allocation18 + $0x3f0] sm:$0xff]
        %v2358 = vld [vmem:[#allocation18 + $0x3f8] sm:$0xff]
        %v2359 = vld [vmem:[#allocation18 + $0x400] sm:$0xff]
        %v2360 = vld [vmem:[#allocation18 + $0x408] sm:$0xff]
        %v2361 = vld [vmem:[#allocation18 + $0x410] sm:$0xff]
        %v2362 = vld [vmem:[#allocation18 + $0x418] sm:$0xff]
        %v2363 = vld [vmem:[#allocation18 + $0x420] sm:$0xff]
        %v2364 = vld [vmem:[#allocation18 + $0x428] sm:$0xff]
        %v2365 = vld [vmem:[#allocation18 + $0x430] sm:$0xff]
        %v2366 = vld [vmem:[#allocation18 + $0x438] sm:$0xff]
        %v2367 = vld [vmem:[#allocation18 + $0x440] sm:$0xff]
        %v2368 = vld [vmem:[#allocation18 + $0x448] sm:$0xff]
        %v2369 = vld [vmem:[#allocation18 + $0x450] sm:$0xff]
        %v2370 = vld [vmem:[#allocation18 + $0x458] sm:$0xff]
        %v2371 = vld [vmem:[#allocation18 + $0x460] sm:$0xff]
        %v2372 = vld [vmem:[#allocation18 + $0x468] sm:$0xff]
        %v2373 = vld [vmem:[#allocation18 + $0x470] sm:$0xff]
        %v2374 = vld [vmem:[#allocation18 + $0x478] sm:$0xff]
        %v2375 = vld [vmem:[#allocation18 + $0x480] sm:$0xff]
        %v2376 = vld [vmem:[#allocation18 + $0x488] sm:$0xff]
        %v2377 = vld [vmem:[#allocation18 + $0x490] sm:$0xff]
        %v2378 = vld [vmem:[#allocation18 + $0x498] sm:$0xff]
        %v2379 = vld [vmem:[#allocation18 + $0x4a0] sm:$0xff]
        %v2380 = vld [vmem:[#allocation18 + $0x4a8] sm:$0xff]
        %v2381 = vld [vmem:[#allocation18 + $0x4b0] sm:$0xff]
        %v2382 = vld [vmem:[#allocation18 + $0x4b8] sm:$0xff]
        %v2383 = vld [vmem:[#allocation18 + $0x4c0] sm:$0xff]
        %v2384 = vld [vmem:[#allocation18 + $0x4c8] sm:$0xff]
        %v2385 = vld [vmem:[#allocation18 + $0x4d0] sm:$0xff]
        %v2386 = vld [vmem:[#allocation18 + $0x4d8] sm:$0xff]
        %v2387 = vld [vmem:[#allocation18 + $0x4e0] sm:$0xff]
        %v2388 = vld [vmem:[#allocation18 + $0x4e8] sm:$0xff]
        %v2389 = vld [vmem:[#allocation18 + $0x4f0] sm:$0xff]
        %v2390 = vld [vmem:[#allocation18 + $0x4f8] sm:$0xff]
        %v2391 = vld [vmem:[#allocation18 + $0x500] sm:$0xff]
        %v2392 = vld [vmem:[#allocation18 + $0x508] sm:$0xff]
        %v2393 = vld [vmem:[#allocation18 + $0x510] sm:$0xff]
        %v2394 = vld [vmem:[#allocation18 + $0x518] sm:$0xff]
        %v2395 = vld [vmem:[#allocation18 + $0x520] sm:$0xff]
        %v2396 = vld [vmem:[#allocation18 + $0x528] sm:$0xff]
        %v2397 = vld [vmem:[#allocation18 + $0x530] sm:$0xff]
        %v2398 = vld [vmem:[#allocation18 + $0x538] sm:$0xff]
        %v2399 = vld [vmem:[#allocation18 + $0x540] sm:$0xff]
        %v2400 = vld [vmem:[#allocation18 + $0x548] sm:$0xff]
        %v2401 = vld [vmem:[#allocation18 + $0x550] sm:$0xff]
        %v2402 = vld [vmem:[#allocation18 + $0x558] sm:$0xff]
        %v2403 = vld [vmem:[#allocation18 + $0x560] sm:$0xff]
        %v2404 = vld [vmem:[#allocation18 + $0x568] sm:$0xff]
        %v2405 = vld [vmem:[#allocation18 + $0x570] sm:$0xff]
        %v2406 = vld [vmem:[#allocation18 + $0x578] sm:$0xff]
        %v2407 = vld [vmem:[#allocation18 + $0x580] sm:$0xff]
        %v2408 = vld [vmem:[#allocation18 + $0x588] sm:$0xff]
        %v2409 = vld [vmem:[#allocation18 + $0x590] sm:$0xff]
        %v2410 = vld [vmem:[#allocation18 + $0x598] sm:$0xff]
        %v2411 = vld [vmem:[#allocation18 + $0x5a0] sm:$0xff]
        %v2412 = vld [vmem:[#allocation18 + $0x5a8] sm:$0xff]
        %v2413 = vld [vmem:[#allocation18 + $0x5b0] sm:$0xff]
        %v2414 = vld [vmem:[#allocation18 + $0x5b8] sm:$0xff]
        %v2415 = vld [vmem:[#allocation18 + $0x5c0] sm:$0xff]
        %v2416 = vld [vmem:[#allocation18 + $0x5c8] sm:$0xff]
        %v2417 = vld [vmem:[#allocation18 + $0x5d0] sm:$0xff]
        %v2418 = vld [vmem:[#allocation18 + $0x5d8] sm:$0xff]
        %v2419 = vld [vmem:[#allocation18 + $0x5e0] sm:$0xff]
        %v2420 = vld [vmem:[#allocation18 + $0x5e8] sm:$0xff]
        %v2421 = vld [vmem:[#allocation18 + $0x5f0] sm:$0xff]
        %v2422 = vld [vmem:[#allocation18 + $0x5f8] sm:$0xff]
        %v2455 = vunpack.c.l.b16 %v2199
        %v2456 = vunpack.c.h.b16 %v2199
        %v2457 = vunpack.c.l.b16 %v2200
        %v2458 = vunpack.c.h.b16 %v2200
        %v2459 = vunpack.c.l.b16 %v2201
        %v2460 = vunpack.c.h.b16 %v2201
        %v2461 = vunpack.c.l.b16 %v2202
        %v2462 = vunpack.c.h.b16 %v2202
        %v2463 = vunpack.c.l.b16 %v2203
        %v2464 = vunpack.c.h.b16 %v2203
        %v2465 = vunpack.c.l.b16 %v2204
        %v2466 = vunpack.c.h.b16 %v2204
        %v2467 = vunpack.c.l.b16 %v2205
        %v2468 = vunpack.c.h.b16 %v2205
        %v2469 = vunpack.c.l.b16 %v2206
        %v2470 = vunpack.c.h.b16 %v2206
        %v2471 = vunpack.c.l.b16 %v2207
        %v2472 = vunpack.c.h.b16 %v2207
        %v2473 = vunpack.c.l.b16 %v2208
        %v2474 = vunpack.c.h.b16 %v2208
        %v2475 = vunpack.c.l.b16 %v2209
        %v2476 = vunpack.c.h.b16 %v2209
        %v2477 = vunpack.c.l.b16 %v2210
        %v2478 = vunpack.c.h.b16 %v2210
        %v2479 = vunpack.c.l.b16 %v2211
        %v2480 = vunpack.c.h.b16 %v2211
        %v2481 = vunpack.c.l.b16 %v2212
        %v2482 = vunpack.c.h.b16 %v2212
        %v2483 = vunpack.c.l.b16 %v2213
        %v2484 = vunpack.c.h.b16 %v2213
        %v2485 = vunpack.c.l.b16 %v2214
        %v2486 = vunpack.c.h.b16 %v2214
        %v2487 = vunpack.c.l.b16 %v2215
        %v2488 = vunpack.c.h.b16 %v2215
        %v2489 = vunpack.c.l.b16 %v2216
        %v2490 = vunpack.c.h.b16 %v2216
        %v2491 = vunpack.c.l.b16 %v2217
        %v2492 = vunpack.c.h.b16 %v2217
        %v2493 = vunpack.c.l.b16 %v2218
        %v2494 = vunpack.c.h.b16 %v2218
        %v2495 = vunpack.c.l.b16 %v2219
        %v2496 = vunpack.c.h.b16 %v2219
        %v2497 = vunpack.c.l.b16 %v2220
        %v2498 = vunpack.c.h.b16 %v2220
        %v2499 = vunpack.c.l.b16 %v2221
        %v2500 = vunpack.c.h.b16 %v2221
        %v2501 = vunpack.c.l.b16 %v2222
        %v2502 = vunpack.c.h.b16 %v2222
        %v2503 = vunpack.c.l.b16 %v2223
        %v2504 = vunpack.c.h.b16 %v2223
        %v2505 = vunpack.c.l.b16 %v2224
        %v2506 = vunpack.c.h.b16 %v2224
        %v2507 = vunpack.c.l.b16 %v2225
        %v2508 = vunpack.c.h.b16 %v2225
        %v2509 = vunpack.c.l.b16 %v2226
        %v2510 = vunpack.c.h.b16 %v2226
        %v2511 = vunpack.c.l.b16 %v2227
        %v2512 = vunpack.c.h.b16 %v2227
        %v2513 = vunpack.c.l.b16 %v2228
        %v2514 = vunpack.c.h.b16 %v2228
        %v2515 = vunpack.c.l.b16 %v2229
        %v2516 = vunpack.c.h.b16 %v2229
        %v2517 = vunpack.c.l.b16 %v2230
        %v2518 = vunpack.c.h.b16 %v2230
        %v2519 = vpack.c.b16 %v2459, %v2455
        %v2520 = vpack.c.b16 %v2460, %v2456
        %v2521 = vpack.c.b16 %v2461, %v2457
        %v2522 = vpack.c.b16 %v2462, %v2458
        %v2523 = vpack.c.b16 %v2467, %v2463
        %v2524 = vpack.c.b16 %v2468, %v2464
        %v2525 = vpack.c.b16 %v2469, %v2465
        %v2526 = vpack.c.b16 %v2470, %v2466
        %v2527 = vpack.c.b16 %v2475, %v2471
        %v2528 = vpack.c.b16 %v2476, %v2472
        %v2529 = vpack.c.b16 %v2477, %v2473
        %v2530 = vpack.c.b16 %v2478, %v2474
        %v2531 = vpack.c.b16 %v2483, %v2479
        %v2532 = vpack.c.b16 %v2484, %v2480
        %v2533 = vpack.c.b16 %v2485, %v2481
        %v2534 = vpack.c.b16 %v2486, %v2482
        %v2535 = vpack.c.b16 %v2491, %v2487
        %v2536 = vpack.c.b16 %v2492, %v2488
        %v2537 = vpack.c.b16 %v2493, %v2489
        %v2538 = vpack.c.b16 %v2494, %v2490
        %v2539 = vpack.c.b16 %v2499, %v2495
        %v2540 = vpack.c.b16 %v2500, %v2496
        %v2541 = vpack.c.b16 %v2501, %v2497
        %v2542 = vpack.c.b16 %v2502, %v2498
        %v2543 = vpack.c.b16 %v2507, %v2503
        %v2544 = vpack.c.b16 %v2508, %v2504
        %v2545 = vpack.c.b16 %v2509, %v2505
        %v2546 = vpack.c.b16 %v2510, %v2506
        %v2547 = vpack.c.b16 %v2515, %v2511
        %v2548 = vpack.c.b16 %v2516, %v2512
        %v2549 = vpack.c.b16 %v2517, %v2513
        %v2550 = vpack.c.b16 %v2518, %v2514
        %2583 = vmatpush.bf16.msra.mxu0 %v2547
        %2584 = vmatpush.bf16.msra.mxu0 %v2543
        %2585 = vmatpush.bf16.msra.mxu0 %v2539
        %2586 = vmatpush.bf16.msra.mxu0 %v2535
        %2587 = vmatpush.bf16.msra.mxu0 %v2531
        %2588 = vmatpush.bf16.msra.mxu0 %v2527
        %2589 = vmatpush.bf16.msra.mxu0 %v2523
        %2590 = vmatpush.bf16.msra.mxu0 %v2519
        %2591 = vmatmul.bf16.gmra.mxu0 %v2175
        %v2592 = vpop.f32.mrf.mxu0
        %v2593 = vadd.f32 %v2231, %v2592
        %v2594 = vpop.f32.mrf.mxu0
        %v2595 = vadd.f32 %v2235, %v2594
        %2596 = vmatmul.bf16.gmra.mxu0 %v2176
        %v2597 = vpop.f32.mrf.mxu0
        %v2598 = vadd.f32 %v2239, %v2597
        %v2599 = vpop.f32.mrf.mxu0
        %v2600 = vadd.f32 %v2243, %v2599
        %2601 = vmatmul.bf16.gmra.mxu0 %v2177
        %v2602 = vpop.f32.mrf.mxu0
        %v2603 = vadd.f32 %v2247, %v2602
        %v2604 = vpop.f32.mrf.mxu0
        %v2605 = vadd.f32 %v2251, %v2604
        %2606 = vmatmul.bf16.gmra.mxu0 %v2178
        %v2607 = vpop.f32.mrf.mxu0
        %v2608 = vadd.f32 %v2255, %v2607
        %v2609 = vpop.f32.mrf.mxu0
        %v2610 = vadd.f32 %v2259, %v2609
        %2611 = vmatmul.bf16.gmra.mxu0 %v2179
        %v2612 = vpop.f32.mrf.mxu0
        %v2613 = vadd.f32 %v2263, %v2612
        %v2614 = vpop.f32.mrf.mxu0
        %v2615 = vadd.f32 %v2267, %v2614
        %2616 = vmatmul.bf16.gmra.mxu0 %v2180
        %v2617 = vpop.f32.mrf.mxu0
        %v2618 = vadd.f32 %v2271, %v2617
        %v2619 = vpop.f32.mrf.mxu0
        %v2620 = vadd.f32 %v2275, %v2619
        %2621 = vmatmul.bf16.gmra.mxu0 %v2181
        %v2622 = vpop.f32.mrf.mxu0
        %v2623 = vadd.f32 %v2279, %v2622
        %v2624 = vpop.f32.mrf.mxu0
        %v2625 = vadd.f32 %v2283, %v2624
        %2626 = vmatmul.bf16.gmra.mxu0 %v2182
        %v2627 = vpop.f32.mrf.mxu0
        %v2628 = vadd.f32 %v2287, %v2627
        %v2629 = vpop.f32.mrf.mxu0
        %v2630 = vadd.f32 %v2291, %v2629
        %2631 = vmatmul.bf16.gmra.mxu0 %v2183
        %v2632 = vpop.f32.mrf.mxu0
        %v2633 = vadd.f32 %v2295, %v2632
        %v2634 = vpop.f32.mrf.mxu0
        %v2635 = vadd.f32 %v2299, %v2634
        %2636 = vmatmul.bf16.gmra.mxu0 %v2184
        %v2637 = vpop.f32.mrf.mxu0
        %v2638 = vadd.f32 %v2303, %v2637
        %v2639 = vpop.f32.mrf.mxu0
        %v2640 = vadd.f32 %v2307, %v2639
        %2641 = vmatmul.bf16.gmra.mxu0 %v2185
        %v2642 = vpop.f32.mrf.mxu0
        %v2643 = vadd.f32 %v2311, %v2642
        %v2644 = vpop.f32.mrf.mxu0
        %v2645 = vadd.f32 %v2315, %v2644
        %2646 = vmatmul.bf16.gmra.mxu0 %v2186
        %v2647 = vpop.f32.mrf.mxu0
        %v2648 = vadd.f32 %v2319, %v2647
        %v2649 = vpop.f32.mrf.mxu0
        %v2650 = vadd.f32 %v2323, %v2649
        %2651 = vmatmul.bf16.gmra.mxu0 %v2187
        %v2652 = vpop.f32.mrf.mxu0
        %v2653 = vadd.f32 %v2327, %v2652
        %v2654 = vpop.f32.mrf.mxu0
        %v2655 = vadd.f32 %v2331, %v2654
        %2656 = vmatmul.bf16.gmra.mxu0 %v2188
        %v2657 = vpop.f32.mrf.mxu0
        %v2658 = vadd.f32 %v2335, %v2657
        %v2659 = vpop.f32.mrf.mxu0
        %v2660 = vadd.f32 %v2339, %v2659
        %2661 = vmatmul.bf16.gmra.mxu0 %v2189
        %v2662 = vpop.f32.mrf.mxu0
        %v2663 = vadd.f32 %v2343, %v2662
        %v2664 = vpop.f32.mrf.mxu0
        %v2665 = vadd.f32 %v2347, %v2664
        %2666 = vmatmul.bf16.gmra.mxu0 %v2190
        %v2667 = vpop.f32.mrf.mxu0
        %v2668 = vadd.f32 %v2351, %v2667
        %v2669 = vpop.f32.mrf.mxu0
        %v2670 = vadd.f32 %v2355, %v2669
        %2671 = vmatmul.bf16.gmra.mxu0 %v2191
        %v2672 = vpop.f32.mrf.mxu0
        %v2673 = vadd.f32 %v2359, %v2672
        %v2674 = vpop.f32.mrf.mxu0
        %v2675 = vadd.f32 %v2363, %v2674
        %2676 = vmatmul.bf16.gmra.mxu0 %v2192
        %v2677 = vpop.f32.mrf.mxu0
        %v2678 = vadd.f32 %v2367, %v2677
        %v2679 = vpop.f32.mrf.mxu0
        %v2680 = vadd.f32 %v2371, %v2679
        %2681 = vmatmul.bf16.gmra.mxu0 %v2193
        %v2682 = vpop.f32.mrf.mxu0
        %v2683 = vadd.f32 %v2375, %v2682
        %v2684 = vpop.f32.mrf.mxu0
        %v2685 = vadd.f32 %v2379, %v2684
        %2686 = vmatmul.bf16.gmra.mxu0 %v2194
        %v2687 = vpop.f32.mrf.mxu0
        %v2688 = vadd.f32 %v2383, %v2687
        %v2689 = vpop.f32.mrf.mxu0
        %v2690 = vadd.f32 %v2387, %v2689
        %2691 = vmatmul.bf16.gmra.mxu0 %v2195
        %v2692 = vpop.f32.mrf.mxu0
        %v2693 = vadd.f32 %v2391, %v2692
        %v2694 = vpop.f32.mrf.mxu0
        %v2695 = vadd.f32 %v2395, %v2694
        %2696 = vmatmul.bf16.gmra.mxu0 %v2196
        %v2697 = vpop.f32.mrf.mxu0
        %v2698 = vadd.f32 %v2399, %v2697
        %v2699 = vpop.f32.mrf.mxu0
        %v2700 = vadd.f32 %v2403, %v2699
        %2701 = vmatmul.bf16.gmra.mxu0 %v2197
        %v2702 = vpop.f32.mrf.mxu0
        %v2703 = vadd.f32 %v2407, %v2702
        %v2704 = vpop.f32.mrf.mxu0
        %v2705 = vadd.f32 %v2411, %v2704
        %2706 = vmatmul.bf16.gmra.mxu0 %v2198
        %v2707 = vpop.f32.mrf.mxu0
        %v2708 = vadd.f32 %v2415, %v2707
        %v2709 = vpop.f32.mrf.mxu0
        %v2710 = vadd.f32 %v2419, %v2709
        %2711 = vdwg.mxu0
        %2712 = vmatpush.bf16.msra.mxu0 %v2548
        %2713 = vmatpush.bf16.msra.mxu0 %v2544
        %2714 = vmatpush.bf16.msra.mxu0 %v2540
        %2715 = vmatpush.bf16.msra.mxu0 %v2536
        %2716 = vmatpush.bf16.msra.mxu0 %v2532
        %2717 = vmatpush.bf16.msra.mxu0 %v2528
        %2718 = vmatpush.bf16.msra.mxu0 %v2524
        %2719 = vmatpush.bf16.msra.mxu0 %v2520
        %2720 = vmatmul.bf16.gmra.mxu0 %v2175
        %v2721 = vpop.f32.mrf.mxu0
        %v2722 = vadd.f32 %v2232, %v2721
        %v2723 = vpop.f32.mrf.mxu0
        %v2724 = vadd.f32 %v2236, %v2723
        %2725 = vmatmul.bf16.gmra.mxu0 %v2176
        %v2726 = vpop.f32.mrf.mxu0
        %v2727 = vadd.f32 %v2240, %v2726
        %v2728 = vpop.f32.mrf.mxu0
        %v2729 = vadd.f32 %v2244, %v2728
        %2730 = vmatmul.bf16.gmra.mxu0 %v2177
        %v2731 = vpop.f32.mrf.mxu0
        %v2732 = vadd.f32 %v2248, %v2731
        %v2733 = vpop.f32.mrf.mxu0
        %v2734 = vadd.f32 %v2252, %v2733
        %2735 = vmatmul.bf16.gmra.mxu0 %v2178
        %v2736 = vpop.f32.mrf.mxu0
        %v2737 = vadd.f32 %v2256, %v2736
        %v2738 = vpop.f32.mrf.mxu0
        %v2739 = vadd.f32 %v2260, %v2738
        %2740 = vmatmul.bf16.gmra.mxu0 %v2179
        %v2741 = vpop.f32.mrf.mxu0
        %v2742 = vadd.f32 %v2264, %v2741
        %v2743 = vpop.f32.mrf.mxu0
        %v2744 = vadd.f32 %v2268, %v2743
        %2745 = vmatmul.bf16.gmra.mxu0 %v2180
        %v2746 = vpop.f32.mrf.mxu0
        %v2747 = vadd.f32 %v2272, %v2746
        %v2748 = vpop.f32.mrf.mxu0
        %v2749 = vadd.f32 %v2276, %v2748
        %2750 = vmatmul.bf16.gmra.mxu0 %v2181
        %v2751 = vpop.f32.mrf.mxu0
        %v2752 = vadd.f32 %v2280, %v2751
        %v2753 = vpop.f32.mrf.mxu0
        %v2754 = vadd.f32 %v2284, %v2753
        %2755 = vmatmul.bf16.gmra.mxu0 %v2182
        %v2756 = vpop.f32.mrf.mxu0
        %v2757 = vadd.f32 %v2288, %v2756
        %v2758 = vpop.f32.mrf.mxu0
        %v2759 = vadd.f32 %v2292, %v2758
        %2760 = vmatmul.bf16.gmra.mxu0 %v2183
        %v2761 = vpop.f32.mrf.mxu0
        %v2762 = vadd.f32 %v2296, %v2761
        %v2763 = vpop.f32.mrf.mxu0
        %v2764 = vadd.f32 %v2300, %v2763
        %2765 = vmatmul.bf16.gmra.mxu0 %v2184
        %v2766 = vpop.f32.mrf.mxu0
        %v2767 = vadd.f32 %v2304, %v2766
        %v2768 = vpop.f32.mrf.mxu0
        %v2769 = vadd.f32 %v2308, %v2768
        %2770 = vmatmul.bf16.gmra.mxu0 %v2185
        %v2771 = vpop.f32.mrf.mxu0
        %v2772 = vadd.f32 %v2312, %v2771
        %v2773 = vpop.f32.mrf.mxu0
        %v2774 = vadd.f32 %v2316, %v2773
        %2775 = vmatmul.bf16.gmra.mxu0 %v2186
        %v2776 = vpop.f32.mrf.mxu0
        %v2777 = vadd.f32 %v2320, %v2776
        %v2778 = vpop.f32.mrf.mxu0
        %v2779 = vadd.f32 %v2324, %v2778
        %2780 = vmatmul.bf16.gmra.mxu0 %v2187
        %v2781 = vpop.f32.mrf.mxu0
        %v2782 = vadd.f32 %v2328, %v2781
        %v2783 = vpop.f32.mrf.mxu0
        %v2784 = vadd.f32 %v2332, %v2783
        %2785 = vmatmul.bf16.gmra.mxu0 %v2188
        %v2786 = vpop.f32.mrf.mxu0
        %v2787 = vadd.f32 %v2336, %v2786
        %v2788 = vpop.f32.mrf.mxu0
        %v2789 = vadd.f32 %v2340, %v2788
        %2790 = vmatmul.bf16.gmra.mxu0 %v2189
        %v2791 = vpop.f32.mrf.mxu0
        %v2792 = vadd.f32 %v2344, %v2791
        %v2793 = vpop.f32.mrf.mxu0
        %v2794 = vadd.f32 %v2348, %v2793
        %2795 = vmatmul.bf16.gmra.mxu0 %v2190
        %v2796 = vpop.f32.mrf.mxu0
        %v2797 = vadd.f32 %v2352, %v2796
        %v2798 = vpop.f32.mrf.mxu0
        %v2799 = vadd.f32 %v2356, %v2798
        %2800 = vmatmul.bf16.gmra.mxu0 %v2191
        %v2801 = vpop.f32.mrf.mxu0
        %v2802 = vadd.f32 %v2360, %v2801
        %v2803 = vpop.f32.mrf.mxu0
        %v2804 = vadd.f32 %v2364, %v2803
        %2805 = vmatmul.bf16.gmra.mxu0 %v2192
        %v2806 = vpop.f32.mrf.mxu0
        %v2807 = vadd.f32 %v2368, %v2806
        %v2808 = vpop.f32.mrf.mxu0
        %v2809 = vadd.f32 %v2372, %v2808
        %2810 = vmatmul.bf16.gmra.mxu0 %v2193
        %v2811 = vpop.f32.mrf.mxu0
        %v2812 = vadd.f32 %v2376, %v2811
        %v2813 = vpop.f32.mrf.mxu0
        %v2814 = vadd.f32 %v2380, %v2813
        %2815 = vmatmul.bf16.gmra.mxu0 %v2194
        %v2816 = vpop.f32.mrf.mxu0
        %v2817 = vadd.f32 %v2384, %v2816
        %v2818 = vpop.f32.mrf.mxu0
        %v2819 = vadd.f32 %v2388, %v2818
        %2820 = vmatmul.bf16.gmra.mxu0 %v2195
        %v2821 = vpop.f32.mrf.mxu0
        %v2822 = vadd.f32 %v2392, %v2821
        %v2823 = vpop.f32.mrf.mxu0
        %v2824 = vadd.f32 %v2396, %v2823
        %2825 = vmatmul.bf16.gmra.mxu0 %v2196
        %v2826 = vpop.f32.mrf.mxu0
        %v2827 = vadd.f32 %v2400, %v2826
        %v2828 = vpop.f32.mrf.mxu0
        %v2829 = vadd.f32 %v2404, %v2828
        %2830 = vmatmul.bf16.gmra.mxu0 %v2197
        %v2831 = vpop.f32.mrf.mxu0
        %v2832 = vadd.f32 %v2408, %v2831
        %v2833 = vpop.f32.mrf.mxu0
        %v2834 = vadd.f32 %v2412, %v2833
        %2835 = vmatmul.bf16.gmra.mxu0 %v2198
        %v2836 = vpop.f32.mrf.mxu0
        %v2837 = vadd.f32 %v2416, %v2836
        %v2838 = vpop.f32.mrf.mxu0
        %v2839 = vadd.f32 %v2420, %v2838
        %2840 = vdwg.mxu0
        %2841 = vmatpush.bf16.msra.mxu0 %v2549
        %2842 = vmatpush.bf16.msra.mxu0 %v2545
        %2843 = vmatpush.bf16.msra.mxu0 %v2541
        %2844 = vmatpush.bf16.msra.mxu0 %v2537
        %2845 = vmatpush.bf16.msra.mxu0 %v2533
        %2846 = vmatpush.bf16.msra.mxu0 %v2529
        %2847 = vmatpush.bf16.msra.mxu0 %v2525
        %2848 = vmatpush.bf16.msra.mxu0 %v2521
        %2849 = vmatmul.bf16.gmra.mxu0 %v2175
        %v2850 = vpop.f32.mrf.mxu0
        %v2851 = vadd.f32 %v2233, %v2850
        %v2852 = vpop.f32.mrf.mxu0
        %v2853 = vadd.f32 %v2237, %v2852
        %2854 = vmatmul.bf16.gmra.mxu0 %v2176
        %v2855 = vpop.f32.mrf.mxu0
        %v2856 = vadd.f32 %v2241, %v2855
        %v2857 = vpop.f32.mrf.mxu0
        %v2858 = vadd.f32 %v2245, %v2857
        %2859 = vmatmul.bf16.gmra.mxu0 %v2177
        %v2860 = vpop.f32.mrf.mxu0
        %v2861 = vadd.f32 %v2249, %v2860
        %v2862 = vpop.f32.mrf.mxu0
        %v2863 = vadd.f32 %v2253, %v2862
        %2864 = vmatmul.bf16.gmra.mxu0 %v2178
        %v2865 = vpop.f32.mrf.mxu0
        %v2866 = vadd.f32 %v2257, %v2865
        %v2867 = vpop.f32.mrf.mxu0
        %v2868 = vadd.f32 %v2261, %v2867
        %2869 = vmatmul.bf16.gmra.mxu0 %v2179
        %v2870 = vpop.f32.mrf.mxu0
        %v2871 = vadd.f32 %v2265, %v2870
        %v2872 = vpop.f32.mrf.mxu0
        %v2873 = vadd.f32 %v2269, %v2872
        %2874 = vmatmul.bf16.gmra.mxu0 %v2180
        %v2875 = vpop.f32.mrf.mxu0
        %v2876 = vadd.f32 %v2273, %v2875
        %v2877 = vpop.f32.mrf.mxu0
        %v2878 = vadd.f32 %v2277, %v2877
        %2879 = vmatmul.bf16.gmra.mxu0 %v2181
        %v2880 = vpop.f32.mrf.mxu0
        %v2881 = vadd.f32 %v2281, %v2880
        %v2882 = vpop.f32.mrf.mxu0
        %v2883 = vadd.f32 %v2285, %v2882
        %2884 = vmatmul.bf16.gmra.mxu0 %v2182
        %v2885 = vpop.f32.mrf.mxu0
        %v2886 = vadd.f32 %v2289, %v2885
        %v2887 = vpop.f32.mrf.mxu0
        %v2888 = vadd.f32 %v2293, %v2887
        %2889 = vmatmul.bf16.gmra.mxu0 %v2183
        %v2890 = vpop.f32.mrf.mxu0
        %v2891 = vadd.f32 %v2297, %v2890
        %v2892 = vpop.f32.mrf.mxu0
        %v2893 = vadd.f32 %v2301, %v2892
        %2894 = vmatmul.bf16.gmra.mxu0 %v2184
        %v2895 = vpop.f32.mrf.mxu0
        %v2896 = vadd.f32 %v2305, %v2895
        %v2897 = vpop.f32.mrf.mxu0
        %v2898 = vadd.f32 %v2309, %v2897
        %2899 = vmatmul.bf16.gmra.mxu0 %v2185
        %v2900 = vpop.f32.mrf.mxu0
        %v2901 = vadd.f32 %v2313, %v2900
        %v2902 = vpop.f32.mrf.mxu0
        %v2903 = vadd.f32 %v2317, %v2902
        %2904 = vmatmul.bf16.gmra.mxu0 %v2186
        %v2905 = vpop.f32.mrf.mxu0
        %v2906 = vadd.f32 %v2321, %v2905
        %v2907 = vpop.f32.mrf.mxu0
        %v2908 = vadd.f32 %v2325, %v2907
        %2909 = vmatmul.bf16.gmra.mxu0 %v2187
        %v2910 = vpop.f32.mrf.mxu0
        %v2911 = vadd.f32 %v2329, %v2910
        %v2912 = vpop.f32.mrf.mxu0
        %v2913 = vadd.f32 %v2333, %v2912
        %2914 = vmatmul.bf16.gmra.mxu0 %v2188
        %v2915 = vpop.f32.mrf.mxu0
        %v2916 = vadd.f32 %v2337, %v2915
        %v2917 = vpop.f32.mrf.mxu0
        %v2918 = vadd.f32 %v2341, %v2917
        %2919 = vmatmul.bf16.gmra.mxu0 %v2189
        %v2920 = vpop.f32.mrf.mxu0
        %v2921 = vadd.f32 %v2345, %v2920
        %v2922 = vpop.f32.mrf.mxu0
        %v2923 = vadd.f32 %v2349, %v2922
        %2924 = vmatmul.bf16.gmra.mxu0 %v2190
        %v2925 = vpop.f32.mrf.mxu0
        %v2926 = vadd.f32 %v2353, %v2925
        %v2927 = vpop.f32.mrf.mxu0
        %v2928 = vadd.f32 %v2357, %v2927
        %2929 = vmatmul.bf16.gmra.mxu0 %v2191
        %v2930 = vpop.f32.mrf.mxu0
        %v2931 = vadd.f32 %v2361, %v2930
        %v2932 = vpop.f32.mrf.mxu0
        %v2933 = vadd.f32 %v2365, %v2932
        %2934 = vmatmul.bf16.gmra.mxu0 %v2192
        %v2935 = vpop.f32.mrf.mxu0
        %v2936 = vadd.f32 %v2369, %v2935
        %v2937 = vpop.f32.mrf.mxu0
        %v2938 = vadd.f32 %v2373, %v2937
        %2939 = vmatmul.bf16.gmra.mxu0 %v2193
        %v2940 = vpop.f32.mrf.mxu0
        %v2941 = vadd.f32 %v2377, %v2940
        %v2942 = vpop.f32.mrf.mxu0
        %v2943 = vadd.f32 %v2381, %v2942
        %2944 = vmatmul.bf16.gmra.mxu0 %v2194
        %v2945 = vpop.f32.mrf.mxu0
        %v2946 = vadd.f32 %v2385, %v2945
        %v2947 = vpop.f32.mrf.mxu0
        %v2948 = vadd.f32 %v2389, %v2947
        %2949 = vmatmul.bf16.gmra.mxu0 %v2195
        %v2950 = vpop.f32.mrf.mxu0
        %v2951 = vadd.f32 %v2393, %v2950
        %v2952 = vpop.f32.mrf.mxu0
        %v2953 = vadd.f32 %v2397, %v2952
        %2954 = vmatmul.bf16.gmra.mxu0 %v2196
        %v2955 = vpop.f32.mrf.mxu0
        %v2956 = vadd.f32 %v2401, %v2955
        %v2957 = vpop.f32.mrf.mxu0
        %v2958 = vadd.f32 %v2405, %v2957
        %2959 = vmatmul.bf16.gmra.mxu0 %v2197
        %v2960 = vpop.f32.mrf.mxu0
        %v2961 = vadd.f32 %v2409, %v2960
        %v2962 = vpop.f32.mrf.mxu0
        %v2963 = vadd.f32 %v2413, %v2962
        %2964 = vmatmul.bf16.gmra.mxu0 %v2198
        %v2965 = vpop.f32.mrf.mxu0
        %v2966 = vadd.f32 %v2417, %v2965
        %v2967 = vpop.f32.mrf.mxu0
        %v2968 = vadd.f32 %v2421, %v2967
        %2969 = vdwg.mxu0
        %2970 = vmatpush.bf16.msra.mxu0 %v2550
        %2971 = vmatpush.bf16.msra.mxu0 %v2546
        %2972 = vmatpush.bf16.msra.mxu0 %v2542
        %2973 = vmatpush.bf16.msra.mxu0 %v2538
        %2974 = vmatpush.bf16.msra.mxu0 %v2534
        %2975 = vmatpush.bf16.msra.mxu0 %v2530
        %2976 = vmatpush.bf16.msra.mxu0 %v2526
        %2977 = vmatpush.bf16.msra.mxu0 %v2522
        %2978 = vmatmul.bf16.gmra.mxu0 %v2175
        %v2979 = vpop.f32.mrf.mxu0
        %v2980 = vadd.f32 %v2234, %v2979
        %v2981 = vpop.f32.mrf.mxu0
        %v2982 = vadd.f32 %v2238, %v2981
        %2983 = vmatmul.bf16.gmra.mxu0 %v2176
        %v2984 = vpop.f32.mrf.mxu0
        %v2985 = vadd.f32 %v2242, %v2984
        %v2986 = vpop.f32.mrf.mxu0
        %v2987 = vadd.f32 %v2246, %v2986
        %2988 = vmatmul.bf16.gmra.mxu0 %v2177
        %v2989 = vpop.f32.mrf.mxu0
        %v2990 = vadd.f32 %v2250, %v2989
        %v2991 = vpop.f32.mrf.mxu0
        %v2992 = vadd.f32 %v2254, %v2991
        %2993 = vmatmul.bf16.gmra.mxu0 %v2178
        %v2994 = vpop.f32.mrf.mxu0
        %v2995 = vadd.f32 %v2258, %v2994
        %v2996 = vpop.f32.mrf.mxu0
        %v2997 = vadd.f32 %v2262, %v2996
        %2998 = vmatmul.bf16.gmra.mxu0 %v2179
        %v2999 = vpop.f32.mrf.mxu0
        %v3000 = vadd.f32 %v2266, %v2999
        %v3001 = vpop.f32.mrf.mxu0
        %v3002 = vadd.f32 %v2270, %v3001
        %3003 = vmatmul.bf16.gmra.mxu0 %v2180
        %v3004 = vpop.f32.mrf.mxu0
        %v3005 = vadd.f32 %v2274, %v3004
        %v3006 = vpop.f32.mrf.mxu0
        %v3007 = vadd.f32 %v2278, %v3006
        %3008 = vmatmul.bf16.gmra.mxu0 %v2181
        %v3009 = vpop.f32.mrf.mxu0
        %v3010 = vadd.f32 %v2282, %v3009
        %v3011 = vpop.f32.mrf.mxu0
        %v3012 = vadd.f32 %v2286, %v3011
        %3013 = vmatmul.bf16.gmra.mxu0 %v2182
        %v3014 = vpop.f32.mrf.mxu0
        %v3015 = vadd.f32 %v2290, %v3014
        %v3016 = vpop.f32.mrf.mxu0
        %v3017 = vadd.f32 %v2294, %v3016
        %3018 = vmatmul.bf16.gmra.mxu0 %v2183
        %v3019 = vpop.f32.mrf.mxu0
        %v3020 = vadd.f32 %v2298, %v3019
        %v3021 = vpop.f32.mrf.mxu0
        %v3022 = vadd.f32 %v2302, %v3021
        %3023 = vmatmul.bf16.gmra.mxu0 %v2184
        %v3024 = vpop.f32.mrf.mxu0
        %v3025 = vadd.f32 %v2306, %v3024
        %v3026 = vpop.f32.mrf.mxu0
        %v3027 = vadd.f32 %v2310, %v3026
        %3028 = vmatmul.bf16.gmra.mxu0 %v2185
        %v3029 = vpop.f32.mrf.mxu0
        %v3030 = vadd.f32 %v2314, %v3029
        %v3031 = vpop.f32.mrf.mxu0
        %v3032 = vadd.f32 %v2318, %v3031
        %3033 = vmatmul.bf16.gmra.mxu0 %v2186
        %v3034 = vpop.f32.mrf.mxu0
        %v3035 = vadd.f32 %v2322, %v3034
        %v3036 = vpop.f32.mrf.mxu0
        %v3037 = vadd.f32 %v2326, %v3036
        %3038 = vmatmul.bf16.gmra.mxu0 %v2187
        %v3039 = vpop.f32.mrf.mxu0
        %v3040 = vadd.f32 %v2330, %v3039
        %v3041 = vpop.f32.mrf.mxu0
        %v3042 = vadd.f32 %v2334, %v3041
        %3043 = vmatmul.bf16.gmra.mxu0 %v2188
        %v3044 = vpop.f32.mrf.mxu0
        %v3045 = vadd.f32 %v2338, %v3044
        %v3046 = vpop.f32.mrf.mxu0
        %v3047 = vadd.f32 %v2342, %v3046
        %3048 = vmatmul.bf16.gmra.mxu0 %v2189
        %v3049 = vpop.f32.mrf.mxu0
        %v3050 = vadd.f32 %v2346, %v3049
        %v3051 = vpop.f32.mrf.mxu0
        %v3052 = vadd.f32 %v2350, %v3051
        %3053 = vmatmul.bf16.gmra.mxu0 %v2190
        %v3054 = vpop.f32.mrf.mxu0
        %v3055 = vadd.f32 %v2354, %v3054
        %v3056 = vpop.f32.mrf.mxu0
        %v3057 = vadd.f32 %v2358, %v3056
        %3058 = vmatmul.bf16.gmra.mxu0 %v2191
        %v3059 = vpop.f32.mrf.mxu0
        %v3060 = vadd.f32 %v2362, %v3059
        %v3061 = vpop.f32.mrf.mxu0
        %v3062 = vadd.f32 %v2366, %v3061
        %3063 = vmatmul.bf16.gmra.mxu0 %v2192
        %v3064 = vpop.f32.mrf.mxu0
        %v3065 = vadd.f32 %v2370, %v3064
        %v3066 = vpop.f32.mrf.mxu0
        %v3067 = vadd.f32 %v2374, %v3066
        %3068 = vmatmul.bf16.gmra.mxu0 %v2193
        %v3069 = vpop.f32.mrf.mxu0
        %v3070 = vadd.f32 %v2378, %v3069
        %v3071 = vpop.f32.mrf.mxu0
        %v3072 = vadd.f32 %v2382, %v3071
        %3073 = vmatmul.bf16.gmra.mxu0 %v2194
        %v3074 = vpop.f32.mrf.mxu0
        %v3075 = vadd.f32 %v2386, %v3074
        %v3076 = vpop.f32.mrf.mxu0
        %v3077 = vadd.f32 %v2390, %v3076
        %3078 = vmatmul.bf16.gmra.mxu0 %v2195
        %v3079 = vpop.f32.mrf.mxu0
        %v3080 = vadd.f32 %v2394, %v3079
        %v3081 = vpop.f32.mrf.mxu0
        %v3082 = vadd.f32 %v2398, %v3081
        %3083 = vmatmul.bf16.gmra.mxu0 %v2196
        %v3084 = vpop.f32.mrf.mxu0
        %v3085 = vadd.f32 %v2402, %v3084
        %v3086 = vpop.f32.mrf.mxu0
        %v3087 = vadd.f32 %v2406, %v3086
        %3088 = vmatmul.bf16.gmra.mxu0 %v2197
        %v3089 = vpop.f32.mrf.mxu0
        %v3090 = vadd.f32 %v2410, %v3089
        %v3091 = vpop.f32.mrf.mxu0
        %v3092 = vadd.f32 %v2414, %v3091
        %3093 = vmatmul.bf16.gmra.mxu0 %v2198
        %v3094 = vpop.f32.mrf.mxu0
        %v3095 = vadd.f32 %v2418, %v3094
        %v3096 = vpop.f32.mrf.mxu0
        %v3097 = vadd.f32 %v2422, %v3096
        %3098 = vdwg.mxu0
        %v3099 = vpack.c.bf16 %v2722, %v2593
        %v3100 = vpack.c.bf16 %v2980, %v2851
        %v3101 = vpack.c.bf16 %v2724, %v2595
        %v3102 = vpack.c.bf16 %v2982, %v2853
        %v3103 = vpack.c.bf16 %v2727, %v2598
        %v3104 = vpack.c.bf16 %v2985, %v2856
        %v3105 = vpack.c.bf16 %v2729, %v2600
        %v3106 = vpack.c.bf16 %v2987, %v2858
        %v3107 = vpack.c.bf16 %v2732, %v2603
        %v3108 = vpack.c.bf16 %v2990, %v2861
        %v3109 = vpack.c.bf16 %v2734, %v2605
        %v3110 = vpack.c.bf16 %v2992, %v2863
        %v3111 = vpack.c.bf16 %v2737, %v2608
        %v3112 = vpack.c.bf16 %v2995, %v2866
        %v3113 = vpack.c.bf16 %v2739, %v2610
        %v3114 = vpack.c.bf16 %v2997, %v2868
        %v3115 = vpack.c.bf16 %v2742, %v2613
        %v3116 = vpack.c.bf16 %v3000, %v2871
        %v3117 = vpack.c.bf16 %v2744, %v2615
        %v3118 = vpack.c.bf16 %v3002, %v2873
        %v3119 = vpack.c.bf16 %v2747, %v2618
        %v3120 = vpack.c.bf16 %v3005, %v2876
        %v3121 = vpack.c.bf16 %v2749, %v2620
        %v3122 = vpack.c.bf16 %v3007, %v2878
        %v3123 = vpack.c.bf16 %v2752, %v2623
        %v3124 = vpack.c.bf16 %v3010, %v2881
        %v3125 = vpack.c.bf16 %v2754, %v2625
        %v3126 = vpack.c.bf16 %v3012, %v2883
        %v3127 = vpack.c.bf16 %v2757, %v2628
        %v3128 = vpack.c.bf16 %v3015, %v2886
        %v3129 = vpack.c.bf16 %v2759, %v2630
        %v3130 = vpack.c.bf16 %v3017, %v2888
        %v3131 = vpack.c.bf16 %v2762, %v2633
        %v3132 = vpack.c.bf16 %v3020, %v2891
        %v3133 = vpack.c.bf16 %v2764, %v2635
        %v3134 = vpack.c.bf16 %v3022, %v2893
        %v3135 = vpack.c.bf16 %v2767, %v2638
        %v3136 = vpack.c.bf16 %v3025, %v2896
        %v3137 = vpack.c.bf16 %v2769, %v2640
        %v3138 = vpack.c.bf16 %v3027, %v2898
        %v3139 = vpack.c.bf16 %v2772, %v2643
        %v3140 = vpack.c.bf16 %v3030, %v2901
        %v3141 = vpack.c.bf16 %v2774, %v2645
        %v3142 = vpack.c.bf16 %v3032, %v2903
        %v3143 = vpack.c.bf16 %v2777, %v2648
        %v3144 = vpack.c.bf16 %v3035, %v2906
        %v3145 = vpack.c.bf16 %v2779, %v2650
        %v3146 = vpack.c.bf16 %v3037, %v2908
        %v3147 = vpack.c.bf16 %v2782, %v2653
        %v3148 = vpack.c.bf16 %v3040, %v2911
        %v3149 = vpack.c.bf16 %v2784, %v2655
        %v3150 = vpack.c.bf16 %v3042, %v2913
        %v3151 = vpack.c.bf16 %v2787, %v2658
        %v3152 = vpack.c.bf16 %v3045, %v2916
        %v3153 = vpack.c.bf16 %v2789, %v2660
        %v3154 = vpack.c.bf16 %v3047, %v2918
        %v3155 = vpack.c.bf16 %v2792, %v2663
        %v3156 = vpack.c.bf16 %v3050, %v2921
        %v3157 = vpack.c.bf16 %v2794, %v2665
        %v3158 = vpack.c.bf16 %v3052, %v2923
        %v3159 = vpack.c.bf16 %v2797, %v2668
        %v3160 = vpack.c.bf16 %v3055, %v2926
        %v3161 = vpack.c.bf16 %v2799, %v2670
        %v3162 = vpack.c.bf16 %v3057, %v2928
        %v3163 = vpack.c.bf16 %v2802, %v2673
        %v3164 = vpack.c.bf16 %v3060, %v2931
        %v3165 = vpack.c.bf16 %v2804, %v2675
        %v3166 = vpack.c.bf16 %v3062, %v2933
        %v3167 = vpack.c.bf16 %v2807, %v2678
        %v3168 = vpack.c.bf16 %v3065, %v2936
        %v3169 = vpack.c.bf16 %v2809, %v2680
        %v3170 = vpack.c.bf16 %v3067, %v2938
        %v3171 = vpack.c.bf16 %v2812, %v2683
        %v3172 = vpack.c.bf16 %v3070, %v2941
        %v3173 = vpack.c.bf16 %v2814, %v2685
        %v3174 = vpack.c.bf16 %v3072, %v2943
        %v3175 = vpack.c.bf16 %v2817, %v2688
        %v3176 = vpack.c.bf16 %v3075, %v2946
        %v3177 = vpack.c.bf16 %v2819, %v2690
        %v3178 = vpack.c.bf16 %v3077, %v2948
        %v3179 = vpack.c.bf16 %v2822, %v2693
        %v3180 = vpack.c.bf16 %v3080, %v2951
        %v3181 = vpack.c.bf16 %v2824, %v2695
        %v3182 = vpack.c.bf16 %v3082, %v2953
        %v3183 = vpack.c.bf16 %v2827, %v2698
        %v3184 = vpack.c.bf16 %v3085, %v2956
        %v3185 = vpack.c.bf16 %v2829, %v2700
        %v3186 = vpack.c.bf16 %v3087, %v2958
        %v3187 = vpack.c.bf16 %v2832, %v2703
        %v3188 = vpack.c.bf16 %v3090, %v2961
        %v3189 = vpack.c.bf16 %v2834, %v2705
        %v3190 = vpack.c.bf16 %v3092, %v2963
        %v3191 = vpack.c.bf16 %v2837, %v2708
        %v3192 = vpack.c.bf16 %v3095, %v2966
        %v3193 = vpack.c.bf16 %v2839, %v2710
        %v3194 = vpack.c.bf16 %v3097, %v2968
        %v3195 = vld [vmem:[%s1343] sm:$0xff]
        %v3196 = vld [vmem:[%s1343 + $0x8] sm:$0xff]
        %v3197 = vld [vmem:[%s1343 + $0x10] sm:$0xff]
        %v3198 = vld [vmem:[%s1343 + $0x18] sm:$0xff]
        %v3199 = vld [vmem:[%s9] sm:$0x1]
        %v3200 = vld [vmem:[%s1150] sm:$0x7]
        %v3201 = vld [vmem:[%s59] sm:$0x7]
        %v3202 = vld [vmem:[%s61] sm:$0x7]
        %v3203 = vld [vmem:[%s35] sm:$0xff]
        %v3204 = vld [vmem:[%s35 + $0x8] sm:$0xf]
        %v3205 = vld [vmem:[%s35 + $0xc] sm:$0xff]
        %v3206 = vld [vmem:[%s35 + $0x14] sm:$0xf]
        %v3207 = vld [vmem:[%s35 + $0x18] sm:$0xff]
        %v3208 = vld [vmem:[%s35 + $0x20] sm:$0xf]
        %v3209 = vld [vmem:[%s35 + $0x24] sm:$0xff]
        %v3210 = vld [vmem:[%s35 + $0x2c] sm:$0xf]
        %v3211 = vld [vmem:[%s35 + $0x30] sm:$0xff]
        %v3212 = vld [vmem:[%s35 + $0x38] sm:$0xf]
        %v3213 = vld [vmem:[%s35 + $0x3c] sm:$0xff]
        %v3214 = vld [vmem:[%s35 + $0x44] sm:$0xf]
        %v3215 = vld [vmem:[%s35 + $0x48] sm:$0xff]
        %v3216 = vld [vmem:[%s35 + $0x50] sm:$0xf]
        %v3217 = vld [vmem:[%s35 + $0x54] sm:$0xff]
        %v3218 = vld [vmem:[%s35 + $0x5c] sm:$0xf]
        %v3219 = vld [vmem:[%s35 + $0x60] sm:$0xff]
        %v3220 = vld [vmem:[%s35 + $0x68] sm:$0xf]
        %v3221 = vld [vmem:[%s35 + $0x6c] sm:$0xff]
        %v3222 = vld [vmem:[%s35 + $0x74] sm:$0xf]
        %v3223 = vld [vmem:[%s35 + $0x78] sm:$0xff]
        %v3224 = vld [vmem:[%s35 + $0x80] sm:$0xf]
        %v3225 = vld [vmem:[%s35 + $0x84] sm:$0xff]
        %v3226 = vld [vmem:[%s35 + $0x8c] sm:$0xf]
        %v3227 = vld [vmem:[%s35 + $0x90] sm:$0xff]
        %v3228 = vld [vmem:[%s35 + $0x98] sm:$0xf]
        %v3229 = vld [vmem:[%s35 + $0x9c] sm:$0xff]
        %v3230 = vld [vmem:[%s35 + $0xa4] sm:$0xf]
        %v3231 = vld [vmem:[%s35 + $0xa8] sm:$0xff]
        %v3232 = vld [vmem:[%s35 + $0xb0] sm:$0xf]
        %v3233 = vld [vmem:[%s35 + $0xb4] sm:$0xff]
        %v3234 = vld [vmem:[%s35 + $0xbc] sm:$0xf]
        %v3235 = vld [vmem:[#allocation20] sm:$0xff]
        %v3236 = vld [vmem:[#allocation20 + $0x8] sm:$0xff]
        %v3237 = vld [vmem:[#allocation20 + $0x10] sm:$0xff]
        %v3238 = vld [vmem:[#allocation20 + $0x18] sm:$0xff]
        %v3239 = vld [vmem:[#allocation20 + $0x20] sm:$0xff]
        %v3240 = vld [vmem:[#allocation20 + $0x28] sm:$0xff]
        %v3241 = vld [vmem:[#allocation20 + $0x30] sm:$0xff]
        %v3242 = vld [vmem:[#allocation20 + $0x38] sm:$0xff]
        %v3243 = vld [vmem:[#allocation20 + $0x40] sm:$0xff]
        %v3244 = vld [vmem:[#allocation20 + $0x48] sm:$0xff]
        %v3245 = vld [vmem:[#allocation20 + $0x50] sm:$0xff]
        %v3246 = vld [vmem:[#allocation20 + $0x58] sm:$0xff]
        %v3247 = vpack.c.bf16 %v3196, %v3195
        %v3248 = vpack.c.bf16 %v3198, %v3197
        %v3281 = vunpack.c.l.b16 %v3203
        %v3282 = vunpack.c.h.b16 %v3203
        %v3283 = vunpack.c.l.b16 %v3204
        %v3284 = vunpack.c.l.b16 %v3205
        %v3285 = vunpack.c.h.b16 %v3205
        %v3286 = vunpack.c.l.b16 %v3206
        %v3287 = vunpack.c.l.b16 %v3207
        %v3288 = vunpack.c.h.b16 %v3207
        %v3289 = vunpack.c.l.b16 %v3208
        %v3290 = vunpack.c.l.b16 %v3209
        %v3291 = vunpack.c.h.b16 %v3209
        %v3292 = vunpack.c.l.b16 %v3210
        %v3293 = vunpack.c.l.b16 %v3211
        %v3294 = vunpack.c.h.b16 %v3211
        %v3295 = vunpack.c.l.b16 %v3212
        %v3296 = vunpack.c.l.b16 %v3213
        %v3297 = vunpack.c.h.b16 %v3213
        %v3298 = vunpack.c.l.b16 %v3214
        %v3299 = vunpack.c.l.b16 %v3215
        %v3300 = vunpack.c.h.b16 %v3215
        %v3301 = vunpack.c.l.b16 %v3216
        %v3302 = vunpack.c.l.b16 %v3217
        %v3303 = vunpack.c.h.b16 %v3217
        %v3304 = vunpack.c.l.b16 %v3218
        %v3305 = vunpack.c.l.b16 %v3219
        %v3306 = vunpack.c.h.b16 %v3219
        %v3307 = vunpack.c.l.b16 %v3220
        %v3308 = vunpack.c.l.b16 %v3221
        %v3309 = vunpack.c.h.b16 %v3221
        %v3310 = vunpack.c.l.b16 %v3222
        %v3311 = vunpack.c.l.b16 %v3223
        %v3312 = vunpack.c.h.b16 %v3223
        %v3313 = vunpack.c.l.b16 %v3224
        %v3314 = vunpack.c.l.b16 %v3225
        %v3315 = vunpack.c.h.b16 %v3225
        %v3316 = vunpack.c.l.b16 %v3226
        %v3317 = vunpack.c.l.b16 %v3227
        %v3318 = vunpack.c.h.b16 %v3227
        %v3319 = vunpack.c.l.b16 %v3228
        %v3320 = vunpack.c.l.b16 %v3229
        %v3321 = vunpack.c.h.b16 %v3229
        %v3322 = vunpack.c.l.b16 %v3230
        %v3323 = vunpack.c.l.b16 %v3231
        %v3324 = vunpack.c.h.b16 %v3231
        %v3325 = vunpack.c.l.b16 %v3232
        %v3326 = vunpack.c.l.b16 %v3233
        %v3327 = vunpack.c.h.b16 %v3233
        %v3328 = vunpack.c.l.b16 %v3234
        %v3329 = vpack.c.b16 %v3284, %v3281
        %v3330 = vpack.c.b16 %v3285, %v3282
        %v3331 = vpack.c.b16 %v3286, %v3283
        %v3332 = vpack.c.b16 %v3290, %v3287
        %v3333 = vpack.c.b16 %v3291, %v3288
        %v3334 = vpack.c.b16 %v3292, %v3289
        %v3335 = vpack.c.b16 %v3296, %v3293
        %v3336 = vpack.c.b16 %v3297, %v3294
        %v3337 = vpack.c.b16 %v3298, %v3295
        %v3338 = vpack.c.b16 %v3302, %v3299
        %v3339 = vpack.c.b16 %v3303, %v3300
        %v3340 = vpack.c.b16 %v3304, %v3301
        %v3341 = vpack.c.b16 %v3308, %v3305
        %v3342 = vpack.c.b16 %v3309, %v3306
        %v3343 = vpack.c.b16 %v3310, %v3307
        %v3344 = vpack.c.b16 %v3314, %v3311
        %v3345 = vpack.c.b16 %v3315, %v3312
        %v3346 = vpack.c.b16 %v3316, %v3313
        %v3347 = vpack.c.b16 %v3320, %v3317
        %v3348 = vpack.c.b16 %v3321, %v3318
        %v3349 = vpack.c.b16 %v3322, %v3319
        %v3350 = vpack.c.b16 %v3326, %v3323
        %v3351 = vpack.c.b16 %v3327, %v3324
        %v3352 = vpack.c.b16 %v3328, %v3325
        %3377 = vmatpush.bf16.msra.mxu0 %v3350
        %3378 = vmatpush.bf16.msra.mxu0 %v3347
        %3379 = vmatpush.bf16.msra.mxu0 %v3344
        %3380 = vmatpush.bf16.msra.mxu0 %v3341
        %3381 = vmatpush.bf16.msra.mxu0 %v3338
        %3382 = vmatpush.bf16.msra.mxu0 %v3335
        %3383 = vmatpush.bf16.msra.mxu0 %v3332
        %3384 = vmatpush.bf16.msra.mxu0 %v3329
        %3385 = vmatmul.bf16.gmra.mxu0 %v3247
        %v3386 = vpop.f32.mrf.mxu0
        %v3387 = vadd.f32 %v3235, %v3386
        %v3388 = vpop.f32.mrf.mxu0
        %v3389 = vadd.f32 %v3238, %v3388
        %3390 = vmatmul.bf16.gmra.mxu0 %v3248
        %v3391 = vpop.f32.mrf.mxu0
        %v3392 = vadd.f32 %v3241, %v3391
        %v3393 = vpop.f32.mrf.mxu0
        %v3394 = vadd.f32 %v3244, %v3393
        %3395 = vdwg.mxu0
        %3396 = vmatpush.bf16.msra.mxu0 %v3351
        %3397 = vmatpush.bf16.msra.mxu0 %v3348
        %3398 = vmatpush.bf16.msra.mxu0 %v3345
        %3399 = vmatpush.bf16.msra.mxu0 %v3342
        %3400 = vmatpush.bf16.msra.mxu0 %v3339
        %3401 = vmatpush.bf16.msra.mxu0 %v3336
        %3402 = vmatpush.bf16.msra.mxu0 %v3333
        %3403 = vmatpush.bf16.msra.mxu0 %v3330
        %3404 = vmatmul.bf16.gmra.mxu0 %v3247
        %v3405 = vpop.f32.mrf.mxu0
        %v3406 = vadd.f32 %v3236, %v3405
        %v3407 = vpop.f32.mrf.mxu0
        %v3408 = vadd.f32 %v3239, %v3407
        %3409 = vmatmul.bf16.gmra.mxu0 %v3248
        %v3410 = vpop.f32.mrf.mxu0
        %v3411 = vadd.f32 %v3242, %v3410
        %v3412 = vpop.f32.mrf.mxu0
        %v3413 = vadd.f32 %v3245, %v3412
        %3414 = vdwg.mxu0
        %3415 = vmatpush.bf16.msra.mxu0 %v3352
        %3416 = vmatpush.bf16.msra.mxu0 %v3349
        %3417 = vmatpush.bf16.msra.mxu0 %v3346
        %3418 = vmatpush.bf16.msra.mxu0 %v3343
        %3419 = vmatpush.bf16.msra.mxu0 %v3340
        %3420 = vmatpush.bf16.msra.mxu0 %v3337
        %3421 = vmatpush.bf16.msra.mxu0 %v3334
        %3422 = vmatpush.bf16.msra.mxu0 %v3331
        %3423 = vmatmul.bf16.gmra.mxu0 %v3247
        %v3424 = vpop.f32.mrf.mxu0
        %v3425 = vadd.f32 %v3237, %v3424
        %v3426 = vpop.f32.mrf.mxu0
        %v3427 = vadd.f32 %v3240, %v3426
        %3428 = vmatmul.bf16.gmra.mxu0 %v3248
        %v3429 = vpop.f32.mrf.mxu0
        %v3430 = vadd.f32 %v3243, %v3429
        %v3431 = vpop.f32.mrf.mxu0
        %v3432 = vadd.f32 %v3246, %v3431
        %3433 = vdwg.mxu0
        %v3434 = vpack.c.bf16 %v3408, %v3406
        %v3435 = vpack.c.bf16 %v3413, %v3411
        %v3436 = vpack.c.bf16 %v3427, %v3425
        %v3437 = vpack.c.bf16 %v3432, %v3430
        %v3446 = vperm.slane %v1361, 0
        %v3447 = vperm.slane %v1362, 0
        %v3448 = vperm.slane %v1363, 0
        %v3449 = vperm.slane %v1364, 0
        %v3450 = vperm.slane %v1365, 0
        %v3451 = vperm.slane %v1366, 0
        %v3452 = vperm.slane %v1367, 0
        %v3453 = vperm.slane %v1368, 0
        %v3462 = vmul.f32 %v3387, %v3446
        %v3463 = vmul.f32 %v3389, %v3446
        %v3464 = vmul.f32 %v3392, %v3446
        %v3465 = vmul.f32 %v3394, %v3446
        %v3466 = vmul.f32 %v3387, %v3447
        %v3467 = vmul.f32 %v3389, %v3447
        %v3468 = vmul.f32 %v3392, %v3447
        %v3469 = vmul.f32 %v3394, %v3447
        %v3470 = vmul.f32 %v3387, %v3448
        %v3471 = vmul.f32 %v3389, %v3448
        %v3472 = vmul.f32 %v3392, %v3448
        %v3473 = vmul.f32 %v3394, %v3448
        %v3474 = vmul.f32 %v3387, %v3449
        %v3475 = vmul.f32 %v3389, %v3449
        %v3476 = vmul.f32 %v3392, %v3449
        %v3477 = vmul.f32 %v3394, %v3449
        %v3478 = vmul.f32 %v3387, %v3450
        %v3479 = vmul.f32 %v3389, %v3450
        %v3480 = vmul.f32 %v3392, %v3450
        %v3481 = vmul.f32 %v3394, %v3450
        %v3482 = vmul.f32 %v3387, %v3451
        %v3483 = vmul.f32 %v3389, %v3451
        %v3484 = vmul.f32 %v3392, %v3451
        %v3485 = vmul.f32 %v3394, %v3451
        %v3486 = vmul.f32 %v3387, %v3452
        %v3487 = vmul.f32 %v3389, %v3452
        %v3488 = vmul.f32 %v3392, %v3452
        %v3489 = vmul.f32 %v3394, %v3452
        %v3490 = vmul.f32 %v3387, %v3453
        %v3491 = vmul.f32 %v3389, %v3453
        %v3492 = vmul.f32 %v3392, %v3453
        %v3493 = vmul.f32 %v3394, %v3453
        %v3494 = vpack.c.bf16 %v3463, %v3462
        %v3495 = vpack.c.bf16 %v3465, %v3464
        %v3496 = vpack.c.bf16 %v3467, %v3466
        %v3497 = vpack.c.bf16 %v3469, %v3468
        %v3498 = vpack.c.bf16 %v3471, %v3470
        %v3499 = vpack.c.bf16 %v3473, %v3472
        %v3500 = vpack.c.bf16 %v3475, %v3474
        %v3501 = vpack.c.bf16 %v3477, %v3476
        %v3502 = vpack.c.bf16 %v3479, %v3478
        %v3503 = vpack.c.bf16 %v3481, %v3480
        %v3504 = vpack.c.bf16 %v3483, %v3482
        %v3505 = vpack.c.bf16 %v3485, %v3484
        %v3506 = vpack.c.bf16 %v3487, %v3486
        %v3507 = vpack.c.bf16 %v3489, %v3488
        %v3508 = vpack.c.bf16 %v3491, %v3490
        %v3509 = vpack.c.bf16 %v3493, %v3492
        %v3511 = vperm.slane %v3199, 0
        %3513 = vmatpush.bf16.xpose.msra.mxu0 0
        %3514 = vmatpush.bf16.xpose.msra.mxu0 0
        %3515 = vmatpush.bf16.xpose.msra.mxu0 0
        %3516 = vmatpush.bf16.xpose.msra.mxu0 0
        %3517 = vmatpush.bf16.xpose.msra.mxu0 0
        %3518 = vmatpush.bf16.xpose.msra.mxu0 0
        %3519 = vmatpush.bf16.xpose.msra.mxu0 %v3435
        %3520 = vmatpush.bf16.xpose.msra.mxu0 %v3434
        %3521 = vmatmul.bf16.gmra.mxu0 %v3494
        %v3522 = vpop.f32.mrf.mxu0
        %v3523 = vadd.f32 %v3511, %v3522
        %v3524 = vpop.f32.mrf.mxu0
        %v3525 = vadd.f32 %v3511, %v3524
        %3526 = vmatmul.bf16.gmra.mxu0 %v3495
        %v3527 = vpop.f32.mrf.mxu0
        %v3528 = vadd.f32 %v3511, %v3527
        %v3529 = vpop.f32.mrf.mxu0
        %v3530 = vadd.f32 %v3511, %v3529
        %3531 = vmatmul.bf16.gmra.mxu0 %v3496
        %v3532 = vpop.f32.mrf.mxu0
        %v3533 = vadd.f32 %v3511, %v3532
        %v3534 = vpop.f32.mrf.mxu0
        %v3535 = vadd.f32 %v3511, %v3534
        %3536 = vmatmul.bf16.gmra.mxu0 %v3497
        %v3537 = vpop.f32.mrf.mxu0
        %v3538 = vadd.f32 %v3511, %v3537
        %v3539 = vpop.f32.mrf.mxu0
        %v3540 = vadd.f32 %v3511, %v3539
        %3541 = vmatmul.bf16.gmra.mxu0 %v3498
        %v3542 = vpop.f32.mrf.mxu0
        %v3543 = vadd.f32 %v3511, %v3542
        %v3544 = vpop.f32.mrf.mxu0
        %v3545 = vadd.f32 %v3511, %v3544
        %3546 = vmatmul.bf16.gmra.mxu0 %v3499
        %v3547 = vpop.f32.mrf.mxu0
        %v3548 = vadd.f32 %v3511, %v3547
        %v3549 = vpop.f32.mrf.mxu0
        %v3550 = vadd.f32 %v3511, %v3549
        %3551 = vmatmul.bf16.gmra.mxu0 %v3500
        %v3552 = vpop.f32.mrf.mxu0
        %v3553 = vadd.f32 %v3511, %v3552
        %v3554 = vpop.f32.mrf.mxu0
        %v3555 = vadd.f32 %v3511, %v3554
        %3556 = vmatmul.bf16.gmra.mxu0 %v3501
        %v3557 = vpop.f32.mrf.mxu0
        %v3558 = vadd.f32 %v3511, %v3557
        %v3559 = vpop.f32.mrf.mxu0
        %v3560 = vadd.f32 %v3511, %v3559
        %3561 = vmatmul.bf16.gmra.mxu0 %v3502
        %v3562 = vpop.f32.mrf.mxu0
        %v3563 = vadd.f32 %v3511, %v3562
        %v3564 = vpop.f32.mrf.mxu0
        %v3565 = vadd.f32 %v3511, %v3564
        %3566 = vmatmul.bf16.gmra.mxu0 %v3503
        %v3567 = vpop.f32.mrf.mxu0
        %v3568 = vadd.f32 %v3511, %v3567
        %v3569 = vpop.f32.mrf.mxu0
        %v3570 = vadd.f32 %v3511, %v3569
        %3571 = vmatmul.bf16.gmra.mxu0 %v3504
        %v3572 = vpop.f32.mrf.mxu0
        %v3573 = vadd.f32 %v3511, %v3572
        %v3574 = vpop.f32.mrf.mxu0
        %v3575 = vadd.f32 %v3511, %v3574
        %3576 = vmatmul.bf16.gmra.mxu0 %v3505
        %v3577 = vpop.f32.mrf.mxu0
        %v3578 = vadd.f32 %v3511, %v3577
        %v3579 = vpop.f32.mrf.mxu0
        %v3580 = vadd.f32 %v3511, %v3579
        %3581 = vmatmul.bf16.gmra.mxu0 %v3506
        %v3582 = vpop.f32.mrf.mxu0
        %v3583 = vadd.f32 %v3511, %v3582
        %v3584 = vpop.f32.mrf.mxu0
        %v3585 = vadd.f32 %v3511, %v3584
        %3586 = vmatmul.bf16.gmra.mxu0 %v3507
        %v3587 = vpop.f32.mrf.mxu0
        %v3588 = vadd.f32 %v3511, %v3587
        %v3589 = vpop.f32.mrf.mxu0
        %v3590 = vadd.f32 %v3511, %v3589
        %3591 = vmatmul.bf16.gmra.mxu0 %v3508
        %v3592 = vpop.f32.mrf.mxu0
        %v3593 = vadd.f32 %v3511, %v3592
        %v3594 = vpop.f32.mrf.mxu0
        %v3595 = vadd.f32 %v3511, %v3594
        %3596 = vmatmul.bf16.gmra.mxu0 %v3509
        %v3597 = vpop.f32.mrf.mxu0
        %v3598 = vadd.f32 %v3511, %v3597
        %v3599 = vpop.f32.mrf.mxu0
        %v3600 = vadd.f32 %v3511, %v3599
        %3601 = vdwg.mxu0
        %v3602 = vsel %vm1403, %v3523, -inf
        %3603 = vmax.xlane.f32.xlu0 %v3602
        %v3604 = vpop.xlane.xlu0 %3603
        %v3605 = vsel %vm1403, %v3525, -inf
        %3606 = vmax.xlane.f32.xlu0 %v3605
        %v3607 = vpop.xlane.xlu0 %3606
        %v3608 = vsel %vm1403, %v3528, -inf
        %3609 = vmax.xlane.f32.xlu0 %v3608
        %v3610 = vpop.xlane.xlu0 %3609
        %v3611 = vsel %vm1403, %v3530, -inf
        %3612 = vmax.xlane.f32.xlu0 %v3611
        %v3613 = vpop.xlane.xlu0 %3612
        %v3614 = vsel %vm1403, %v3533, -inf
        %3615 = vmax.xlane.f32.xlu0 %v3614
        %v3616 = vpop.xlane.xlu0 %3615
        %v3617 = vsel %vm1403, %v3535, -inf
        %3618 = vmax.xlane.f32.xlu0 %v3617
        %v3619 = vpop.xlane.xlu0 %3618
        %v3620 = vsel %vm1403, %v3538, -inf
        %3621 = vmax.xlane.f32.xlu0 %v3620
        %v3622 = vpop.xlane.xlu0 %3621
        %v3623 = vsel %vm1403, %v3540, -inf
        %3624 = vmax.xlane.f32.xlu0 %v3623
        %v3625 = vpop.xlane.xlu0 %3624
        %v3626 = vsel %vm1403, %v3543, -inf
        %3627 = vmax.xlane.f32.xlu0 %v3626
        %v3628 = vpop.xlane.xlu0 %3627
        %v3629 = vsel %vm1403, %v3545, -inf
        %3630 = vmax.xlane.f32.xlu0 %v3629
        %v3631 = vpop.xlane.xlu0 %3630
        %v3632 = vsel %vm1403, %v3548, -inf
        %3633 = vmax.xlane.f32.xlu0 %v3632
        %v3634 = vpop.xlane.xlu0 %3633
        %v3635 = vsel %vm1403, %v3550, -inf
        %3636 = vmax.xlane.f32.xlu0 %v3635
        %v3637 = vpop.xlane.xlu0 %3636
        %v3638 = vsel %vm1403, %v3553, -inf
        %3639 = vmax.xlane.f32.xlu0 %v3638
        %v3640 = vpop.xlane.xlu0 %3639
        %v3641 = vsel %vm1403, %v3555, -inf
        %3642 = vmax.xlane.f32.xlu0 %v3641
        %v3643 = vpop.xlane.xlu0 %3642
        %v3644 = vsel %vm1403, %v3558, -inf
        %3645 = vmax.xlane.f32.xlu0 %v3644
        %v3646 = vpop.xlane.xlu0 %3645
        %v3647 = vsel %vm1403, %v3560, -inf
        %3648 = vmax.xlane.f32.xlu0 %v3647
        %v3649 = vpop.xlane.xlu0 %3648
        %v3650 = vsel %vm1403, %v3563, -inf
        %3651 = vmax.xlane.f32.xlu0 %v3650
        %v3652 = vpop.xlane.xlu0 %3651
        %v3653 = vsel %vm1403, %v3565, -inf
        %3654 = vmax.xlane.f32.xlu0 %v3653
        %v3655 = vpop.xlane.xlu0 %3654
        %v3656 = vsel %vm1403, %v3568, -inf
        %3657 = vmax.xlane.f32.xlu0 %v3656
        %v3658 = vpop.xlane.xlu0 %3657
        %v3659 = vsel %vm1403, %v3570, -inf
        %3660 = vmax.xlane.f32.xlu0 %v3659
        %v3661 = vpop.xlane.xlu0 %3660
        %v3662 = vsel %vm1403, %v3573, -inf
        %3663 = vmax.xlane.f32.xlu0 %v3662
        %v3664 = vpop.xlane.xlu0 %3663
        %v3665 = vsel %vm1403, %v3575, -inf
        %3666 = vmax.xlane.f32.xlu0 %v3665
        %v3667 = vpop.xlane.xlu0 %3666
        %v3668 = vsel %vm1403, %v3578, -inf
        %3669 = vmax.xlane.f32.xlu0 %v3668
        %v3670 = vpop.xlane.xlu0 %3669
        %v3671 = vsel %vm1403, %v3580, -inf
        %3672 = vmax.xlane.f32.xlu0 %v3671
        %v3673 = vpop.xlane.xlu0 %3672
        %v3674 = vsel %vm1403, %v3583, -inf
        %3675 = vmax.xlane.f32.xlu0 %v3674
        %v3676 = vpop.xlane.xlu0 %3675
        %v3677 = vsel %vm1403, %v3585, -inf
        %3678 = vmax.xlane.f32.xlu0 %v3677
        %v3679 = vpop.xlane.xlu0 %3678
        %v3680 = vsel %vm1403, %v3588, -inf
        %3681 = vmax.xlane.f32.xlu0 %v3680
        %v3682 = vpop.xlane.xlu0 %3681
        %v3683 = vsel %vm1403, %v3590, -inf
        %3684 = vmax.xlane.f32.xlu0 %v3683
        %v3685 = vpop.xlane.xlu0 %3684
        %v3686 = vsel %vm1403, %v3593, -inf
        %3687 = vmax.xlane.f32.xlu0 %v3686
        %v3688 = vpop.xlane.xlu0 %3687
        %v3689 = vsel %vm1403, %v3595, -inf
        %3690 = vmax.xlane.f32.xlu0 %v3689
        %v3691 = vpop.xlane.xlu0 %3690
        %v3692 = vsel %vm1403, %v3598, -inf
        %3693 = vmax.xlane.f32.xlu0 %v3692
        %v3694 = vpop.xlane.xlu0 %3693
        %v3695 = vsel %vm1403, %v3600, -inf
        %3696 = vmax.xlane.f32.xlu0 %v3695
        %v3697 = vpop.xlane.xlu0 %3696
        %v3698 = vsub.f32 %v3523, %v3604
        %v3699 = vsub.f32 %v3525, %v3607
        %v3700 = vsub.f32 %v3528, %v3610
        %v3701 = vsub.f32 %v3530, %v3613
        %v3702 = vsub.f32 %v3533, %v3616
        %v3703 = vsub.f32 %v3535, %v3619
        %v3704 = vsub.f32 %v3538, %v3622
        %v3705 = vsub.f32 %v3540, %v3625
        %v3706 = vsub.f32 %v3543, %v3628
        %v3707 = vsub.f32 %v3545, %v3631
        %v3708 = vsub.f32 %v3548, %v3634
        %v3709 = vsub.f32 %v3550, %v3637
        %v3710 = vsub.f32 %v3553, %v3640
        %v3711 = vsub.f32 %v3555, %v3643
        %v3712 = vsub.f32 %v3558, %v3646
        %v3713 = vsub.f32 %v3560, %v3649
        %v3714 = vsub.f32 %v3563, %v3652
        %v3715 = vsub.f32 %v3565, %v3655
        %v3716 = vsub.f32 %v3568, %v3658
        %v3717 = vsub.f32 %v3570, %v3661
        %v3718 = vsub.f32 %v3573, %v3664
        %v3719 = vsub.f32 %v3575, %v3667
        %v3720 = vsub.f32 %v3578, %v3670
        %v3721 = vsub.f32 %v3580, %v3673
        %v3722 = vsub.f32 %v3583, %v3676
        %v3723 = vsub.f32 %v3585, %v3679
        %v3724 = vsub.f32 %v3588, %v3682
        %v3725 = vsub.f32 %v3590, %v3685
        %v3726 = vsub.f32 %v3593, %v3688
        %v3727 = vsub.f32 %v3595, %v3691
        %v3728 = vsub.f32 %v3598, %v3694
        %v3729 = vsub.f32 %v3600, %v3697
        %v3730 = vmul.f32 %v3698, 1.442695
        %v3731 = vpow.pop %v3730
        %v3732 = vmul.f32 %v3699, 1.442695
        %v3733 = vpow.pop %v3732
        %v3734 = vmul.f32 %v3700, 1.442695
        %v3735 = vpow.pop %v3734
        %v3736 = vmul.f32 %v3701, 1.442695
        %v3737 = vpow.pop %v3736
        %v3738 = vmul.f32 %v3702, 1.442695
        %v3739 = vpow.pop %v3738
        %v3740 = vmul.f32 %v3703, 1.442695
        %v3741 = vpow.pop %v3740
        %v3742 = vmul.f32 %v3704, 1.442695
        %v3743 = vpow.pop %v3742
        %v3744 = vmul.f32 %v3705, 1.442695
        %v3745 = vpow.pop %v3744
        %v3746 = vmul.f32 %v3706, 1.442695
        %v3747 = vpow.pop %v3746
        %v3748 = vmul.f32 %v3707, 1.442695
        %v3749 = vpow.pop %v3748
        %v3750 = vmul.f32 %v3708, 1.442695
        %v3751 = vpow.pop %v3750
        %v3752 = vmul.f32 %v3709, 1.442695
        %v3753 = vpow.pop %v3752
        %v3754 = vmul.f32 %v3710, 1.442695
        %v3755 = vpow.pop %v3754
        %v3756 = vmul.f32 %v3711, 1.442695
        %v3757 = vpow.pop %v3756
        %v3758 = vmul.f32 %v3712, 1.442695
        %v3759 = vpow.pop %v3758
        %v3760 = vmul.f32 %v3713, 1.442695
        %v3761 = vpow.pop %v3760
        %v3762 = vmul.f32 %v3714, 1.442695
        %v3763 = vpow.pop %v3762
        %v3764 = vmul.f32 %v3715, 1.442695
        %v3765 = vpow.pop %v3764
        %v3766 = vmul.f32 %v3716, 1.442695
        %v3767 = vpow.pop %v3766
        %v3768 = vmul.f32 %v3717, 1.442695
        %v3769 = vpow.pop %v3768
        %v3770 = vmul.f32 %v3718, 1.442695
        %v3771 = vpow.pop %v3770
        %v3772 = vmul.f32 %v3719, 1.442695
        %v3773 = vpow.pop %v3772
        %v3774 = vmul.f32 %v3720, 1.442695
        %v3775 = vpow.pop %v3774
        %v3776 = vmul.f32 %v3721, 1.442695
        %v3777 = vpow.pop %v3776
        %v3778 = vmul.f32 %v3722, 1.442695
        %v3779 = vpow.pop %v3778
        %v3780 = vmul.f32 %v3723, 1.442695
        %v3781 = vpow.pop %v3780
        %v3782 = vmul.f32 %v3724, 1.442695
        %v3783 = vpow.pop %v3782
        %v3784 = vmul.f32 %v3725, 1.442695
        %v3785 = vpow.pop %v3784
        %v3786 = vmul.f32 %v3726, 1.442695
        %v3787 = vpow.pop %v3786
        %v3788 = vmul.f32 %v3727, 1.442695
        %v3789 = vpow.pop %v3788
        %v3790 = vmul.f32 %v3728, 1.442695
        %v3791 = vpow.pop %v3790
        %v3792 = vmul.f32 %v3729, 1.442695
        %v3793 = vpow.pop %v3792
        %v3794 = vsel %vm1403, %v3731, 0.0
        %3795 = vadd.xlane.f32.xlu0 %v3794
        %v3796 = vpop.xlane.xlu0 %3795
        %v3797 = vsel %vm1403, %v3733, 0.0
        %3798 = vadd.xlane.f32.xlu0 %v3797
        %v3799 = vpop.xlane.xlu0 %3798
        %v3800 = vsel %vm1403, %v3735, 0.0
        %3801 = vadd.xlane.f32.xlu0 %v3800
        %v3802 = vpop.xlane.xlu0 %3801
        %v3803 = vsel %vm1403, %v3737, 0.0
        %3804 = vadd.xlane.f32.xlu0 %v3803
        %v3805 = vpop.xlane.xlu0 %3804
        %v3806 = vsel %vm1403, %v3739, 0.0
        %3807 = vadd.xlane.f32.xlu0 %v3806
        %v3808 = vpop.xlane.xlu0 %3807
        %v3809 = vsel %vm1403, %v3741, 0.0
        %3810 = vadd.xlane.f32.xlu0 %v3809
        %v3811 = vpop.xlane.xlu0 %3810
        %v3812 = vsel %vm1403, %v3743, 0.0
        %3813 = vadd.xlane.f32.xlu0 %v3812
        %v3814 = vpop.xlane.xlu0 %3813
        %v3815 = vsel %vm1403, %v3745, 0.0
        %3816 = vadd.xlane.f32.xlu0 %v3815
        %v3817 = vpop.xlane.xlu0 %3816
        %v3818 = vsel %vm1403, %v3747, 0.0
        %3819 = vadd.xlane.f32.xlu0 %v3818
        %v3820 = vpop.xlane.xlu0 %3819
        %v3821 = vsel %vm1403, %v3749, 0.0
        %3822 = vadd.xlane.f32.xlu0 %v3821
        %v3823 = vpop.xlane.xlu0 %3822
        %v3824 = vsel %vm1403, %v3751, 0.0
        %3825 = vadd.xlane.f32.xlu0 %v3824
        %v3826 = vpop.xlane.xlu0 %3825
        %v3827 = vsel %vm1403, %v3753, 0.0
        %3828 = vadd.xlane.f32.xlu0 %v3827
        %v3829 = vpop.xlane.xlu0 %3828
        %v3830 = vsel %vm1403, %v3755, 0.0
        %3831 = vadd.xlane.f32.xlu0 %v3830
        %v3832 = vpop.xlane.xlu0 %3831
        %v3833 = vsel %vm1403, %v3757, 0.0
        %3834 = vadd.xlane.f32.xlu0 %v3833
        %v3835 = vpop.xlane.xlu0 %3834
        %v3836 = vsel %vm1403, %v3759, 0.0
        %3837 = vadd.xlane.f32.xlu0 %v3836
        %v3838 = vpop.xlane.xlu0 %3837
        %v3839 = vsel %vm1403, %v3761, 0.0
        %3840 = vadd.xlane.f32.xlu0 %v3839
        %v3841 = vpop.xlane.xlu0 %3840
        %v3842 = vsel %vm1403, %v3763, 0.0
        %3843 = vadd.xlane.f32.xlu0 %v3842
        %v3844 = vpop.xlane.xlu0 %3843
        %v3845 = vsel %vm1403, %v3765, 0.0
        %3846 = vadd.xlane.f32.xlu0 %v3845
        %v3847 = vpop.xlane.xlu0 %3846
        %v3848 = vsel %vm1403, %v3767, 0.0
        %3849 = vadd.xlane.f32.xlu0 %v3848
        %v3850 = vpop.xlane.xlu0 %3849
        %v3851 = vsel %vm1403, %v3769, 0.0
        %3852 = vadd.xlane.f32.xlu0 %v3851
        %v3853 = vpop.xlane.xlu0 %3852
        %v3854 = vsel %vm1403, %v3771, 0.0
        %3855 = vadd.xlane.f32.xlu0 %v3854
        %v3856 = vpop.xlane.xlu0 %3855
        %v3857 = vsel %vm1403, %v3773, 0.0
        %3858 = vadd.xlane.f32.xlu0 %v3857
        %v3859 = vpop.xlane.xlu0 %3858
        %v3860 = vsel %vm1403, %v3775, 0.0
        %3861 = vadd.xlane.f32.xlu0 %v3860
        %v3862 = vpop.xlane.xlu0 %3861
        %v3863 = vsel %vm1403, %v3777, 0.0
        %3864 = vadd.xlane.f32.xlu0 %v3863
        %v3865 = vpop.xlane.xlu0 %3864
        %v3866 = vsel %vm1403, %v3779, 0.0
        %3867 = vadd.xlane.f32.xlu0 %v3866
        %v3868 = vpop.xlane.xlu0 %3867
        %v3869 = vsel %vm1403, %v3781, 0.0
        %3870 = vadd.xlane.f32.xlu0 %v3869
        %v3871 = vpop.xlane.xlu0 %3870
        %v3872 = vsel %vm1403, %v3783, 0.0
        %3873 = vadd.xlane.f32.xlu0 %v3872
        %v3874 = vpop.xlane.xlu0 %3873
        %v3875 = vsel %vm1403, %v3785, 0.0
        %3876 = vadd.xlane.f32.xlu0 %v3875
        %v3877 = vpop.xlane.xlu0 %3876
        %v3878 = vsel %vm1403, %v3787, 0.0
        %3879 = vadd.xlane.f32.xlu0 %v3878
        %v3880 = vpop.xlane.xlu0 %3879
        %v3881 = vsel %vm1403, %v3789, 0.0
        %3882 = vadd.xlane.f32.xlu0 %v3881
        %v3883 = vpop.xlane.xlu0 %3882
        %v3884 = vsel %vm1403, %v3791, 0.0
        %3885 = vadd.xlane.f32.xlu0 %v3884
        %v3886 = vpop.xlane.xlu0 %3885
        %v3887 = vsel %vm1403, %v3793, 0.0
        %3888 = vadd.xlane.f32.xlu0 %v3887
        %v3889 = vpop.xlane.xlu0 %3888
        %v3890 = vrcp.pop %v3796
        %v3891 = vrcp.pop %v3799
        %v3892 = vrcp.pop %v3802
        %v3893 = vrcp.pop %v3805
        %v3894 = vrcp.pop %v3808
        %v3895 = vrcp.pop %v3811
        %v3896 = vrcp.pop %v3814
        %v3897 = vrcp.pop %v3817
        %v3898 = vrcp.pop %v3820
        %v3899 = vrcp.pop %v3823
        %v3900 = vrcp.pop %v3826
        %v3901 = vrcp.pop %v3829
        %v3902 = vrcp.pop %v3832
        %v3903 = vrcp.pop %v3835
        %v3904 = vrcp.pop %v3838
        %v3905 = vrcp.pop %v3841
        %v3906 = vrcp.pop %v3844
        %v3907 = vrcp.pop %v3847
        %v3908 = vrcp.pop %v3850
        %v3909 = vrcp.pop %v3853
        %v3910 = vrcp.pop %v3856
        %v3911 = vrcp.pop %v3859
        %v3912 = vrcp.pop %v3862
        %v3913 = vrcp.pop %v3865
        %v3914 = vrcp.pop %v3868
        %v3915 = vrcp.pop %v3871
        %v3916 = vrcp.pop %v3874
        %v3917 = vrcp.pop %v3877
        %v3918 = vrcp.pop %v3880
        %v3919 = vrcp.pop %v3883
        %v3920 = vrcp.pop %v3886
        %v3921 = vrcp.pop %v3889
        %v3922 = vmul.f32 %v3731, %v3890
        %v3923 = vmul.f32 %v3733, %v3891
        %v3924 = vmul.f32 %v3735, %v3892
        %v3925 = vmul.f32 %v3737, %v3893
        %v3926 = vmul.f32 %v3739, %v3894
        %v3927 = vmul.f32 %v3741, %v3895
        %v3928 = vmul.f32 %v3743, %v3896
        %v3929 = vmul.f32 %v3745, %v3897
        %v3930 = vmul.f32 %v3747, %v3898
        %v3931 = vmul.f32 %v3749, %v3899
        %v3932 = vmul.f32 %v3751, %v3900
        %v3933 = vmul.f32 %v3753, %v3901
        %v3934 = vmul.f32 %v3755, %v3902
        %v3935 = vmul.f32 %v3757, %v3903
        %v3936 = vmul.f32 %v3759, %v3904
        %v3937 = vmul.f32 %v3761, %v3905
        %v3938 = vmul.f32 %v3763, %v3906
        %v3939 = vmul.f32 %v3765, %v3907
        %v3940 = vmul.f32 %v3767, %v3908
        %v3941 = vmul.f32 %v3769, %v3909
        %v3942 = vmul.f32 %v3771, %v3910
        %v3943 = vmul.f32 %v3773, %v3911
        %v3944 = vmul.f32 %v3775, %v3912
        %v3945 = vmul.f32 %v3777, %v3913
        %v3946 = vmul.f32 %v3779, %v3914
        %v3947 = vmul.f32 %v3781, %v3915
        %v3948 = vmul.f32 %v3783, %v3916
        %v3949 = vmul.f32 %v3785, %v3917
        %v3950 = vmul.f32 %v3787, %v3918
        %v3951 = vmul.f32 %v3789, %v3919
        %v3952 = vmul.f32 %v3791, %v3920
        %v3953 = vmul.f32 %v3793, %v3921
        %v3954 = vpack.c.bf16 %v3923, %v3922
        %v3955 = vpack.c.bf16 %v3925, %v3924
        %v3956 = vpack.c.bf16 %v3927, %v3926
        %v3957 = vpack.c.bf16 %v3929, %v3928
        %v3958 = vpack.c.bf16 %v3931, %v3930
        %v3959 = vpack.c.bf16 %v3933, %v3932
        %v3960 = vpack.c.bf16 %v3935, %v3934
        %v3961 = vpack.c.bf16 %v3937, %v3936
        %v3962 = vpack.c.bf16 %v3939, %v3938
        %v3963 = vpack.c.bf16 %v3941, %v3940
        %v3964 = vpack.c.bf16 %v3943, %v3942
        %v3965 = vpack.c.bf16 %v3945, %v3944
        %v3966 = vpack.c.bf16 %v3947, %v3946
        %v3967 = vpack.c.bf16 %v3949, %v3948
        %v3968 = vpack.c.bf16 %v3951, %v3950
        %v3969 = vpack.c.bf16 %v3953, %v3952
        %v3971 = vsel %vm1403, %v3954, 0
        %v3974 = vsel %vm1403, %v3955, 0
        %v3977 = vsel %vm1403, %v3956, 0
        %v3980 = vsel %vm1403, %v3957, 0
        %v3983 = vsel %vm1403, %v3958, 0
        %v3986 = vsel %vm1403, %v3959, 0
        %v3989 = vsel %vm1403, %v3960, 0
        %v3992 = vsel %vm1403, %v3961, 0
        %v3995 = vsel %vm1403, %v3962, 0
        %v3998 = vsel %vm1403, %v3963, 0
        %v4001 = vsel %vm1403, %v3964, 0
        %v4004 = vsel %vm1403, %v3965, 0
        %v4007 = vsel %vm1403, %v3966, 0
        %v4010 = vsel %vm1403, %v3967, 0
        %v4013 = vsel %vm1403, %v3968, 0
        %v4016 = vsel %vm1403, %v3969, 0
        %4018 = vmatpush.bf16.msra.mxu0 0
        %4019 = vmatpush.bf16.msra.mxu0 0
        %4020 = vmatpush.bf16.msra.mxu0 0
        %4021 = vmatpush.bf16.msra.mxu0 0
        %4022 = vmatpush.bf16.msra.mxu0 0
        %4023 = vmatpush.bf16.msra.mxu0 0
        %4024 = vmatpush.bf16.msra.mxu0 %v3437
        %4025 = vmatpush.bf16.msra.mxu0 %v3436
        %4026 = vmatmul.bf16.gmra.mxu0 %v3971
        %v4027 = vpop.f32.mrf.mxu0
        %v4028 = vadd.f32 0.0, %v4027
        %v4029 = vpop.f32.mrf.mxu0
        %v4030 = vadd.f32 0.0, %v4029
        %4031 = vmatmul.bf16.gmra.mxu0 %v3974
        %v4032 = vpop.f32.mrf.mxu0
        %v4033 = vadd.f32 0.0, %v4032
        %v4034 = vpop.f32.mrf.mxu0
        %v4035 = vadd.f32 0.0, %v4034
        %4036 = vmatmul.bf16.gmra.mxu0 %v3977
        %v4037 = vpop.f32.mrf.mxu0
        %v4038 = vadd.f32 0.0, %v4037
        %v4039 = vpop.f32.mrf.mxu0
        %v4040 = vadd.f32 0.0, %v4039
        %4041 = vmatmul.bf16.gmra.mxu0 %v3980
        %v4042 = vpop.f32.mrf.mxu0
        %v4043 = vadd.f32 0.0, %v4042
        %v4044 = vpop.f32.mrf.mxu0
        %v4045 = vadd.f32 0.0, %v4044
        %4046 = vmatmul.bf16.gmra.mxu0 %v3983
        %v4047 = vpop.f32.mrf.mxu0
        %v4048 = vadd.f32 0.0, %v4047
        %v4049 = vpop.f32.mrf.mxu0
        %v4050 = vadd.f32 0.0, %v4049
        %4051 = vmatmul.bf16.gmra.mxu0 %v3986
        %v4052 = vpop.f32.mrf.mxu0
        %v4053 = vadd.f32 0.0, %v4052
        %v4054 = vpop.f32.mrf.mxu0
        %v4055 = vadd.f32 0.0, %v4054
        %4056 = vmatmul.bf16.gmra.mxu0 %v3989
        %v4057 = vpop.f32.mrf.mxu0
        %v4058 = vadd.f32 0.0, %v4057
        %v4059 = vpop.f32.mrf.mxu0
        %v4060 = vadd.f32 0.0, %v4059
        %4061 = vmatmul.bf16.gmra.mxu0 %v3992
        %v4062 = vpop.f32.mrf.mxu0
        %v4063 = vadd.f32 0.0, %v4062
        %v4064 = vpop.f32.mrf.mxu0
        %v4065 = vadd.f32 0.0, %v4064
        %4066 = vmatmul.bf16.gmra.mxu0 %v3995
        %v4067 = vpop.f32.mrf.mxu0
        %v4068 = vadd.f32 0.0, %v4067
        %v4069 = vpop.f32.mrf.mxu0
        %v4070 = vadd.f32 0.0, %v4069
        %4071 = vmatmul.bf16.gmra.mxu0 %v3998
        %v4072 = vpop.f32.mrf.mxu0
        %v4073 = vadd.f32 0.0, %v4072
        %v4074 = vpop.f32.mrf.mxu0
        %v4075 = vadd.f32 0.0, %v4074
        %4076 = vmatmul.bf16.gmra.mxu0 %v4001
        %v4077 = vpop.f32.mrf.mxu0
        %v4078 = vadd.f32 0.0, %v4077
        %v4079 = vpop.f32.mrf.mxu0
        %v4080 = vadd.f32 0.0, %v4079
        %4081 = vmatmul.bf16.gmra.mxu0 %v4004
        %v4082 = vpop.f32.mrf.mxu0
        %v4083 = vadd.f32 0.0, %v4082
        %v4084 = vpop.f32.mrf.mxu0
        %v4085 = vadd.f32 0.0, %v4084
        %4086 = vmatmul.bf16.gmra.mxu0 %v4007
        %v4087 = vpop.f32.mrf.mxu0
        %v4088 = vadd.f32 0.0, %v4087
        %v4089 = vpop.f32.mrf.mxu0
        %v4090 = vadd.f32 0.0, %v4089
        %4091 = vmatmul.bf16.gmra.mxu0 %v4010
        %v4092 = vpop.f32.mrf.mxu0
        %v4093 = vadd.f32 0.0, %v4092
        %v4094 = vpop.f32.mrf.mxu0
        %v4095 = vadd.f32 0.0, %v4094
        %4096 = vmatmul.bf16.gmra.mxu0 %v4013
        %v4097 = vpop.f32.mrf.mxu0
        %v4098 = vadd.f32 0.0, %v4097
        %v4099 = vpop.f32.mrf.mxu0
        %v4100 = vadd.f32 0.0, %v4099
        %4101 = vmatmul.bf16.gmra.mxu0 %v4016
        %v4102 = vpop.f32.mrf.mxu0
        %v4103 = vadd.f32 0.0, %v4102
        %v4104 = vpop.f32.mrf.mxu0
        %v4105 = vadd.f32 0.0, %v4104
        %4106 = vdwg.mxu0
        %v4107 = vmul.f32 %v4028, %v3446
        %v4108 = vmul.f32 %v4030, %v3446
        %v4109 = vmul.f32 %v4033, %v3446
        %v4110 = vmul.f32 %v4035, %v3446
        %v4111 = vmul.f32 %v4038, %v3447
        %v4112 = vmul.f32 %v4040, %v3447
        %v4113 = vmul.f32 %v4043, %v3447
        %v4114 = vmul.f32 %v4045, %v3447
        %v4115 = vmul.f32 %v4048, %v3448
        %v4116 = vmul.f32 %v4050, %v3448
        %v4117 = vmul.f32 %v4053, %v3448
        %v4118 = vmul.f32 %v4055, %v3448
        %v4119 = vmul.f32 %v4058, %v3449
        %v4120 = vmul.f32 %v4060, %v3449
        %v4121 = vmul.f32 %v4063, %v3449
        %v4122 = vmul.f32 %v4065, %v3449
        %v4123 = vmul.f32 %v4068, %v3450
        %v4124 = vmul.f32 %v4070, %v3450
        %v4125 = vmul.f32 %v4073, %v3450
        %v4126 = vmul.f32 %v4075, %v3450
        %v4127 = vmul.f32 %v4078, %v3451
        %v4128 = vmul.f32 %v4080, %v3451
        %v4129 = vmul.f32 %v4083, %v3451
        %v4130 = vmul.f32 %v4085, %v3451
        %v4131 = vmul.f32 %v4088, %v3452
        %v4132 = vmul.f32 %v4090, %v3452
        %v4133 = vmul.f32 %v4093, %v3452
        %v4134 = vmul.f32 %v4095, %v3452
        %v4135 = vmul.f32 %v4098, %v3453
        %v4136 = vmul.f32 %v4100, %v3453
        %v4137 = vmul.f32 %v4103, %v3453
        %v4138 = vmul.f32 %v4105, %v3453
        %v4139 = vadd.f32 %v4107, %v4111
        %v4140 = vadd.f32 %v4139, %v4115
        %v4141 = vadd.f32 %v4140, %v4119
        %v4142 = vadd.f32 %v4141, %v4123
        %v4143 = vadd.f32 %v4142, %v4127
        %v4144 = vadd.f32 %v4143, %v4131
        %v4145 = vadd.f32 %v4144, %v4135
        %v4146 = vadd.f32 %v4108, %v4112
        %v4147 = vadd.f32 %v4146, %v4116
        %v4148 = vadd.f32 %v4147, %v4120
        %v4149 = vadd.f32 %v4148, %v4124
        %v4150 = vadd.f32 %v4149, %v4128
        %v4151 = vadd.f32 %v4150, %v4132
        %v4152 = vadd.f32 %v4151, %v4136
        %v4153 = vadd.f32 %v4109, %v4113
        %v4154 = vadd.f32 %v4153, %v4117
        %v4155 = vadd.f32 %v4154, %v4121
        %v4156 = vadd.f32 %v4155, %v4125
        %v4157 = vadd.f32 %v4156, %v4129
        %v4158 = vadd.f32 %v4157, %v4133
        %v4159 = vadd.f32 %v4158, %v4137
        %v4160 = vadd.f32 %v4110, %v4114
        %v4161 = vadd.f32 %v4160, %v4118
        %v4162 = vadd.f32 %v4161, %v4122
        %v4163 = vadd.f32 %v4162, %v4126
        %v4164 = vadd.f32 %v4163, %v4130
        %v4165 = vadd.f32 %v4164, %v4134
        %v4166 = vadd.f32 %v4165, %v4138
        %v4167 = vld [vmem:[#allocation21] sm:$0xf]
        %v4168 = vld [vmem:[#allocation21 + $0x4] sm:$0xf]
        %v4169 = vld [vmem:[#allocation21 + $0x8] sm:$0xf]
        %v4170 = vld [vmem:[#allocation21 + $0xc] sm:$0xf]
        %v4171 = vld [vmem:[#allocation21 + $0x10] sm:$0xf]
        %v4172 = vld [vmem:[#allocation21 + $0x14] sm:$0xf]
        %v4173 = vld [vmem:[#allocation21 + $0x18] sm:$0xf]
        %v4174 = vld [vmem:[#allocation21 + $0x1c] sm:$0xf]
        %v4175 = vld [vmem:[#allocation21 + $0x20] sm:$0xf]
        %v4176 = vld [vmem:[#allocation21 + $0x24] sm:$0xf]
        %v4177 = vld [vmem:[#allocation21 + $0x28] sm:$0xf]
        %v4178 = vld [vmem:[#allocation21 + $0x2c] sm:$0xf]
        %v4179 = vld [vmem:[#allocation21 + $0x30] sm:$0xf]
        %v4180 = vld [vmem:[#allocation21 + $0x34] sm:$0xf]
        %v4181 = vld [vmem:[#allocation21 + $0x38] sm:$0xf]
        %v4182 = vld [vmem:[#allocation21 + $0x3c] sm:$0xf]
        %v4183 = vld [vmem:[%s41] sm:$0x1]
        %v4184 = vpack.c.bf16 %v4152, %v4145
        %v4185 = vpack.c.bf16 %v4166, %v4159
        %v4187 = vperm.slane %v4183, 0
        %v4205 = vunpack.c.l.b16 %v4167
        %v4206 = vunpack.c.l.b16 %v4168
        %v4207 = vunpack.c.l.b16 %v4169
        %v4208 = vunpack.c.l.b16 %v4170
        %v4209 = vunpack.c.l.b16 %v4171
        %v4210 = vunpack.c.l.b16 %v4172
        %v4211 = vunpack.c.l.b16 %v4173
        %v4212 = vunpack.c.l.b16 %v4174
        %v4213 = vunpack.c.l.b16 %v4175
        %v4214 = vunpack.c.l.b16 %v4176
        %v4215 = vunpack.c.l.b16 %v4177
        %v4216 = vunpack.c.l.b16 %v4178
        %v4217 = vunpack.c.l.b16 %v4179
        %v4218 = vunpack.c.l.b16 %v4180
        %v4219 = vunpack.c.l.b16 %v4181
        %v4220 = vunpack.c.l.b16 %v4182
        %v4221 = vpack.c.b16 %v4206, %v4205
        %v4222 = vpack.c.b16 %v4208, %v4207
        %v4223 = vpack.c.b16 %v4210, %v4209
        %v4224 = vpack.c.b16 %v4212, %v4211
        %v4225 = vpack.c.b16 %v4214, %v4213
        %v4226 = vpack.c.b16 %v4216, %v4215
        %v4227 = vpack.c.b16 %v4218, %v4217
        %v4228 = vpack.c.b16 %v4220, %v4219
        %4237 = vmatpush.bf16.msra.mxu0 %v4228
        %4238 = vmatpush.bf16.msra.mxu0 %v4227
        %4239 = vmatpush.bf16.msra.mxu0 %v4226
        %4240 = vmatpush.bf16.msra.mxu0 %v4225
        %4241 = vmatpush.bf16.msra.mxu0 %v4224
        %4242 = vmatpush.bf16.msra.mxu0 %v4223
        %4243 = vmatpush.bf16.msra.mxu0 %v4222
        %4244 = vmatpush.bf16.msra.mxu0 %v4221
        %4245 = vmatmul.bf16.gmra.mxu0 %v4184
        %v4246 = vpop.f32.mrf.mxu0
        %v4247 = vadd.f32 %v4187, %v4246
        %v4248 = vpop.f32.mrf.mxu0
        %v4249 = vadd.f32 %v4187, %v4248
        %4250 = vmatmul.bf16.gmra.mxu0 %v4185
        %v4251 = vpop.f32.mrf.mxu0
        %v4252 = vadd.f32 %v4187, %v4251
        %v4253 = vpop.f32.mrf.mxu0
        %v4254 = vadd.f32 %v4187, %v4253
        %4255 = vdwg.mxu0
        %v4256 = vadd.f32 %v3195, %v4247
        %v4257 = vadd.f32 %v3196, %v4249
        %v4258 = vadd.f32 %v3197, %v4252
        %v4259 = vadd.f32 %v3198, %v4254
        %4260 = vadd.xlane.f32.xlu0 %v4256
        %v4261 = vpop.xlane.xlu0 %4260
        %4262 = vadd.xlane.f32.xlu0 %v4257
        %v4263 = vpop.xlane.xlu0 %4262
        %4264 = vadd.xlane.f32.xlu0 %v4258
        %v4265 = vpop.xlane.xlu0 %4264
        %4266 = vadd.xlane.f32.xlu0 %v4259
        %v4267 = vpop.xlane.xlu0 %4266
        %v4268 = vrcp.pop 128.0
        %v4269 = vmul.f32 128.0, %v4268
        %v4270 = vsub.f32 1.0, %v4269
        %v4271 = vmul.f32 %v4268, %v4270
        %v4272 = vadd.f32 %v4268, %v4271
        %vm4273 = vweird.f32 %v4268
        %v4274 = vsel %vm4273, %v4268, %v4272
        %v4275 = vmul.f32 %v4261, %v4274
        %v4276 = vmul.f32 %v4263, %v4274
        %v4277 = vmul.f32 %v4265, %v4274
        %v4278 = vmul.f32 %v4267, %v4274
        %v4279 = vsub.f32 %v4256, %v4275
        %v4280 = vsub.f32 %v4257, %v4276
        %v4281 = vsub.f32 %v4258, %v4277
        %v4282 = vsub.f32 %v4259, %v4278
        %v4283 = vmul.f32 %v4279, %v4279
        %v4284 = vmul.f32 %v4280, %v4280
        %v4285 = vmul.f32 %v4281, %v4281
        %v4286 = vmul.f32 %v4282, %v4282
        %4287 = vadd.xlane.f32.xlu0 %v4283
        %v4288 = vpop.xlane.xlu0 %4287
        %4289 = vadd.xlane.f32.xlu0 %v4284
        %v4290 = vpop.xlane.xlu0 %4289
        %4291 = vadd.xlane.f32.xlu0 %v4285
        %v4292 = vpop.xlane.xlu0 %4291
        %4293 = vadd.xlane.f32.xlu0 %v4286
        %v4294 = vpop.xlane.xlu0 %4293
        %v4295 = vmul.f32 %v4288, %v4274
        %v4296 = vmul.f32 %v4290, %v4274
        %v4297 = vmul.f32 %v4292, %v4274
        %v4298 = vmul.f32 %v4294, %v4274
        %v4299 = vadd.f32 %v4295, 1e-05
        %v4300 = vadd.f32 %v4296, 1e-05
        %v4301 = vadd.f32 %v4297, 1e-05
        %v4302 = vadd.f32 %v4298, 1e-05
        %v4303 = vrsqrt.pop %v4299
        %v4304 = vmul.f32 %v4303, %v4299
        %v4305 = vmul.f32 %v4304, %v4303
        %v4306 = vmul.f32 0.5, %v4305
        %v4307 = vsub.f32 1.5, %v4306
        %v4308 = vmul.f32 %v4303, %v4307
        %vm4309 = vweird.f32 %v4299
        %vm4310 = vweird.f32 %v4303
        %vm4311 = vmor %vm4309, %vm4310
        %v4312 = vsel %vm4311, %v4303, %v4308
        %v4313 = vrsqrt.pop %v4300
        %v4314 = vmul.f32 %v4313, %v4300
        %v4315 = vmul.f32 %v4314, %v4313
        %v4316 = vmul.f32 0.5, %v4315
        %v4317 = vsub.f32 1.5, %v4316
        %v4318 = vmul.f32 %v4313, %v4317
        %vm4319 = vweird.f32 %v4300
        %vm4320 = vweird.f32 %v4313
        %vm4321 = vmor %vm4319, %vm4320
        %v4322 = vsel %vm4321, %v4313, %v4318
        %v4323 = vrsqrt.pop %v4301
        %v4324 = vmul.f32 %v4323, %v4301
        %v4325 = vmul.f32 %v4324, %v4323
        %v4326 = vmul.f32 0.5, %v4325
        %v4327 = vsub.f32 1.5, %v4326
        %v4328 = vmul.f32 %v4323, %v4327
        %vm4329 = vweird.f32 %v4301
        %vm4330 = vweird.f32 %v4323
        %vm4331 = vmor %vm4329, %vm4330
        %v4332 = vsel %vm4331, %v4323, %v4328
        %v4333 = vrsqrt.pop %v4302
        %v4334 = vmul.f32 %v4333, %v4302
        %v4335 = vmul.f32 %v4334, %v4333
        %v4336 = vmul.f32 0.5, %v4335
        %v4337 = vsub.f32 1.5, %v4336
        %v4338 = vmul.f32 %v4333, %v4337
        %vm4339 = vweird.f32 %v4302
        %vm4340 = vweird.f32 %v4333
        %vm4341 = vmor %vm4339, %vm4340
        %v4342 = vsel %vm4341, %v4333, %v4338
        %v4343 = vmul.f32 %v4279, %v4312
        %v4344 = vmul.f32 %v4280, %v4322
        %v4345 = vmul.f32 %v4281, %v4332
        %v4346 = vmul.f32 %v4282, %v4342
        %v4347 = vperm.slane %v3201, 0
        %v4348 = vmul.f32 %v4343, %v4347
        %v4349 = vmul.f32 %v4344, %v4347
        %v4350 = vmul.f32 %v4345, %v4347
        %v4351 = vmul.f32 %v4346, %v4347
        %v4352 = vperm.slane %v3202, 0
        %v4353 = vadd.f32 %v4348, %v4352
        %v4354 = vadd.f32 %v4349, %v4352
        %v4355 = vadd.f32 %v4350, %v4352
        %v4356 = vadd.f32 %v4351, %v4352
        %v4357 = vld [vmem:[#allocation23] sm:$0xf]
        %v4358 = vld [vmem:[#allocation23 + $0x4] sm:$0xf]
        %v4359 = vld [vmem:[#allocation23 + $0x8] sm:$0xf]
        %v4360 = vld [vmem:[#allocation23 + $0xc] sm:$0xf]
        %v4361 = vld [vmem:[#allocation23 + $0x10] sm:$0xf]
        %v4362 = vld [vmem:[#allocation23 + $0x14] sm:$0xf]
        %v4363 = vld [vmem:[#allocation23 + $0x18] sm:$0xf]
        %v4364 = vld [vmem:[#allocation23 + $0x1c] sm:$0xf]
        %v4365 = vld [vmem:[#allocation23 + $0x20] sm:$0xf]
        %v4366 = vld [vmem:[#allocation23 + $0x24] sm:$0xf]
        %v4367 = vld [vmem:[#allocation23 + $0x28] sm:$0xf]
        %v4368 = vld [vmem:[#allocation23 + $0x2c] sm:$0xf]
        %v4369 = vld [vmem:[#allocation23 + $0x30] sm:$0xf]
        %v4370 = vld [vmem:[#allocation23 + $0x34] sm:$0xf]
        %v4371 = vld [vmem:[#allocation23 + $0x38] sm:$0xf]
        %v4372 = vld [vmem:[#allocation23 + $0x3c] sm:$0xf]
        %v4373 = vld [vmem:[#allocation24] sm:$0xff]
        %v4374 = vld [vmem:[#allocation24 + $0x8] sm:$0xff]
        %v4375 = vld [vmem:[#allocation24 + $0x10] sm:$0xff]
        %v4376 = vld [vmem:[#allocation24 + $0x18] sm:$0xff]
        %v4377 = vpack.c.bf16 %v4354, %v4353
        %v4378 = vpack.c.bf16 %v4356, %v4355
        %v4395 = vunpack.c.l.b16 %v4357
        %v4396 = vunpack.c.l.b16 %v4358
        %v4397 = vunpack.c.l.b16 %v4359
        %v4398 = vunpack.c.l.b16 %v4360
        %v4399 = vunpack.c.l.b16 %v4361
        %v4400 = vunpack.c.l.b16 %v4362
        %v4401 = vunpack.c.l.b16 %v4363
        %v4402 = vunpack.c.l.b16 %v4364
        %v4403 = vunpack.c.l.b16 %v4365
        %v4404 = vunpack.c.l.b16 %v4366
        %v4405 = vunpack.c.l.b16 %v4367
        %v4406 = vunpack.c.l.b16 %v4368
        %v4407 = vunpack.c.l.b16 %v4369
        %v4408 = vunpack.c.l.b16 %v4370
        %v4409 = vunpack.c.l.b16 %v4371
        %v4410 = vunpack.c.l.b16 %v4372
        %v4411 = vpack.c.b16 %v4396, %v4395
        %v4412 = vpack.c.b16 %v4398, %v4397
        %v4413 = vpack.c.b16 %v4400, %v4399
        %v4414 = vpack.c.b16 %v4402, %v4401
        %v4415 = vpack.c.b16 %v4404, %v4403
        %v4416 = vpack.c.b16 %v4406, %v4405
        %v4417 = vpack.c.b16 %v4408, %v4407
        %v4418 = vpack.c.b16 %v4410, %v4409
        %4427 = vmatpush.bf16.msra.mxu0 %v4418
        %4428 = vmatpush.bf16.msra.mxu0 %v4417
        %4429 = vmatpush.bf16.msra.mxu0 %v4416
        %4430 = vmatpush.bf16.msra.mxu0 %v4415
        %4431 = vmatpush.bf16.msra.mxu0 %v4414
        %4432 = vmatpush.bf16.msra.mxu0 %v4413
        %4433 = vmatpush.bf16.msra.mxu0 %v4412
        %4434 = vmatpush.bf16.msra.mxu0 %v4411
        %4435 = vmatmul.bf16.gmra.mxu0 %v4377
        %v4436 = vpop.f32.mrf.mxu0
        %v4437 = vadd.f32 %v4373, %v4436
        %v4438 = vpop.f32.mrf.mxu0
        %v4439 = vadd.f32 %v4374, %v4438
        %4440 = vmatmul.bf16.gmra.mxu0 %v4378
        %v4441 = vpop.f32.mrf.mxu0
        %v4442 = vadd.f32 %v4375, %v4441
        %v4443 = vpop.f32.mrf.mxu0
        %v4444 = vadd.f32 %v4376, %v4443
        %4445 = vdwg.mxu0
        %v4446 = vmul.f32 %v4437, %v3446
        %v4447 = vmul.f32 %v4439, %v3446
        %v4448 = vmul.f32 %v4442, %v3446
        %v4449 = vmul.f32 %v4444, %v3446
        %v4450 = vmul.f32 %v4437, %v3447
        %v4451 = vmul.f32 %v4439, %v3447
        %v4452 = vmul.f32 %v4442, %v3447
        %v4453 = vmul.f32 %v4444, %v3447
        %v4454 = vmul.f32 %v4437, %v3448
        %v4455 = vmul.f32 %v4439, %v3448
        %v4456 = vmul.f32 %v4442, %v3448
        %v4457 = vmul.f32 %v4444, %v3448
        %v4458 = vmul.f32 %v4437, %v3449
        %v4459 = vmul.f32 %v4439, %v3449
        %v4460 = vmul.f32 %v4442, %v3449
        %v4461 = vmul.f32 %v4444, %v3449
        %v4462 = vmul.f32 %v4437, %v3450
        %v4463 = vmul.f32 %v4439, %v3450
        %v4464 = vmul.f32 %v4442, %v3450
        %v4465 = vmul.f32 %v4444, %v3450
        %v4466 = vmul.f32 %v4437, %v3451
        %v4467 = vmul.f32 %v4439, %v3451
        %v4468 = vmul.f32 %v4442, %v3451
        %v4469 = vmul.f32 %v4444, %v3451
        %v4470 = vmul.f32 %v4437, %v3452
        %v4471 = vmul.f32 %v4439, %v3452
        %v4472 = vmul.f32 %v4442, %v3452
        %v4473 = vmul.f32 %v4444, %v3452
        %v4474 = vmul.f32 %v4437, %v3453
        %v4475 = vmul.f32 %v4439, %v3453
        %v4476 = vmul.f32 %v4442, %v3453
        %v4477 = vmul.f32 %v4444, %v3453
        %v4478 = vpack.c.bf16 %v4447, %v4446
        %v4479 = vpack.c.bf16 %v4449, %v4448
        %v4480 = vpack.c.bf16 %v4451, %v4450
        %v4481 = vpack.c.bf16 %v4453, %v4452
        %v4482 = vpack.c.bf16 %v4455, %v4454
        %v4483 = vpack.c.bf16 %v4457, %v4456
        %v4484 = vpack.c.bf16 %v4459, %v4458
        %v4485 = vpack.c.bf16 %v4461, %v4460
        %v4486 = vpack.c.bf16 %v4463, %v4462
        %v4487 = vpack.c.bf16 %v4465, %v4464
        %v4488 = vpack.c.bf16 %v4467, %v4466
        %v4489 = vpack.c.bf16 %v4469, %v4468
        %v4490 = vpack.c.bf16 %v4471, %v4470
        %v4491 = vpack.c.bf16 %v4473, %v4472
        %v4492 = vpack.c.bf16 %v4475, %v4474
        %v4493 = vpack.c.bf16 %v4477, %v4476
        %v4495 = vperm.slane %v3200, 0
        %v4496 = vperm.slane %v3200, 1
        %v4497 = vperm.slane %v3200, 2
        %v4549 = vunpack.c.l.b16 %v3099
        %v4550 = vunpack.c.l.b16 %v3101
        %v4551 = vunpack.c.l.b16 %v3103
        %v4552 = vunpack.c.l.b16 %v3105
        %v4553 = vunpack.c.l.b16 %v3107
        %v4554 = vunpack.c.l.b16 %v3109
        %v4555 = vunpack.c.l.b16 %v3111
        %v4556 = vunpack.c.l.b16 %v3113
        %v4557 = vunpack.c.l.b16 %v3115
        %v4558 = vunpack.c.l.b16 %v3117
        %v4559 = vunpack.c.l.b16 %v3119
        %v4560 = vunpack.c.l.b16 %v3121
        %v4561 = vunpack.c.l.b16 %v3123
        %v4562 = vunpack.c.l.b16 %v3125
        %v4563 = vunpack.c.l.b16 %v3127
        %v4564 = vunpack.c.l.b16 %v3129
        %v4565 = vunpack.c.l.b16 %v3131
        %v4566 = vunpack.c.l.b16 %v3133
        %v4567 = vunpack.c.l.b16 %v3135
        %v4568 = vunpack.c.l.b16 %v3137
        %v4569 = vunpack.c.l.b16 %v3139
        %v4570 = vunpack.c.l.b16 %v3141
        %v4571 = vunpack.c.l.b16 %v3143
        %v4572 = vunpack.c.l.b16 %v3145
        %v4573 = vunpack.c.l.b16 %v3147
        %v4574 = vunpack.c.l.b16 %v3149
        %v4575 = vunpack.c.l.b16 %v3151
        %v4576 = vunpack.c.l.b16 %v3153
        %v4577 = vunpack.c.l.b16 %v3155
        %v4578 = vunpack.c.l.b16 %v3157
        %v4579 = vunpack.c.l.b16 %v3159
        %v4580 = vunpack.c.l.b16 %v3161
        %v4581 = vunpack.c.l.b16 %v3163
        %v4582 = vunpack.c.l.b16 %v3165
        %v4583 = vunpack.c.l.b16 %v3167
        %v4584 = vunpack.c.l.b16 %v3169
        %v4585 = vunpack.c.l.b16 %v3171
        %v4586 = vunpack.c.l.b16 %v3173
        %v4587 = vunpack.c.l.b16 %v3175
        %v4588 = vunpack.c.l.b16 %v3177
        %v4589 = vunpack.c.l.b16 %v3179
        %v4590 = vunpack.c.l.b16 %v3181
        %v4591 = vunpack.c.l.b16 %v3183
        %v4592 = vunpack.c.l.b16 %v3185
        %v4593 = vunpack.c.l.b16 %v3187
        %v4594 = vunpack.c.l.b16 %v3189
        %v4595 = vunpack.c.l.b16 %v3191
        %v4596 = vunpack.c.l.b16 %v3193
        %v4597 = vpack.c.b16 %v4550, %v4549
        %v4598 = vpack.c.b16 %v4552, %v4551
        %v4599 = vpack.c.b16 %v4554, %v4553
        %v4600 = vpack.c.b16 %v4556, %v4555
        %v4601 = vpack.c.b16 %v4558, %v4557
        %v4602 = vpack.c.b16 %v4560, %v4559
        %v4603 = vpack.c.b16 %v4562, %v4561
        %v4604 = vpack.c.b16 %v4564, %v4563
        %v4605 = vpack.c.b16 %v4566, %v4565
        %v4606 = vpack.c.b16 %v4568, %v4567
        %v4607 = vpack.c.b16 %v4570, %v4569
        %v4608 = vpack.c.b16 %v4572, %v4571
        %v4609 = vpack.c.b16 %v4574, %v4573
        %v4610 = vpack.c.b16 %v4576, %v4575
        %v4611 = vpack.c.b16 %v4578, %v4577
        %v4612 = vpack.c.b16 %v4580, %v4579
        %v4613 = vpack.c.b16 %v4582, %v4581
        %v4614 = vpack.c.b16 %v4584, %v4583
        %v4615 = vpack.c.b16 %v4586, %v4585
        %v4616 = vpack.c.b16 %v4588, %v4587
        %v4617 = vpack.c.b16 %v4590, %v4589
        %v4618 = vpack.c.b16 %v4592, %v4591
        %v4619 = vpack.c.b16 %v4594, %v4593
        %v4620 = vpack.c.b16 %v4596, %v4595
        %4645 = vmatpush.bf16.xpose.msra.mxu0 %v4604
        %4646 = vmatpush.bf16.xpose.msra.mxu0 %v4603
        %4647 = vmatpush.bf16.xpose.msra.mxu0 %v4602
        %4648 = vmatpush.bf16.xpose.msra.mxu0 %v4601
        %4649 = vmatpush.bf16.xpose.msra.mxu0 %v4600
        %4650 = vmatpush.bf16.xpose.msra.mxu0 %v4599
        %4651 = vmatpush.bf16.xpose.msra.mxu0 %v4598
        %4652 = vmatpush.bf16.xpose.msra.mxu0 %v4597
        %4653 = vmatmul.bf16.gmra.mxu0 %v4478
        %v4654 = vpop.f32.mrf.mxu0
        %v4655 = vadd.f32 %v4495, %v4654
        %v4656 = vpop.f32.mrf.mxu0
        %v4657 = vadd.f32 %v4495, %v4656
        %4658 = vmatmul.bf16.gmra.mxu0 %v4479
        %v4659 = vpop.f32.mrf.mxu0
        %v4660 = vadd.f32 %v4495, %v4659
        %v4661 = vpop.f32.mrf.mxu0
        %v4662 = vadd.f32 %v4495, %v4661
        %4663 = vmatmul.bf16.gmra.mxu0 %v4480
        %v4664 = vpop.f32.mrf.mxu0
        %v4665 = vadd.f32 %v4495, %v4664
        %v4666 = vpop.f32.mrf.mxu0
        %v4667 = vadd.f32 %v4495, %v4666
        %4668 = vmatmul.bf16.gmra.mxu0 %v4481
        %v4669 = vpop.f32.mrf.mxu0
        %v4670 = vadd.f32 %v4495, %v4669
        %v4671 = vpop.f32.mrf.mxu0
        %v4672 = vadd.f32 %v4495, %v4671
        %4673 = vmatmul.bf16.gmra.mxu0 %v4482
        %v4674 = vpop.f32.mrf.mxu0
        %v4675 = vadd.f32 %v4495, %v4674
        %v4676 = vpop.f32.mrf.mxu0
        %v4677 = vadd.f32 %v4495, %v4676
        %4678 = vmatmul.bf16.gmra.mxu0 %v4483
        %v4679 = vpop.f32.mrf.mxu0
        %v4680 = vadd.f32 %v4495, %v4679
        %v4681 = vpop.f32.mrf.mxu0
        %v4682 = vadd.f32 %v4495, %v4681
        %4683 = vmatmul.bf16.gmra.mxu0 %v4484
        %v4684 = vpop.f32.mrf.mxu0
        %v4685 = vadd.f32 %v4495, %v4684
        %v4686 = vpop.f32.mrf.mxu0
        %v4687 = vadd.f32 %v4495, %v4686
        %4688 = vmatmul.bf16.gmra.mxu0 %v4485
        %v4689 = vpop.f32.mrf.mxu0
        %v4690 = vadd.f32 %v4495, %v4689
        %v4691 = vpop.f32.mrf.mxu0
        %v4692 = vadd.f32 %v4495, %v4691
        %4693 = vmatmul.bf16.gmra.mxu0 %v4486
        %v4694 = vpop.f32.mrf.mxu0
        %v4695 = vadd.f32 %v4495, %v4694
        %v4696 = vpop.f32.mrf.mxu0
        %v4697 = vadd.f32 %v4495, %v4696
        %4698 = vmatmul.bf16.gmra.mxu0 %v4487
        %v4699 = vpop.f32.mrf.mxu0
        %v4700 = vadd.f32 %v4495, %v4699
        %v4701 = vpop.f32.mrf.mxu0
        %v4702 = vadd.f32 %v4495, %v4701
        %4703 = vmatmul.bf16.gmra.mxu0 %v4488
        %v4704 = vpop.f32.mrf.mxu0
        %v4705 = vadd.f32 %v4495, %v4704
        %v4706 = vpop.f32.mrf.mxu0
        %v4707 = vadd.f32 %v4495, %v4706
        %4708 = vmatmul.bf16.gmra.mxu0 %v4489
        %v4709 = vpop.f32.mrf.mxu0
        %v4710 = vadd.f32 %v4495, %v4709
        %v4711 = vpop.f32.mrf.mxu0
        %v4712 = vadd.f32 %v4495, %v4711
        %4713 = vmatmul.bf16.gmra.mxu0 %v4490
        %v4714 = vpop.f32.mrf.mxu0
        %v4715 = vadd.f32 %v4495, %v4714
        %v4716 = vpop.f32.mrf.mxu0
        %v4717 = vadd.f32 %v4495, %v4716
        %4718 = vmatmul.bf16.gmra.mxu0 %v4491
        %v4719 = vpop.f32.mrf.mxu0
        %v4720 = vadd.f32 %v4495, %v4719
        %v4721 = vpop.f32.mrf.mxu0
        %v4722 = vadd.f32 %v4495, %v4721
        %4723 = vmatmul.bf16.gmra.mxu0 %v4492
        %v4724 = vpop.f32.mrf.mxu0
        %v4725 = vadd.f32 %v4495, %v4724
        %v4726 = vpop.f32.mrf.mxu0
        %v4727 = vadd.f32 %v4495, %v4726
        %4728 = vmatmul.bf16.gmra.mxu0 %v4493
        %v4729 = vpop.f32.mrf.mxu0
        %v4730 = vadd.f32 %v4495, %v4729
        %v4731 = vpop.f32.mrf.mxu0
        %v4732 = vadd.f32 %v4495, %v4731
        %4733 = vdwg.mxu0
        %4734 = vmatpush.bf16.xpose.msra.mxu0 %v4612
        %4735 = vmatpush.bf16.xpose.msra.mxu0 %v4611
        %4736 = vmatpush.bf16.xpose.msra.mxu0 %v4610
        %4737 = vmatpush.bf16.xpose.msra.mxu0 %v4609
        %4738 = vmatpush.bf16.xpose.msra.mxu0 %v4608
        %4739 = vmatpush.bf16.xpose.msra.mxu0 %v4607
        %4740 = vmatpush.bf16.xpose.msra.mxu0 %v4606
        %4741 = vmatpush.bf16.xpose.msra.mxu0 %v4605
        %4742 = vmatmul.bf16.gmra.mxu0 %v4478
        %v4743 = vpop.f32.mrf.mxu0
        %v4744 = vadd.f32 %v4496, %v4743
        %v4745 = vpop.f32.mrf.mxu0
        %v4746 = vadd.f32 %v4496, %v4745
        %4747 = vmatmul.bf16.gmra.mxu0 %v4479
        %v4748 = vpop.f32.mrf.mxu0
        %v4749 = vadd.f32 %v4496, %v4748
        %v4750 = vpop.f32.mrf.mxu0
        %v4751 = vadd.f32 %v4496, %v4750
        %4752 = vmatmul.bf16.gmra.mxu0 %v4480
        %v4753 = vpop.f32.mrf.mxu0
        %v4754 = vadd.f32 %v4496, %v4753
        %v4755 = vpop.f32.mrf.mxu0
        %v4756 = vadd.f32 %v4496, %v4755
        %4757 = vmatmul.bf16.gmra.mxu0 %v4481
        %v4758 = vpop.f32.mrf.mxu0
        %v4759 = vadd.f32 %v4496, %v4758
        %v4760 = vpop.f32.mrf.mxu0
        %v4761 = vadd.f32 %v4496, %v4760
        %4762 = vmatmul.bf16.gmra.mxu0 %v4482
        %v4763 = vpop.f32.mrf.mxu0
        %v4764 = vadd.f32 %v4496, %v4763
        %v4765 = vpop.f32.mrf.mxu0
        %v4766 = vadd.f32 %v4496, %v4765
        %4767 = vmatmul.bf16.gmra.mxu0 %v4483
        %v4768 = vpop.f32.mrf.mxu0
        %v4769 = vadd.f32 %v4496, %v4768
        %v4770 = vpop.f32.mrf.mxu0
        %v4771 = vadd.f32 %v4496, %v4770
        %4772 = vmatmul.bf16.gmra.mxu0 %v4484
        %v4773 = vpop.f32.mrf.mxu0
        %v4774 = vadd.f32 %v4496, %v4773
        %v4775 = vpop.f32.mrf.mxu0
        %v4776 = vadd.f32 %v4496, %v4775
        %4777 = vmatmul.bf16.gmra.mxu0 %v4485
        %v4778 = vpop.f32.mrf.mxu0
        %v4779 = vadd.f32 %v4496, %v4778
        %v4780 = vpop.f32.mrf.mxu0
        %v4781 = vadd.f32 %v4496, %v4780
        %4782 = vmatmul.bf16.gmra.mxu0 %v4486
        %v4783 = vpop.f32.mrf.mxu0
        %v4784 = vadd.f32 %v4496, %v4783
        %v4785 = vpop.f32.mrf.mxu0
        %v4786 = vadd.f32 %v4496, %v4785
        %4787 = vmatmul.bf16.gmra.mxu0 %v4487
        %v4788 = vpop.f32.mrf.mxu0
        %v4789 = vadd.f32 %v4496, %v4788
        %v4790 = vpop.f32.mrf.mxu0
        %v4791 = vadd.f32 %v4496, %v4790
        %4792 = vmatmul.bf16.gmra.mxu0 %v4488
        %v4793 = vpop.f32.mrf.mxu0
        %v4794 = vadd.f32 %v4496, %v4793
        %v4795 = vpop.f32.mrf.mxu0
        %v4796 = vadd.f32 %v4496, %v4795
        %4797 = vmatmul.bf16.gmra.mxu0 %v4489
        %v4798 = vpop.f32.mrf.mxu0
        %v4799 = vadd.f32 %v4496, %v4798
        %v4800 = vpop.f32.mrf.mxu0
        %v4801 = vadd.f32 %v4496, %v4800
        %4802 = vmatmul.bf16.gmra.mxu0 %v4490
        %v4803 = vpop.f32.mrf.mxu0
        %v4804 = vadd.f32 %v4496, %v4803
        %v4805 = vpop.f32.mrf.mxu0
        %v4806 = vadd.f32 %v4496, %v4805
        %4807 = vmatmul.bf16.gmra.mxu0 %v4491
        %v4808 = vpop.f32.mrf.mxu0
        %v4809 = vadd.f32 %v4496, %v4808
        %v4810 = vpop.f32.mrf.mxu0
        %v4811 = vadd.f32 %v4496, %v4810
        %4812 = vmatmul.bf16.gmra.mxu0 %v4492
        %v4813 = vpop.f32.mrf.mxu0
        %v4814 = vadd.f32 %v4496, %v4813
        %v4815 = vpop.f32.mrf.mxu0
        %v4816 = vadd.f32 %v4496, %v4815
        %4817 = vmatmul.bf16.gmra.mxu0 %v4493
        %v4818 = vpop.f32.mrf.mxu0
        %v4819 = vadd.f32 %v4496, %v4818
        %v4820 = vpop.f32.mrf.mxu0
        %v4821 = vadd.f32 %v4496, %v4820
        %4822 = vdwg.mxu0
        %4823 = vmatpush.bf16.xpose.msra.mxu0 %v4620
        %4824 = vmatpush.bf16.xpose.msra.mxu0 %v4619
        %4825 = vmatpush.bf16.xpose.msra.mxu0 %v4618
        %4826 = vmatpush.bf16.xpose.msra.mxu0 %v4617
        %4827 = vmatpush.bf16.xpose.msra.mxu0 %v4616
        %4828 = vmatpush.bf16.xpose.msra.mxu0 %v4615
        %4829 = vmatpush.bf16.xpose.msra.mxu0 %v4614
        %4830 = vmatpush.bf16.xpose.msra.mxu0 %v4613
        %4831 = vmatmul.bf16.gmra.mxu0 %v4478
        %v4832 = vpop.f32.mrf.mxu0
        %v4833 = vadd.f32 %v4497, %v4832
        %v4834 = vpop.f32.mrf.mxu0
        %v4835 = vadd.f32 %v4497, %v4834
        %4836 = vmatmul.bf16.gmra.mxu0 %v4479
        %v4837 = vpop.f32.mrf.mxu0
        %v4838 = vadd.f32 %v4497, %v4837
        %v4839 = vpop.f32.mrf.mxu0
        %v4840 = vadd.f32 %v4497, %v4839
        %4841 = vmatmul.bf16.gmra.mxu0 %v4480
        %v4842 = vpop.f32.mrf.mxu0
        %v4843 = vadd.f32 %v4497, %v4842
        %v4844 = vpop.f32.mrf.mxu0
        %v4845 = vadd.f32 %v4497, %v4844
        %4846 = vmatmul.bf16.gmra.mxu0 %v4481
        %v4847 = vpop.f32.mrf.mxu0
        %v4848 = vadd.f32 %v4497, %v4847
        %v4849 = vpop.f32.mrf.mxu0
        %v4850 = vadd.f32 %v4497, %v4849
        %4851 = vmatmul.bf16.gmra.mxu0 %v4482
        %v4852 = vpop.f32.mrf.mxu0
        %v4853 = vadd.f32 %v4497, %v4852
        %v4854 = vpop.f32.mrf.mxu0
        %v4855 = vadd.f32 %v4497, %v4854
        %4856 = vmatmul.bf16.gmra.mxu0 %v4483
        %v4857 = vpop.f32.mrf.mxu0
        %v4858 = vadd.f32 %v4497, %v4857
        %v4859 = vpop.f32.mrf.mxu0
        %v4860 = vadd.f32 %v4497, %v4859
        %4861 = vmatmul.bf16.gmra.mxu0 %v4484
        %v4862 = vpop.f32.mrf.mxu0
        %v4863 = vadd.f32 %v4497, %v4862
        %v4864 = vpop.f32.mrf.mxu0
        %v4865 = vadd.f32 %v4497, %v4864
        %4866 = vmatmul.bf16.gmra.mxu0 %v4485
        %v4867 = vpop.f32.mrf.mxu0
        %v4868 = vadd.f32 %v4497, %v4867
        %v4869 = vpop.f32.mrf.mxu0
        %v4870 = vadd.f32 %v4497, %v4869
        %4871 = vmatmul.bf16.gmra.mxu0 %v4486
        %v4872 = vpop.f32.mrf.mxu0
        %v4873 = vadd.f32 %v4497, %v4872
        %v4874 = vpop.f32.mrf.mxu0
        %v4875 = vadd.f32 %v4497, %v4874
        %4876 = vmatmul.bf16.gmra.mxu0 %v4487
        %v4877 = vpop.f32.mrf.mxu0
        %v4878 = vadd.f32 %v4497, %v4877
        %v4879 = vpop.f32.mrf.mxu0
        %v4880 = vadd.f32 %v4497, %v4879
        %4881 = vmatmul.bf16.gmra.mxu0 %v4488
        %v4882 = vpop.f32.mrf.mxu0
        %v4883 = vadd.f32 %v4497, %v4882
        %v4884 = vpop.f32.mrf.mxu0
        %v4885 = vadd.f32 %v4497, %v4884
        %4886 = vmatmul.bf16.gmra.mxu0 %v4489
        %v4887 = vpop.f32.mrf.mxu0
        %v4888 = vadd.f32 %v4497, %v4887
        %v4889 = vpop.f32.mrf.mxu0
        %v4890 = vadd.f32 %v4497, %v4889
        %4891 = vmatmul.bf16.gmra.mxu0 %v4490
        %v4892 = vpop.f32.mrf.mxu0
        %v4893 = vadd.f32 %v4497, %v4892
        %v4894 = vpop.f32.mrf.mxu0
        %v4895 = vadd.f32 %v4497, %v4894
        %4896 = vmatmul.bf16.gmra.mxu0 %v4491
        %v4897 = vpop.f32.mrf.mxu0
        %v4898 = vadd.f32 %v4497, %v4897
        %v4899 = vpop.f32.mrf.mxu0
        %v4900 = vadd.f32 %v4497, %v4899
        %4901 = vmatmul.bf16.gmra.mxu0 %v4492
        %v4902 = vpop.f32.mrf.mxu0
        %v4903 = vadd.f32 %v4497, %v4902
        %v4904 = vpop.f32.mrf.mxu0
        %v4905 = vadd.f32 %v4497, %v4904
        %4906 = vmatmul.bf16.gmra.mxu0 %v4493
        %v4907 = vpop.f32.mrf.mxu0
        %v4908 = vadd.f32 %v4497, %v4907
        %v4909 = vpop.f32.mrf.mxu0
        %v4910 = vadd.f32 %v4497, %v4909
        %4911 = vdwg.mxu0
        %v4912 = vmax.f32 %v4655, %v4744
        %v4913 = vmax.f32 %v4912, %v4833
        %4914 = vmax.xlane.f32.xlu0 %v4913
        %v4915 = vpop.xlane.xlu0 %4914
        %v4916 = vmax.f32 %v4657, %v4746
        %v4917 = vmax.f32 %v4916, %v4835
        %4918 = vmax.xlane.f32.xlu0 %v4917
        %v4919 = vpop.xlane.xlu0 %4918
        %v4920 = vmax.f32 %v4660, %v4749
        %v4921 = vmax.f32 %v4920, %v4838
        %4922 = vmax.xlane.f32.xlu0 %v4921
        %v4923 = vpop.xlane.xlu0 %4922
        %v4924 = vmax.f32 %v4662, %v4751
        %v4925 = vmax.f32 %v4924, %v4840
        %4926 = vmax.xlane.f32.xlu0 %v4925
        %v4927 = vpop.xlane.xlu0 %4926
        %v4928 = vmax.f32 %v4665, %v4754
        %v4929 = vmax.f32 %v4928, %v4843
        %4930 = vmax.xlane.f32.xlu0 %v4929
        %v4931 = vpop.xlane.xlu0 %4930
        %v4932 = vmax.f32 %v4667, %v4756
        %v4933 = vmax.f32 %v4932, %v4845
        %4934 = vmax.xlane.f32.xlu0 %v4933
        %v4935 = vpop.xlane.xlu0 %4934
        %v4936 = vmax.f32 %v4670, %v4759
        %v4937 = vmax.f32 %v4936, %v4848
        %4938 = vmax.xlane.f32.xlu0 %v4937
        %v4939 = vpop.xlane.xlu0 %4938
        %v4940 = vmax.f32 %v4672, %v4761
        %v4941 = vmax.f32 %v4940, %v4850
        %4942 = vmax.xlane.f32.xlu0 %v4941
        %v4943 = vpop.xlane.xlu0 %4942
        %v4944 = vmax.f32 %v4675, %v4764
        %v4945 = vmax.f32 %v4944, %v4853
        %4946 = vmax.xlane.f32.xlu0 %v4945
        %v4947 = vpop.xlane.xlu0 %4946
        %v4948 = vmax.f32 %v4677, %v4766
        %v4949 = vmax.f32 %v4948, %v4855
        %4950 = vmax.xlane.f32.xlu0 %v4949
        %v4951 = vpop.xlane.xlu0 %4950
        %v4952 = vmax.f32 %v4680, %v4769
        %v4953 = vmax.f32 %v4952, %v4858
        %4954 = vmax.xlane.f32.xlu0 %v4953
        %v4955 = vpop.xlane.xlu0 %4954
        %v4956 = vmax.f32 %v4682, %v4771
        %v4957 = vmax.f32 %v4956, %v4860
        %4958 = vmax.xlane.f32.xlu0 %v4957
        %v4959 = vpop.xlane.xlu0 %4958
        %v4960 = vmax.f32 %v4685, %v4774
        %v4961 = vmax.f32 %v4960, %v4863
        %4962 = vmax.xlane.f32.xlu0 %v4961
        %v4963 = vpop.xlane.xlu0 %4962
        %v4964 = vmax.f32 %v4687, %v4776
        %v4965 = vmax.f32 %v4964, %v4865
        %4966 = vmax.xlane.f32.xlu0 %v4965
        %v4967 = vpop.xlane.xlu0 %4966
        %v4968 = vmax.f32 %v4690, %v4779
        %v4969 = vmax.f32 %v4968, %v4868
        %4970 = vmax.xlane.f32.xlu0 %v4969
        %v4971 = vpop.xlane.xlu0 %4970
        %v4972 = vmax.f32 %v4692, %v4781
        %v4973 = vmax.f32 %v4972, %v4870
        %4974 = vmax.xlane.f32.xlu0 %v4973
        %v4975 = vpop.xlane.xlu0 %4974
        %v4976 = vmax.f32 %v4695, %v4784
        %v4977 = vmax.f32 %v4976, %v4873
        %4978 = vmax.xlane.f32.xlu0 %v4977
        %v4979 = vpop.xlane.xlu0 %4978
        %v4980 = vmax.f32 %v4697, %v4786
        %v4981 = vmax.f32 %v4980, %v4875
        %4982 = vmax.xlane.f32.xlu0 %v4981
        %v4983 = vpop.xlane.xlu0 %4982
        %v4984 = vmax.f32 %v4700, %v4789
        %v4985 = vmax.f32 %v4984, %v4878
        %4986 = vmax.xlane.f32.xlu0 %v4985
        %v4987 = vpop.xlane.xlu0 %4986
        %v4988 = vmax.f32 %v4702, %v4791
        %v4989 = vmax.f32 %v4988, %v4880
        %4990 = vmax.xlane.f32.xlu0 %v4989
        %v4991 = vpop.xlane.xlu0 %4990
        %v4992 = vmax.f32 %v4705, %v4794
        %v4993 = vmax.f32 %v4992, %v4883
        %4994 = vmax.xlane.f32.xlu0 %v4993
        %v4995 = vpop.xlane.xlu0 %4994
        %v4996 = vmax.f32 %v4707, %v4796
        %v4997 = vmax.f32 %v4996, %v4885
        %4998 = vmax.xlane.f32.xlu0 %v4997
        %v4999 = vpop.xlane.xlu0 %4998
        %v5000 = vmax.f32 %v4710, %v4799
        %v5001 = vmax.f32 %v5000, %v4888
        %5002 = vmax.xlane.f32.xlu0 %v5001
        %v5003 = vpop.xlane.xlu0 %5002
        %v5004 = vmax.f32 %v4712, %v4801
        %v5005 = vmax.f32 %v5004, %v4890
        %5006 = vmax.xlane.f32.xlu0 %v5005
        %v5007 = vpop.xlane.xlu0 %5006
        %v5008 = vmax.f32 %v4715, %v4804
        %v5009 = vmax.f32 %v5008, %v4893
        %5010 = vmax.xlane.f32.xlu0 %v5009
        %v5011 = vpop.xlane.xlu0 %5010
        %v5012 = vmax.f32 %v4717, %v4806
        %v5013 = vmax.f32 %v5012, %v4895
        %5014 = vmax.xlane.f32.xlu0 %v5013
        %v5015 = vpop.xlane.xlu0 %5014
        %v5016 = vmax.f32 %v4720, %v4809
        %v5017 = vmax.f32 %v5016, %v4898
        %5018 = vmax.xlane.f32.xlu0 %v5017
        %v5019 = vpop.xlane.xlu0 %5018
        %v5020 = vmax.f32 %v4722, %v4811
        %v5021 = vmax.f32 %v5020, %v4900
        %5022 = vmax.xlane.f32.xlu0 %v5021
        %v5023 = vpop.xlane.xlu0 %5022
        %v5024 = vmax.f32 %v4725, %v4814
        %v5025 = vmax.f32 %v5024, %v4903
        %5026 = vmax.xlane.f32.xlu0 %v5025
        %v5027 = vpop.xlane.xlu0 %5026
        %v5028 = vmax.f32 %v4727, %v4816
        %v5029 = vmax.f32 %v5028, %v4905
        %5030 = vmax.xlane.f32.xlu0 %v5029
        %v5031 = vpop.xlane.xlu0 %5030
        %v5032 = vmax.f32 %v4730, %v4819
        %v5033 = vmax.f32 %v5032, %v4908
        %5034 = vmax.xlane.f32.xlu0 %v5033
        %v5035 = vpop.xlane.xlu0 %5034
        %v5036 = vmax.f32 %v4732, %v4821
        %v5037 = vmax.f32 %v5036, %v4910
        %5038 = vmax.xlane.f32.xlu0 %v5037
        %v5039 = vpop.xlane.xlu0 %5038
        %v5040 = vsub.f32 %v4655, %v4915
        %v5041 = vsub.f32 %v4744, %v4915
        %v5042 = vsub.f32 %v4833, %v4915
        %v5043 = vsub.f32 %v4657, %v4919
        %v5044 = vsub.f32 %v4746, %v4919
        %v5045 = vsub.f32 %v4835, %v4919
        %v5046 = vsub.f32 %v4660, %v4923
        %v5047 = vsub.f32 %v4749, %v4923
        %v5048 = vsub.f32 %v4838, %v4923
        %v5049 = vsub.f32 %v4662, %v4927
        %v5050 = vsub.f32 %v4751, %v4927
        %v5051 = vsub.f32 %v4840, %v4927
        %v5052 = vsub.f32 %v4665, %v4931
        %v5053 = vsub.f32 %v4754, %v4931
        %v5054 = vsub.f32 %v4843, %v4931
        %v5055 = vsub.f32 %v4667, %v4935
        %v5056 = vsub.f32 %v4756, %v4935
        %v5057 = vsub.f32 %v4845, %v4935
        %v5058 = vsub.f32 %v4670, %v4939
        %v5059 = vsub.f32 %v4759, %v4939
        %v5060 = vsub.f32 %v4848, %v4939
        %v5061 = vsub.f32 %v4672, %v4943
        %v5062 = vsub.f32 %v4761, %v4943
        %v5063 = vsub.f32 %v4850, %v4943
        %v5064 = vsub.f32 %v4675, %v4947
        %v5065 = vsub.f32 %v4764, %v4947
        %v5066 = vsub.f32 %v4853, %v4947
        %v5067 = vsub.f32 %v4677, %v4951
        %v5068 = vsub.f32 %v4766, %v4951
        %v5069 = vsub.f32 %v4855, %v4951
        %v5070 = vsub.f32 %v4680, %v4955
        %v5071 = vsub.f32 %v4769, %v4955
        %v5072 = vsub.f32 %v4858, %v4955
        %v5073 = vsub.f32 %v4682, %v4959
        %v5074 = vsub.f32 %v4771, %v4959
        %v5075 = vsub.f32 %v4860, %v4959
        %v5076 = vsub.f32 %v4685, %v4963
        %v5077 = vsub.f32 %v4774, %v4963
        %v5078 = vsub.f32 %v4863, %v4963
        %v5079 = vsub.f32 %v4687, %v4967
        %v5080 = vsub.f32 %v4776, %v4967
        %v5081 = vsub.f32 %v4865, %v4967
        %v5082 = vsub.f32 %v4690, %v4971
        %v5083 = vsub.f32 %v4779, %v4971
        %v5084 = vsub.f32 %v4868, %v4971
        %v5085 = vsub.f32 %v4692, %v4975
        %v5086 = vsub.f32 %v4781, %v4975
        %v5087 = vsub.f32 %v4870, %v4975
        %v5088 = vsub.f32 %v4695, %v4979
        %v5089 = vsub.f32 %v4784, %v4979
        %v5090 = vsub.f32 %v4873, %v4979
        %v5091 = vsub.f32 %v4697, %v4983
        %v5092 = vsub.f32 %v4786, %v4983
        %v5093 = vsub.f32 %v4875, %v4983
        %v5094 = vsub.f32 %v4700, %v4987
        %v5095 = vsub.f32 %v4789, %v4987
        %v5096 = vsub.f32 %v4878, %v4987
        %v5097 = vsub.f32 %v4702, %v4991
        %v5098 = vsub.f32 %v4791, %v4991
        %v5099 = vsub.f32 %v4880, %v4991
        %v5100 = vsub.f32 %v4705, %v4995
        %v5101 = vsub.f32 %v4794, %v4995
        %v5102 = vsub.f32 %v4883, %v4995
        %v5103 = vsub.f32 %v4707, %v4999
        %v5104 = vsub.f32 %v4796, %v4999
        %v5105 = vsub.f32 %v4885, %v4999
        %v5106 = vsub.f32 %v4710, %v5003
        %v5107 = vsub.f32 %v4799, %v5003
        %v5108 = vsub.f32 %v4888, %v5003
        %v5109 = vsub.f32 %v4712, %v5007
        %v5110 = vsub.f32 %v4801, %v5007
        %v5111 = vsub.f32 %v4890, %v5007
        %v5112 = vsub.f32 %v4715, %v5011
        %v5113 = vsub.f32 %v4804, %v5011
        %v5114 = vsub.f32 %v4893, %v5011
        %v5115 = vsub.f32 %v4717, %v5015
        %v5116 = vsub.f32 %v4806, %v5015
        %v5117 = vsub.f32 %v4895, %v5015
        %v5118 = vsub.f32 %v4720, %v5019
        %v5119 = vsub.f32 %v4809, %v5019
        %v5120 = vsub.f32 %v4898, %v5019
        %v5121 = vsub.f32 %v4722, %v5023
        %v5122 = vsub.f32 %v4811, %v5023
        %v5123 = vsub.f32 %v4900, %v5023
        %v5124 = vsub.f32 %v4725, %v5027
        %v5125 = vsub.f32 %v4814, %v5027
        %v5126 = vsub.f32 %v4903, %v5027
        %v5127 = vsub.f32 %v4727, %v5031
        %v5128 = vsub.f32 %v4816, %v5031
        %v5129 = vsub.f32 %v4905, %v5031
        %v5130 = vsub.f32 %v4730, %v5035
        %v5131 = vsub.f32 %v4819, %v5035
        %v5132 = vsub.f32 %v4908, %v5035
        %v5133 = vsub.f32 %v4732, %v5039
        %v5134 = vsub.f32 %v4821, %v5039
        %v5135 = vsub.f32 %v4910, %v5039
        %v5136 = vmul.f32 %v5040, 1.442695
        %v5137 = vpow.pop %v5136
        %v5138 = vmul.f32 %v5041, 1.442695
        %v5139 = vpow.pop %v5138
        %v5140 = vmul.f32 %v5042, 1.442695
        %v5141 = vpow.pop %v5140
        %v5142 = vmul.f32 %v5043, 1.442695
        %v5143 = vpow.pop %v5142
        %v5144 = vmul.f32 %v5044, 1.442695
        %v5145 = vpow.pop %v5144
        %v5146 = vmul.f32 %v5045, 1.442695
        %v5147 = vpow.pop %v5146
        %v5148 = vmul.f32 %v5046, 1.442695
        %v5149 = vpow.pop %v5148
        %v5150 = vmul.f32 %v5047, 1.442695
        %v5151 = vpow.pop %v5150
        %v5152 = vmul.f32 %v5048, 1.442695
        %v5153 = vpow.pop %v5152
        %v5154 = vmul.f32 %v5049, 1.442695
        %v5155 = vpow.pop %v5154
        %v5156 = vmul.f32 %v5050, 1.442695
        %v5157 = vpow.pop %v5156
        %v5158 = vmul.f32 %v5051, 1.442695
        %v5159 = vpow.pop %v5158
        %v5160 = vmul.f32 %v5052, 1.442695
        %v5161 = vpow.pop %v5160
        %v5162 = vmul.f32 %v5053, 1.442695
        %v5163 = vpow.pop %v5162
        %v5164 = vmul.f32 %v5054, 1.442695
        %v5165 = vpow.pop %v5164
        %v5166 = vmul.f32 %v5055, 1.442695
        %v5167 = vpow.pop %v5166
        %v5168 = vmul.f32 %v5056, 1.442695
        %v5169 = vpow.pop %v5168
        %v5170 = vmul.f32 %v5057, 1.442695
        %v5171 = vpow.pop %v5170
        %v5172 = vmul.f32 %v5058, 1.442695
        %v5173 = vpow.pop %v5172
        %v5174 = vmul.f32 %v5059, 1.442695
        %v5175 = vpow.pop %v5174
        %v5176 = vmul.f32 %v5060, 1.442695
        %v5177 = vpow.pop %v5176
        %v5178 = vmul.f32 %v5061, 1.442695
        %v5179 = vpow.pop %v5178
        %v5180 = vmul.f32 %v5062, 1.442695
        %v5181 = vpow.pop %v5180
        %v5182 = vmul.f32 %v5063, 1.442695
        %v5183 = vpow.pop %v5182
        %v5184 = vmul.f32 %v5064, 1.442695
        %v5185 = vpow.pop %v5184
        %v5186 = vmul.f32 %v5065, 1.442695
        %v5187 = vpow.pop %v5186
        %v5188 = vmul.f32 %v5066, 1.442695
        %v5189 = vpow.pop %v5188
        %v5190 = vmul.f32 %v5067, 1.442695
        %v5191 = vpow.pop %v5190
        %v5192 = vmul.f32 %v5068, 1.442695
        %v5193 = vpow.pop %v5192
        %v5194 = vmul.f32 %v5069, 1.442695
        %v5195 = vpow.pop %v5194
        %v5196 = vmul.f32 %v5070, 1.442695
        %v5197 = vpow.pop %v5196
        %v5198 = vmul.f32 %v5071, 1.442695
        %v5199 = vpow.pop %v5198
        %v5200 = vmul.f32 %v5072, 1.442695
        %v5201 = vpow.pop %v5200
        %v5202 = vmul.f32 %v5073, 1.442695
        %v5203 = vpow.pop %v5202
        %v5204 = vmul.f32 %v5074, 1.442695
        %v5205 = vpow.pop %v5204
        %v5206 = vmul.f32 %v5075, 1.442695
        %v5207 = vpow.pop %v5206
        %v5208 = vmul.f32 %v5076, 1.442695
        %v5209 = vpow.pop %v5208
        %v5210 = vmul.f32 %v5077, 1.442695
        %v5211 = vpow.pop %v5210
        %v5212 = vmul.f32 %v5078, 1.442695
        %v5213 = vpow.pop %v5212
        %v5214 = vmul.f32 %v5079, 1.442695
        %v5215 = vpow.pop %v5214
        %v5216 = vmul.f32 %v5080, 1.442695
        %v5217 = vpow.pop %v5216
        %v5218 = vmul.f32 %v5081, 1.442695
        %v5219 = vpow.pop %v5218
        %v5220 = vmul.f32 %v5082, 1.442695
        %v5221 = vpow.pop %v5220
        %v5222 = vmul.f32 %v5083, 1.442695
        %v5223 = vpow.pop %v5222
        %v5224 = vmul.f32 %v5084, 1.442695
        %v5225 = vpow.pop %v5224
        %v5226 = vmul.f32 %v5085, 1.442695
        %v5227 = vpow.pop %v5226
        %v5228 = vmul.f32 %v5086, 1.442695
        %v5229 = vpow.pop %v5228
        %v5230 = vmul.f32 %v5087, 1.442695
        %v5231 = vpow.pop %v5230
        %v5232 = vmul.f32 %v5088, 1.442695
        %v5233 = vpow.pop %v5232
        %v5234 = vmul.f32 %v5089, 1.442695
        %v5235 = vpow.pop %v5234
        %v5236 = vmul.f32 %v5090, 1.442695
        %v5237 = vpow.pop %v5236
        %v5238 = vmul.f32 %v5091, 1.442695
        %v5239 = vpow.pop %v5238
        %v5240 = vmul.f32 %v5092, 1.442695
        %v5241 = vpow.pop %v5240
        %v5242 = vmul.f32 %v5093, 1.442695
        %v5243 = vpow.pop %v5242
        %v5244 = vmul.f32 %v5094, 1.442695
        %v5245 = vpow.pop %v5244
        %v5246 = vmul.f32 %v5095, 1.442695
        %v5247 = vpow.pop %v5246
        %v5248 = vmul.f32 %v5096, 1.442695
        %v5249 = vpow.pop %v5248
        %v5250 = vmul.f32 %v5097, 1.442695
        %v5251 = vpow.pop %v5250
        %v5252 = vmul.f32 %v5098, 1.442695
        %v5253 = vpow.pop %v5252
        %v5254 = vmul.f32 %v5099, 1.442695
        %v5255 = vpow.pop %v5254
        %v5256 = vmul.f32 %v5100, 1.442695
        %v5257 = vpow.pop %v5256
        %v5258 = vmul.f32 %v5101, 1.442695
        %v5259 = vpow.pop %v5258
        %v5260 = vmul.f32 %v5102, 1.442695
        %v5261 = vpow.pop %v5260
        %v5262 = vmul.f32 %v5103, 1.442695
        %v5263 = vpow.pop %v5262
        %v5264 = vmul.f32 %v5104, 1.442695
        %v5265 = vpow.pop %v5264
        %v5266 = vmul.f32 %v5105, 1.442695
        %v5267 = vpow.pop %v5266
        %v5268 = vmul.f32 %v5106, 1.442695
        %v5269 = vpow.pop %v5268
        %v5270 = vmul.f32 %v5107, 1.442695
        %v5271 = vpow.pop %v5270
        %v5272 = vmul.f32 %v5108, 1.442695
        %v5273 = vpow.pop %v5272
        %v5274 = vmul.f32 %v5109, 1.442695
        %v5275 = vpow.pop %v5274
        %v5276 = vmul.f32 %v5110, 1.442695
        %v5277 = vpow.pop %v5276
        %v5278 = vmul.f32 %v5111, 1.442695
        %v5279 = vpow.pop %v5278
        %v5280 = vmul.f32 %v5112, 1.442695
        %v5281 = vpow.pop %v5280
        %v5282 = vmul.f32 %v5113, 1.442695
        %v5283 = vpow.pop %v5282
        %v5284 = vmul.f32 %v5114, 1.442695
        %v5285 = vpow.pop %v5284
        %v5286 = vmul.f32 %v5115, 1.442695
        %v5287 = vpow.pop %v5286
        %v5288 = vmul.f32 %v5116, 1.442695
        %v5289 = vpow.pop %v5288
        %v5290 = vmul.f32 %v5117, 1.442695
        %v5291 = vpow.pop %v5290
        %v5292 = vmul.f32 %v5118, 1.442695
        %v5293 = vpow.pop %v5292
        %v5294 = vmul.f32 %v5119, 1.442695
        %v5295 = vpow.pop %v5294
        %v5296 = vmul.f32 %v5120, 1.442695
        %v5297 = vpow.pop %v5296
        %v5298 = vmul.f32 %v5121, 1.442695
        %v5299 = vpow.pop %v5298
        %v5300 = vmul.f32 %v5122, 1.442695
        %v5301 = vpow.pop %v5300
        %v5302 = vmul.f32 %v5123, 1.442695
        %v5303 = vpow.pop %v5302
        %v5304 = vmul.f32 %v5124, 1.442695
        %v5305 = vpow.pop %v5304
        %v5306 = vmul.f32 %v5125, 1.442695
        %v5307 = vpow.pop %v5306
        %v5308 = vmul.f32 %v5126, 1.442695
        %v5309 = vpow.pop %v5308
        %v5310 = vmul.f32 %v5127, 1.442695
        %v5311 = vpow.pop %v5310
        %v5312 = vmul.f32 %v5128, 1.442695
        %v5313 = vpow.pop %v5312
        %v5314 = vmul.f32 %v5129, 1.442695
        %v5315 = vpow.pop %v5314
        %v5316 = vmul.f32 %v5130, 1.442695
        %v5317 = vpow.pop %v5316
        %v5318 = vmul.f32 %v5131, 1.442695
        %v5319 = vpow.pop %v5318
        %v5320 = vmul.f32 %v5132, 1.442695
        %v5321 = vpow.pop %v5320
        %v5322 = vmul.f32 %v5133, 1.442695
        %v5323 = vpow.pop %v5322
        %v5324 = vmul.f32 %v5134, 1.442695
        %v5325 = vpow.pop %v5324
        %v5326 = vmul.f32 %v5135, 1.442695
        %v5327 = vpow.pop %v5326
        %v5328 = vadd.f32 %v5137, %v5139
        %v5329 = vadd.f32 %v5328, %v5141
        %5330 = vadd.xlane.f32.xlu0 %v5329
        %v5331 = vpop.xlane.xlu0 %5330
        %v5332 = vadd.f32 %v5143, %v5145
        %v5333 = vadd.f32 %v5332, %v5147
        %5334 = vadd.xlane.f32.xlu0 %v5333
        %v5335 = vpop.xlane.xlu0 %5334
        %v5336 = vadd.f32 %v5149, %v5151
        %v5337 = vadd.f32 %v5336, %v5153
        %5338 = vadd.xlane.f32.xlu0 %v5337
        %v5339 = vpop.xlane.xlu0 %5338
        %v5340 = vadd.f32 %v5155, %v5157
        %v5341 = vadd.f32 %v5340, %v5159
        %5342 = vadd.xlane.f32.xlu0 %v5341
        %v5343 = vpop.xlane.xlu0 %5342
        %v5344 = vadd.f32 %v5161, %v5163
        %v5345 = vadd.f32 %v5344, %v5165
        %5346 = vadd.xlane.f32.xlu0 %v5345
        %v5347 = vpop.xlane.xlu0 %5346
        %v5348 = vadd.f32 %v5167, %v5169
        %v5349 = vadd.f32 %v5348, %v5171
        %5350 = vadd.xlane.f32.xlu0 %v5349
        %v5351 = vpop.xlane.xlu0 %5350
        %v5352 = vadd.f32 %v5173, %v5175
        %v5353 = vadd.f32 %v5352, %v5177
        %5354 = vadd.xlane.f32.xlu0 %v5353
        %v5355 = vpop.xlane.xlu0 %5354
        %v5356 = vadd.f32 %v5179, %v5181
        %v5357 = vadd.f32 %v5356, %v5183
        %5358 = vadd.xlane.f32.xlu0 %v5357
        %v5359 = vpop.xlane.xlu0 %5358
        %v5360 = vadd.f32 %v5185, %v5187
        %v5361 = vadd.f32 %v5360, %v5189
        %5362 = vadd.xlane.f32.xlu0 %v5361
        %v5363 = vpop.xlane.xlu0 %5362
        %v5364 = vadd.f32 %v5191, %v5193
        %v5365 = vadd.f32 %v5364, %v5195
        %5366 = vadd.xlane.f32.xlu0 %v5365
        %v5367 = vpop.xlane.xlu0 %5366
        %v5368 = vadd.f32 %v5197, %v5199
        %v5369 = vadd.f32 %v5368, %v5201
        %5370 = vadd.xlane.f32.xlu0 %v5369
        %v5371 = vpop.xlane.xlu0 %5370
        %v5372 = vadd.f32 %v5203, %v5205
        %v5373 = vadd.f32 %v5372, %v5207
        %5374 = vadd.xlane.f32.xlu0 %v5373
        %v5375 = vpop.xlane.xlu0 %5374
        %v5376 = vadd.f32 %v5209, %v5211
        %v5377 = vadd.f32 %v5376, %v5213
        %5378 = vadd.xlane.f32.xlu0 %v5377
        %v5379 = vpop.xlane.xlu0 %5378
        %v5380 = vadd.f32 %v5215, %v5217
        %v5381 = vadd.f32 %v5380, %v5219
        %5382 = vadd.xlane.f32.xlu0 %v5381
        %v5383 = vpop.xlane.xlu0 %5382
        %v5384 = vadd.f32 %v5221, %v5223
        %v5385 = vadd.f32 %v5384, %v5225
        %5386 = vadd.xlane.f32.xlu0 %v5385
        %v5387 = vpop.xlane.xlu0 %5386
        %v5388 = vadd.f32 %v5227, %v5229
        %v5389 = vadd.f32 %v5388, %v5231
        %5390 = vadd.xlane.f32.xlu0 %v5389
        %v5391 = vpop.xlane.xlu0 %5390
        %v5392 = vadd.f32 %v5233, %v5235
        %v5393 = vadd.f32 %v5392, %v5237
        %5394 = vadd.xlane.f32.xlu0 %v5393
        %v5395 = vpop.xlane.xlu0 %5394
        %v5396 = vadd.f32 %v5239, %v5241
        %v5397 = vadd.f32 %v5396, %v5243
        %5398 = vadd.xlane.f32.xlu0 %v5397
        %v5399 = vpop.xlane.xlu0 %5398
        %v5400 = vadd.f32 %v5245, %v5247
        %v5401 = vadd.f32 %v5400, %v5249
        %5402 = vadd.xlane.f32.xlu0 %v5401
        %v5403 = vpop.xlane.xlu0 %5402
        %v5404 = vadd.f32 %v5251, %v5253
        %v5405 = vadd.f32 %v5404, %v5255
        %5406 = vadd.xlane.f32.xlu0 %v5405
        %v5407 = vpop.xlane.xlu0 %5406
        %v5408 = vadd.f32 %v5257, %v5259
        %v5409 = vadd.f32 %v5408, %v5261
        %5410 = vadd.xlane.f32.xlu0 %v5409
        %v5411 = vpop.xlane.xlu0 %5410
        %v5412 = vadd.f32 %v5263, %v5265
        %v5413 = vadd.f32 %v5412, %v5267
        %5414 = vadd.xlane.f32.xlu0 %v5413
        %v5415 = vpop.xlane.xlu0 %5414
        %v5416 = vadd.f32 %v5269, %v5271
        %v5417 = vadd.f32 %v5416, %v5273
        %5418 = vadd.xlane.f32.xlu0 %v5417
        %v5419 = vpop.xlane.xlu0 %5418
        %v5420 = vadd.f32 %v5275, %v5277
        %v5421 = vadd.f32 %v5420, %v5279
        %5422 = vadd.xlane.f32.xlu0 %v5421
        %v5423 = vpop.xlane.xlu0 %5422
        %v5424 = vadd.f32 %v5281, %v5283
        %v5425 = vadd.f32 %v5424, %v5285
        %5426 = vadd.xlane.f32.xlu0 %v5425
        %v5427 = vpop.xlane.xlu0 %5426
        %v5428 = vadd.f32 %v5287, %v5289
        %v5429 = vadd.f32 %v5428, %v5291
        %5430 = vadd.xlane.f32.xlu0 %v5429
        %v5431 = vpop.xlane.xlu0 %5430
        %v5432 = vadd.f32 %v5293, %v5295
        %v5433 = vadd.f32 %v5432, %v5297
        %5434 = vadd.xlane.f32.xlu0 %v5433
        %v5435 = vpop.xlane.xlu0 %5434
        %v5436 = vadd.f32 %v5299, %v5301
        %v5437 = vadd.f32 %v5436, %v5303
        %5438 = vadd.xlane.f32.xlu0 %v5437
        %v5439 = vpop.xlane.xlu0 %5438
        %v5440 = vadd.f32 %v5305, %v5307
        %v5441 = vadd.f32 %v5440, %v5309
        %5442 = vadd.xlane.f32.xlu0 %v5441
        %v5443 = vpop.xlane.xlu0 %5442
        %v5444 = vadd.f32 %v5311, %v5313
        %v5445 = vadd.f32 %v5444, %v5315
        %5446 = vadd.xlane.f32.xlu0 %v5445
        %v5447 = vpop.xlane.xlu0 %5446
        %v5448 = vadd.f32 %v5317, %v5319
        %v5449 = vadd.f32 %v5448, %v5321
        %5450 = vadd.xlane.f32.xlu0 %v5449
        %v5451 = vpop.xlane.xlu0 %5450
        %v5452 = vadd.f32 %v5323, %v5325
        %v5453 = vadd.f32 %v5452, %v5327
        %5454 = vadd.xlane.f32.xlu0 %v5453
        %v5455 = vpop.xlane.xlu0 %5454
        %v5456 = vrcp.pop %v5331
        %v5457 = vrcp.pop %v5335
        %v5458 = vrcp.pop %v5339
        %v5459 = vrcp.pop %v5343
        %v5460 = vrcp.pop %v5347
        %v5461 = vrcp.pop %v5351
        %v5462 = vrcp.pop %v5355
        %v5463 = vrcp.pop %v5359
        %v5464 = vrcp.pop %v5363
        %v5465 = vrcp.pop %v5367
        %v5466 = vrcp.pop %v5371
        %v5467 = vrcp.pop %v5375
        %v5468 = vrcp.pop %v5379
        %v5469 = vrcp.pop %v5383
        %v5470 = vrcp.pop %v5387
        %v5471 = vrcp.pop %v5391
        %v5472 = vrcp.pop %v5395
        %v5473 = vrcp.pop %v5399
        %v5474 = vrcp.pop %v5403
        %v5475 = vrcp.pop %v5407
        %v5476 = vrcp.pop %v5411
        %v5477 = vrcp.pop %v5415
        %v5478 = vrcp.pop %v5419
        %v5479 = vrcp.pop %v5423
        %v5480 = vrcp.pop %v5427
        %v5481 = vrcp.pop %v5431
        %v5482 = vrcp.pop %v5435
        %v5483 = vrcp.pop %v5439
        %v5484 = vrcp.pop %v5443
        %v5485 = vrcp.pop %v5447
        %v5486 = vrcp.pop %v5451
        %v5487 = vrcp.pop %v5455
        %v5488 = vmul.f32 %v5137, %v5456
        %v5489 = vmul.f32 %v5139, %v5456
        %v5490 = vmul.f32 %v5141, %v5456
        %v5491 = vmul.f32 %v5143, %v5457
        %v5492 = vmul.f32 %v5145, %v5457
        %v5493 = vmul.f32 %v5147, %v5457
        %v5494 = vmul.f32 %v5149, %v5458
        %v5495 = vmul.f32 %v5151, %v5458
        %v5496 = vmul.f32 %v5153, %v5458
        %v5497 = vmul.f32 %v5155, %v5459
        %v5498 = vmul.f32 %v5157, %v5459
        %v5499 = vmul.f32 %v5159, %v5459
        %v5500 = vmul.f32 %v5161, %v5460
        %v5501 = vmul.f32 %v5163, %v5460
        %v5502 = vmul.f32 %v5165, %v5460
        %v5503 = vmul.f32 %v5167, %v5461
        %v5504 = vmul.f32 %v5169, %v5461
        %v5505 = vmul.f32 %v5171, %v5461
        %v5506 = vmul.f32 %v5173, %v5462
        %v5507 = vmul.f32 %v5175, %v5462
        %v5508 = vmul.f32 %v5177, %v5462
        %v5509 = vmul.f32 %v5179, %v5463
        %v5510 = vmul.f32 %v5181, %v5463
        %v5511 = vmul.f32 %v5183, %v5463
        %v5512 = vmul.f32 %v5185, %v5464
        %v5513 = vmul.f32 %v5187, %v5464
        %v5514 = vmul.f32 %v5189, %v5464
        %v5515 = vmul.f32 %v5191, %v5465
        %v5516 = vmul.f32 %v5193, %v5465
        %v5517 = vmul.f32 %v5195, %v5465
        %v5518 = vmul.f32 %v5197, %v5466
        %v5519 = vmul.f32 %v5199, %v5466
        %v5520 = vmul.f32 %v5201, %v5466
        %v5521 = vmul.f32 %v5203, %v5467
        %v5522 = vmul.f32 %v5205, %v5467
        %v5523 = vmul.f32 %v5207, %v5467
        %v5524 = vmul.f32 %v5209, %v5468
        %v5525 = vmul.f32 %v5211, %v5468
        %v5526 = vmul.f32 %v5213, %v5468
        %v5527 = vmul.f32 %v5215, %v5469
        %v5528 = vmul.f32 %v5217, %v5469
        %v5529 = vmul.f32 %v5219, %v5469
        %v5530 = vmul.f32 %v5221, %v5470
        %v5531 = vmul.f32 %v5223, %v5470
        %v5532 = vmul.f32 %v5225, %v5470
        %v5533 = vmul.f32 %v5227, %v5471
        %v5534 = vmul.f32 %v5229, %v5471
        %v5535 = vmul.f32 %v5231, %v5471
        %v5536 = vmul.f32 %v5233, %v5472
        %v5537 = vmul.f32 %v5235, %v5472
        %v5538 = vmul.f32 %v5237, %v5472
        %v5539 = vmul.f32 %v5239, %v5473
        %v5540 = vmul.f32 %v5241, %v5473
        %v5541 = vmul.f32 %v5243, %v5473
        %v5542 = vmul.f32 %v5245, %v5474
        %v5543 = vmul.f32 %v5247, %v5474
        %v5544 = vmul.f32 %v5249, %v5474
        %v5545 = vmul.f32 %v5251, %v5475
        %v5546 = vmul.f32 %v5253, %v5475
        %v5547 = vmul.f32 %v5255, %v5475
        %v5548 = vmul.f32 %v5257, %v5476
        %v5549 = vmul.f32 %v5259, %v5476
        %v5550 = vmul.f32 %v5261, %v5476
        %v5551 = vmul.f32 %v5263, %v5477
        %v5552 = vmul.f32 %v5265, %v5477
        %v5553 = vmul.f32 %v5267, %v5477
        %v5554 = vmul.f32 %v5269, %v5478
        %v5555 = vmul.f32 %v5271, %v5478
        %v5556 = vmul.f32 %v5273, %v5478
        %v5557 = vmul.f32 %v5275, %v5479
        %v5558 = vmul.f32 %v5277, %v5479
        %v5559 = vmul.f32 %v5279, %v5479
        %v5560 = vmul.f32 %v5281, %v5480
        %v5561 = vmul.f32 %v5283, %v5480
        %v5562 = vmul.f32 %v5285, %v5480
        %v5563 = vmul.f32 %v5287, %v5481
        %v5564 = vmul.f32 %v5289, %v5481
        %v5565 = vmul.f32 %v5291, %v5481
        %v5566 = vmul.f32 %v5293, %v5482
        %v5567 = vmul.f32 %v5295, %v5482
        %v5568 = vmul.f32 %v5297, %v5482
        %v5569 = vmul.f32 %v5299, %v5483
        %v5570 = vmul.f32 %v5301, %v5483
        %v5571 = vmul.f32 %v5303, %v5483
        %v5572 = vmul.f32 %v5305, %v5484
        %v5573 = vmul.f32 %v5307, %v5484
        %v5574 = vmul.f32 %v5309, %v5484
        %v5575 = vmul.f32 %v5311, %v5485
        %v5576 = vmul.f32 %v5313, %v5485
        %v5577 = vmul.f32 %v5315, %v5485
        %v5578 = vmul.f32 %v5317, %v5486
        %v5579 = vmul.f32 %v5319, %v5486
        %v5580 = vmul.f32 %v5321, %v5486
        %v5581 = vmul.f32 %v5323, %v5487
        %v5582 = vmul.f32 %v5325, %v5487
        %v5583 = vmul.f32 %v5327, %v5487
        %v5584 = vpack.c.bf16 %v5491, %v5488
        %v5585 = vpack.c.bf16 %v5492, %v5489
        %v5586 = vpack.c.bf16 %v5493, %v5490
        %v5587 = vpack.c.bf16 %v5497, %v5494
        %v5588 = vpack.c.bf16 %v5498, %v5495
        %v5589 = vpack.c.bf16 %v5499, %v5496
        %v5590 = vpack.c.bf16 %v5503, %v5500
        %v5591 = vpack.c.bf16 %v5504, %v5501
        %v5592 = vpack.c.bf16 %v5505, %v5502
        %v5593 = vpack.c.bf16 %v5509, %v5506
        %v5594 = vpack.c.bf16 %v5510, %v5507
        %v5595 = vpack.c.bf16 %v5511, %v5508
        %v5596 = vpack.c.bf16 %v5515, %v5512
        %v5597 = vpack.c.bf16 %v5516, %v5513
        %v5598 = vpack.c.bf16 %v5517, %v5514
        %v5599 = vpack.c.bf16 %v5521, %v5518
        %v5600 = vpack.c.bf16 %v5522, %v5519
        %v5601 = vpack.c.bf16 %v5523, %v5520
        %v5602 = vpack.c.bf16 %v5527, %v5524
        %v5603 = vpack.c.bf16 %v5528, %v5525
        %v5604 = vpack.c.bf16 %v5529, %v5526
        %v5605 = vpack.c.bf16 %v5533, %v5530
        %v5606 = vpack.c.bf16 %v5534, %v5531
        %v5607 = vpack.c.bf16 %v5535, %v5532
        %v5608 = vpack.c.bf16 %v5539, %v5536
        %v5609 = vpack.c.bf16 %v5540, %v5537
        %v5610 = vpack.c.bf16 %v5541, %v5538
        %v5611 = vpack.c.bf16 %v5545, %v5542
        %v5612 = vpack.c.bf16 %v5546, %v5543
        %v5613 = vpack.c.bf16 %v5547, %v5544
        %v5614 = vpack.c.bf16 %v5551, %v5548
        %v5615 = vpack.c.bf16 %v5552, %v5549
        %v5616 = vpack.c.bf16 %v5553, %v5550
        %v5617 = vpack.c.bf16 %v5557, %v5554
        %v5618 = vpack.c.bf16 %v5558, %v5555
        %v5619 = vpack.c.bf16 %v5559, %v5556
        %v5620 = vpack.c.bf16 %v5563, %v5560
        %v5621 = vpack.c.bf16 %v5564, %v5561
        %v5622 = vpack.c.bf16 %v5565, %v5562
        %v5623 = vpack.c.bf16 %v5569, %v5566
        %v5624 = vpack.c.bf16 %v5570, %v5567
        %v5625 = vpack.c.bf16 %v5571, %v5568
        %v5626 = vpack.c.bf16 %v5575, %v5572
        %v5627 = vpack.c.bf16 %v5576, %v5573
        %v5628 = vpack.c.bf16 %v5577, %v5574
        %v5629 = vpack.c.bf16 %v5581, %v5578
        %v5630 = vpack.c.bf16 %v5582, %v5579
        %v5631 = vpack.c.bf16 %v5583, %v5580
        %v5632 = vunpack.c.h.b16 %v3099
        %v5633 = vunpack.c.h.b16 %v3101
        %v5634 = vunpack.c.h.b16 %v3103
        %v5635 = vunpack.c.h.b16 %v3105
        %v5636 = vunpack.c.h.b16 %v3107
        %v5637 = vunpack.c.h.b16 %v3109
        %v5638 = vunpack.c.h.b16 %v3111
        %v5639 = vunpack.c.h.b16 %v3113
        %v5640 = vunpack.c.h.b16 %v3115
        %v5641 = vunpack.c.h.b16 %v3117
        %v5642 = vunpack.c.h.b16 %v3119
        %v5643 = vunpack.c.h.b16 %v3121
        %v5644 = vunpack.c.h.b16 %v3123
        %v5645 = vunpack.c.h.b16 %v3125
        %v5646 = vunpack.c.h.b16 %v3127
        %v5647 = vunpack.c.h.b16 %v3129
        %v5648 = vunpack.c.h.b16 %v3131
        %v5649 = vunpack.c.h.b16 %v3133
        %v5650 = vunpack.c.h.b16 %v3135
        %v5651 = vunpack.c.h.b16 %v3137
        %v5652 = vunpack.c.h.b16 %v3139
        %v5653 = vunpack.c.h.b16 %v3141
        %v5654 = vunpack.c.h.b16 %v3143
        %v5655 = vunpack.c.h.b16 %v3145
        %v5656 = vunpack.c.h.b16 %v3147
        %v5657 = vunpack.c.h.b16 %v3149
        %v5658 = vunpack.c.h.b16 %v3151
        %v5659 = vunpack.c.h.b16 %v3153
        %v5660 = vunpack.c.h.b16 %v3155
        %v5661 = vunpack.c.h.b16 %v3157
        %v5662 = vunpack.c.h.b16 %v3159
        %v5663 = vunpack.c.h.b16 %v3161
        %v5664 = vunpack.c.h.b16 %v3163
        %v5665 = vunpack.c.h.b16 %v3165
        %v5666 = vunpack.c.h.b16 %v3167
        %v5667 = vunpack.c.h.b16 %v3169
        %v5668 = vunpack.c.h.b16 %v3171
        %v5669 = vunpack.c.h.b16 %v3173
        %v5670 = vunpack.c.h.b16 %v3175
        %v5671 = vunpack.c.h.b16 %v3177
        %v5672 = vunpack.c.h.b16 %v3179
        %v5673 = vunpack.c.h.b16 %v3181
        %v5674 = vunpack.c.h.b16 %v3183
        %v5675 = vunpack.c.h.b16 %v3185
        %v5676 = vunpack.c.h.b16 %v3187
        %v5677 = vunpack.c.h.b16 %v3189
        %v5678 = vunpack.c.h.b16 %v3191
        %v5679 = vunpack.c.h.b16 %v3193
        %v5680 = vpack.c.b16 %v5633, %v5632
        %v5681 = vpack.c.b16 %v5635, %v5634
        %v5682 = vpack.c.b16 %v5637, %v5636
        %v5683 = vpack.c.b16 %v5639, %v5638
        %v5684 = vpack.c.b16 %v5641, %v5640
        %v5685 = vpack.c.b16 %v5643, %v5642
        %v5686 = vpack.c.b16 %v5645, %v5644
        %v5687 = vpack.c.b16 %v5647, %v5646
        %v5688 = vpack.c.b16 %v5649, %v5648
        %v5689 = vpack.c.b16 %v5651, %v5650
        %v5690 = vpack.c.b16 %v5653, %v5652
        %v5691 = vpack.c.b16 %v5655, %v5654
        %v5692 = vpack.c.b16 %v5657, %v5656
        %v5693 = vpack.c.b16 %v5659, %v5658
        %v5694 = vpack.c.b16 %v5661, %v5660
        %v5695 = vpack.c.b16 %v5663, %v5662
        %v5696 = vpack.c.b16 %v5665, %v5664
        %v5697 = vpack.c.b16 %v5667, %v5666
        %v5698 = vpack.c.b16 %v5669, %v5668
        %v5699 = vpack.c.b16 %v5671, %v5670
        %v5700 = vpack.c.b16 %v5673, %v5672
        %v5701 = vpack.c.b16 %v5675, %v5674
        %v5702 = vpack.c.b16 %v5677, %v5676
        %v5703 = vpack.c.b16 %v5679, %v5678
        %5728 = vmatpush.bf16.msra.mxu0 %v5687
        %5729 = vmatpush.bf16.msra.mxu0 %v5686
        %5730 = vmatpush.bf16.msra.mxu0 %v5685
        %5731 = vmatpush.bf16.msra.mxu0 %v5684
        %5732 = vmatpush.bf16.msra.mxu0 %v5683
        %5733 = vmatpush.bf16.msra.mxu0 %v5682
        %5734 = vmatpush.bf16.msra.mxu0 %v5681
        %5735 = vmatpush.bf16.msra.mxu0 %v5680
        %5736 = vmatmul.bf16.gmra.mxu0 %v5584
        %v5737 = vpop.f32.mrf.mxu0
        %v5738 = vadd.f32 0.0, %v5737
        %v5739 = vpop.f32.mrf.mxu0
        %v5740 = vadd.f32 0.0, %v5739
        %5741 = vmatmul.bf16.gmra.mxu0 %v5587
        %v5742 = vpop.f32.mrf.mxu0
        %v5743 = vadd.f32 0.0, %v5742
        %v5744 = vpop.f32.mrf.mxu0
        %v5745 = vadd.f32 0.0, %v5744
        %5746 = vmatmul.bf16.gmra.mxu0 %v5590
        %v5747 = vpop.f32.mrf.mxu0
        %v5748 = vadd.f32 0.0, %v5747
        %v5749 = vpop.f32.mrf.mxu0
        %v5750 = vadd.f32 0.0, %v5749
        %5751 = vmatmul.bf16.gmra.mxu0 %v5593
        %v5752 = vpop.f32.mrf.mxu0
        %v5753 = vadd.f32 0.0, %v5752
        %v5754 = vpop.f32.mrf.mxu0
        %v5755 = vadd.f32 0.0, %v5754
        %5756 = vmatmul.bf16.gmra.mxu0 %v5596
        %v5757 = vpop.f32.mrf.mxu0
        %v5758 = vadd.f32 0.0, %v5757
        %v5759 = vpop.f32.mrf.mxu0
        %v5760 = vadd.f32 0.0, %v5759
        %5761 = vmatmul.bf16.gmra.mxu0 %v5599
        %v5762 = vpop.f32.mrf.mxu0
        %v5763 = vadd.f32 0.0, %v5762
        %v5764 = vpop.f32.mrf.mxu0
        %v5765 = vadd.f32 0.0, %v5764
        %5766 = vmatmul.bf16.gmra.mxu0 %v5602
        %v5767 = vpop.f32.mrf.mxu0
        %v5768 = vadd.f32 0.0, %v5767
        %v5769 = vpop.f32.mrf.mxu0
        %v5770 = vadd.f32 0.0, %v5769
        %5771 = vmatmul.bf16.gmra.mxu0 %v5605
        %v5772 = vpop.f32.mrf.mxu0
        %v5773 = vadd.f32 0.0, %v5772
        %v5774 = vpop.f32.mrf.mxu0
        %v5775 = vadd.f32 0.0, %v5774
        %5776 = vmatmul.bf16.gmra.mxu0 %v5608
        %v5777 = vpop.f32.mrf.mxu0
        %v5778 = vadd.f32 0.0, %v5777
        %v5779 = vpop.f32.mrf.mxu0
        %v5780 = vadd.f32 0.0, %v5779
        %5781 = vmatmul.bf16.gmra.mxu0 %v5611
        %v5782 = vpop.f32.mrf.mxu0
        %v5783 = vadd.f32 0.0, %v5782
        %v5784 = vpop.f32.mrf.mxu0
        %v5785 = vadd.f32 0.0, %v5784
        %5786 = vmatmul.bf16.gmra.mxu0 %v5614
        %v5787 = vpop.f32.mrf.mxu0
        %v5788 = vadd.f32 0.0, %v5787
        %v5789 = vpop.f32.mrf.mxu0
        %v5790 = vadd.f32 0.0, %v5789
        %5791 = vmatmul.bf16.gmra.mxu0 %v5617
        %v5792 = vpop.f32.mrf.mxu0
        %v5793 = vadd.f32 0.0, %v5792
        %v5794 = vpop.f32.mrf.mxu0
        %v5795 = vadd.f32 0.0, %v5794
        %5796 = vmatmul.bf16.gmra.mxu0 %v5620
        %v5797 = vpop.f32.mrf.mxu0
        %v5798 = vadd.f32 0.0, %v5797
        %v5799 = vpop.f32.mrf.mxu0
        %v5800 = vadd.f32 0.0, %v5799
        %5801 = vmatmul.bf16.gmra.mxu0 %v5623
        %v5802 = vpop.f32.mrf.mxu0
        %v5803 = vadd.f32 0.0, %v5802
        %v5804 = vpop.f32.mrf.mxu0
        %v5805 = vadd.f32 0.0, %v5804
        %5806 = vmatmul.bf16.gmra.mxu0 %v5626
        %v5807 = vpop.f32.mrf.mxu0
        %v5808 = vadd.f32 0.0, %v5807
        %v5809 = vpop.f32.mrf.mxu0
        %v5810 = vadd.f32 0.0, %v5809
        %5811 = vmatmul.bf16.gmra.mxu0 %v5629
        %v5812 = vpop.f32.mrf.mxu0
        %v5813 = vadd.f32 0.0, %v5812
        %v5814 = vpop.f32.mrf.mxu0
        %v5815 = vadd.f32 0.0, %v5814
        %5816 = vdwg.mxu0
        %5817 = vmatpush.bf16.msra.mxu0 %v5695
        %5818 = vmatpush.bf16.msra.mxu0 %v5694
        %5819 = vmatpush.bf16.msra.mxu0 %v5693
        %5820 = vmatpush.bf16.msra.mxu0 %v5692
        %5821 = vmatpush.bf16.msra.mxu0 %v5691
        %5822 = vmatpush.bf16.msra.mxu0 %v5690
        %5823 = vmatpush.bf16.msra.mxu0 %v5689
        %5824 = vmatpush.bf16.msra.mxu0 %v5688
        %5825 = vmatmul.bf16.gmra.mxu0 %v5585
        %v5826 = vpop.f32.mrf.mxu0
        %v5827 = vadd.f32 %v5738, %v5826
        %v5828 = vpop.f32.mrf.mxu0
        %v5829 = vadd.f32 %v5740, %v5828
        %5830 = vmatmul.bf16.gmra.mxu0 %v5588
        %v5831 = vpop.f32.mrf.mxu0
        %v5832 = vadd.f32 %v5743, %v5831
        %v5833 = vpop.f32.mrf.mxu0
        %v5834 = vadd.f32 %v5745, %v5833
        %5835 = vmatmul.bf16.gmra.mxu0 %v5591
        %v5836 = vpop.f32.mrf.mxu0
        %v5837 = vadd.f32 %v5748, %v5836
        %v5838 = vpop.f32.mrf.mxu0
        %v5839 = vadd.f32 %v5750, %v5838
        %5840 = vmatmul.bf16.gmra.mxu0 %v5594
        %v5841 = vpop.f32.mrf.mxu0
        %v5842 = vadd.f32 %v5753, %v5841
        %v5843 = vpop.f32.mrf.mxu0
        %v5844 = vadd.f32 %v5755, %v5843
        %5845 = vmatmul.bf16.gmra.mxu0 %v5597
        %v5846 = vpop.f32.mrf.mxu0
        %v5847 = vadd.f32 %v5758, %v5846
        %v5848 = vpop.f32.mrf.mxu0
        %v5849 = vadd.f32 %v5760, %v5848
        %5850 = vmatmul.bf16.gmra.mxu0 %v5600
        %v5851 = vpop.f32.mrf.mxu0
        %v5852 = vadd.f32 %v5763, %v5851
        %v5853 = vpop.f32.mrf.mxu0
        %v5854 = vadd.f32 %v5765, %v5853
        %5855 = vmatmul.bf16.gmra.mxu0 %v5603
        %v5856 = vpop.f32.mrf.mxu0
        %v5857 = vadd.f32 %v5768, %v5856
        %v5858 = vpop.f32.mrf.mxu0
        %v5859 = vadd.f32 %v5770, %v5858
        %5860 = vmatmul.bf16.gmra.mxu0 %v5606
        %v5861 = vpop.f32.mrf.mxu0
        %v5862 = vadd.f32 %v5773, %v5861
        %v5863 = vpop.f32.mrf.mxu0
        %v5864 = vadd.f32 %v5775, %v5863
        %5865 = vmatmul.bf16.gmra.mxu0 %v5609
        %v5866 = vpop.f32.mrf.mxu0
        %v5867 = vadd.f32 %v5778, %v5866
        %v5868 = vpop.f32.mrf.mxu0
        %v5869 = vadd.f32 %v5780, %v5868
        %5870 = vmatmul.bf16.gmra.mxu0 %v5612
        %v5871 = vpop.f32.mrf.mxu0
        %v5872 = vadd.f32 %v5783, %v5871
        %v5873 = vpop.f32.mrf.mxu0
        %v5874 = vadd.f32 %v5785, %v5873
        %5875 = vmatmul.bf16.gmra.mxu0 %v5615
        %v5876 = vpop.f32.mrf.mxu0
        %v5877 = vadd.f32 %v5788, %v5876
        %v5878 = vpop.f32.mrf.mxu0
        %v5879 = vadd.f32 %v5790, %v5878
        %5880 = vmatmul.bf16.gmra.mxu0 %v5618
        %v5881 = vpop.f32.mrf.mxu0
        %v5882 = vadd.f32 %v5793, %v5881
        %v5883 = vpop.f32.mrf.mxu0
        %v5884 = vadd.f32 %v5795, %v5883
        %5885 = vmatmul.bf16.gmra.mxu0 %v5621
        %v5886 = vpop.f32.mrf.mxu0
        %v5887 = vadd.f32 %v5798, %v5886
        %v5888 = vpop.f32.mrf.mxu0
        %v5889 = vadd.f32 %v5800, %v5888
        %5890 = vmatmul.bf16.gmra.mxu0 %v5624
        %v5891 = vpop.f32.mrf.mxu0
        %v5892 = vadd.f32 %v5803, %v5891
        %v5893 = vpop.f32.mrf.mxu0
        %v5894 = vadd.f32 %v5805, %v5893
        %5895 = vmatmul.bf16.gmra.mxu0 %v5627
        %v5896 = vpop.f32.mrf.mxu0
        %v5897 = vadd.f32 %v5808, %v5896
        %v5898 = vpop.f32.mrf.mxu0
        %v5899 = vadd.f32 %v5810, %v5898
        %5900 = vmatmul.bf16.gmra.mxu0 %v5630
        %v5901 = vpop.f32.mrf.mxu0
        %v5902 = vadd.f32 %v5813, %v5901
        %v5903 = vpop.f32.mrf.mxu0
        %v5904 = vadd.f32 %v5815, %v5903
        %5905 = vdwg.mxu0
        %5906 = vmatpush.bf16.msra.mxu0 %v5703
        %5907 = vmatpush.bf16.msra.mxu0 %v5702
        %5908 = vmatpush.bf16.msra.mxu0 %v5701
        %5909 = vmatpush.bf16.msra.mxu0 %v5700
        %5910 = vmatpush.bf16.msra.mxu0 %v5699
        %5911 = vmatpush.bf16.msra.mxu0 %v5698
        %5912 = vmatpush.bf16.msra.mxu0 %v5697
        %5913 = vmatpush.bf16.msra.mxu0 %v5696
        %5914 = vmatmul.bf16.gmra.mxu0 %v5586
        %v5915 = vpop.f32.mrf.mxu0
        %v5916 = vadd.f32 %v5827, %v5915
        %v5917 = vpop.f32.mrf.mxu0
        %v5918 = vadd.f32 %v5829, %v5917
        %5919 = vmatmul.bf16.gmra.mxu0 %v5589
        %v5920 = vpop.f32.mrf.mxu0
        %v5921 = vadd.f32 %v5832, %v5920
        %v5922 = vpop.f32.mrf.mxu0
        %v5923 = vadd.f32 %v5834, %v5922
        %5924 = vmatmul.bf16.gmra.mxu0 %v5592
        %v5925 = vpop.f32.mrf.mxu0
        %v5926 = vadd.f32 %v5837, %v5925
        %v5927 = vpop.f32.mrf.mxu0
        %v5928 = vadd.f32 %v5839, %v5927
        %5929 = vmatmul.bf16.gmra.mxu0 %v5595
        %v5930 = vpop.f32.mrf.mxu0
        %v5931 = vadd.f32 %v5842, %v5930
        %v5932 = vpop.f32.mrf.mxu0
        %v5933 = vadd.f32 %v5844, %v5932
        %5934 = vmatmul.bf16.gmra.mxu0 %v5598
        %v5935 = vpop.f32.mrf.mxu0
        %v5936 = vadd.f32 %v5847, %v5935
        %v5937 = vpop.f32.mrf.mxu0
        %v5938 = vadd.f32 %v5849, %v5937
        %5939 = vmatmul.bf16.gmra.mxu0 %v5601
        %v5940 = vpop.f32.mrf.mxu0
        %v5941 = vadd.f32 %v5852, %v5940
        %v5942 = vpop.f32.mrf.mxu0
        %v5943 = vadd.f32 %v5854, %v5942
        %5944 = vmatmul.bf16.gmra.mxu0 %v5604
        %v5945 = vpop.f32.mrf.mxu0
        %v5946 = vadd.f32 %v5857, %v5945
        %v5947 = vpop.f32.mrf.mxu0
        %v5948 = vadd.f32 %v5859, %v5947
        %5949 = vmatmul.bf16.gmra.mxu0 %v5607
        %v5950 = vpop.f32.mrf.mxu0
        %v5951 = vadd.f32 %v5862, %v5950
        %v5952 = vpop.f32.mrf.mxu0
        %v5953 = vadd.f32 %v5864, %v5952
        %5954 = vmatmul.bf16.gmra.mxu0 %v5610
        %v5955 = vpop.f32.mrf.mxu0
        %v5956 = vadd.f32 %v5867, %v5955
        %v5957 = vpop.f32.mrf.mxu0
        %v5958 = vadd.f32 %v5869, %v5957
        %5959 = vmatmul.bf16.gmra.mxu0 %v5613
        %v5960 = vpop.f32.mrf.mxu0
        %v5961 = vadd.f32 %v5872, %v5960
        %v5962 = vpop.f32.mrf.mxu0
        %v5963 = vadd.f32 %v5874, %v5962
        %5964 = vmatmul.bf16.gmra.mxu0 %v5616
        %v5965 = vpop.f32.mrf.mxu0
        %v5966 = vadd.f32 %v5877, %v5965
        %v5967 = vpop.f32.mrf.mxu0
        %v5968 = vadd.f32 %v5879, %v5967
        %5969 = vmatmul.bf16.gmra.mxu0 %v5619
        %v5970 = vpop.f32.mrf.mxu0
        %v5971 = vadd.f32 %v5882, %v5970
        %v5972 = vpop.f32.mrf.mxu0
        %v5973 = vadd.f32 %v5884, %v5972
        %5974 = vmatmul.bf16.gmra.mxu0 %v5622
        %v5975 = vpop.f32.mrf.mxu0
        %v5976 = vadd.f32 %v5887, %v5975
        %v5977 = vpop.f32.mrf.mxu0
        %v5978 = vadd.f32 %v5889, %v5977
        %5979 = vmatmul.bf16.gmra.mxu0 %v5625
        %v5980 = vpop.f32.mrf.mxu0
        %v5981 = vadd.f32 %v5892, %v5980
        %v5982 = vpop.f32.mrf.mxu0
        %v5983 = vadd.f32 %v5894, %v5982
        %5984 = vmatmul.bf16.gmra.mxu0 %v5628
        %v5985 = vpop.f32.mrf.mxu0
        %v5986 = vadd.f32 %v5897, %v5985
        %v5987 = vpop.f32.mrf.mxu0
        %v5988 = vadd.f32 %v5899, %v5987
        %5989 = vmatmul.bf16.gmra.mxu0 %v5631
        %v5990 = vpop.f32.mrf.mxu0
        %v5991 = vadd.f32 %v5902, %v5990
        %v5992 = vpop.f32.mrf.mxu0
        %v5993 = vadd.f32 %v5904, %v5992
        %5994 = vdwg.mxu0
        %v5995 = vmul.f32 %v5916, %v3446
        %v5996 = vmul.f32 %v5918, %v3446
        %v5997 = vmul.f32 %v5921, %v3446
        %v5998 = vmul.f32 %v5923, %v3446
        %v5999 = vmul.f32 %v5926, %v3447
        %v6000 = vmul.f32 %v5928, %v3447
        %v6001 = vmul.f32 %v5931, %v3447
        %v6002 = vmul.f32 %v5933, %v3447
        %v6003 = vmul.f32 %v5936, %v3448
        %v6004 = vmul.f32 %v5938, %v3448
        %v6005 = vmul.f32 %v5941, %v3448
        %v6006 = vmul.f32 %v5943, %v3448
        %v6007 = vmul.f32 %v5946, %v3449
        %v6008 = vmul.f32 %v5948, %v3449
        %v6009 = vmul.f32 %v5951, %v3449
        %v6010 = vmul.f32 %v5953, %v3449
        %v6011 = vmul.f32 %v5956, %v3450
        %v6012 = vmul.f32 %v5958, %v3450
        %v6013 = vmul.f32 %v5961, %v3450
        %v6014 = vmul.f32 %v5963, %v3450
        %v6015 = vmul.f32 %v5966, %v3451
        %v6016 = vmul.f32 %v5968, %v3451
        %v6017 = vmul.f32 %v5971, %v3451
        %v6018 = vmul.f32 %v5973, %v3451
        %v6019 = vmul.f32 %v5976, %v3452
        %v6020 = vmul.f32 %v5978, %v3452
        %v6021 = vmul.f32 %v5981, %v3452
        %v6022 = vmul.f32 %v5983, %v3452
        %v6023 = vmul.f32 %v5986, %v3453
        %v6024 = vmul.f32 %v5988, %v3453
        %v6025 = vmul.f32 %v5991, %v3453
        %v6026 = vmul.f32 %v5993, %v3453
        %v6027 = vadd.f32 %v5995, %v5999
        %v6028 = vadd.f32 %v6027, %v6003
        %v6029 = vadd.f32 %v6028, %v6007
        %v6030 = vadd.f32 %v6029, %v6011
        %v6031 = vadd.f32 %v6030, %v6015
        %v6032 = vadd.f32 %v6031, %v6019
        %v6033 = vadd.f32 %v6032, %v6023
        %v6034 = vadd.f32 %v5996, %v6000
        %v6035 = vadd.f32 %v6034, %v6004
        %v6036 = vadd.f32 %v6035, %v6008
        %v6037 = vadd.f32 %v6036, %v6012
        %v6038 = vadd.f32 %v6037, %v6016
        %v6039 = vadd.f32 %v6038, %v6020
        %v6040 = vadd.f32 %v6039, %v6024
        %v6041 = vadd.f32 %v5997, %v6001
        %v6042 = vadd.f32 %v6041, %v6005
        %v6043 = vadd.f32 %v6042, %v6009
        %v6044 = vadd.f32 %v6043, %v6013
        %v6045 = vadd.f32 %v6044, %v6017
        %v6046 = vadd.f32 %v6045, %v6021
        %v6047 = vadd.f32 %v6046, %v6025
        %v6048 = vadd.f32 %v5998, %v6002
        %v6049 = vadd.f32 %v6048, %v6006
        %v6050 = vadd.f32 %v6049, %v6010
        %v6051 = vadd.f32 %v6050, %v6014
        %v6052 = vadd.f32 %v6051, %v6018
        %v6053 = vadd.f32 %v6052, %v6022
        %v6054 = vadd.f32 %v6053, %v6026
        %v6055 = vld [vmem:[#allocation26] sm:$0xf]
        %v6056 = vld [vmem:[#allocation26 + $0x4] sm:$0xf]
        %v6057 = vld [vmem:[#allocation26 + $0x8] sm:$0xf]
        %v6058 = vld [vmem:[#allocation26 + $0xc] sm:$0xf]
        %v6059 = vld [vmem:[#allocation26 + $0x10] sm:$0xf]
        %v6060 = vld [vmem:[#allocation26 + $0x14] sm:$0xf]
        %v6061 = vld [vmem:[#allocation26 + $0x18] sm:$0xf]
        %v6062 = vld [vmem:[#allocation26 + $0x1c] sm:$0xf]
        %v6063 = vld [vmem:[#allocation26 + $0x20] sm:$0xf]
        %v6064 = vld [vmem:[#allocation26 + $0x24] sm:$0xf]
        %v6065 = vld [vmem:[#allocation26 + $0x28] sm:$0xf]
        %v6066 = vld [vmem:[#allocation26 + $0x2c] sm:$0xf]
        %v6067 = vld [vmem:[#allocation26 + $0x30] sm:$0xf]
        %v6068 = vld [vmem:[#allocation26 + $0x34] sm:$0xf]
        %v6069 = vld [vmem:[#allocation26 + $0x38] sm:$0xf]
        %v6070 = vld [vmem:[#allocation26 + $0x3c] sm:$0xf]
        %v6071 = vld [vmem:[%s49] sm:$0x1]
        %v6072 = vpack.c.bf16 %v6040, %v6033
        %v6073 = vpack.c.bf16 %v6054, %v6047
        %v6075 = vperm.slane %v6071, 0
        %v6093 = vunpack.c.l.b16 %v6055
        %v6094 = vunpack.c.l.b16 %v6056
        %v6095 = vunpack.c.l.b16 %v6057
        %v6096 = vunpack.c.l.b16 %v6058
        %v6097 = vunpack.c.l.b16 %v6059
        %v6098 = vunpack.c.l.b16 %v6060
        %v6099 = vunpack.c.l.b16 %v6061
        %v6100 = vunpack.c.l.b16 %v6062
        %v6101 = vunpack.c.l.b16 %v6063
        %v6102 = vunpack.c.l.b16 %v6064
        %v6103 = vunpack.c.l.b16 %v6065
        %v6104 = vunpack.c.l.b16 %v6066
        %v6105 = vunpack.c.l.b16 %v6067
        %v6106 = vunpack.c.l.b16 %v6068
        %v6107 = vunpack.c.l.b16 %v6069
        %v6108 = vunpack.c.l.b16 %v6070
        %v6109 = vpack.c.b16 %v6094, %v6093
        %v6110 = vpack.c.b16 %v6096, %v6095
        %v6111 = vpack.c.b16 %v6098, %v6097
        %v6112 = vpack.c.b16 %v6100, %v6099
        %v6113 = vpack.c.b16 %v6102, %v6101
        %v6114 = vpack.c.b16 %v6104, %v6103
        %v6115 = vpack.c.b16 %v6106, %v6105
        %v6116 = vpack.c.b16 %v6108, %v6107
        %6125 = vmatpush.bf16.msra.mxu0 %v6116
        %6126 = vmatpush.bf16.msra.mxu0 %v6115
        %6127 = vmatpush.bf16.msra.mxu0 %v6114
        %6128 = vmatpush.bf16.msra.mxu0 %v6113
        %6129 = vmatpush.bf16.msra.mxu0 %v6112
        %6130 = vmatpush.bf16.msra.mxu0 %v6111
        %6131 = vmatpush.bf16.msra.mxu0 %v6110
        %6132 = vmatpush.bf16.msra.mxu0 %v6109
        %6133 = vmatmul.bf16.gmra.mxu0 %v6072
        %v6134 = vpop.f32.mrf.mxu0
        %v6135 = vadd.f32 %v6075, %v6134
        %v6136 = vpop.f32.mrf.mxu0
        %v6137 = vadd.f32 %v6075, %v6136
        %6138 = vmatmul.bf16.gmra.mxu0 %v6073
        %v6139 = vpop.f32.mrf.mxu0
        %v6140 = vadd.f32 %v6075, %v6139
        %v6141 = vpop.f32.mrf.mxu0
        %v6142 = vadd.f32 %v6075, %v6141
        %6143 = vdwg.mxu0
        %v6144 = vadd.f32 %v4353, %v6135
        %v6145 = vadd.f32 %v4354, %v6137
        %v6146 = vadd.f32 %v4355, %v6140
        %v6147 = vadd.f32 %v4356, %v6142
        %6148 = vadd.xlane.f32.xlu0 %v6144
        %v6149 = vpop.xlane.xlu0 %6148
        %6150 = vadd.xlane.f32.xlu0 %v6145
        %v6151 = vpop.xlane.xlu0 %6150
        %6152 = vadd.xlane.f32.xlu0 %v6146
        %v6153 = vpop.xlane.xlu0 %6152
        %6154 = vadd.xlane.f32.xlu0 %v6147
        %v6155 = vpop.xlane.xlu0 %6154
        %v6156 = vmul.f32 %v6149, %v4274
        %v6157 = vmul.f32 %v6151, %v4274
        %v6158 = vmul.f32 %v6153, %v4274
        %v6159 = vmul.f32 %v6155, %v4274
        %v6160 = vsub.f32 %v6144, %v6156
        %v6161 = vsub.f32 %v6145, %v6157
        %v6162 = vsub.f32 %v6146, %v6158
        %v6163 = vsub.f32 %v6147, %v6159
        %v6164 = vmul.f32 %v6160, %v6160
        %v6165 = vmul.f32 %v6161, %v6161
        %v6166 = vmul.f32 %v6162, %v6162
        %v6167 = vmul.f32 %v6163, %v6163
        %6168 = vadd.xlane.f32.xlu0 %v6164
        %v6169 = vpop.xlane.xlu0 %6168
        %6170 = vadd.xlane.f32.xlu0 %v6165
        %v6171 = vpop.xlane.xlu0 %6170
        %6172 = vadd.xlane.f32.xlu0 %v6166
        %v6173 = vpop.xlane.xlu0 %6172
        %6174 = vadd.xlane.f32.xlu0 %v6167
        %v6175 = vpop.xlane.xlu0 %6174
        %v6176 = vmul.f32 %v6169, %v4274
        %v6177 = vmul.f32 %v6171, %v4274
        %v6178 = vmul.f32 %v6173, %v4274
        %v6179 = vmul.f32 %v6175, %v4274
        %v6180 = vadd.f32 %v6176, 1e-05
        %v6181 = vadd.f32 %v6177, 1e-05
        %v6182 = vadd.f32 %v6178, 1e-05
        %v6183 = vadd.f32 %v6179, 1e-05
        %v6184 = vrsqrt.pop %v6180
        %v6185 = vmul.f32 %v6184, %v6180
        %v6186 = vmul.f32 %v6185, %v6184
        %v6187 = vmul.f32 0.5, %v6186
        %v6188 = vsub.f32 1.5, %v6187
        %v6189 = vmul.f32 %v6184, %v6188
        %vm6190 = vweird.f32 %v6180
        %vm6191 = vweird.f32 %v6184
        %vm6192 = vmor %vm6190, %vm6191
        %v6193 = vsel %vm6192, %v6184, %v6189
        %v6194 = vrsqrt.pop %v6181
        %v6195 = vmul.f32 %v6194, %v6181
        %v6196 = vmul.f32 %v6195, %v6194
        %v6197 = vmul.f32 0.5, %v6196
        %v6198 = vsub.f32 1.5, %v6197
        %v6199 = vmul.f32 %v6194, %v6198
        %vm6200 = vweird.f32 %v6181
        %vm6201 = vweird.f32 %v6194
        %vm6202 = vmor %vm6200, %vm6201
        %v6203 = vsel %vm6202, %v6194, %v6199
        %v6204 = vrsqrt.pop %v6182
        %v6205 = vmul.f32 %v6204, %v6182
        %v6206 = vmul.f32 %v6205, %v6204
        %v6207 = vmul.f32 0.5, %v6206
        %v6208 = vsub.f32 1.5, %v6207
        %v6209 = vmul.f32 %v6204, %v6208
        %vm6210 = vweird.f32 %v6182
        %vm6211 = vweird.f32 %v6204
        %vm6212 = vmor %vm6210, %vm6211
        %v6213 = vsel %vm6212, %v6204, %v6209
        %v6214 = vrsqrt.pop %v6183
        %v6215 = vmul.f32 %v6214, %v6183
        %v6216 = vmul.f32 %v6215, %v6214
        %v6217 = vmul.f32 0.5, %v6216
        %v6218 = vsub.f32 1.5, %v6217
        %v6219 = vmul.f32 %v6214, %v6218
        %vm6220 = vweird.f32 %v6183
        %vm6221 = vweird.f32 %v6214
        %vm6222 = vmor %vm6220, %vm6221
        %v6223 = vsel %vm6222, %v6214, %v6219
        %v6224 = vmul.f32 %v6160, %v6193
        %v6225 = vmul.f32 %v6161, %v6203
        %v6226 = vmul.f32 %v6162, %v6213
        %v6227 = vmul.f32 %v6163, %v6223
        %v6228 = vperm.slane %v3201, 1
        %v6229 = vmul.f32 %v6224, %v6228
        %v6230 = vmul.f32 %v6225, %v6228
        %v6231 = vmul.f32 %v6226, %v6228
        %v6232 = vmul.f32 %v6227, %v6228
        %v6233 = vperm.slane %v3202, 1
        %v6234 = vadd.f32 %v6229, %v6233
        %v6235 = vadd.f32 %v6230, %v6233
        %v6236 = vadd.f32 %v6231, %v6233
        %v6237 = vadd.f32 %v6232, %v6233
        %v6238 = vld [vmem:[#allocation27] sm:$0xff]
        %v6239 = vld [vmem:[#allocation27 + $0x8] sm:$0xff]
        %v6240 = vld [vmem:[#allocation27 + $0x10] sm:$0xff]
        %v6241 = vld [vmem:[#allocation27 + $0x18] sm:$0xff]
        %v6242 = vld [vmem:[#allocation27 + $0x20] sm:$0xff]
        %v6243 = vld [vmem:[#allocation27 + $0x28] sm:$0xff]
        %v6244 = vld [vmem:[#allocation27 + $0x30] sm:$0xff]
        %v6245 = vld [vmem:[#allocation27 + $0x38] sm:$0xff]
        %v6246 = vld [vmem:[#allocation27 + $0x40] sm:$0xff]
        %v6247 = vld [vmem:[#allocation27 + $0x48] sm:$0xff]
        %v6248 = vld [vmem:[#allocation27 + $0x50] sm:$0xff]
        %v6249 = vld [vmem:[#allocation27 + $0x58] sm:$0xff]
        %v6250 = vld [vmem:[#allocation27 + $0x60] sm:$0xff]
        %v6251 = vld [vmem:[#allocation27 + $0x68] sm:$0xff]
        %v6252 = vld [vmem:[#allocation27 + $0x70] sm:$0xff]
        %v6253 = vld [vmem:[#allocation27 + $0x78] sm:$0xff]
        %v6254 = vld [vmem:[%s53] sm:$0x3]
        %v6255 = vpack.c.bf16 %v6235, %v6234
        %v6256 = vpack.c.bf16 %v6237, %v6236
        %v6258 = vperm.slane %v6254, 0
        %v6259 = vperm.slane %v6254, 1
        %v6278 = vunpack.c.l.b16 %v6238
        %v6279 = vunpack.c.h.b16 %v6238
        %v6280 = vunpack.c.l.b16 %v6239
        %v6281 = vunpack.c.h.b16 %v6239
        %v6282 = vunpack.c.l.b16 %v6240
        %v6283 = vunpack.c.h.b16 %v6240
        %v6284 = vunpack.c.l.b16 %v6241
        %v6285 = vunpack.c.h.b16 %v6241
        %v6286 = vunpack.c.l.b16 %v6242
        %v6287 = vunpack.c.h.b16 %v6242
        %v6288 = vunpack.c.l.b16 %v6243
        %v6289 = vunpack.c.h.b16 %v6243
        %v6290 = vunpack.c.l.b16 %v6244
        %v6291 = vunpack.c.h.b16 %v6244
        %v6292 = vunpack.c.l.b16 %v6245
        %v6293 = vunpack.c.h.b16 %v6245
        %v6294 = vunpack.c.l.b16 %v6246
        %v6295 = vunpack.c.h.b16 %v6246
        %v6296 = vunpack.c.l.b16 %v6247
        %v6297 = vunpack.c.h.b16 %v6247
        %v6298 = vunpack.c.l.b16 %v6248
        %v6299 = vunpack.c.h.b16 %v6248
        %v6300 = vunpack.c.l.b16 %v6249
        %v6301 = vunpack.c.h.b16 %v6249
        %v6302 = vunpack.c.l.b16 %v6250
        %v6303 = vunpack.c.h.b16 %v6250
        %v6304 = vunpack.c.l.b16 %v6251
        %v6305 = vunpack.c.h.b16 %v6251
        %v6306 = vunpack.c.l.b16 %v6252
        %v6307 = vunpack.c.h.b16 %v6252
        %v6308 = vunpack.c.l.b16 %v6253
        %v6309 = vunpack.c.h.b16 %v6253
        %v6310 = vpack.c.b16 %v6280, %v6278
        %v6311 = vpack.c.b16 %v6281, %v6279
        %v6312 = vpack.c.b16 %v6284, %v6282
        %v6313 = vpack.c.b16 %v6285, %v6283
        %v6314 = vpack.c.b16 %v6288, %v6286
        %v6315 = vpack.c.b16 %v6289, %v6287
        %v6316 = vpack.c.b16 %v6292, %v6290
        %v6317 = vpack.c.b16 %v6293, %v6291
        %v6318 = vpack.c.b16 %v6296, %v6294
        %v6319 = vpack.c.b16 %v6297, %v6295
        %v6320 = vpack.c.b16 %v6300, %v6298
        %v6321 = vpack.c.b16 %v6301, %v6299
        %v6322 = vpack.c.b16 %v6304, %v6302
        %v6323 = vpack.c.b16 %v6305, %v6303
        %v6324 = vpack.c.b16 %v6308, %v6306
        %v6325 = vpack.c.b16 %v6309, %v6307
        %6342 = vmatpush.bf16.msra.mxu0 %v6324
        %6343 = vmatpush.bf16.msra.mxu0 %v6322
        %6344 = vmatpush.bf16.msra.mxu0 %v6320
        %6345 = vmatpush.bf16.msra.mxu0 %v6318
        %6346 = vmatpush.bf16.msra.mxu0 %v6316
        %6347 = vmatpush.bf16.msra.mxu0 %v6314
        %6348 = vmatpush.bf16.msra.mxu0 %v6312
        %6349 = vmatpush.bf16.msra.mxu0 %v6310
        %6350 = vmatmul.bf16.gmra.mxu0 %v6255
        %v6351 = vpop.f32.mrf.mxu0
        %v6352 = vadd.f32 %v6258, %v6351
        %v6353 = vpop.f32.mrf.mxu0
        %v6354 = vadd.f32 %v6258, %v6353
        %6355 = vmatmul.bf16.gmra.mxu0 %v6256
        %v6356 = vpop.f32.mrf.mxu0
        %v6357 = vadd.f32 %v6258, %v6356
        %v6358 = vpop.f32.mrf.mxu0
        %v6359 = vadd.f32 %v6258, %v6358
        %6360 = vdwg.mxu0
        %6361 = vmatpush.bf16.msra.mxu0 %v6325
        %6362 = vmatpush.bf16.msra.mxu0 %v6323
        %6363 = vmatpush.bf16.msra.mxu0 %v6321
        %6364 = vmatpush.bf16.msra.mxu0 %v6319
        %6365 = vmatpush.bf16.msra.mxu0 %v6317
        %6366 = vmatpush.bf16.msra.mxu0 %v6315
        %6367 = vmatpush.bf16.msra.mxu0 %v6313
        %6368 = vmatpush.bf16.msra.mxu0 %v6311
        %6369 = vmatmul.bf16.gmra.mxu0 %v6255
        %v6370 = vpop.f32.mrf.mxu0
        %v6371 = vadd.f32 %v6259, %v6370
        %v6372 = vpop.f32.mrf.mxu0
        %v6373 = vadd.f32 %v6259, %v6372
        %6374 = vmatmul.bf16.gmra.mxu0 %v6256
        %v6375 = vpop.f32.mrf.mxu0
        %v6376 = vadd.f32 %v6259, %v6375
        %v6377 = vpop.f32.mrf.mxu0
        %v6378 = vadd.f32 %v6259, %v6377
        %6379 = vdwg.mxu0
        %v6380 = vmax.f32 %v6352, 0.0
        %v6381 = vmax.f32 %v6371, 0.0
        %v6382 = vmax.f32 %v6354, 0.0
        %v6383 = vmax.f32 %v6373, 0.0
        %v6384 = vmax.f32 %v6357, 0.0
        %v6385 = vmax.f32 %v6376, 0.0
        %v6386 = vmax.f32 %v6359, 0.0
        %v6387 = vmax.f32 %v6378, 0.0
        %v6388 = vld [vmem:[#allocation29] sm:$0xf]
        %v6389 = vld [vmem:[#allocation29 + $0x4] sm:$0xf]
        %v6390 = vld [vmem:[#allocation29 + $0x8] sm:$0xf]
        %v6391 = vld [vmem:[#allocation29 + $0xc] sm:$0xf]
        %v6392 = vld [vmem:[#allocation29 + $0x10] sm:$0xf]
        %v6393 = vld [vmem:[#allocation29 + $0x14] sm:$0xf]
        %v6394 = vld [vmem:[#allocation29 + $0x18] sm:$0xf]
        %v6395 = vld [vmem:[#allocation29 + $0x1c] sm:$0xf]
        %v6396 = vld [vmem:[#allocation29 + $0x20] sm:$0xf]
        %v6397 = vld [vmem:[#allocation29 + $0x24] sm:$0xf]
        %v6398 = vld [vmem:[#allocation29 + $0x28] sm:$0xf]
        %v6399 = vld [vmem:[#allocation29 + $0x2c] sm:$0xf]
        %v6400 = vld [vmem:[#allocation29 + $0x30] sm:$0xf]
        %v6401 = vld [vmem:[#allocation29 + $0x34] sm:$0xf]
        %v6402 = vld [vmem:[#allocation29 + $0x38] sm:$0xf]
        %v6403 = vld [vmem:[#allocation29 + $0x3c] sm:$0xf]
        %v6404 = vld [vmem:[#allocation29 + $0x40] sm:$0xf]
        %v6405 = vld [vmem:[#allocation29 + $0x44] sm:$0xf]
        %v6406 = vld [vmem:[#allocation29 + $0x48] sm:$0xf]
        %v6407 = vld [vmem:[#allocation29 + $0x4c] sm:$0xf]
        %v6408 = vld [vmem:[#allocation29 + $0x50] sm:$0xf]
        %v6409 = vld [vmem:[#allocation29 + $0x54] sm:$0xf]
        %v6410 = vld [vmem:[#allocation29 + $0x58] sm:$0xf]
        %v6411 = vld [vmem:[#allocation29 + $0x5c] sm:$0xf]
        %v6412 = vld [vmem:[#allocation29 + $0x60] sm:$0xf]
        %v6413 = vld [vmem:[#allocation29 + $0x64] sm:$0xf]
        %v6414 = vld [vmem:[#allocation29 + $0x68] sm:$0xf]
        %v6415 = vld [vmem:[#allocation29 + $0x6c] sm:$0xf]
        %v6416 = vld [vmem:[#allocation29 + $0x70] sm:$0xf]
        %v6417 = vld [vmem:[#allocation29 + $0x74] sm:$0xf]
        %v6418 = vld [vmem:[#allocation29 + $0x78] sm:$0xf]
        %v6419 = vld [vmem:[#allocation29 + $0x7c] sm:$0xf]
        %v6420 = vld [vmem:[%s57] sm:$0x1]
        %v6421 = vpack.c.bf16 %v6382, %v6380
        %v6422 = vpack.c.bf16 %v6383, %v6381
        %v6423 = vpack.c.bf16 %v6386, %v6384
        %v6424 = vpack.c.bf16 %v6387, %v6385
        %v6426 = vperm.slane %v6420, 0
        %v6460 = vunpack.c.l.b16 %v6388
        %v6461 = vunpack.c.l.b16 %v6389
        %v6462 = vunpack.c.l.b16 %v6390
        %v6463 = vunpack.c.l.b16 %v6391
        %v6464 = vunpack.c.l.b16 %v6392
        %v6465 = vunpack.c.l.b16 %v6393
        %v6466 = vunpack.c.l.b16 %v6394
        %v6467 = vunpack.c.l.b16 %v6395
        %v6468 = vunpack.c.l.b16 %v6396
        %v6469 = vunpack.c.l.b16 %v6397
        %v6470 = vunpack.c.l.b16 %v6398
        %v6471 = vunpack.c.l.b16 %v6399
        %v6472 = vunpack.c.l.b16 %v6400
        %v6473 = vunpack.c.l.b16 %v6401
        %v6474 = vunpack.c.l.b16 %v6402
        %v6475 = vunpack.c.l.b16 %v6403
        %v6476 = vunpack.c.l.b16 %v6404
        %v6477 = vunpack.c.l.b16 %v6405
        %v6478 = vunpack.c.l.b16 %v6406
        %v6479 = vunpack.c.l.b16 %v6407
        %v6480 = vunpack.c.l.b16 %v6408
        %v6481 = vunpack.c.l.b16 %v6409
        %v6482 = vunpack.c.l.b16 %v6410
        %v6483 = vunpack.c.l.b16 %v6411
        %v6484 = vunpack.c.l.b16 %v6412
        %v6485 = vunpack.c.l.b16 %v6413
        %v6486 = vunpack.c.l.b16 %v6414
        %v6487 = vunpack.c.l.b16 %v6415
        %v6488 = vunpack.c.l.b16 %v6416
        %v6489 = vunpack.c.l.b16 %v6417
        %v6490 = vunpack.c.l.b16 %v6418
        %v6491 = vunpack.c.l.b16 %v6419
        %v6492 = vpack.c.b16 %v6461, %v6460
        %v6493 = vpack.c.b16 %v6463, %v6462
        %v6494 = vpack.c.b16 %v6465, %v6464
        %v6495 = vpack.c.b16 %v6467, %v6466
        %v6496 = vpack.c.b16 %v6469, %v6468
        %v6497 = vpack.c.b16 %v6471, %v6470
        %v6498 = vpack.c.b16 %v6473, %v6472
        %v6499 = vpack.c.b16 %v6475, %v6474
        %v6500 = vpack.c.b16 %v6477, %v6476
        %v6501 = vpack.c.b16 %v6479, %v6478
        %v6502 = vpack.c.b16 %v6481, %v6480
        %v6503 = vpack.c.b16 %v6483, %v6482
        %v6504 = vpack.c.b16 %v6485, %v6484
        %v6505 = vpack.c.b16 %v6487, %v6486
        %v6506 = vpack.c.b16 %v6489, %v6488
        %v6507 = vpack.c.b16 %v6491, %v6490
        %6524 = vmatpush.bf16.msra.mxu0 %v6499
        %6525 = vmatpush.bf16.msra.mxu0 %v6498
        %6526 = vmatpush.bf16.msra.mxu0 %v6497
        %6527 = vmatpush.bf16.msra.mxu0 %v6496
        %6528 = vmatpush.bf16.msra.mxu0 %v6495
        %6529 = vmatpush.bf16.msra.mxu0 %v6494
        %6530 = vmatpush.bf16.msra.mxu0 %v6493
        %6531 = vmatpush.bf16.msra.mxu0 %v6492
        %6532 = vmatmul.bf16.gmra.mxu0 %v6421
        %v6533 = vpop.f32.mrf.mxu0
        %v6534 = vadd.f32 %v6426, %v6533
        %v6535 = vpop.f32.mrf.mxu0
        %v6536 = vadd.f32 %v6426, %v6535
        %6537 = vmatmul.bf16.gmra.mxu0 %v6423
        %v6538 = vpop.f32.mrf.mxu0
        %v6539 = vadd.f32 %v6426, %v6538
        %v6540 = vpop.f32.mrf.mxu0
        %v6541 = vadd.f32 %v6426, %v6540
        %6542 = vdwg.mxu0
        %6543 = vmatpush.bf16.msra.mxu0 %v6507
        %6544 = vmatpush.bf16.msra.mxu0 %v6506
        %6545 = vmatpush.bf16.msra.mxu0 %v6505
        %6546 = vmatpush.bf16.msra.mxu0 %v6504
        %6547 = vmatpush.bf16.msra.mxu0 %v6503
        %6548 = vmatpush.bf16.msra.mxu0 %v6502
        %6549 = vmatpush.bf16.msra.mxu0 %v6501
        %6550 = vmatpush.bf16.msra.mxu0 %v6500
        %6551 = vmatmul.bf16.gmra.mxu0 %v6422
        %v6552 = vpop.f32.mrf.mxu0
        %v6553 = vadd.f32 %v6534, %v6552
        %v6554 = vpop.f32.mrf.mxu0
        %v6555 = vadd.f32 %v6536, %v6554
        %6556 = vmatmul.bf16.gmra.mxu0 %v6424
        %v6557 = vpop.f32.mrf.mxu0
        %v6558 = vadd.f32 %v6539, %v6557
        %v6559 = vpop.f32.mrf.mxu0
        %v6560 = vadd.f32 %v6541, %v6559
        %6561 = vdwg.mxu0
        %v6562 = vadd.f32 %v6234, %v6553
        %v6563 = vadd.f32 %v6235, %v6555
        %v6564 = vadd.f32 %v6236, %v6558
        %v6565 = vadd.f32 %v6237, %v6560
        %6566 = vadd.xlane.f32.xlu0 %v6562
        %v6567 = vpop.xlane.xlu0 %6566
        %6568 = vadd.xlane.f32.xlu0 %v6563
        %v6569 = vpop.xlane.xlu0 %6568
        %6570 = vadd.xlane.f32.xlu0 %v6564
        %v6571 = vpop.xlane.xlu0 %6570
        %6572 = vadd.xlane.f32.xlu0 %v6565
        %v6573 = vpop.xlane.xlu0 %6572
        %v6574 = vmul.f32 %v6567, %v4274
        %v6575 = vmul.f32 %v6569, %v4274
        %v6576 = vmul.f32 %v6571, %v4274
        %v6577 = vmul.f32 %v6573, %v4274
        %v6578 = vsub.f32 %v6562, %v6574
        %v6579 = vsub.f32 %v6563, %v6575
        %v6580 = vsub.f32 %v6564, %v6576
        %v6581 = vsub.f32 %v6565, %v6577
        %v6582 = vmul.f32 %v6578, %v6578
        %v6583 = vmul.f32 %v6579, %v6579
        %v6584 = vmul.f32 %v6580, %v6580
        %v6585 = vmul.f32 %v6581, %v6581
        %6586 = vadd.xlane.f32.xlu0 %v6582
        %v6587 = vpop.xlane.xlu0 %6586
        %6588 = vadd.xlane.f32.xlu0 %v6583
        %v6589 = vpop.xlane.xlu0 %6588
        %6590 = vadd.xlane.f32.xlu0 %v6584
        %v6591 = vpop.xlane.xlu0 %6590
        %6592 = vadd.xlane.f32.xlu0 %v6585
        %v6593 = vpop.xlane.xlu0 %6592
        %v6594 = vmul.f32 %v6587, %v4274
        %v6595 = vmul.f32 %v6589, %v4274
        %v6596 = vmul.f32 %v6591, %v4274
        %v6597 = vmul.f32 %v6593, %v4274
        %v6598 = vadd.f32 %v6594, 1e-05
        %v6599 = vadd.f32 %v6595, 1e-05
        %v6600 = vadd.f32 %v6596, 1e-05
        %v6601 = vadd.f32 %v6597, 1e-05
        %v6602 = vrsqrt.pop %v6598
        %v6603 = vmul.f32 %v6602, %v6598
        %v6604 = vmul.f32 %v6603, %v6602
        %v6605 = vmul.f32 0.5, %v6604
        %v6606 = vsub.f32 1.5, %v6605
        %v6607 = vmul.f32 %v6602, %v6606
        %vm6608 = vweird.f32 %v6598
        %vm6609 = vweird.f32 %v6602
        %vm6610 = vmor %vm6608, %vm6609
        %v6611 = vsel %vm6610, %v6602, %v6607
        %v6612 = vrsqrt.pop %v6599
        %v6613 = vmul.f32 %v6612, %v6599
        %v6614 = vmul.f32 %v6613, %v6612
        %v6615 = vmul.f32 0.5, %v6614
        %v6616 = vsub.f32 1.5, %v6615
        %v6617 = vmul.f32 %v6612, %v6616
        %vm6618 = vweird.f32 %v6599
        %vm6619 = vweird.f32 %v6612
        %vm6620 = vmor %vm6618, %vm6619
        %v6621 = vsel %vm6620, %v6612, %v6617
        %v6622 = vrsqrt.pop %v6600
        %v6623 = vmul.f32 %v6622, %v6600
        %v6624 = vmul.f32 %v6623, %v6622
        %v6625 = vmul.f32 0.5, %v6624
        %v6626 = vsub.f32 1.5, %v6625
        %v6627 = vmul.f32 %v6622, %v6626
        %vm6628 = vweird.f32 %v6600
        %vm6629 = vweird.f32 %v6622
        %vm6630 = vmor %vm6628, %vm6629
        %v6631 = vsel %vm6630, %v6622, %v6627
        %v6632 = vrsqrt.pop %v6601
        %v6633 = vmul.f32 %v6632, %v6601
        %v6634 = vmul.f32 %v6633, %v6632
        %v6635 = vmul.f32 0.5, %v6634
        %v6636 = vsub.f32 1.5, %v6635
        %v6637 = vmul.f32 %v6632, %v6636
        %vm6638 = vweird.f32 %v6601
        %vm6639 = vweird.f32 %v6632
        %vm6640 = vmor %vm6638, %vm6639
        %v6641 = vsel %vm6640, %v6632, %v6637
        %v6642 = vmul.f32 %v6578, %v6611
        %v6643 = vmul.f32 %v6579, %v6621
        %v6644 = vmul.f32 %v6580, %v6631
        %v6645 = vmul.f32 %v6581, %v6641
        %v6646 = vperm.slane %v3201, 2
        %v6647 = vmul.f32 %v6642, %v6646
        %v6648 = vmul.f32 %v6643, %v6646
        %v6649 = vmul.f32 %v6644, %v6646
        %v6650 = vmul.f32 %v6645, %v6646
        %v6651 = vperm.slane %v3202, 2
        %v6652 = vadd.f32 %v6647, %v6651
        %v6653 = vadd.f32 %v6648, %v6651
        %v6654 = vadd.f32 %v6649, %v6651
        %v6655 = vadd.f32 %v6650, %v6651
        %s6656 = scalar_lea.vmem %s59, 4
        %v6657 = vld [vmem:[%s6656] sm:$0x7]
        %s6658 = scalar_lea.vmem %s61, 4
        %v6659 = vld [vmem:[%s6658] sm:$0x7]
        %s6660 = scalar_lea.vmem %s35, 192
        %v6661 = vld [vmem:[%s6660] sm:$0xff]
        %v6662 = vld [vmem:[%s6660 + $0x8] sm:$0xf]
        %v6663 = vld [vmem:[%s6660 + $0xc] sm:$0xff]
        %v6664 = vld [vmem:[%s6660 + $0x14] sm:$0xf]
        %v6665 = vld [vmem:[%s6660 + $0x18] sm:$0xff]
        %v6666 = vld [vmem:[%s6660 + $0x20] sm:$0xf]
        %v6667 = vld [vmem:[%s6660 + $0x24] sm:$0xff]
        %v6668 = vld [vmem:[%s6660 + $0x2c] sm:$0xf]
        %v6669 = vld [vmem:[%s6660 + $0x30] sm:$0xff]
        %v6670 = vld [vmem:[%s6660 + $0x38] sm:$0xf]
        %v6671 = vld [vmem:[%s6660 + $0x3c] sm:$0xff]
        %v6672 = vld [vmem:[%s6660 + $0x44] sm:$0xf]
        %v6673 = vld [vmem:[%s6660 + $0x48] sm:$0xff]
        %v6674 = vld [vmem:[%s6660 + $0x50] sm:$0xf]
        %v6675 = vld [vmem:[%s6660 + $0x54] sm:$0xff]
        %v6676 = vld [vmem:[%s6660 + $0x5c] sm:$0xf]
        %v6677 = vld [vmem:[%s6660 + $0x60] sm:$0xff]
        %v6678 = vld [vmem:[%s6660 + $0x68] sm:$0xf]
        %v6679 = vld [vmem:[%s6660 + $0x6c] sm:$0xff]
        %v6680 = vld [vmem:[%s6660 + $0x74] sm:$0xf]
        %v6681 = vld [vmem:[%s6660 + $0x78] sm:$0xff]
        %v6682 = vld [vmem:[%s6660 + $0x80] sm:$0xf]
        %v6683 = vld [vmem:[%s6660 + $0x84] sm:$0xff]
        %v6684 = vld [vmem:[%s6660 + $0x8c] sm:$0xf]
        %v6685 = vld [vmem:[%s6660 + $0x90] sm:$0xff]
        %v6686 = vld [vmem:[%s6660 + $0x98] sm:$0xf]
        %v6687 = vld [vmem:[%s6660 + $0x9c] sm:$0xff]
        %v6688 = vld [vmem:[%s6660 + $0xa4] sm:$0xf]
        %v6689 = vld [vmem:[%s6660 + $0xa8] sm:$0xff]
        %v6690 = vld [vmem:[%s6660 + $0xb0] sm:$0xf]
        %v6691 = vld [vmem:[%s6660 + $0xb4] sm:$0xff]
        %v6692 = vld [vmem:[%s6660 + $0xbc] sm:$0xf]
        %s6693 = scalar_lea.vmem [#allocation20], 96
        %v6694 = vld [vmem:[%s6693] sm:$0xff]
        %v6695 = vld [vmem:[%s6693 + $0x8] sm:$0xff]
        %v6696 = vld [vmem:[%s6693 + $0x10] sm:$0xff]
        %v6697 = vld [vmem:[%s6693 + $0x18] sm:$0xff]
        %v6698 = vld [vmem:[%s6693 + $0x20] sm:$0xff]
        %v6699 = vld [vmem:[%s6693 + $0x28] sm:$0xff]
        %v6700 = vld [vmem:[%s6693 + $0x30] sm:$0xff]
        %v6701 = vld [vmem:[%s6693 + $0x38] sm:$0xff]
        %v6702 = vld [vmem:[%s6693 + $0x40] sm:$0xff]
        %v6703 = vld [vmem:[%s6693 + $0x48] sm:$0xff]
        %v6704 = vld [vmem:[%s6693 + $0x50] sm:$0xff]
        %v6705 = vld [vmem:[%s6693 + $0x58] sm:$0xff]
        %v6706 = vpack.c.bf16 %v6653, %v6652
        %v6707 = vpack.c.bf16 %v6655, %v6654
        %v6740 = vunpack.c.l.b16 %v6661
        %v6741 = vunpack.c.h.b16 %v6661
        %v6742 = vunpack.c.l.b16 %v6662
        %v6743 = vunpack.c.l.b16 %v6663
        %v6744 = vunpack.c.h.b16 %v6663
        %v6745 = vunpack.c.l.b16 %v6664
        %v6746 = vunpack.c.l.b16 %v6665
        %v6747 = vunpack.c.h.b16 %v6665
        %v6748 = vunpack.c.l.b16 %v6666
        %v6749 = vunpack.c.l.b16 %v6667
        %v6750 = vunpack.c.h.b16 %v6667
        %v6751 = vunpack.c.l.b16 %v6668
        %v6752 = vunpack.c.l.b16 %v6669
        %v6753 = vunpack.c.h.b16 %v6669
        %v6754 = vunpack.c.l.b16 %v6670
        %v6755 = vunpack.c.l.b16 %v6671
        %v6756 = vunpack.c.h.b16 %v6671
        %v6757 = vunpack.c.l.b16 %v6672
        %v6758 = vunpack.c.l.b16 %v6673
        %v6759 = vunpack.c.h.b16 %v6673
        %v6760 = vunpack.c.l.b16 %v6674
        %v6761 = vunpack.c.l.b16 %v6675
        %v6762 = vunpack.c.h.b16 %v6675
        %v6763 = vunpack.c.l.b16 %v6676
        %v6764 = vunpack.c.l.b16 %v6677
        %v6765 = vunpack.c.h.b16 %v6677
        %v6766 = vunpack.c.l.b16 %v6678
        %v6767 = vunpack.c.l.b16 %v6679
        %v6768 = vunpack.c.h.b16 %v6679
        %v6769 = vunpack.c.l.b16 %v6680
        %v6770 = vunpack.c.l.b16 %v6681
        %v6771 = vunpack.c.h.b16 %v6681
        %v6772 = vunpack.c.l.b16 %v6682
        %v6773 = vunpack.c.l.b16 %v6683
        %v6774 = vunpack.c.h.b16 %v6683
        %v6775 = vunpack.c.l.b16 %v6684
        %v6776 = vunpack.c.l.b16 %v6685
        %v6777 = vunpack.c.h.b16 %v6685
        %v6778 = vunpack.c.l.b16 %v6686
        %v6779 = vunpack.c.l.b16 %v6687
        %v6780 = vunpack.c.h.b16 %v6687
        %v6781 = vunpack.c.l.b16 %v6688
        %v6782 = vunpack.c.l.b16 %v6689
        %v6783 = vunpack.c.h.b16 %v6689
        %v6784 = vunpack.c.l.b16 %v6690
        %v6785 = vunpack.c.l.b16 %v6691
        %v6786 = vunpack.c.h.b16 %v6691
        %v6787 = vunpack.c.l.b16 %v6692
        %v6788 = vpack.c.b16 %v6743, %v6740
        %v6789 = vpack.c.b16 %v6744, %v6741
        %v6790 = vpack.c.b16 %v6745, %v6742
        %v6791 = vpack.c.b16 %v6749, %v6746
        %v6792 = vpack.c.b16 %v6750, %v6747
        %v6793 = vpack.c.b16 %v6751, %v6748
        %v6794 = vpack.c.b16 %v6755, %v6752
        %v6795 = vpack.c.b16 %v6756, %v6753
        %v6796 = vpack.c.b16 %v6757, %v6754
        %v6797 = vpack.c.b16 %v6761, %v6758
        %v6798 = vpack.c.b16 %v6762, %v6759
        %v6799 = vpack.c.b16 %v6763, %v6760
        %v6800 = vpack.c.b16 %v6767, %v6764
        %v6801 = vpack.c.b16 %v6768, %v6765
        %v6802 = vpack.c.b16 %v6769, %v6766
        %v6803 = vpack.c.b16 %v6773, %v6770
        %v6804 = vpack.c.b16 %v6774, %v6771
        %v6805 = vpack.c.b16 %v6775, %v6772
        %v6806 = vpack.c.b16 %v6779, %v6776
        %v6807 = vpack.c.b16 %v6780, %v6777
        %v6808 = vpack.c.b16 %v6781, %v6778
        %v6809 = vpack.c.b16 %v6785, %v6782
        %v6810 = vpack.c.b16 %v6786, %v6783
        %v6811 = vpack.c.b16 %v6787, %v6784
        %6836 = vmatpush.bf16.msra.mxu0 %v6809
        %6837 = vmatpush.bf16.msra.mxu0 %v6806
        %6838 = vmatpush.bf16.msra.mxu0 %v6803
        %6839 = vmatpush.bf16.msra.mxu0 %v6800
        %6840 = vmatpush.bf16.msra.mxu0 %v6797
        %6841 = vmatpush.bf16.msra.mxu0 %v6794
        %6842 = vmatpush.bf16.msra.mxu0 %v6791
        %6843 = vmatpush.bf16.msra.mxu0 %v6788
        %6844 = vmatmul.bf16.gmra.mxu0 %v6706
        %v6845 = vpop.f32.mrf.mxu0
        %v6846 = vadd.f32 %v6694, %v6845
        %v6847 = vpop.f32.mrf.mxu0
        %v6848 = vadd.f32 %v6697, %v6847
        %6849 = vmatmul.bf16.gmra.mxu0 %v6707
        %v6850 = vpop.f32.mrf.mxu0
        %v6851 = vadd.f32 %v6700, %v6850
        %v6852 = vpop.f32.mrf.mxu0
        %v6853 = vadd.f32 %v6703, %v6852
        %6854 = vdwg.mxu0
        %6855 = vmatpush.bf16.msra.mxu0 %v6810
        %6856 = vmatpush.bf16.msra.mxu0 %v6807
        %6857 = vmatpush.bf16.msra.mxu0 %v6804
        %6858 = vmatpush.bf16.msra.mxu0 %v6801
        %6859 = vmatpush.bf16.msra.mxu0 %v6798
        %6860 = vmatpush.bf16.msra.mxu0 %v6795
        %6861 = vmatpush.bf16.msra.mxu0 %v6792
        %6862 = vmatpush.bf16.msra.mxu0 %v6789
        %6863 = vmatmul.bf16.gmra.mxu0 %v6706
        %v6864 = vpop.f32.mrf.mxu0
        %v6865 = vadd.f32 %v6695, %v6864
        %v6866 = vpop.f32.mrf.mxu0
        %v6867 = vadd.f32 %v6698, %v6866
        %6868 = vmatmul.bf16.gmra.mxu0 %v6707
        %v6869 = vpop.f32.mrf.mxu0
        %v6870 = vadd.f32 %v6701, %v6869
        %v6871 = vpop.f32.mrf.mxu0
        %v6872 = vadd.f32 %v6704, %v6871
        %6873 = vdwg.mxu0
        %6874 = vmatpush.bf16.msra.mxu0 %v6811
        %6875 = vmatpush.bf16.msra.mxu0 %v6808
        %6876 = vmatpush.bf16.msra.mxu0 %v6805
        %6877 = vmatpush.bf16.msra.mxu0 %v6802
        %6878 = vmatpush.bf16.msra.mxu0 %v6799
        %6879 = vmatpush.bf16.msra.mxu0 %v6796
        %6880 = vmatpush.bf16.msra.mxu0 %v6793
        %6881 = vmatpush.bf16.msra.mxu0 %v6790
        %6882 = vmatmul.bf16.gmra.mxu0 %v6706
        %v6883 = vpop.f32.mrf.mxu0
        %v6884 = vadd.f32 %v6696, %v6883
        %v6885 = vpop.f32.mrf.mxu0
        %v6886 = vadd.f32 %v6699, %v6885
        %6887 = vmatmul.bf16.gmra.mxu0 %v6707
        %v6888 = vpop.f32.mrf.mxu0
        %v6889 = vadd.f32 %v6702, %v6888
        %v6890 = vpop.f32.mrf.mxu0
        %v6891 = vadd.f32 %v6705, %v6890
        %6892 = vdwg.mxu0
        %v6893 = vpack.c.bf16 %v6867, %v6865
        %v6894 = vpack.c.bf16 %v6872, %v6870
        %v6895 = vpack.c.bf16 %v6886, %v6884
        %v6896 = vpack.c.bf16 %v6891, %v6889
        %v6897 = vmul.f32 %v6846, %v3446
        %v6898 = vmul.f32 %v6848, %v3446
        %v6899 = vmul.f32 %v6851, %v3446
        %v6900 = vmul.f32 %v6853, %v3446
        %v6901 = vmul.f32 %v6846, %v3447
        %v6902 = vmul.f32 %v6848, %v3447
        %v6903 = vmul.f32 %v6851, %v3447
        %v6904 = vmul.f32 %v6853, %v3447
        %v6905 = vmul.f32 %v6846, %v3448
        %v6906 = vmul.f32 %v6848, %v3448
        %v6907 = vmul.f32 %v6851, %v3448
        %v6908 = vmul.f32 %v6853, %v3448
        %v6909 = vmul.f32 %v6846, %v3449
        %v6910 = vmul.f32 %v6848, %v3449
        %v6911 = vmul.f32 %v6851, %v3449
        %v6912 = vmul.f32 %v6853, %v3449
        %v6913 = vmul.f32 %v6846, %v3450
        %v6914 = vmul.f32 %v6848, %v3450
        %v6915 = vmul.f32 %v6851, %v3450
        %v6916 = vmul.f32 %v6853, %v3450
        %v6917 = vmul.f32 %v6846, %v3451
        %v6918 = vmul.f32 %v6848, %v3451
        %v6919 = vmul.f32 %v6851, %v3451
        %v6920 = vmul.f32 %v6853, %v3451
        %v6921 = vmul.f32 %v6846, %v3452
        %v6922 = vmul.f32 %v6848, %v3452
        %v6923 = vmul.f32 %v6851, %v3452
        %v6924 = vmul.f32 %v6853, %v3452
        %v6925 = vmul.f32 %v6846, %v3453
        %v6926 = vmul.f32 %v6848, %v3453
        %v6927 = vmul.f32 %v6851, %v3453
        %v6928 = vmul.f32 %v6853, %v3453
        %v6929 = vpack.c.bf16 %v6898, %v6897
        %v6930 = vpack.c.bf16 %v6900, %v6899
        %v6931 = vpack.c.bf16 %v6902, %v6901
        %v6932 = vpack.c.bf16 %v6904, %v6903
        %v6933 = vpack.c.bf16 %v6906, %v6905
        %v6934 = vpack.c.bf16 %v6908, %v6907
        %v6935 = vpack.c.bf16 %v6910, %v6909
        %v6936 = vpack.c.bf16 %v6912, %v6911
        %v6937 = vpack.c.bf16 %v6914, %v6913
        %v6938 = vpack.c.bf16 %v6916, %v6915
        %v6939 = vpack.c.bf16 %v6918, %v6917
        %v6940 = vpack.c.bf16 %v6920, %v6919
        %v6941 = vpack.c.bf16 %v6922, %v6921
        %v6942 = vpack.c.bf16 %v6924, %v6923
        %v6943 = vpack.c.bf16 %v6926, %v6925
        %v6944 = vpack.c.bf16 %v6928, %v6927
        %6945 = vmatpush.bf16.xpose.msra.mxu0 0
        %6946 = vmatpush.bf16.xpose.msra.mxu0 0
        %6947 = vmatpush.bf16.xpose.msra.mxu0 0
        %6948 = vmatpush.bf16.xpose.msra.mxu0 0
        %6949 = vmatpush.bf16.xpose.msra.mxu0 0
        %6950 = vmatpush.bf16.xpose.msra.mxu0 0
        %6951 = vmatpush.bf16.xpose.msra.mxu0 %v6894
        %6952 = vmatpush.bf16.xpose.msra.mxu0 %v6893
        %6953 = vmatmul.bf16.gmra.mxu0 %v6929
        %v6954 = vpop.f32.mrf.mxu0
        %v6955 = vadd.f32 %v3511, %v6954
        %v6956 = vpop.f32.mrf.mxu0
        %v6957 = vadd.f32 %v3511, %v6956
        %6958 = vmatmul.bf16.gmra.mxu0 %v6930
        %v6959 = vpop.f32.mrf.mxu0
        %v6960 = vadd.f32 %v3511, %v6959
        %v6961 = vpop.f32.mrf.mxu0
        %v6962 = vadd.f32 %v3511, %v6961
        %6963 = vmatmul.bf16.gmra.mxu0 %v6931
        %v6964 = vpop.f32.mrf.mxu0
        %v6965 = vadd.f32 %v3511, %v6964
        %v6966 = vpop.f32.mrf.mxu0
        %v6967 = vadd.f32 %v3511, %v6966
        %6968 = vmatmul.bf16.gmra.mxu0 %v6932
        %v6969 = vpop.f32.mrf.mxu0
        %v6970 = vadd.f32 %v3511, %v6969
        %v6971 = vpop.f32.mrf.mxu0
        %v6972 = vadd.f32 %v3511, %v6971
        %6973 = vmatmul.bf16.gmra.mxu0 %v6933
        %v6974 = vpop.f32.mrf.mxu0
        %v6975 = vadd.f32 %v3511, %v6974
        %v6976 = vpop.f32.mrf.mxu0
        %v6977 = vadd.f32 %v3511, %v6976
        %6978 = vmatmul.bf16.gmra.mxu0 %v6934
        %v6979 = vpop.f32.mrf.mxu0
        %v6980 = vadd.f32 %v3511, %v6979
        %v6981 = vpop.f32.mrf.mxu0
        %v6982 = vadd.f32 %v3511, %v6981
        %6983 = vmatmul.bf16.gmra.mxu0 %v6935
        %v6984 = vpop.f32.mrf.mxu0
        %v6985 = vadd.f32 %v3511, %v6984
        %v6986 = vpop.f32.mrf.mxu0
        %v6987 = vadd.f32 %v3511, %v6986
        %6988 = vmatmul.bf16.gmra.mxu0 %v6936
        %v6989 = vpop.f32.mrf.mxu0
        %v6990 = vadd.f32 %v3511, %v6989
        %v6991 = vpop.f32.mrf.mxu0
        %v6992 = vadd.f32 %v3511, %v6991
        %6993 = vmatmul.bf16.gmra.mxu0 %v6937
        %v6994 = vpop.f32.mrf.mxu0
        %v6995 = vadd.f32 %v3511, %v6994
        %v6996 = vpop.f32.mrf.mxu0
        %v6997 = vadd.f32 %v3511, %v6996
        %6998 = vmatmul.bf16.gmra.mxu0 %v6938
        %v6999 = vpop.f32.mrf.mxu0
        %v7000 = vadd.f32 %v3511, %v6999
        %v7001 = vpop.f32.mrf.mxu0
        %v7002 = vadd.f32 %v3511, %v7001
        %7003 = vmatmul.bf16.gmra.mxu0 %v6939
        %v7004 = vpop.f32.mrf.mxu0
        %v7005 = vadd.f32 %v3511, %v7004
        %v7006 = vpop.f32.mrf.mxu0
        %v7007 = vadd.f32 %v3511, %v7006
        %7008 = vmatmul.bf16.gmra.mxu0 %v6940
        %v7009 = vpop.f32.mrf.mxu0
        %v7010 = vadd.f32 %v3511, %v7009
        %v7011 = vpop.f32.mrf.mxu0
        %v7012 = vadd.f32 %v3511, %v7011
        %7013 = vmatmul.bf16.gmra.mxu0 %v6941
        %v7014 = vpop.f32.mrf.mxu0
        %v7015 = vadd.f32 %v3511, %v7014
        %v7016 = vpop.f32.mrf.mxu0
        %v7017 = vadd.f32 %v3511, %v7016
        %7018 = vmatmul.bf16.gmra.mxu0 %v6942
        %v7019 = vpop.f32.mrf.mxu0
        %v7020 = vadd.f32 %v3511, %v7019
        %v7021 = vpop.f32.mrf.mxu0
        %v7022 = vadd.f32 %v3511, %v7021
        %7023 = vmatmul.bf16.gmra.mxu0 %v6943
        %v7024 = vpop.f32.mrf.mxu0
        %v7025 = vadd.f32 %v3511, %v7024
        %v7026 = vpop.f32.mrf.mxu0
        %v7027 = vadd.f32 %v3511, %v7026
        %7028 = vmatmul.bf16.gmra.mxu0 %v6944
        %v7029 = vpop.f32.mrf.mxu0
        %v7030 = vadd.f32 %v3511, %v7029
        %v7031 = vpop.f32.mrf.mxu0
        %v7032 = vadd.f32 %v3511, %v7031
        %7033 = vdwg.mxu0
        %v7034 = vsel %vm1403, %v6955, -inf
        %7035 = vmax.xlane.f32.xlu0 %v7034
        %v7036 = vpop.xlane.xlu0 %7035
        %v7037 = vsel %vm1403, %v6957, -inf
        %7038 = vmax.xlane.f32.xlu0 %v7037
        %v7039 = vpop.xlane.xlu0 %7038
        %v7040 = vsel %vm1403, %v6960, -inf
        %7041 = vmax.xlane.f32.xlu0 %v7040
        %v7042 = vpop.xlane.xlu0 %7041
        %v7043 = vsel %vm1403, %v6962, -inf
        %7044 = vmax.xlane.f32.xlu0 %v7043
        %v7045 = vpop.xlane.xlu0 %7044
        %v7046 = vsel %vm1403, %v6965, -inf
        %7047 = vmax.xlane.f32.xlu0 %v7046
        %v7048 = vpop.xlane.xlu0 %7047
        %v7049 = vsel %vm1403, %v6967, -inf
        %7050 = vmax.xlane.f32.xlu0 %v7049
        %v7051 = vpop.xlane.xlu0 %7050
        %v7052 = vsel %vm1403, %v6970, -inf
        %7053 = vmax.xlane.f32.xlu0 %v7052
        %v7054 = vpop.xlane.xlu0 %7053
        %v7055 = vsel %vm1403, %v6972, -inf
        %7056 = vmax.xlane.f32.xlu0 %v7055
        %v7057 = vpop.xlane.xlu0 %7056
        %v7058 = vsel %vm1403, %v6975, -inf
        %7059 = vmax.xlane.f32.xlu0 %v7058
        %v7060 = vpop.xlane.xlu0 %7059
        %v7061 = vsel %vm1403, %v6977, -inf
        %7062 = vmax.xlane.f32.xlu0 %v7061
        %v7063 = vpop.xlane.xlu0 %7062
        %v7064 = vsel %vm1403, %v6980, -inf
        %7065 = vmax.xlane.f32.xlu0 %v7064
        %v7066 = vpop.xlane.xlu0 %7065
        %v7067 = vsel %vm1403, %v6982, -inf
        %7068 = vmax.xlane.f32.xlu0 %v7067
        %v7069 = vpop.xlane.xlu0 %7068
        %v7070 = vsel %vm1403, %v6985, -inf
        %7071 = vmax.xlane.f32.xlu0 %v7070
        %v7072 = vpop.xlane.xlu0 %7071
        %v7073 = vsel %vm1403, %v6987, -inf
        %7074 = vmax.xlane.f32.xlu0 %v7073
        %v7075 = vpop.xlane.xlu0 %7074
        %v7076 = vsel %vm1403, %v6990, -inf
        %7077 = vmax.xlane.f32.xlu0 %v7076
        %v7078 = vpop.xlane.xlu0 %7077
        %v7079 = vsel %vm1403, %v6992, -inf
        %7080 = vmax.xlane.f32.xlu0 %v7079
        %v7081 = vpop.xlane.xlu0 %7080
        %v7082 = vsel %vm1403, %v6995, -inf
        %7083 = vmax.xlane.f32.xlu0 %v7082
        %v7084 = vpop.xlane.xlu0 %7083
        %v7085 = vsel %vm1403, %v6997, -inf
        %7086 = vmax.xlane.f32.xlu0 %v7085
        %v7087 = vpop.xlane.xlu0 %7086
        %v7088 = vsel %vm1403, %v7000, -inf
        %7089 = vmax.xlane.f32.xlu0 %v7088
        %v7090 = vpop.xlane.xlu0 %7089
        %v7091 = vsel %vm1403, %v7002, -inf
        %7092 = vmax.xlane.f32.xlu0 %v7091
        %v7093 = vpop.xlane.xlu0 %7092
        %v7094 = vsel %vm1403, %v7005, -inf
        %7095 = vmax.xlane.f32.xlu0 %v7094
        %v7096 = vpop.xlane.xlu0 %7095
        %v7097 = vsel %vm1403, %v7007, -inf
        %7098 = vmax.xlane.f32.xlu0 %v7097
        %v7099 = vpop.xlane.xlu0 %7098
        %v7100 = vsel %vm1403, %v7010, -inf
        %7101 = vmax.xlane.f32.xlu0 %v7100
        %v7102 = vpop.xlane.xlu0 %7101
        %v7103 = vsel %vm1403, %v7012, -inf
        %7104 = vmax.xlane.f32.xlu0 %v7103
        %v7105 = vpop.xlane.xlu0 %7104
        %v7106 = vsel %vm1403, %v7015, -inf
        %7107 = vmax.xlane.f32.xlu0 %v7106
        %v7108 = vpop.xlane.xlu0 %7107
        %v7109 = vsel %vm1403, %v7017, -inf
        %7110 = vmax.xlane.f32.xlu0 %v7109
        %v7111 = vpop.xlane.xlu0 %7110
        %v7112 = vsel %vm1403, %v7020, -inf
        %7113 = vmax.xlane.f32.xlu0 %v7112
        %v7114 = vpop.xlane.xlu0 %7113
        %v7115 = vsel %vm1403, %v7022, -inf
        %7116 = vmax.xlane.f32.xlu0 %v7115
        %v7117 = vpop.xlane.xlu0 %7116
        %v7118 = vsel %vm1403, %v7025, -inf
        %7119 = vmax.xlane.f32.xlu0 %v7118
        %v7120 = vpop.xlane.xlu0 %7119
        %v7121 = vsel %vm1403, %v7027, -inf
        %7122 = vmax.xlane.f32.xlu0 %v7121
        %v7123 = vpop.xlane.xlu0 %7122
        %v7124 = vsel %vm1403, %v7030, -inf
        %7125 = vmax.xlane.f32.xlu0 %v7124
        %v7126 = vpop.xlane.xlu0 %7125
        %v7127 = vsel %vm1403, %v7032, -inf
        %7128 = vmax.xlane.f32.xlu0 %v7127
        %v7129 = vpop.xlane.xlu0 %7128
        %v7130 = vsub.f32 %v6955, %v7036
        %v7131 = vsub.f32 %v6957, %v7039
        %v7132 = vsub.f32 %v6960, %v7042
        %v7133 = vsub.f32 %v6962, %v7045
        %v7134 = vsub.f32 %v6965, %v7048
        %v7135 = vsub.f32 %v6967, %v7051
        %v7136 = vsub.f32 %v6970, %v7054
        %v7137 = vsub.f32 %v6972, %v7057
        %v7138 = vsub.f32 %v6975, %v7060
        %v7139 = vsub.f32 %v6977, %v7063
        %v7140 = vsub.f32 %v6980, %v7066
        %v7141 = vsub.f32 %v6982, %v7069
        %v7142 = vsub.f32 %v6985, %v7072
        %v7143 = vsub.f32 %v6987, %v7075
        %v7144 = vsub.f32 %v6990, %v7078
        %v7145 = vsub.f32 %v6992, %v7081
        %v7146 = vsub.f32 %v6995, %v7084
        %v7147 = vsub.f32 %v6997, %v7087
        %v7148 = vsub.f32 %v7000, %v7090
        %v7149 = vsub.f32 %v7002, %v7093
        %v7150 = vsub.f32 %v7005, %v7096
        %v7151 = vsub.f32 %v7007, %v7099
        %v7152 = vsub.f32 %v7010, %v7102
        %v7153 = vsub.f32 %v7012, %v7105
        %v7154 = vsub.f32 %v7015, %v7108
        %v7155 = vsub.f32 %v7017, %v7111
        %v7156 = vsub.f32 %v7020, %v7114
        %v7157 = vsub.f32 %v7022, %v7117
        %v7158 = vsub.f32 %v7025, %v7120
        %v7159 = vsub.f32 %v7027, %v7123
        %v7160 = vsub.f32 %v7030, %v7126
        %v7161 = vsub.f32 %v7032, %v7129
        %v7162 = vmul.f32 %v7130, 1.442695
        %v7163 = vpow.pop %v7162
        %v7164 = vmul.f32 %v7131, 1.442695
        %v7165 = vpow.pop %v7164
        %v7166 = vmul.f32 %v7132, 1.442695
        %v7167 = vpow.pop %v7166
        %v7168 = vmul.f32 %v7133, 1.442695
        %v7169 = vpow.pop %v7168
        %v7170 = vmul.f32 %v7134, 1.442695
        %v7171 = vpow.pop %v7170
        %v7172 = vmul.f32 %v7135, 1.442695
        %v7173 = vpow.pop %v7172
        %v7174 = vmul.f32 %v7136, 1.442695
        %v7175 = vpow.pop %v7174
        %v7176 = vmul.f32 %v7137, 1.442695
        %v7177 = vpow.pop %v7176
        %v7178 = vmul.f32 %v7138, 1.442695
        %v7179 = vpow.pop %v7178
        %v7180 = vmul.f32 %v7139, 1.442695
        %v7181 = vpow.pop %v7180
        %v7182 = vmul.f32 %v7140, 1.442695
        %v7183 = vpow.pop %v7182
        %v7184 = vmul.f32 %v7141, 1.442695
        %v7185 = vpow.pop %v7184
        %v7186 = vmul.f32 %v7142, 1.442695
        %v7187 = vpow.pop %v7186
        %v7188 = vmul.f32 %v7143, 1.442695
        %v7189 = vpow.pop %v7188
        %v7190 = vmul.f32 %v7144, 1.442695
        %v7191 = vpow.pop %v7190
        %v7192 = vmul.f32 %v7145, 1.442695
        %v7193 = vpow.pop %v7192
        %v7194 = vmul.f32 %v7146, 1.442695
        %v7195 = vpow.pop %v7194
        %v7196 = vmul.f32 %v7147, 1.442695
        %v7197 = vpow.pop %v7196
        %v7198 = vmul.f32 %v7148, 1.442695
        %v7199 = vpow.pop %v7198
        %v7200 = vmul.f32 %v7149, 1.442695
        %v7201 = vpow.pop %v7200
        %v7202 = vmul.f32 %v7150, 1.442695
        %v7203 = vpow.pop %v7202
        %v7204 = vmul.f32 %v7151, 1.442695
        %v7205 = vpow.pop %v7204
        %v7206 = vmul.f32 %v7152, 1.442695
        %v7207 = vpow.pop %v7206
        %v7208 = vmul.f32 %v7153, 1.442695
        %v7209 = vpow.pop %v7208
        %v7210 = vmul.f32 %v7154, 1.442695
        %v7211 = vpow.pop %v7210
        %v7212 = vmul.f32 %v7155, 1.442695
        %v7213 = vpow.pop %v7212
        %v7214 = vmul.f32 %v7156, 1.442695
        %v7215 = vpow.pop %v7214
        %v7216 = vmul.f32 %v7157, 1.442695
        %v7217 = vpow.pop %v7216
        %v7218 = vmul.f32 %v7158, 1.442695
        %v7219 = vpow.pop %v7218
        %v7220 = vmul.f32 %v7159, 1.442695
        %v7221 = vpow.pop %v7220
        %v7222 = vmul.f32 %v7160, 1.442695
        %v7223 = vpow.pop %v7222
        %v7224 = vmul.f32 %v7161, 1.442695
        %v7225 = vpow.pop %v7224
        %v7226 = vsel %vm1403, %v7163, 0.0
        %7227 = vadd.xlane.f32.xlu0 %v7226
        %v7228 = vpop.xlane.xlu0 %7227
        %v7229 = vsel %vm1403, %v7165, 0.0
        %7230 = vadd.xlane.f32.xlu0 %v7229
        %v7231 = vpop.xlane.xlu0 %7230
        %v7232 = vsel %vm1403, %v7167, 0.0
        %7233 = vadd.xlane.f32.xlu0 %v7232
        %v7234 = vpop.xlane.xlu0 %7233
        %v7235 = vsel %vm1403, %v7169, 0.0
        %7236 = vadd.xlane.f32.xlu0 %v7235
        %v7237 = vpop.xlane.xlu0 %7236
        %v7238 = vsel %vm1403, %v7171, 0.0
        %7239 = vadd.xlane.f32.xlu0 %v7238
        %v7240 = vpop.xlane.xlu0 %7239
        %v7241 = vsel %vm1403, %v7173, 0.0
        %7242 = vadd.xlane.f32.xlu0 %v7241
        %v7243 = vpop.xlane.xlu0 %7242
        %v7244 = vsel %vm1403, %v7175, 0.0
        %7245 = vadd.xlane.f32.xlu0 %v7244
        %v7246 = vpop.xlane.xlu0 %7245
        %v7247 = vsel %vm1403, %v7177, 0.0
        %7248 = vadd.xlane.f32.xlu0 %v7247
        %v7249 = vpop.xlane.xlu0 %7248
        %v7250 = vsel %vm1403, %v7179, 0.0
        %7251 = vadd.xlane.f32.xlu0 %v7250
        %v7252 = vpop.xlane.xlu0 %7251
        %v7253 = vsel %vm1403, %v7181, 0.0
        %7254 = vadd.xlane.f32.xlu0 %v7253
        %v7255 = vpop.xlane.xlu0 %7254
        %v7256 = vsel %vm1403, %v7183, 0.0
        %7257 = vadd.xlane.f32.xlu0 %v7256
        %v7258 = vpop.xlane.xlu0 %7257
        %v7259 = vsel %vm1403, %v7185, 0.0
        %7260 = vadd.xlane.f32.xlu0 %v7259
        %v7261 = vpop.xlane.xlu0 %7260
        %v7262 = vsel %vm1403, %v7187, 0.0
        %7263 = vadd.xlane.f32.xlu0 %v7262
        %v7264 = vpop.xlane.xlu0 %7263
        %v7265 = vsel %vm1403, %v7189, 0.0
        %7266 = vadd.xlane.f32.xlu0 %v7265
        %v7267 = vpop.xlane.xlu0 %7266
        %v7268 = vsel %vm1403, %v7191, 0.0
        %7269 = vadd.xlane.f32.xlu0 %v7268
        %v7270 = vpop.xlane.xlu0 %7269
        %v7271 = vsel %vm1403, %v7193, 0.0
        %7272 = vadd.xlane.f32.xlu0 %v7271
        %v7273 = vpop.xlane.xlu0 %7272
        %v7274 = vsel %vm1403, %v7195, 0.0
        %7275 = vadd.xlane.f32.xlu0 %v7274
        %v7276 = vpop.xlane.xlu0 %7275
        %v7277 = vsel %vm1403, %v7197, 0.0
        %7278 = vadd.xlane.f32.xlu0 %v7277
        %v7279 = vpop.xlane.xlu0 %7278
        %v7280 = vsel %vm1403, %v7199, 0.0
        %7281 = vadd.xlane.f32.xlu0 %v7280
        %v7282 = vpop.xlane.xlu0 %7281
        %v7283 = vsel %vm1403, %v7201, 0.0
        %7284 = vadd.xlane.f32.xlu0 %v7283
        %v7285 = vpop.xlane.xlu0 %7284
        %v7286 = vsel %vm1403, %v7203, 0.0
        %7287 = vadd.xlane.f32.xlu0 %v7286
        %v7288 = vpop.xlane.xlu0 %7287
        %v7289 = vsel %vm1403, %v7205, 0.0
        %7290 = vadd.xlane.f32.xlu0 %v7289
        %v7291 = vpop.xlane.xlu0 %7290
        %v7292 = vsel %vm1403, %v7207, 0.0
        %7293 = vadd.xlane.f32.xlu0 %v7292
        %v7294 = vpop.xlane.xlu0 %7293
        %v7295 = vsel %vm1403, %v7209, 0.0
        %7296 = vadd.xlane.f32.xlu0 %v7295
        %v7297 = vpop.xlane.xlu0 %7296
        %v7298 = vsel %vm1403, %v7211, 0.0
        %7299 = vadd.xlane.f32.xlu0 %v7298
        %v7300 = vpop.xlane.xlu0 %7299
        %v7301 = vsel %vm1403, %v7213, 0.0
        %7302 = vadd.xlane.f32.xlu0 %v7301
        %v7303 = vpop.xlane.xlu0 %7302
        %v7304 = vsel %vm1403, %v7215, 0.0
        %7305 = vadd.xlane.f32.xlu0 %v7304
        %v7306 = vpop.xlane.xlu0 %7305
        %v7307 = vsel %vm1403, %v7217, 0.0
        %7308 = vadd.xlane.f32.xlu0 %v7307
        %v7309 = vpop.xlane.xlu0 %7308
        %v7310 = vsel %vm1403, %v7219, 0.0
        %7311 = vadd.xlane.f32.xlu0 %v7310
        %v7312 = vpop.xlane.xlu0 %7311
        %v7313 = vsel %vm1403, %v7221, 0.0
        %7314 = vadd.xlane.f32.xlu0 %v7313
        %v7315 = vpop.xlane.xlu0 %7314
        %v7316 = vsel %vm1403, %v7223, 0.0
        %7317 = vadd.xlane.f32.xlu0 %v7316
        %v7318 = vpop.xlane.xlu0 %7317
        %v7319 = vsel %vm1403, %v7225, 0.0
        %7320 = vadd.xlane.f32.xlu0 %v7319
        %v7321 = vpop.xlane.xlu0 %7320
        %v7322 = vrcp.pop %v7228
        %v7323 = vrcp.pop %v7231
        %v7324 = vrcp.pop %v7234
        %v7325 = vrcp.pop %v7237
        %v7326 = vrcp.pop %v7240
        %v7327 = vrcp.pop %v7243
        %v7328 = vrcp.pop %v7246
        %v7329 = vrcp.pop %v7249
        %v7330 = vrcp.pop %v7252
        %v7331 = vrcp.pop %v7255
        %v7332 = vrcp.pop %v7258
        %v7333 = vrcp.pop %v7261
        %v7334 = vrcp.pop %v7264
        %v7335 = vrcp.pop %v7267
        %v7336 = vrcp.pop %v7270
        %v7337 = vrcp.pop %v7273
        %v7338 = vrcp.pop %v7276
        %v7339 = vrcp.pop %v7279
        %v7340 = vrcp.pop %v7282
        %v7341 = vrcp.pop %v7285
        %v7342 = vrcp.pop %v7288
        %v7343 = vrcp.pop %v7291
        %v7344 = vrcp.pop %v7294
        %v7345 = vrcp.pop %v7297
        %v7346 = vrcp.pop %v7300
        %v7347 = vrcp.pop %v7303
        %v7348 = vrcp.pop %v7306
        %v7349 = vrcp.pop %v7309
        %v7350 = vrcp.pop %v7312
        %v7351 = vrcp.pop %v7315
        %v7352 = vrcp.pop %v7318
        %v7353 = vrcp.pop %v7321
        %v7354 = vmul.f32 %v7163, %v7322
        %v7355 = vmul.f32 %v7165, %v7323
        %v7356 = vmul.f32 %v7167, %v7324
        %v7357 = vmul.f32 %v7169, %v7325
        %v7358 = vmul.f32 %v7171, %v7326
        %v7359 = vmul.f32 %v7173, %v7327
        %v7360 = vmul.f32 %v7175, %v7328
        %v7361 = vmul.f32 %v7177, %v7329
        %v7362 = vmul.f32 %v7179, %v7330
        %v7363 = vmul.f32 %v7181, %v7331
        %v7364 = vmul.f32 %v7183, %v7332
        %v7365 = vmul.f32 %v7185, %v7333
        %v7366 = vmul.f32 %v7187, %v7334
        %v7367 = vmul.f32 %v7189, %v7335
        %v7368 = vmul.f32 %v7191, %v7336
        %v7369 = vmul.f32 %v7193, %v7337
        %v7370 = vmul.f32 %v7195, %v7338
        %v7371 = vmul.f32 %v7197, %v7339
        %v7372 = vmul.f32 %v7199, %v7340
        %v7373 = vmul.f32 %v7201, %v7341
        %v7374 = vmul.f32 %v7203, %v7342
        %v7375 = vmul.f32 %v7205, %v7343
        %v7376 = vmul.f32 %v7207, %v7344
        %v7377 = vmul.f32 %v7209, %v7345
        %v7378 = vmul.f32 %v7211, %v7346
        %v7379 = vmul.f32 %v7213, %v7347
        %v7380 = vmul.f32 %v7215, %v7348
        %v7381 = vmul.f32 %v7217, %v7349
        %v7382 = vmul.f32 %v7219, %v7350
        %v7383 = vmul.f32 %v7221, %v7351
        %v7384 = vmul.f32 %v7223, %v7352
        %v7385 = vmul.f32 %v7225, %v7353
        %v7386 = vpack.c.bf16 %v7355, %v7354
        %v7387 = vpack.c.bf16 %v7357, %v7356
        %v7388 = vpack.c.bf16 %v7359, %v7358
        %v7389 = vpack.c.bf16 %v7361, %v7360
        %v7390 = vpack.c.bf16 %v7363, %v7362
        %v7391 = vpack.c.bf16 %v7365, %v7364
        %v7392 = vpack.c.bf16 %v7367, %v7366
        %v7393 = vpack.c.bf16 %v7369, %v7368
        %v7394 = vpack.c.bf16 %v7371, %v7370
        %v7395 = vpack.c.bf16 %v7373, %v7372
        %v7396 = vpack.c.bf16 %v7375, %v7374
        %v7397 = vpack.c.bf16 %v7377, %v7376
        %v7398 = vpack.c.bf16 %v7379, %v7378
        %v7399 = vpack.c.bf16 %v7381, %v7380
        %v7400 = vpack.c.bf16 %v7383, %v7382
        %v7401 = vpack.c.bf16 %v7385, %v7384
        %v7403 = vsel %vm1403, %v7386, 0
        %v7406 = vsel %vm1403, %v7387, 0
        %v7409 = vsel %vm1403, %v7388, 0
        %v7412 = vsel %vm1403, %v7389, 0
        %v7415 = vsel %vm1403, %v7390, 0
        %v7418 = vsel %vm1403, %v7391, 0
        %v7421 = vsel %vm1403, %v7392, 0
        %v7424 = vsel %vm1403, %v7393, 0
        %v7427 = vsel %vm1403, %v7394, 0
        %v7430 = vsel %vm1403, %v7395, 0
        %v7433 = vsel %vm1403, %v7396, 0
        %v7436 = vsel %vm1403, %v7397, 0
        %v7439 = vsel %vm1403, %v7398, 0
        %v7442 = vsel %vm1403, %v7399, 0
        %v7445 = vsel %vm1403, %v7400, 0
        %v7448 = vsel %vm1403, %v7401, 0
        %7450 = vmatpush.bf16.msra.mxu0 0
        %7451 = vmatpush.bf16.msra.mxu0 0
        %7452 = vmatpush.bf16.msra.mxu0 0
        %7453 = vmatpush.bf16.msra.mxu0 0
        %7454 = vmatpush.bf16.msra.mxu0 0
        %7455 = vmatpush.bf16.msra.mxu0 0
        %7456 = vmatpush.bf16.msra.mxu0 %v6896
        %7457 = vmatpush.bf16.msra.mxu0 %v6895
        %7458 = vmatmul.bf16.gmra.mxu0 %v7403
        %v7459 = vpop.f32.mrf.mxu0
        %v7460 = vadd.f32 0.0, %v7459
        %v7461 = vpop.f32.mrf.mxu0
        %v7462 = vadd.f32 0.0, %v7461
        %7463 = vmatmul.bf16.gmra.mxu0 %v7406
        %v7464 = vpop.f32.mrf.mxu0
        %v7465 = vadd.f32 0.0, %v7464
        %v7466 = vpop.f32.mrf.mxu0
        %v7467 = vadd.f32 0.0, %v7466
        %7468 = vmatmul.bf16.gmra.mxu0 %v7409
        %v7469 = vpop.f32.mrf.mxu0
        %v7470 = vadd.f32 0.0, %v7469
        %v7471 = vpop.f32.mrf.mxu0
        %v7472 = vadd.f32 0.0, %v7471
        %7473 = vmatmul.bf16.gmra.mxu0 %v7412
        %v7474 = vpop.f32.mrf.mxu0
        %v7475 = vadd.f32 0.0, %v7474
        %v7476 = vpop.f32.mrf.mxu0
        %v7477 = vadd.f32 0.0, %v7476
        %7478 = vmatmul.bf16.gmra.mxu0 %v7415
        %v7479 = vpop.f32.mrf.mxu0
        %v7480 = vadd.f32 0.0, %v7479
        %v7481 = vpop.f32.mrf.mxu0
        %v7482 = vadd.f32 0.0, %v7481
        %7483 = vmatmul.bf16.gmra.mxu0 %v7418
        %v7484 = vpop.f32.mrf.mxu0
        %v7485 = vadd.f32 0.0, %v7484
        %v7486 = vpop.f32.mrf.mxu0
        %v7487 = vadd.f32 0.0, %v7486
        %7488 = vmatmul.bf16.gmra.mxu0 %v7421
        %v7489 = vpop.f32.mrf.mxu0
        %v7490 = vadd.f32 0.0, %v7489
        %v7491 = vpop.f32.mrf.mxu0
        %v7492 = vadd.f32 0.0, %v7491
        %7493 = vmatmul.bf16.gmra.mxu0 %v7424
        %v7494 = vpop.f32.mrf.mxu0
        %v7495 = vadd.f32 0.0, %v7494
        %v7496 = vpop.f32.mrf.mxu0
        %v7497 = vadd.f32 0.0, %v7496
        %7498 = vmatmul.bf16.gmra.mxu0 %v7427
        %v7499 = vpop.f32.mrf.mxu0
        %v7500 = vadd.f32 0.0, %v7499
        %v7501 = vpop.f32.mrf.mxu0
        %v7502 = vadd.f32 0.0, %v7501
        %7503 = vmatmul.bf16.gmra.mxu0 %v7430
        %v7504 = vpop.f32.mrf.mxu0
        %v7505 = vadd.f32 0.0, %v7504
        %v7506 = vpop.f32.mrf.mxu0
        %v7507 = vadd.f32 0.0, %v7506
        %7508 = vmatmul.bf16.gmra.mxu0 %v7433
        %v7509 = vpop.f32.mrf.mxu0
        %v7510 = vadd.f32 0.0, %v7509
        %v7511 = vpop.f32.mrf.mxu0
        %v7512 = vadd.f32 0.0, %v7511
        %7513 = vmatmul.bf16.gmra.mxu0 %v7436
        %v7514 = vpop.f32.mrf.mxu0
        %v7515 = vadd.f32 0.0, %v7514
        %v7516 = vpop.f32.mrf.mxu0
        %v7517 = vadd.f32 0.0, %v7516
        %7518 = vmatmul.bf16.gmra.mxu0 %v7439
        %v7519 = vpop.f32.mrf.mxu0
        %v7520 = vadd.f32 0.0, %v7519
        %v7521 = vpop.f32.mrf.mxu0
        %v7522 = vadd.f32 0.0, %v7521
        %7523 = vmatmul.bf16.gmra.mxu0 %v7442
        %v7524 = vpop.f32.mrf.mxu0
        %v7525 = vadd.f32 0.0, %v7524
        %v7526 = vpop.f32.mrf.mxu0
        %v7527 = vadd.f32 0.0, %v7526
        %7528 = vmatmul.bf16.gmra.mxu0 %v7445
        %v7529 = vpop.f32.mrf.mxu0
        %v7530 = vadd.f32 0.0, %v7529
        %v7531 = vpop.f32.mrf.mxu0
        %v7532 = vadd.f32 0.0, %v7531
        %7533 = vmatmul.bf16.gmra.mxu0 %v7448
        %v7534 = vpop.f32.mrf.mxu0
        %v7535 = vadd.f32 0.0, %v7534
        %v7536 = vpop.f32.mrf.mxu0
        %v7537 = vadd.f32 0.0, %v7536
        %7538 = vdwg.mxu0
        %v7539 = vmul.f32 %v7460, %v3446
        %v7540 = vmul.f32 %v7462, %v3446
        %v7541 = vmul.f32 %v7465, %v3446
        %v7542 = vmul.f32 %v7467, %v3446
        %v7543 = vmul.f32 %v7470, %v3447
        %v7544 = vmul.f32 %v7472, %v3447
        %v7545 = vmul.f32 %v7475, %v3447
        %v7546 = vmul.f32 %v7477, %v3447
        %v7547 = vmul.f32 %v7480, %v3448
        %v7548 = vmul.f32 %v7482, %v3448
        %v7549 = vmul.f32 %v7485, %v3448
        %v7550 = vmul.f32 %v7487, %v3448
        %v7551 = vmul.f32 %v7490, %v3449
        %v7552 = vmul.f32 %v7492, %v3449
        %v7553 = vmul.f32 %v7495, %v3449
        %v7554 = vmul.f32 %v7497, %v3449
        %v7555 = vmul.f32 %v7500, %v3450
        %v7556 = vmul.f32 %v7502, %v3450
        %v7557 = vmul.f32 %v7505, %v3450
        %v7558 = vmul.f32 %v7507, %v3450
        %v7559 = vmul.f32 %v7510, %v3451
        %v7560 = vmul.f32 %v7512, %v3451
        %v7561 = vmul.f32 %v7515, %v3451
        %v7562 = vmul.f32 %v7517, %v3451
        %v7563 = vmul.f32 %v7520, %v3452
        %v7564 = vmul.f32 %v7522, %v3452
        %v7565 = vmul.f32 %v7525, %v3452
        %v7566 = vmul.f32 %v7527, %v3452
        %v7567 = vmul.f32 %v7530, %v3453
        %v7568 = vmul.f32 %v7532, %v3453
        %v7569 = vmul.f32 %v7535, %v3453
        %v7570 = vmul.f32 %v7537, %v3453
        %v7571 = vadd.f32 %v7539, %v7543
        %v7572 = vadd.f32 %v7571, %v7547
        %v7573 = vadd.f32 %v7572, %v7551
        %v7574 = vadd.f32 %v7573, %v7555
        %v7575 = vadd.f32 %v7574, %v7559
        %v7576 = vadd.f32 %v7575, %v7563
        %v7577 = vadd.f32 %v7576, %v7567
        %v7578 = vadd.f32 %v7540, %v7544
        %v7579 = vadd.f32 %v7578, %v7548
        %v7580 = vadd.f32 %v7579, %v7552
        %v7581 = vadd.f32 %v7580, %v7556
        %v7582 = vadd.f32 %v7581, %v7560
        %v7583 = vadd.f32 %v7582, %v7564
        %v7584 = vadd.f32 %v7583, %v7568
        %v7585 = vadd.f32 %v7541, %v7545
        %v7586 = vadd.f32 %v7585, %v7549
        %v7587 = vadd.f32 %v7586, %v7553
        %v7588 = vadd.f32 %v7587, %v7557
        %v7589 = vadd.f32 %v7588, %v7561
        %v7590 = vadd.f32 %v7589, %v7565
        %v7591 = vadd.f32 %v7590, %v7569
        %v7592 = vadd.f32 %v7542, %v7546
        %v7593 = vadd.f32 %v7592, %v7550
        %v7594 = vadd.f32 %v7593, %v7554
        %v7595 = vadd.f32 %v7594, %v7558
        %v7596 = vadd.f32 %v7595, %v7562
        %v7597 = vadd.f32 %v7596, %v7566
        %v7598 = vadd.f32 %v7597, %v7570
        %s7599 = scalar_lea.vmem [#allocation21], 64
        %v7600 = vld [vmem:[%s7599] sm:$0xf]
        %v7601 = vld [vmem:[%s7599 + $0x4] sm:$0xf]
        %v7602 = vld [vmem:[%s7599 + $0x8] sm:$0xf]
        %v7603 = vld [vmem:[%s7599 + $0xc] sm:$0xf]
        %v7604 = vld [vmem:[%s7599 + $0x10] sm:$0xf]
        %v7605 = vld [vmem:[%s7599 + $0x14] sm:$0xf]
        %v7606 = vld [vmem:[%s7599 + $0x18] sm:$0xf]
        %v7607 = vld [vmem:[%s7599 + $0x1c] sm:$0xf]
        %v7608 = vld [vmem:[%s7599 + $0x20] sm:$0xf]
        %v7609 = vld [vmem:[%s7599 + $0x24] sm:$0xf]
        %v7610 = vld [vmem:[%s7599 + $0x28] sm:$0xf]
        %v7611 = vld [vmem:[%s7599 + $0x2c] sm:$0xf]
        %v7612 = vld [vmem:[%s7599 + $0x30] sm:$0xf]
        %v7613 = vld [vmem:[%s7599 + $0x34] sm:$0xf]
        %v7614 = vld [vmem:[%s7599 + $0x38] sm:$0xf]
        %v7615 = vld [vmem:[%s7599 + $0x3c] sm:$0xf]
        %s7616 = scalar_lea.vmem %s41, 1
        %v7617 = vld [vmem:[%s7616] sm:$0x1]
        %v7618 = vpack.c.bf16 %v7584, %v7577
        %v7619 = vpack.c.bf16 %v7598, %v7591
        %v7621 = vperm.slane %v7617, 0
        %v7639 = vunpack.c.l.b16 %v7600
        %v7640 = vunpack.c.l.b16 %v7601
        %v7641 = vunpack.c.l.b16 %v7602
        %v7642 = vunpack.c.l.b16 %v7603
        %v7643 = vunpack.c.l.b16 %v7604
        %v7644 = vunpack.c.l.b16 %v7605
        %v7645 = vunpack.c.l.b16 %v7606
        %v7646 = vunpack.c.l.b16 %v7607
        %v7647 = vunpack.c.l.b16 %v7608
        %v7648 = vunpack.c.l.b16 %v7609
        %v7649 = vunpack.c.l.b16 %v7610
        %v7650 = vunpack.c.l.b16 %v7611
        %v7651 = vunpack.c.l.b16 %v7612
        %v7652 = vunpack.c.l.b16 %v7613
        %v7653 = vunpack.c.l.b16 %v7614
        %v7654 = vunpack.c.l.b16 %v7615
        %v7655 = vpack.c.b16 %v7640, %v7639
        %v7656 = vpack.c.b16 %v7642, %v7641
        %v7657 = vpack.c.b16 %v7644, %v7643
        %v7658 = vpack.c.b16 %v7646, %v7645
        %v7659 = vpack.c.b16 %v7648, %v7647
        %v7660 = vpack.c.b16 %v7650, %v7649
        %v7661 = vpack.c.b16 %v7652, %v7651
        %v7662 = vpack.c.b16 %v7654, %v7653
        %7671 = vmatpush.bf16.msra.mxu0 %v7662
        %7672 = vmatpush.bf16.msra.mxu0 %v7661
        %7673 = vmatpush.bf16.msra.mxu0 %v7660
        %7674 = vmatpush.bf16.msra.mxu0 %v7659
        %7675 = vmatpush.bf16.msra.mxu0 %v7658
        %7676 = vmatpush.bf16.msra.mxu0 %v7657
        %7677 = vmatpush.bf16.msra.mxu0 %v7656
        %7678 = vmatpush.bf16.msra.mxu0 %v7655
        %7679 = vmatmul.bf16.gmra.mxu0 %v7618
        %v7680 = vpop.f32.mrf.mxu0
        %v7681 = vadd.f32 %v7621, %v7680
        %v7682 = vpop.f32.mrf.mxu0
        %v7683 = vadd.f32 %v7621, %v7682
        %7684 = vmatmul.bf16.gmra.mxu0 %v7619
        %v7685 = vpop.f32.mrf.mxu0
        %v7686 = vadd.f32 %v7621, %v7685
        %v7687 = vpop.f32.mrf.mxu0
        %v7688 = vadd.f32 %v7621, %v7687
        %7689 = vdwg.mxu0
        %v7690 = vadd.f32 %v6652, %v7681
        %v7691 = vadd.f32 %v6653, %v7683
        %v7692 = vadd.f32 %v6654, %v7686
        %v7693 = vadd.f32 %v6655, %v7688
        %7694 = vadd.xlane.f32.xlu0 %v7690
        %v7695 = vpop.xlane.xlu0 %7694
        %7696 = vadd.xlane.f32.xlu0 %v7691
        %v7697 = vpop.xlane.xlu0 %7696
        %7698 = vadd.xlane.f32.xlu0 %v7692
        %v7699 = vpop.xlane.xlu0 %7698
        %7700 = vadd.xlane.f32.xlu0 %v7693
        %v7701 = vpop.xlane.xlu0 %7700
        %v7702 = vmul.f32 %v7695, %v4274
        %v7703 = vmul.f32 %v7697, %v4274
        %v7704 = vmul.f32 %v7699, %v4274
        %v7705 = vmul.f32 %v7701, %v4274
        %v7706 = vsub.f32 %v7690, %v7702
        %v7707 = vsub.f32 %v7691, %v7703
        %v7708 = vsub.f32 %v7692, %v7704
        %v7709 = vsub.f32 %v7693, %v7705
        %v7710 = vmul.f32 %v7706, %v7706
        %v7711 = vmul.f32 %v7707, %v7707
        %v7712 = vmul.f32 %v7708, %v7708
        %v7713 = vmul.f32 %v7709, %v7709
        %7714 = vadd.xlane.f32.xlu0 %v7710
        %v7715 = vpop.xlane.xlu0 %7714
        %7716 = vadd.xlane.f32.xlu0 %v7711
        %v7717 = vpop.xlane.xlu0 %7716
        %7718 = vadd.xlane.f32.xlu0 %v7712
        %v7719 = vpop.xlane.xlu0 %7718
        %7720 = vadd.xlane.f32.xlu0 %v7713
        %v7721 = vpop.xlane.xlu0 %7720
        %v7722 = vmul.f32 %v7715, %v4274
        %v7723 = vmul.f32 %v7717, %v4274
        %v7724 = vmul.f32 %v7719, %v4274
        %v7725 = vmul.f32 %v7721, %v4274
        %v7726 = vadd.f32 %v7722, 1e-05
        %v7727 = vadd.f32 %v7723, 1e-05
        %v7728 = vadd.f32 %v7724, 1e-05
        %v7729 = vadd.f32 %v7725, 1e-05
        %v7730 = vrsqrt.pop %v7726
        %v7731 = vmul.f32 %v7730, %v7726
        %v7732 = vmul.f32 %v7731, %v7730
        %v7733 = vmul.f32 0.5, %v7732
        %v7734 = vsub.f32 1.5, %v7733
        %v7735 = vmul.f32 %v7730, %v7734
        %vm7736 = vweird.f32 %v7726
        %vm7737 = vweird.f32 %v7730
        %vm7738 = vmor %vm7736, %vm7737
        %v7739 = vsel %vm7738, %v7730, %v7735
        %v7740 = vrsqrt.pop %v7727
        %v7741 = vmul.f32 %v7740, %v7727
        %v7742 = vmul.f32 %v7741, %v7740
        %v7743 = vmul.f32 0.5, %v7742
        %v7744 = vsub.f32 1.5, %v7743
        %v7745 = vmul.f32 %v7740, %v7744
        %vm7746 = vweird.f32 %v7727
        %vm7747 = vweird.f32 %v7740
        %vm7748 = vmor %vm7746, %vm7747
        %v7749 = vsel %vm7748, %v7740, %v7745
        %v7750 = vrsqrt.pop %v7728
        %v7751 = vmul.f32 %v7750, %v7728
        %v7752 = vmul.f32 %v7751, %v7750
        %v7753 = vmul.f32 0.5, %v7752
        %v7754 = vsub.f32 1.5, %v7753
        %v7755 = vmul.f32 %v7750, %v7754
        %vm7756 = vweird.f32 %v7728
        %vm7757 = vweird.f32 %v7750
        %vm7758 = vmor %vm7756, %vm7757
        %v7759 = vsel %vm7758, %v7750, %v7755
        %v7760 = vrsqrt.pop %v7729
        %v7761 = vmul.f32 %v7760, %v7729
        %v7762 = vmul.f32 %v7761, %v7760
        %v7763 = vmul.f32 0.5, %v7762
        %v7764 = vsub.f32 1.5, %v7763
        %v7765 = vmul.f32 %v7760, %v7764
        %vm7766 = vweird.f32 %v7729
        %vm7767 = vweird.f32 %v7760
        %vm7768 = vmor %vm7766, %vm7767
        %v7769 = vsel %vm7768, %v7760, %v7765
        %v7770 = vmul.f32 %v7706, %v7739
        %v7771 = vmul.f32 %v7707, %v7749
        %v7772 = vmul.f32 %v7708, %v7759
        %v7773 = vmul.f32 %v7709, %v7769
        %v7774 = vperm.slane %v6657, 0
        %v7775 = vmul.f32 %v7770, %v7774
        %v7776 = vmul.f32 %v7771, %v7774
        %v7777 = vmul.f32 %v7772, %v7774
        %v7778 = vmul.f32 %v7773, %v7774
        %v7779 = vperm.slane %v6659, 0
        %v7780 = vadd.f32 %v7775, %v7779
        %v7781 = vadd.f32 %v7776, %v7779
        %v7782 = vadd.f32 %v7777, %v7779
        %v7783 = vadd.f32 %v7778, %v7779
        %s7784 = scalar_lea.vmem [#allocation23], 64
        %v7785 = vld [vmem:[%s7784] sm:$0xf]
        %v7786 = vld [vmem:[%s7784 + $0x4] sm:$0xf]
        %v7787 = vld [vmem:[%s7784 + $0x8] sm:$0xf]
        %v7788 = vld [vmem:[%s7784 + $0xc] sm:$0xf]
        %v7789 = vld [vmem:[%s7784 + $0x10] sm:$0xf]
        %v7790 = vld [vmem:[%s7784 + $0x14] sm:$0xf]
        %v7791 = vld [vmem:[%s7784 + $0x18] sm:$0xf]
        %v7792 = vld [vmem:[%s7784 + $0x1c] sm:$0xf]
        %v7793 = vld [vmem:[%s7784 + $0x20] sm:$0xf]
        %v7794 = vld [vmem:[%s7784 + $0x24] sm:$0xf]
        %v7795 = vld [vmem:[%s7784 + $0x28] sm:$0xf]
        %v7796 = vld [vmem:[%s7784 + $0x2c] sm:$0xf]
        %v7797 = vld [vmem:[%s7784 + $0x30] sm:$0xf]
        %v7798 = vld [vmem:[%s7784 + $0x34] sm:$0xf]
        %v7799 = vld [vmem:[%s7784 + $0x38] sm:$0xf]
        %v7800 = vld [vmem:[%s7784 + $0x3c] sm:$0xf]
        %s7801 = scalar_lea.vmem [#allocation24], 32
        %v7802 = vld [vmem:[%s7801] sm:$0xff]
        %v7803 = vld [vmem:[%s7801 + $0x8] sm:$0xff]
        %v7804 = vld [vmem:[%s7801 + $0x10] sm:$0xff]
        %v7805 = vld [vmem:[%s7801 + $0x18] sm:$0xff]
        %v7806 = vpack.c.bf16 %v7781, %v7780
        %v7807 = vpack.c.bf16 %v7783, %v7782
        %v7824 = vunpack.c.l.b16 %v7785
        %v7825 = vunpack.c.l.b16 %v7786
        %v7826 = vunpack.c.l.b16 %v7787
        %v7827 = vunpack.c.l.b16 %v7788
        %v7828 = vunpack.c.l.b16 %v7789
        %v7829 = vunpack.c.l.b16 %v7790
        %v7830 = vunpack.c.l.b16 %v7791
        %v7831 = vunpack.c.l.b16 %v7792
        %v7832 = vunpack.c.l.b16 %v7793
        %v7833 = vunpack.c.l.b16 %v7794
        %v7834 = vunpack.c.l.b16 %v7795
        %v7835 = vunpack.c.l.b16 %v7796
        %v7836 = vunpack.c.l.b16 %v7797
        %v7837 = vunpack.c.l.b16 %v7798
        %v7838 = vunpack.c.l.b16 %v7799
        %v7839 = vunpack.c.l.b16 %v7800
        %v7840 = vpack.c.b16 %v7825, %v7824
        %v7841 = vpack.c.b16 %v7827, %v7826
        %v7842 = vpack.c.b16 %v7829, %v7828
        %v7843 = vpack.c.b16 %v7831, %v7830
        %v7844 = vpack.c.b16 %v7833, %v7832
        %v7845 = vpack.c.b16 %v7835, %v7834
        %v7846 = vpack.c.b16 %v7837, %v7836
        %v7847 = vpack.c.b16 %v7839, %v7838
        %7856 = vmatpush.bf16.msra.mxu0 %v7847
        %7857 = vmatpush.bf16.msra.mxu0 %v7846
        %7858 = vmatpush.bf16.msra.mxu0 %v7845
        %7859 = vmatpush.bf16.msra.mxu0 %v7844
        %7860 = vmatpush.bf16.msra.mxu0 %v7843
        %7861 = vmatpush.bf16.msra.mxu0 %v7842
        %7862 = vmatpush.bf16.msra.mxu0 %v7841
        %7863 = vmatpush.bf16.msra.mxu0 %v7840
        %7864 = vmatmul.bf16.gmra.mxu0 %v7806
        %v7865 = vpop.f32.mrf.mxu0
        %v7866 = vadd.f32 %v7802, %v7865
        %v7867 = vpop.f32.mrf.mxu0
        %v7868 = vadd.f32 %v7803, %v7867
        %7869 = vmatmul.bf16.gmra.mxu0 %v7807
        %v7870 = vpop.f32.mrf.mxu0
        %v7871 = vadd.f32 %v7804, %v7870
        %v7872 = vpop.f32.mrf.mxu0
        %v7873 = vadd.f32 %v7805, %v7872
        %7874 = vdwg.mxu0
        %v7875 = vmul.f32 %v7866, %v3446
        %v7876 = vmul.f32 %v7868, %v3446
        %v7877 = vmul.f32 %v7871, %v3446
        %v7878 = vmul.f32 %v7873, %v3446
        %v7879 = vmul.f32 %v7866, %v3447
        %v7880 = vmul.f32 %v7868, %v3447
        %v7881 = vmul.f32 %v7871, %v3447
        %v7882 = vmul.f32 %v7873, %v3447
        %v7883 = vmul.f32 %v7866, %v3448
        %v7884 = vmul.f32 %v7868, %v3448
        %v7885 = vmul.f32 %v7871, %v3448
        %v7886 = vmul.f32 %v7873, %v3448
        %v7887 = vmul.f32 %v7866, %v3449
        %v7888 = vmul.f32 %v7868, %v3449
        %v7889 = vmul.f32 %v7871, %v3449
        %v7890 = vmul.f32 %v7873, %v3449
        %v7891 = vmul.f32 %v7866, %v3450
        %v7892 = vmul.f32 %v7868, %v3450
        %v7893 = vmul.f32 %v7871, %v3450
        %v7894 = vmul.f32 %v7873, %v3450
        %v7895 = vmul.f32 %v7866, %v3451
        %v7896 = vmul.f32 %v7868, %v3451
        %v7897 = vmul.f32 %v7871, %v3451
        %v7898 = vmul.f32 %v7873, %v3451
        %v7899 = vmul.f32 %v7866, %v3452
        %v7900 = vmul.f32 %v7868, %v3452
        %v7901 = vmul.f32 %v7871, %v3452
        %v7902 = vmul.f32 %v7873, %v3452
        %v7903 = vmul.f32 %v7866, %v3453
        %v7904 = vmul.f32 %v7868, %v3453
        %v7905 = vmul.f32 %v7871, %v3453
        %v7906 = vmul.f32 %v7873, %v3453
        %v7907 = vpack.c.bf16 %v7876, %v7875
        %v7908 = vpack.c.bf16 %v7878, %v7877
        %v7909 = vpack.c.bf16 %v7880, %v7879
        %v7910 = vpack.c.bf16 %v7882, %v7881
        %v7911 = vpack.c.bf16 %v7884, %v7883
        %v7912 = vpack.c.bf16 %v7886, %v7885
        %v7913 = vpack.c.bf16 %v7888, %v7887
        %v7914 = vpack.c.bf16 %v7890, %v7889
        %v7915 = vpack.c.bf16 %v7892, %v7891
        %v7916 = vpack.c.bf16 %v7894, %v7893
        %v7917 = vpack.c.bf16 %v7896, %v7895
        %v7918 = vpack.c.bf16 %v7898, %v7897
        %v7919 = vpack.c.bf16 %v7900, %v7899
        %v7920 = vpack.c.bf16 %v7902, %v7901
        %v7921 = vpack.c.bf16 %v7904, %v7903
        %v7922 = vpack.c.bf16 %v7906, %v7905
        %v7971 = vunpack.c.l.b16 %v3100
        %v7972 = vunpack.c.l.b16 %v3102
        %v7973 = vunpack.c.l.b16 %v3104
        %v7974 = vunpack.c.l.b16 %v3106
        %v7975 = vunpack.c.l.b16 %v3108
        %v7976 = vunpack.c.l.b16 %v3110
        %v7977 = vunpack.c.l.b16 %v3112
        %v7978 = vunpack.c.l.b16 %v3114
        %v7979 = vunpack.c.l.b16 %v3116
        %v7980 = vunpack.c.l.b16 %v3118
        %v7981 = vunpack.c.l.b16 %v3120
        %v7982 = vunpack.c.l.b16 %v3122
        %v7983 = vunpack.c.l.b16 %v3124
        %v7984 = vunpack.c.l.b16 %v3126
        %v7985 = vunpack.c.l.b16 %v3128
        %v7986 = vunpack.c.l.b16 %v3130
        %v7987 = vunpack.c.l.b16 %v3132
        %v7988 = vunpack.c.l.b16 %v3134
        %v7989 = vunpack.c.l.b16 %v3136
        %v7990 = vunpack.c.l.b16 %v3138
        %v7991 = vunpack.c.l.b16 %v3140
        %v7992 = vunpack.c.l.b16 %v3142
        %v7993 = vunpack.c.l.b16 %v3144
        %v7994 = vunpack.c.l.b16 %v3146
        %v7995 = vunpack.c.l.b16 %v3148
        %v7996 = vunpack.c.l.b16 %v3150
        %v7997 = vunpack.c.l.b16 %v3152
        %v7998 = vunpack.c.l.b16 %v3154
        %v7999 = vunpack.c.l.b16 %v3156
        %v8000 = vunpack.c.l.b16 %v3158
        %v8001 = vunpack.c.l.b16 %v3160
        %v8002 = vunpack.c.l.b16 %v3162
        %v8003 = vunpack.c.l.b16 %v3164
        %v8004 = vunpack.c.l.b16 %v3166
        %v8005 = vunpack.c.l.b16 %v3168
        %v8006 = vunpack.c.l.b16 %v3170
        %v8007 = vunpack.c.l.b16 %v3172
        %v8008 = vunpack.c.l.b16 %v3174
        %v8009 = vunpack.c.l.b16 %v3176
        %v8010 = vunpack.c.l.b16 %v3178
        %v8011 = vunpack.c.l.b16 %v3180
        %v8012 = vunpack.c.l.b16 %v3182
        %v8013 = vunpack.c.l.b16 %v3184
        %v8014 = vunpack.c.l.b16 %v3186
        %v8015 = vunpack.c.l.b16 %v3188
        %v8016 = vunpack.c.l.b16 %v3190
        %v8017 = vunpack.c.l.b16 %v3192
        %v8018 = vunpack.c.l.b16 %v3194
        %v8019 = vpack.c.b16 %v7972, %v7971
        %v8020 = vpack.c.b16 %v7974, %v7973
        %v8021 = vpack.c.b16 %v7976, %v7975
        %v8022 = vpack.c.b16 %v7978, %v7977
        %v8023 = vpack.c.b16 %v7980, %v7979
        %v8024 = vpack.c.b16 %v7982, %v7981
        %v8025 = vpack.c.b16 %v7984, %v7983
        %v8026 = vpack.c.b16 %v7986, %v7985
        %v8027 = vpack.c.b16 %v7988, %v7987
        %v8028 = vpack.c.b16 %v7990, %v7989
        %v8029 = vpack.c.b16 %v7992, %v7991
        %v8030 = vpack.c.b16 %v7994, %v7993
        %v8031 = vpack.c.b16 %v7996, %v7995
        %v8032 = vpack.c.b16 %v7998, %v7997
        %v8033 = vpack.c.b16 %v8000, %v7999
        %v8034 = vpack.c.b16 %v8002, %v8001
        %v8035 = vpack.c.b16 %v8004, %v8003
        %v8036 = vpack.c.b16 %v8006, %v8005
        %v8037 = vpack.c.b16 %v8008, %v8007
        %v8038 = vpack.c.b16 %v8010, %v8009
        %v8039 = vpack.c.b16 %v8012, %v8011
        %v8040 = vpack.c.b16 %v8014, %v8013
        %v8041 = vpack.c.b16 %v8016, %v8015
        %v8042 = vpack.c.b16 %v8018, %v8017
        %8067 = vmatpush.bf16.xpose.msra.mxu0 %v8026
        %8068 = vmatpush.bf16.xpose.msra.mxu0 %v8025
        %8069 = vmatpush.bf16.xpose.msra.mxu0 %v8024
        %8070 = vmatpush.bf16.xpose.msra.mxu0 %v8023
        %8071 = vmatpush.bf16.xpose.msra.mxu0 %v8022
        %8072 = vmatpush.bf16.xpose.msra.mxu0 %v8021
        %8073 = vmatpush.bf16.xpose.msra.mxu0 %v8020
        %8074 = vmatpush.bf16.xpose.msra.mxu0 %v8019
        %8075 = vmatmul.bf16.gmra.mxu0 %v7907
        %v8076 = vpop.f32.mrf.mxu0
        %v8077 = vadd.f32 %v4495, %v8076
        %v8078 = vpop.f32.mrf.mxu0
        %v8079 = vadd.f32 %v4495, %v8078
        %8080 = vmatmul.bf16.gmra.mxu0 %v7908
        %v8081 = vpop.f32.mrf.mxu0
        %v8082 = vadd.f32 %v4495, %v8081
        %v8083 = vpop.f32.mrf.mxu0
        %v8084 = vadd.f32 %v4495, %v8083
        %8085 = vmatmul.bf16.gmra.mxu0 %v7909
        %v8086 = vpop.f32.mrf.mxu0
        %v8087 = vadd.f32 %v4495, %v8086
        %v8088 = vpop.f32.mrf.mxu0
        %v8089 = vadd.f32 %v4495, %v8088
        %8090 = vmatmul.bf16.gmra.mxu0 %v7910
        %v8091 = vpop.f32.mrf.mxu0
        %v8092 = vadd.f32 %v4495, %v8091
        %v8093 = vpop.f32.mrf.mxu0
        %v8094 = vadd.f32 %v4495, %v8093
        %8095 = vmatmul.bf16.gmra.mxu0 %v7911
        %v8096 = vpop.f32.mrf.mxu0
        %v8097 = vadd.f32 %v4495, %v8096
        %v8098 = vpop.f32.mrf.mxu0
        %v8099 = vadd.f32 %v4495, %v8098
        %8100 = vmatmul.bf16.gmra.mxu0 %v7912
        %v8101 = vpop.f32.mrf.mxu0
        %v8102 = vadd.f32 %v4495, %v8101
        %v8103 = vpop.f32.mrf.mxu0
        %v8104 = vadd.f32 %v4495, %v8103
        %8105 = vmatmul.bf16.gmra.mxu0 %v7913
        %v8106 = vpop.f32.mrf.mxu0
        %v8107 = vadd.f32 %v4495, %v8106
        %v8108 = vpop.f32.mrf.mxu0
        %v8109 = vadd.f32 %v4495, %v8108
        %8110 = vmatmul.bf16.gmra.mxu0 %v7914
        %v8111 = vpop.f32.mrf.mxu0
        %v8112 = vadd.f32 %v4495, %v8111
        %v8113 = vpop.f32.mrf.mxu0
        %v8114 = vadd.f32 %v4495, %v8113
        %8115 = vmatmul.bf16.gmra.mxu0 %v7915
        %v8116 = vpop.f32.mrf.mxu0
        %v8117 = vadd.f32 %v4495, %v8116
        %v8118 = vpop.f32.mrf.mxu0
        %v8119 = vadd.f32 %v4495, %v8118
        %8120 = vmatmul.bf16.gmra.mxu0 %v7916
        %v8121 = vpop.f32.mrf.mxu0
        %v8122 = vadd.f32 %v4495, %v8121
        %v8123 = vpop.f32.mrf.mxu0
        %v8124 = vadd.f32 %v4495, %v8123
        %8125 = vmatmul.bf16.gmra.mxu0 %v7917
        %v8126 = vpop.f32.mrf.mxu0
        %v8127 = vadd.f32 %v4495, %v8126
        %v8128 = vpop.f32.mrf.mxu0
        %v8129 = vadd.f32 %v4495, %v8128
        %8130 = vmatmul.bf16.gmra.mxu0 %v7918
        %v8131 = vpop.f32.mrf.mxu0
        %v8132 = vadd.f32 %v4495, %v8131
        %v8133 = vpop.f32.mrf.mxu0
        %v8134 = vadd.f32 %v4495, %v8133
        %8135 = vmatmul.bf16.gmra.mxu0 %v7919
        %v8136 = vpop.f32.mrf.mxu0
        %v8137 = vadd.f32 %v4495, %v8136
        %v8138 = vpop.f32.mrf.mxu0
        %v8139 = vadd.f32 %v4495, %v8138
        %8140 = vmatmul.bf16.gmra.mxu0 %v7920
        %v8141 = vpop.f32.mrf.mxu0
        %v8142 = vadd.f32 %v4495, %v8141
        %v8143 = vpop.f32.mrf.mxu0
        %v8144 = vadd.f32 %v4495, %v8143
        %8145 = vmatmul.bf16.gmra.mxu0 %v7921
        %v8146 = vpop.f32.mrf.mxu0
        %v8147 = vadd.f32 %v4495, %v8146
        %v8148 = vpop.f32.mrf.mxu0
        %v8149 = vadd.f32 %v4495, %v8148
        %8150 = vmatmul.bf16.gmra.mxu0 %v7922
        %v8151 = vpop.f32.mrf.mxu0
        %v8152 = vadd.f32 %v4495, %v8151
        %v8153 = vpop.f32.mrf.mxu0
        %v8154 = vadd.f32 %v4495, %v8153
        %8155 = vdwg.mxu0
        %8156 = vmatpush.bf16.xpose.msra.mxu0 %v8034
        %8157 = vmatpush.bf16.xpose.msra.mxu0 %v8033
        %8158 = vmatpush.bf16.xpose.msra.mxu0 %v8032
        %8159 = vmatpush.bf16.xpose.msra.mxu0 %v8031
        %8160 = vmatpush.bf16.xpose.msra.mxu0 %v8030
        %8161 = vmatpush.bf16.xpose.msra.mxu0 %v8029
        %8162 = vmatpush.bf16.xpose.msra.mxu0 %v8028
        %8163 = vmatpush.bf16.xpose.msra.mxu0 %v8027
        %8164 = vmatmul.bf16.gmra.mxu0 %v7907
        %v8165 = vpop.f32.mrf.mxu0
        %v8166 = vadd.f32 %v4496, %v8165
        %v8167 = vpop.f32.mrf.mxu0
        %v8168 = vadd.f32 %v4496, %v8167
        %8169 = vmatmul.bf16.gmra.mxu0 %v7908
        %v8170 = vpop.f32.mrf.mxu0
        %v8171 = vadd.f32 %v4496, %v8170
        %v8172 = vpop.f32.mrf.mxu0
        %v8173 = vadd.f32 %v4496, %v8172
        %8174 = vmatmul.bf16.gmra.mxu0 %v7909
        %v8175 = vpop.f32.mrf.mxu0
        %v8176 = vadd.f32 %v4496, %v8175
        %v8177 = vpop.f32.mrf.mxu0
        %v8178 = vadd.f32 %v4496, %v8177
        %8179 = vmatmul.bf16.gmra.mxu0 %v7910
        %v8180 = vpop.f32.mrf.mxu0
        %v8181 = vadd.f32 %v4496, %v8180
        %v8182 = vpop.f32.mrf.mxu0
        %v8183 = vadd.f32 %v4496, %v8182
        %8184 = vmatmul.bf16.gmra.mxu0 %v7911
        %v8185 = vpop.f32.mrf.mxu0
        %v8186 = vadd.f32 %v4496, %v8185
        %v8187 = vpop.f32.mrf.mxu0
        %v8188 = vadd.f32 %v4496, %v8187
        %8189 = vmatmul.bf16.gmra.mxu0 %v7912
        %v8190 = vpop.f32.mrf.mxu0
        %v8191 = vadd.f32 %v4496, %v8190
        %v8192 = vpop.f32.mrf.mxu0
        %v8193 = vadd.f32 %v4496, %v8192
        %8194 = vmatmul.bf16.gmra.mxu0 %v7913
        %v8195 = vpop.f32.mrf.mxu0
        %v8196 = vadd.f32 %v4496, %v8195
        %v8197 = vpop.f32.mrf.mxu0
        %v8198 = vadd.f32 %v4496, %v8197
        %8199 = vmatmul.bf16.gmra.mxu0 %v7914
        %v8200 = vpop.f32.mrf.mxu0
        %v8201 = vadd.f32 %v4496, %v8200
        %v8202 = vpop.f32.mrf.mxu0
        %v8203 = vadd.f32 %v4496, %v8202
        %8204 = vmatmul.bf16.gmra.mxu0 %v7915
        %v8205 = vpop.f32.mrf.mxu0
        %v8206 = vadd.f32 %v4496, %v8205
        %v8207 = vpop.f32.mrf.mxu0
        %v8208 = vadd.f32 %v4496, %v8207
        %8209 = vmatmul.bf16.gmra.mxu0 %v7916
        %v8210 = vpop.f32.mrf.mxu0
        %v8211 = vadd.f32 %v4496, %v8210
        %v8212 = vpop.f32.mrf.mxu0
        %v8213 = vadd.f32 %v4496, %v8212
        %8214 = vmatmul.bf16.gmra.mxu0 %v7917
        %v8215 = vpop.f32.mrf.mxu0
        %v8216 = vadd.f32 %v4496, %v8215
        %v8217 = vpop.f32.mrf.mxu0
        %v8218 = vadd.f32 %v4496, %v8217
        %8219 = vmatmul.bf16.gmra.mxu0 %v7918
        %v8220 = vpop.f32.mrf.mxu0
        %v8221 = vadd.f32 %v4496, %v8220
        %v8222 = vpop.f32.mrf.mxu0
        %v8223 = vadd.f32 %v4496, %v8222
        %8224 = vmatmul.bf16.gmra.mxu0 %v7919
        %v8225 = vpop.f32.mrf.mxu0
        %v8226 = vadd.f32 %v4496, %v8225
        %v8227 = vpop.f32.mrf.mxu0
        %v8228 = vadd.f32 %v4496, %v8227
        %8229 = vmatmul.bf16.gmra.mxu0 %v7920
        %v8230 = vpop.f32.mrf.mxu0
        %v8231 = vadd.f32 %v4496, %v8230
        %v8232 = vpop.f32.mrf.mxu0
        %v8233 = vadd.f32 %v4496, %v8232
        %8234 = vmatmul.bf16.gmra.mxu0 %v7921
        %v8235 = vpop.f32.mrf.mxu0
        %v8236 = vadd.f32 %v4496, %v8235
        %v8237 = vpop.f32.mrf.mxu0
        %v8238 = vadd.f32 %v4496, %v8237
        %8239 = vmatmul.bf16.gmra.mxu0 %v7922
        %v8240 = vpop.f32.mrf.mxu0
        %v8241 = vadd.f32 %v4496, %v8240
        %v8242 = vpop.f32.mrf.mxu0
        %v8243 = vadd.f32 %v4496, %v8242
        %8244 = vdwg.mxu0
        %8245 = vmatpush.bf16.xpose.msra.mxu0 %v8042
        %8246 = vmatpush.bf16.xpose.msra.mxu0 %v8041
        %8247 = vmatpush.bf16.xpose.msra.mxu0 %v8040
        %8248 = vmatpush.bf16.xpose.msra.mxu0 %v8039
        %8249 = vmatpush.bf16.xpose.msra.mxu0 %v8038
        %8250 = vmatpush.bf16.xpose.msra.mxu0 %v8037
        %8251 = vmatpush.bf16.xpose.msra.mxu0 %v8036
        %8252 = vmatpush.bf16.xpose.msra.mxu0 %v8035
        %8253 = vmatmul.bf16.gmra.mxu0 %v7907
        %v8254 = vpop.f32.mrf.mxu0
        %v8255 = vadd.f32 %v4497, %v8254
        %v8256 = vpop.f32.mrf.mxu0
        %v8257 = vadd.f32 %v4497, %v8256
        %8258 = vmatmul.bf16.gmra.mxu0 %v7908
        %v8259 = vpop.f32.mrf.mxu0
        %v8260 = vadd.f32 %v4497, %v8259
        %v8261 = vpop.f32.mrf.mxu0
        %v8262 = vadd.f32 %v4497, %v8261
        %8263 = vmatmul.bf16.gmra.mxu0 %v7909
        %v8264 = vpop.f32.mrf.mxu0
        %v8265 = vadd.f32 %v4497, %v8264
        %v8266 = vpop.f32.mrf.mxu0
        %v8267 = vadd.f32 %v4497, %v8266
        %8268 = vmatmul.bf16.gmra.mxu0 %v7910
        %v8269 = vpop.f32.mrf.mxu0
        %v8270 = vadd.f32 %v4497, %v8269
        %v8271 = vpop.f32.mrf.mxu0
        %v8272 = vadd.f32 %v4497, %v8271
        %8273 = vmatmul.bf16.gmra.mxu0 %v7911
        %v8274 = vpop.f32.mrf.mxu0
        %v8275 = vadd.f32 %v4497, %v8274
        %v8276 = vpop.f32.mrf.mxu0
        %v8277 = vadd.f32 %v4497, %v8276
        %8278 = vmatmul.bf16.gmra.mxu0 %v7912
        %v8279 = vpop.f32.mrf.mxu0
        %v8280 = vadd.f32 %v4497, %v8279
        %v8281 = vpop.f32.mrf.mxu0
        %v8282 = vadd.f32 %v4497, %v8281
        %8283 = vmatmul.bf16.gmra.mxu0 %v7913
        %v8284 = vpop.f32.mrf.mxu0
        %v8285 = vadd.f32 %v4497, %v8284
        %v8286 = vpop.f32.mrf.mxu0
        %v8287 = vadd.f32 %v4497, %v8286
        %8288 = vmatmul.bf16.gmra.mxu0 %v7914
        %v8289 = vpop.f32.mrf.mxu0
        %v8290 = vadd.f32 %v4497, %v8289
        %v8291 = vpop.f32.mrf.mxu0
        %v8292 = vadd.f32 %v4497, %v8291
        %8293 = vmatmul.bf16.gmra.mxu0 %v7915
        %v8294 = vpop.f32.mrf.mxu0
        %v8295 = vadd.f32 %v4497, %v8294
        %v8296 = vpop.f32.mrf.mxu0
        %v8297 = vadd.f32 %v4497, %v8296
        %8298 = vmatmul.bf16.gmra.mxu0 %v7916
        %v8299 = vpop.f32.mrf.mxu0
        %v8300 = vadd.f32 %v4497, %v8299
        %v8301 = vpop.f32.mrf.mxu0
        %v8302 = vadd.f32 %v4497, %v8301
        %8303 = vmatmul.bf16.gmra.mxu0 %v7917
        %v8304 = vpop.f32.mrf.mxu0
        %v8305 = vadd.f32 %v4497, %v8304
        %v8306 = vpop.f32.mrf.mxu0
        %v8307 = vadd.f32 %v4497, %v8306
        %8308 = vmatmul.bf16.gmra.mxu0 %v7918
        %v8309 = vpop.f32.mrf.mxu0
        %v8310 = vadd.f32 %v4497, %v8309
        %v8311 = vpop.f32.mrf.mxu0
        %v8312 = vadd.f32 %v4497, %v8311
        %8313 = vmatmul.bf16.gmra.mxu0 %v7919
        %v8314 = vpop.f32.mrf.mxu0
        %v8315 = vadd.f32 %v4497, %v8314
        %v8316 = vpop.f32.mrf.mxu0
        %v8317 = vadd.f32 %v4497, %v8316
        %8318 = vmatmul.bf16.gmra.mxu0 %v7920
        %v8319 = vpop.f32.mrf.mxu0
        %v8320 = vadd.f32 %v4497, %v8319
        %v8321 = vpop.f32.mrf.mxu0
        %v8322 = vadd.f32 %v4497, %v8321
        %8323 = vmatmul.bf16.gmra.mxu0 %v7921
        %v8324 = vpop.f32.mrf.mxu0
        %v8325 = vadd.f32 %v4497, %v8324
        %v8326 = vpop.f32.mrf.mxu0
        %v8327 = vadd.f32 %v4497, %v8326
        %8328 = vmatmul.bf16.gmra.mxu0 %v7922
        %v8329 = vpop.f32.mrf.mxu0
        %v8330 = vadd.f32 %v4497, %v8329
        %v8331 = vpop.f32.mrf.mxu0
        %v8332 = vadd.f32 %v4497, %v8331
        %8333 = vdwg.mxu0
        %v8334 = vmax.f32 %v8077, %v8166
        %v8335 = vmax.f32 %v8334, %v8255
        %8336 = vmax.xlane.f32.xlu0 %v8335
        %v8337 = vpop.xlane.xlu0 %8336
        %v8338 = vmax.f32 %v8079, %v8168
        %v8339 = vmax.f32 %v8338, %v8257
        %8340 = vmax.xlane.f32.xlu0 %v8339
        %v8341 = vpop.xlane.xlu0 %8340
        %v8342 = vmax.f32 %v8082, %v8171
        %v8343 = vmax.f32 %v8342, %v8260
        %8344 = vmax.xlane.f32.xlu0 %v8343
        %v8345 = vpop.xlane.xlu0 %8344
        %v8346 = vmax.f32 %v8084, %v8173
        %v8347 = vmax.f32 %v8346, %v8262
        %8348 = vmax.xlane.f32.xlu0 %v8347
        %v8349 = vpop.xlane.xlu0 %8348
        %v8350 = vmax.f32 %v8087, %v8176
        %v8351 = vmax.f32 %v8350, %v8265
        %8352 = vmax.xlane.f32.xlu0 %v8351
        %v8353 = vpop.xlane.xlu0 %8352
        %v8354 = vmax.f32 %v8089, %v8178
        %v8355 = vmax.f32 %v8354, %v8267
        %8356 = vmax.xlane.f32.xlu0 %v8355
        %v8357 = vpop.xlane.xlu0 %8356
        %v8358 = vmax.f32 %v8092, %v8181
        %v8359 = vmax.f32 %v8358, %v8270
        %8360 = vmax.xlane.f32.xlu0 %v8359
        %v8361 = vpop.xlane.xlu0 %8360
        %v8362 = vmax.f32 %v8094, %v8183
        %v8363 = vmax.f32 %v8362, %v8272
        %8364 = vmax.xlane.f32.xlu0 %v8363
        %v8365 = vpop.xlane.xlu0 %8364
        %v8366 = vmax.f32 %v8097, %v8186
        %v8367 = vmax.f32 %v8366, %v8275
        %8368 = vmax.xlane.f32.xlu0 %v8367
        %v8369 = vpop.xlane.xlu0 %8368
        %v8370 = vmax.f32 %v8099, %v8188
        %v8371 = vmax.f32 %v8370, %v8277
        %8372 = vmax.xlane.f32.xlu0 %v8371
        %v8373 = vpop.xlane.xlu0 %8372
        %v8374 = vmax.f32 %v8102, %v8191
        %v8375 = vmax.f32 %v8374, %v8280
        %8376 = vmax.xlane.f32.xlu0 %v8375
        %v8377 = vpop.xlane.xlu0 %8376
        %v8378 = vmax.f32 %v8104, %v8193
        %v8379 = vmax.f32 %v8378, %v8282
        %8380 = vmax.xlane.f32.xlu0 %v8379
        %v8381 = vpop.xlane.xlu0 %8380
        %v8382 = vmax.f32 %v8107, %v8196
        %v8383 = vmax.f32 %v8382, %v8285
        %8384 = vmax.xlane.f32.xlu0 %v8383
        %v8385 = vpop.xlane.xlu0 %8384
        %v8386 = vmax.f32 %v8109, %v8198
        %v8387 = vmax.f32 %v8386, %v8287
        %8388 = vmax.xlane.f32.xlu0 %v8387
        %v8389 = vpop.xlane.xlu0 %8388
        %v8390 = vmax.f32 %v8112, %v8201
        %v8391 = vmax.f32 %v8390, %v8290
        %8392 = vmax.xlane.f32.xlu0 %v8391
        %v8393 = vpop.xlane.xlu0 %8392
        %v8394 = vmax.f32 %v8114, %v8203
        %v8395 = vmax.f32 %v8394, %v8292
        %8396 = vmax.xlane.f32.xlu0 %v8395
        %v8397 = vpop.xlane.xlu0 %8396
        %v8398 = vmax.f32 %v8117, %v8206
        %v8399 = vmax.f32 %v8398, %v8295
        %8400 = vmax.xlane.f32.xlu0 %v8399
        %v8401 = vpop.xlane.xlu0 %8400
        %v8402 = vmax.f32 %v8119, %v8208
        %v8403 = vmax.f32 %v8402, %v8297
        %8404 = vmax.xlane.f32.xlu0 %v8403
        %v8405 = vpop.xlane.xlu0 %8404
        %v8406 = vmax.f32 %v8122, %v8211
        %v8407 = vmax.f32 %v8406, %v8300
        %8408 = vmax.xlane.f32.xlu0 %v8407
        %v8409 = vpop.xlane.xlu0 %8408
        %v8410 = vmax.f32 %v8124, %v8213
        %v8411 = vmax.f32 %v8410, %v8302
        %8412 = vmax.xlane.f32.xlu0 %v8411
        %v8413 = vpop.xlane.xlu0 %8412
        %v8414 = vmax.f32 %v8127, %v8216
        %v8415 = vmax.f32 %v8414, %v8305
        %8416 = vmax.xlane.f32.xlu0 %v8415
        %v8417 = vpop.xlane.xlu0 %8416
        %v8418 = vmax.f32 %v8129, %v8218
        %v8419 = vmax.f32 %v8418, %v8307
        %8420 = vmax.xlane.f32.xlu0 %v8419
        %v8421 = vpop.xlane.xlu0 %8420
        %v8422 = vmax.f32 %v8132, %v8221
        %v8423 = vmax.f32 %v8422, %v8310
        %8424 = vmax.xlane.f32.xlu0 %v8423
        %v8425 = vpop.xlane.xlu0 %8424
        %v8426 = vmax.f32 %v8134, %v8223
        %v8427 = vmax.f32 %v8426, %v8312
        %8428 = vmax.xlane.f32.xlu0 %v8427
        %v8429 = vpop.xlane.xlu0 %8428
        %v8430 = vmax.f32 %v8137, %v8226
        %v8431 = vmax.f32 %v8430, %v8315
        %8432 = vmax.xlane.f32.xlu0 %v8431
        %v8433 = vpop.xlane.xlu0 %8432
        %v8434 = vmax.f32 %v8139, %v8228
        %v8435 = vmax.f32 %v8434, %v8317
        %8436 = vmax.xlane.f32.xlu0 %v8435
        %v8437 = vpop.xlane.xlu0 %8436
        %v8438 = vmax.f32 %v8142, %v8231
        %v8439 = vmax.f32 %v8438, %v8320
        %8440 = vmax.xlane.f32.xlu0 %v8439
        %v8441 = vpop.xlane.xlu0 %8440
        %v8442 = vmax.f32 %v8144, %v8233
        %v8443 = vmax.f32 %v8442, %v8322
        %8444 = vmax.xlane.f32.xlu0 %v8443
        %v8445 = vpop.xlane.xlu0 %8444
        %v8446 = vmax.f32 %v8147, %v8236
        %v8447 = vmax.f32 %v8446, %v8325
        %8448 = vmax.xlane.f32.xlu0 %v8447
        %v8449 = vpop.xlane.xlu0 %8448
        %v8450 = vmax.f32 %v8149, %v8238
        %v8451 = vmax.f32 %v8450, %v8327
        %8452 = vmax.xlane.f32.xlu0 %v8451
        %v8453 = vpop.xlane.xlu0 %8452
        %v8454 = vmax.f32 %v8152, %v8241
        %v8455 = vmax.f32 %v8454, %v8330
        %8456 = vmax.xlane.f32.xlu0 %v8455
        %v8457 = vpop.xlane.xlu0 %8456
        %v8458 = vmax.f32 %v8154, %v8243
        %v8459 = vmax.f32 %v8458, %v8332
        %8460 = vmax.xlane.f32.xlu0 %v8459
        %v8461 = vpop.xlane.xlu0 %8460
        %v8462 = vsub.f32 %v8077, %v8337
        %v8463 = vsub.f32 %v8166, %v8337
        %v8464 = vsub.f32 %v8255, %v8337
        %v8465 = vsub.f32 %v8079, %v8341
        %v8466 = vsub.f32 %v8168, %v8341
        %v8467 = vsub.f32 %v8257, %v8341
        %v8468 = vsub.f32 %v8082, %v8345
        %v8469 = vsub.f32 %v8171, %v8345
        %v8470 = vsub.f32 %v8260, %v8345
        %v8471 = vsub.f32 %v8084, %v8349
        %v8472 = vsub.f32 %v8173, %v8349
        %v8473 = vsub.f32 %v8262, %v8349
        %v8474 = vsub.f32 %v8087, %v8353
        %v8475 = vsub.f32 %v8176, %v8353
        %v8476 = vsub.f32 %v8265, %v8353
        %v8477 = vsub.f32 %v8089, %v8357
        %v8478 = vsub.f32 %v8178, %v8357
        %v8479 = vsub.f32 %v8267, %v8357
        %v8480 = vsub.f32 %v8092, %v8361
        %v8481 = vsub.f32 %v8181, %v8361
        %v8482 = vsub.f32 %v8270, %v8361
        %v8483 = vsub.f32 %v8094, %v8365
        %v8484 = vsub.f32 %v8183, %v8365
        %v8485 = vsub.f32 %v8272, %v8365
        %v8486 = vsub.f32 %v8097, %v8369
        %v8487 = vsub.f32 %v8186, %v8369
        %v8488 = vsub.f32 %v8275, %v8369
        %v8489 = vsub.f32 %v8099, %v8373
        %v8490 = vsub.f32 %v8188, %v8373
        %v8491 = vsub.f32 %v8277, %v8373
        %v8492 = vsub.f32 %v8102, %v8377
        %v8493 = vsub.f32 %v8191, %v8377
        %v8494 = vsub.f32 %v8280, %v8377
        %v8495 = vsub.f32 %v8104, %v8381
        %v8496 = vsub.f32 %v8193, %v8381
        %v8497 = vsub.f32 %v8282, %v8381
        %v8498 = vsub.f32 %v8107, %v8385
        %v8499 = vsub.f32 %v8196, %v8385
        %v8500 = vsub.f32 %v8285, %v8385
        %v8501 = vsub.f32 %v8109, %v8389
        %v8502 = vsub.f32 %v8198, %v8389
        %v8503 = vsub.f32 %v8287, %v8389
        %v8504 = vsub.f32 %v8112, %v8393
        %v8505 = vsub.f32 %v8201, %v8393
        %v8506 = vsub.f32 %v8290, %v8393
        %v8507 = vsub.f32 %v8114, %v8397
        %v8508 = vsub.f32 %v8203, %v8397
        %v8509 = vsub.f32 %v8292, %v8397
        %v8510 = vsub.f32 %v8117, %v8401
        %v8511 = vsub.f32 %v8206, %v8401
        %v8512 = vsub.f32 %v8295, %v8401
        %v8513 = vsub.f32 %v8119, %v8405
        %v8514 = vsub.f32 %v8208, %v8405
        %v8515 = vsub.f32 %v8297, %v8405
        %v8516 = vsub.f32 %v8122, %v8409
        %v8517 = vsub.f32 %v8211, %v8409
        %v8518 = vsub.f32 %v8300, %v8409
        %v8519 = vsub.f32 %v8124, %v8413
        %v8520 = vsub.f32 %v8213, %v8413
        %v8521 = vsub.f32 %v8302, %v8413
        %v8522 = vsub.f32 %v8127, %v8417
        %v8523 = vsub.f32 %v8216, %v8417
        %v8524 = vsub.f32 %v8305, %v8417
        %v8525 = vsub.f32 %v8129, %v8421
        %v8526 = vsub.f32 %v8218, %v8421
        %v8527 = vsub.f32 %v8307, %v8421
        %v8528 = vsub.f32 %v8132, %v8425
        %v8529 = vsub.f32 %v8221, %v8425
        %v8530 = vsub.f32 %v8310, %v8425
        %v8531 = vsub.f32 %v8134, %v8429
        %v8532 = vsub.f32 %v8223, %v8429
        %v8533 = vsub.f32 %v8312, %v8429
        %v8534 = vsub.f32 %v8137, %v8433
        %v8535 = vsub.f32 %v8226, %v8433
        %v8536 = vsub.f32 %v8315, %v8433
        %v8537 = vsub.f32 %v8139, %v8437
        %v8538 = vsub.f32 %v8228, %v8437
        %v8539 = vsub.f32 %v8317, %v8437
        %v8540 = vsub.f32 %v8142, %v8441
        %v8541 = vsub.f32 %v8231, %v8441
        %v8542 = vsub.f32 %v8320, %v8441
        %v8543 = vsub.f32 %v8144, %v8445
        %v8544 = vsub.f32 %v8233, %v8445
        %v8545 = vsub.f32 %v8322, %v8445
        %v8546 = vsub.f32 %v8147, %v8449
        %v8547 = vsub.f32 %v8236, %v8449
        %v8548 = vsub.f32 %v8325, %v8449
        %v8549 = vsub.f32 %v8149, %v8453
        %v8550 = vsub.f32 %v8238, %v8453
        %v8551 = vsub.f32 %v8327, %v8453
        %v8552 = vsub.f32 %v8152, %v8457
        %v8553 = vsub.f32 %v8241, %v8457
        %v8554 = vsub.f32 %v8330, %v8457
        %v8555 = vsub.f32 %v8154, %v8461
        %v8556 = vsub.f32 %v8243, %v8461
        %v8557 = vsub.f32 %v8332, %v8461
        %v8558 = vmul.f32 %v8462, 1.442695
        %v8559 = vpow.pop %v8558
        %v8560 = vmul.f32 %v8463, 1.442695
        %v8561 = vpow.pop %v8560
        %v8562 = vmul.f32 %v8464, 1.442695
        %v8563 = vpow.pop %v8562
        %v8564 = vmul.f32 %v8465, 1.442695
        %v8565 = vpow.pop %v8564
        %v8566 = vmul.f32 %v8466, 1.442695
        %v8567 = vpow.pop %v8566
        %v8568 = vmul.f32 %v8467, 1.442695
        %v8569 = vpow.pop %v8568
        %v8570 = vmul.f32 %v8468, 1.442695
        %v8571 = vpow.pop %v8570
        %v8572 = vmul.f32 %v8469, 1.442695
        %v8573 = vpow.pop %v8572
        %v8574 = vmul.f32 %v8470, 1.442695
        %v8575 = vpow.pop %v8574
        %v8576 = vmul.f32 %v8471, 1.442695
        %v8577 = vpow.pop %v8576
        %v8578 = vmul.f32 %v8472, 1.442695
        %v8579 = vpow.pop %v8578
        %v8580 = vmul.f32 %v8473, 1.442695
        %v8581 = vpow.pop %v8580
        %v8582 = vmul.f32 %v8474, 1.442695
        %v8583 = vpow.pop %v8582
        %v8584 = vmul.f32 %v8475, 1.442695
        %v8585 = vpow.pop %v8584
        %v8586 = vmul.f32 %v8476, 1.442695
        %v8587 = vpow.pop %v8586
        %v8588 = vmul.f32 %v8477, 1.442695
        %v8589 = vpow.pop %v8588
        %v8590 = vmul.f32 %v8478, 1.442695
        %v8591 = vpow.pop %v8590
        %v8592 = vmul.f32 %v8479, 1.442695
        %v8593 = vpow.pop %v8592
        %v8594 = vmul.f32 %v8480, 1.442695
        %v8595 = vpow.pop %v8594
        %v8596 = vmul.f32 %v8481, 1.442695
        %v8597 = vpow.pop %v8596
        %v8598 = vmul.f32 %v8482, 1.442695
        %v8599 = vpow.pop %v8598
        %v8600 = vmul.f32 %v8483, 1.442695
        %v8601 = vpow.pop %v8600
        %v8602 = vmul.f32 %v8484, 1.442695
        %v8603 = vpow.pop %v8602
        %v8604 = vmul.f32 %v8485, 1.442695
        %v8605 = vpow.pop %v8604
        %v8606 = vmul.f32 %v8486, 1.442695
        %v8607 = vpow.pop %v8606
        %v8608 = vmul.f32 %v8487, 1.442695
        %v8609 = vpow.pop %v8608
        %v8610 = vmul.f32 %v8488, 1.442695
        %v8611 = vpow.pop %v8610
        %v8612 = vmul.f32 %v8489, 1.442695
        %v8613 = vpow.pop %v8612
        %v8614 = vmul.f32 %v8490, 1.442695
        %v8615 = vpow.pop %v8614
        %v8616 = vmul.f32 %v8491, 1.442695
        %v8617 = vpow.pop %v8616
        %v8618 = vmul.f32 %v8492, 1.442695
        %v8619 = vpow.pop %v8618
        %v8620 = vmul.f32 %v8493, 1.442695
        %v8621 = vpow.pop %v8620
        %v8622 = vmul.f32 %v8494, 1.442695
        %v8623 = vpow.pop %v8622
        %v8624 = vmul.f32 %v8495, 1.442695
        %v8625 = vpow.pop %v8624
        %v8626 = vmul.f32 %v8496, 1.442695
        %v8627 = vpow.pop %v8626
        %v8628 = vmul.f32 %v8497, 1.442695
        %v8629 = vpow.pop %v8628
        %v8630 = vmul.f32 %v8498, 1.442695
        %v8631 = vpow.pop %v8630
        %v8632 = vmul.f32 %v8499, 1.442695
        %v8633 = vpow.pop %v8632
        %v8634 = vmul.f32 %v8500, 1.442695
        %v8635 = vpow.pop %v8634
        %v8636 = vmul.f32 %v8501, 1.442695
        %v8637 = vpow.pop %v8636
        %v8638 = vmul.f32 %v8502, 1.442695
        %v8639 = vpow.pop %v8638
        %v8640 = vmul.f32 %v8503, 1.442695
        %v8641 = vpow.pop %v8640
        %v8642 = vmul.f32 %v8504, 1.442695
        %v8643 = vpow.pop %v8642
        %v8644 = vmul.f32 %v8505, 1.442695
        %v8645 = vpow.pop %v8644
        %v8646 = vmul.f32 %v8506, 1.442695
        %v8647 = vpow.pop %v8646
        %v8648 = vmul.f32 %v8507, 1.442695
        %v8649 = vpow.pop %v8648
        %v8650 = vmul.f32 %v8508, 1.442695
        %v8651 = vpow.pop %v8650
        %v8652 = vmul.f32 %v8509, 1.442695
        %v8653 = vpow.pop %v8652
        %v8654 = vmul.f32 %v8510, 1.442695
        %v8655 = vpow.pop %v8654
        %v8656 = vmul.f32 %v8511, 1.442695
        %v8657 = vpow.pop %v8656
        %v8658 = vmul.f32 %v8512, 1.442695
        %v8659 = vpow.pop %v8658
        %v8660 = vmul.f32 %v8513, 1.442695
        %v8661 = vpow.pop %v8660
        %v8662 = vmul.f32 %v8514, 1.442695
        %v8663 = vpow.pop %v8662
        %v8664 = vmul.f32 %v8515, 1.442695
        %v8665 = vpow.pop %v8664
        %v8666 = vmul.f32 %v8516, 1.442695
        %v8667 = vpow.pop %v8666
        %v8668 = vmul.f32 %v8517, 1.442695
        %v8669 = vpow.pop %v8668
        %v8670 = vmul.f32 %v8518, 1.442695
        %v8671 = vpow.pop %v8670
        %v8672 = vmul.f32 %v8519, 1.442695
        %v8673 = vpow.pop %v8672
        %v8674 = vmul.f32 %v8520, 1.442695
        %v8675 = vpow.pop %v8674
        %v8676 = vmul.f32 %v8521, 1.442695
        %v8677 = vpow.pop %v8676
        %v8678 = vmul.f32 %v8522, 1.442695
        %v8679 = vpow.pop %v8678
        %v8680 = vmul.f32 %v8523, 1.442695
        %v8681 = vpow.pop %v8680
        %v8682 = vmul.f32 %v8524, 1.442695
        %v8683 = vpow.pop %v8682
        %v8684 = vmul.f32 %v8525, 1.442695
        %v8685 = vpow.pop %v8684
        %v8686 = vmul.f32 %v8526, 1.442695
        %v8687 = vpow.pop %v8686
        %v8688 = vmul.f32 %v8527, 1.442695
        %v8689 = vpow.pop %v8688
        %v8690 = vmul.f32 %v8528, 1.442695
        %v8691 = vpow.pop %v8690
        %v8692 = vmul.f32 %v8529, 1.442695
        %v8693 = vpow.pop %v8692
        %v8694 = vmul.f32 %v8530, 1.442695
        %v8695 = vpow.pop %v8694
        %v8696 = vmul.f32 %v8531, 1.442695
        %v8697 = vpow.pop %v8696
        %v8698 = vmul.f32 %v8532, 1.442695
        %v8699 = vpow.pop %v8698
        %v8700 = vmul.f32 %v8533, 1.442695
        %v8701 = vpow.pop %v8700
        %v8702 = vmul.f32 %v8534, 1.442695
        %v8703 = vpow.pop %v8702
        %v8704 = vmul.f32 %v8535, 1.442695
        %v8705 = vpow.pop %v8704
        %v8706 = vmul.f32 %v8536, 1.442695
        %v8707 = vpow.pop %v8706
        %v8708 = vmul.f32 %v8537, 1.442695
        %v8709 = vpow.pop %v8708
        %v8710 = vmul.f32 %v8538, 1.442695
        %v8711 = vpow.pop %v8710
        %v8712 = vmul.f32 %v8539, 1.442695
        %v8713 = vpow.pop %v8712
        %v8714 = vmul.f32 %v8540, 1.442695
        %v8715 = vpow.pop %v8714
        %v8716 = vmul.f32 %v8541, 1.442695
        %v8717 = vpow.pop %v8716
        %v8718 = vmul.f32 %v8542, 1.442695
        %v8719 = vpow.pop %v8718
        %v8720 = vmul.f32 %v8543, 1.442695
        %v8721 = vpow.pop %v8720
        %v8722 = vmul.f32 %v8544, 1.442695
        %v8723 = vpow.pop %v8722
        %v8724 = vmul.f32 %v8545, 1.442695
        %v8725 = vpow.pop %v8724
        %v8726 = vmul.f32 %v8546, 1.442695
        %v8727 = vpow.pop %v8726
        %v8728 = vmul.f32 %v8547, 1.442695
        %v8729 = vpow.pop %v8728
        %v8730 = vmul.f32 %v8548, 1.442695
        %v8731 = vpow.pop %v8730
        %v8732 = vmul.f32 %v8549, 1.442695
        %v8733 = vpow.pop %v8732
        %v8734 = vmul.f32 %v8550, 1.442695
        %v8735 = vpow.pop %v8734
        %v8736 = vmul.f32 %v8551, 1.442695
        %v8737 = vpow.pop %v8736
        %v8738 = vmul.f32 %v8552, 1.442695
        %v8739 = vpow.pop %v8738
        %v8740 = vmul.f32 %v8553, 1.442695
        %v8741 = vpow.pop %v8740
        %v8742 = vmul.f32 %v8554, 1.442695
        %v8743 = vpow.pop %v8742
        %v8744 = vmul.f32 %v8555, 1.442695
        %v8745 = vpow.pop %v8744
        %v8746 = vmul.f32 %v8556, 1.442695
        %v8747 = vpow.pop %v8746
        %v8748 = vmul.f32 %v8557, 1.442695
        %v8749 = vpow.pop %v8748
        %v8750 = vadd.f32 %v8559, %v8561
        %v8751 = vadd.f32 %v8750, %v8563
        %8752 = vadd.xlane.f32.xlu0 %v8751
        %v8753 = vpop.xlane.xlu0 %8752
        %v8754 = vadd.f32 %v8565, %v8567
        %v8755 = vadd.f32 %v8754, %v8569
        %8756 = vadd.xlane.f32.xlu0 %v8755
        %v8757 = vpop.xlane.xlu0 %8756
        %v8758 = vadd.f32 %v8571, %v8573
        %v8759 = vadd.f32 %v8758, %v8575
        %8760 = vadd.xlane.f32.xlu0 %v8759
        %v8761 = vpop.xlane.xlu0 %8760
        %v8762 = vadd.f32 %v8577, %v8579
        %v8763 = vadd.f32 %v8762, %v8581
        %8764 = vadd.xlane.f32.xlu0 %v8763
        %v8765 = vpop.xlane.xlu0 %8764
        %v8766 = vadd.f32 %v8583, %v8585
        %v8767 = vadd.f32 %v8766, %v8587
        %8768 = vadd.xlane.f32.xlu0 %v8767
        %v8769 = vpop.xlane.xlu0 %8768
        %v8770 = vadd.f32 %v8589, %v8591
        %v8771 = vadd.f32 %v8770, %v8593
        %8772 = vadd.xlane.f32.xlu0 %v8771
        %v8773 = vpop.xlane.xlu0 %8772
        %v8774 = vadd.f32 %v8595, %v8597
        %v8775 = vadd.f32 %v8774, %v8599
        %8776 = vadd.xlane.f32.xlu0 %v8775
        %v8777 = vpop.xlane.xlu0 %8776
        %v8778 = vadd.f32 %v8601, %v8603
        %v8779 = vadd.f32 %v8778, %v8605
        %8780 = vadd.xlane.f32.xlu0 %v8779
        %v8781 = vpop.xlane.xlu0 %8780
        %v8782 = vadd.f32 %v8607, %v8609
        %v8783 = vadd.f32 %v8782, %v8611
        %8784 = vadd.xlane.f32.xlu0 %v8783
        %v8785 = vpop.xlane.xlu0 %8784
        %v8786 = vadd.f32 %v8613, %v8615
        %v8787 = vadd.f32 %v8786, %v8617
        %8788 = vadd.xlane.f32.xlu0 %v8787
        %v8789 = vpop.xlane.xlu0 %8788
        %v8790 = vadd.f32 %v8619, %v8621
        %v8791 = vadd.f32 %v8790, %v8623
        %8792 = vadd.xlane.f32.xlu0 %v8791
        %v8793 = vpop.xlane.xlu0 %8792
        %v8794 = vadd.f32 %v8625, %v8627
        %v8795 = vadd.f32 %v8794, %v8629
        %8796 = vadd.xlane.f32.xlu0 %v8795
        %v8797 = vpop.xlane.xlu0 %8796
        %v8798 = vadd.f32 %v8631, %v8633
        %v8799 = vadd.f32 %v8798, %v8635
        %8800 = vadd.xlane.f32.xlu0 %v8799
        %v8801 = vpop.xlane.xlu0 %8800
        %v8802 = vadd.f32 %v8637, %v8639
        %v8803 = vadd.f32 %v8802, %v8641
        %8804 = vadd.xlane.f32.xlu0 %v8803
        %v8805 = vpop.xlane.xlu0 %8804
        %v8806 = vadd.f32 %v8643, %v8645
        %v8807 = vadd.f32 %v8806, %v8647
        %8808 = vadd.xlane.f32.xlu0 %v8807
        %v8809 = vpop.xlane.xlu0 %8808
        %v8810 = vadd.f32 %v8649, %v8651
        %v8811 = vadd.f32 %v8810, %v8653
        %8812 = vadd.xlane.f32.xlu0 %v8811
        %v8813 = vpop.xlane.xlu0 %8812
        %v8814 = vadd.f32 %v8655, %v8657
        %v8815 = vadd.f32 %v8814, %v8659
        %8816 = vadd.xlane.f32.xlu0 %v8815
        %v8817 = vpop.xlane.xlu0 %8816
        %v8818 = vadd.f32 %v8661, %v8663
        %v8819 = vadd.f32 %v8818, %v8665
        %8820 = vadd.xlane.f32.xlu0 %v8819
        %v8821 = vpop.xlane.xlu0 %8820
        %v8822 = vadd.f32 %v8667, %v8669
        %v8823 = vadd.f32 %v8822, %v8671
        %8824 = vadd.xlane.f32.xlu0 %v8823
        %v8825 = vpop.xlane.xlu0 %8824
        %v8826 = vadd.f32 %v8673, %v8675
        %v8827 = vadd.f32 %v8826, %v8677
        %8828 = vadd.xlane.f32.xlu0 %v8827
        %v8829 = vpop.xlane.xlu0 %8828
        %v8830 = vadd.f32 %v8679, %v8681
        %v8831 = vadd.f32 %v8830, %v8683
        %8832 = vadd.xlane.f32.xlu0 %v8831
        %v8833 = vpop.xlane.xlu0 %8832
        %v8834 = vadd.f32 %v8685, %v8687
        %v8835 = vadd.f32 %v8834, %v8689
        %8836 = vadd.xlane.f32.xlu0 %v8835
        %v8837 = vpop.xlane.xlu0 %8836
        %v8838 = vadd.f32 %v8691, %v8693
        %v8839 = vadd.f32 %v8838, %v8695
        %8840 = vadd.xlane.f32.xlu0 %v8839
        %v8841 = vpop.xlane.xlu0 %8840
        %v8842 = vadd.f32 %v8697, %v8699
        %v8843 = vadd.f32 %v8842, %v8701
        %8844 = vadd.xlane.f32.xlu0 %v8843
        %v8845 = vpop.xlane.xlu0 %8844
        %v8846 = vadd.f32 %v8703, %v8705
        %v8847 = vadd.f32 %v8846, %v8707
        %8848 = vadd.xlane.f32.xlu0 %v8847
        %v8849 = vpop.xlane.xlu0 %8848
        %v8850 = vadd.f32 %v8709, %v8711
        %v8851 = vadd.f32 %v8850, %v8713
        %8852 = vadd.xlane.f32.xlu0 %v8851
        %v8853 = vpop.xlane.xlu0 %8852
        %v8854 = vadd.f32 %v8715, %v8717
        %v8855 = vadd.f32 %v8854, %v8719
        %8856 = vadd.xlane.f32.xlu0 %v8855
        %v8857 = vpop.xlane.xlu0 %8856
        %v8858 = vadd.f32 %v8721, %v8723
        %v8859 = vadd.f32 %v8858, %v8725
        %8860 = vadd.xlane.f32.xlu0 %v8859
        %v8861 = vpop.xlane.xlu0 %8860
        %v8862 = vadd.f32 %v8727, %v8729
        %v8863 = vadd.f32 %v8862, %v8731
        %8864 = vadd.xlane.f32.xlu0 %v8863
        %v8865 = vpop.xlane.xlu0 %8864
        %v8866 = vadd.f32 %v8733, %v8735
        %v8867 = vadd.f32 %v8866, %v8737
        %8868 = vadd.xlane.f32.xlu0 %v8867
        %v8869 = vpop.xlane.xlu0 %8868
        %v8870 = vadd.f32 %v8739, %v8741
        %v8871 = vadd.f32 %v8870, %v8743
        %8872 = vadd.xlane.f32.xlu0 %v8871
        %v8873 = vpop.xlane.xlu0 %8872
        %v8874 = vadd.f32 %v8745, %v8747
        %v8875 = vadd.f32 %v8874, %v8749
        %8876 = vadd.xlane.f32.xlu0 %v8875
        %v8877 = vpop.xlane.xlu0 %8876
        %v8878 = vrcp.pop %v8753
        %v8879 = vrcp.pop %v8757
        %v8880 = vrcp.pop %v8761
        %v8881 = vrcp.pop %v8765
        %v8882 = vrcp.pop %v8769
        %v8883 = vrcp.pop %v8773
        %v8884 = vrcp.pop %v8777
        %v8885 = vrcp.pop %v8781
        %v8886 = vrcp.pop %v8785
        %v8887 = vrcp.pop %v8789
        %v8888 = vrcp.pop %v8793
        %v8889 = vrcp.pop %v8797
        %v8890 = vrcp.pop %v8801
        %v8891 = vrcp.pop %v8805
        %v8892 = vrcp.pop %v8809
        %v8893 = vrcp.pop %v8813
        %v8894 = vrcp.pop %v8817
        %v8895 = vrcp.pop %v8821
        %v8896 = vrcp.pop %v8825
        %v8897 = vrcp.pop %v8829
        %v8898 = vrcp.pop %v8833
        %v8899 = vrcp.pop %v8837
        %v8900 = vrcp.pop %v8841
        %v8901 = vrcp.pop %v8845
        %v8902 = vrcp.pop %v8849
        %v8903 = vrcp.pop %v8853
        %v8904 = vrcp.pop %v8857
        %v8905 = vrcp.pop %v8861
        %v8906 = vrcp.pop %v8865
        %v8907 = vrcp.pop %v8869
        %v8908 = vrcp.pop %v8873
        %v8909 = vrcp.pop %v8877
        %v8910 = vmul.f32 %v8559, %v8878
        %v8911 = vmul.f32 %v8561, %v8878
        %v8912 = vmul.f32 %v8563, %v8878
        %v8913 = vmul.f32 %v8565, %v8879
        %v8914 = vmul.f32 %v8567, %v8879
        %v8915 = vmul.f32 %v8569, %v8879
        %v8916 = vmul.f32 %v8571, %v8880
        %v8917 = vmul.f32 %v8573, %v8880
        %v8918 = vmul.f32 %v8575, %v8880
        %v8919 = vmul.f32 %v8577, %v8881
        %v8920 = vmul.f32 %v8579, %v8881
        %v8921 = vmul.f32 %v8581, %v8881
        %v8922 = vmul.f32 %v8583, %v8882
        %v8923 = vmul.f32 %v8585, %v8882
        %v8924 = vmul.f32 %v8587, %v8882
        %v8925 = vmul.f32 %v8589, %v8883
        %v8926 = vmul.f32 %v8591, %v8883
        %v8927 = vmul.f32 %v8593, %v8883
        %v8928 = vmul.f32 %v8595, %v8884
        %v8929 = vmul.f32 %v8597, %v8884
        %v8930 = vmul.f32 %v8599, %v8884
        %v8931 = vmul.f32 %v8601, %v8885
        %v8932 = vmul.f32 %v8603, %v8885
        %v8933 = vmul.f32 %v8605, %v8885
        %v8934 = vmul.f32 %v8607, %v8886
        %v8935 = vmul.f32 %v8609, %v8886
        %v8936 = vmul.f32 %v8611, %v8886
        %v8937 = vmul.f32 %v8613, %v8887
        %v8938 = vmul.f32 %v8615, %v8887
        %v8939 = vmul.f32 %v8617, %v8887
        %v8940 = vmul.f32 %v8619, %v8888
        %v8941 = vmul.f32 %v8621, %v8888
        %v8942 = vmul.f32 %v8623, %v8888
        %v8943 = vmul.f32 %v8625, %v8889
        %v8944 = vmul.f32 %v8627, %v8889
        %v8945 = vmul.f32 %v8629, %v8889
        %v8946 = vmul.f32 %v8631, %v8890
        %v8947 = vmul.f32 %v8633, %v8890
        %v8948 = vmul.f32 %v8635, %v8890
        %v8949 = vmul.f32 %v8637, %v8891
        %v8950 = vmul.f32 %v8639, %v8891
        %v8951 = vmul.f32 %v8641, %v8891
        %v8952 = vmul.f32 %v8643, %v8892
        %v8953 = vmul.f32 %v8645, %v8892
        %v8954 = vmul.f32 %v8647, %v8892
        %v8955 = vmul.f32 %v8649, %v8893
        %v8956 = vmul.f32 %v8651, %v8893
        %v8957 = vmul.f32 %v8653, %v8893
        %v8958 = vmul.f32 %v8655, %v8894
        %v8959 = vmul.f32 %v8657, %v8894
        %v8960 = vmul.f32 %v8659, %v8894
        %v8961 = vmul.f32 %v8661, %v8895
        %v8962 = vmul.f32 %v8663, %v8895
        %v8963 = vmul.f32 %v8665, %v8895
        %v8964 = vmul.f32 %v8667, %v8896
        %v8965 = vmul.f32 %v8669, %v8896
        %v8966 = vmul.f32 %v8671, %v8896
        %v8967 = vmul.f32 %v8673, %v8897
        %v8968 = vmul.f32 %v8675, %v8897
        %v8969 = vmul.f32 %v8677, %v8897
        %v8970 = vmul.f32 %v8679, %v8898
        %v8971 = vmul.f32 %v8681, %v8898
        %v8972 = vmul.f32 %v8683, %v8898
        %v8973 = vmul.f32 %v8685, %v8899
        %v8974 = vmul.f32 %v8687, %v8899
        %v8975 = vmul.f32 %v8689, %v8899
        %v8976 = vmul.f32 %v8691, %v8900
        %v8977 = vmul.f32 %v8693, %v8900
        %v8978 = vmul.f32 %v8695, %v8900
        %v8979 = vmul.f32 %v8697, %v8901
        %v8980 = vmul.f32 %v8699, %v8901
        %v8981 = vmul.f32 %v8701, %v8901
        %v8982 = vmul.f32 %v8703, %v8902
        %v8983 = vmul.f32 %v8705, %v8902
        %v8984 = vmul.f32 %v8707, %v8902
        %v8985 = vmul.f32 %v8709, %v8903
        %v8986 = vmul.f32 %v8711, %v8903
        %v8987 = vmul.f32 %v8713, %v8903
        %v8988 = vmul.f32 %v8715, %v8904
        %v8989 = vmul.f32 %v8717, %v8904
        %v8990 = vmul.f32 %v8719, %v8904
        %v8991 = vmul.f32 %v8721, %v8905
        %v8992 = vmul.f32 %v8723, %v8905
        %v8993 = vmul.f32 %v8725, %v8905
        %v8994 = vmul.f32 %v8727, %v8906
        %v8995 = vmul.f32 %v8729, %v8906
        %v8996 = vmul.f32 %v8731, %v8906
        %v8997 = vmul.f32 %v8733, %v8907
        %v8998 = vmul.f32 %v8735, %v8907
        %v8999 = vmul.f32 %v8737, %v8907
        %v9000 = vmul.f32 %v8739, %v8908
        %v9001 = vmul.f32 %v8741, %v8908
        %v9002 = vmul.f32 %v8743, %v8908
        %v9003 = vmul.f32 %v8745, %v8909
        %v9004 = vmul.f32 %v8747, %v8909
        %v9005 = vmul.f32 %v8749, %v8909
        %v9006 = vpack.c.bf16 %v8913, %v8910
        %v9007 = vpack.c.bf16 %v8914, %v8911
        %v9008 = vpack.c.bf16 %v8915, %v8912
        %v9009 = vpack.c.bf16 %v8919, %v8916
        %v9010 = vpack.c.bf16 %v8920, %v8917
        %v9011 = vpack.c.bf16 %v8921, %v8918
        %v9012 = vpack.c.bf16 %v8925, %v8922
        %v9013 = vpack.c.bf16 %v8926, %v8923
        %v9014 = vpack.c.bf16 %v8927, %v8924
        %v9015 = vpack.c.bf16 %v8931, %v8928
        %v9016 = vpack.c.bf16 %v8932, %v8929
        %v9017 = vpack.c.bf16 %v8933, %v8930
        %v9018 = vpack.c.bf16 %v8937, %v8934
        %v9019 = vpack.c.bf16 %v8938, %v8935
        %v9020 = vpack.c.bf16 %v8939, %v8936
        %v9021 = vpack.c.bf16 %v8943, %v8940
        %v9022 = vpack.c.bf16 %v8944, %v8941
        %v9023 = vpack.c.bf16 %v8945, %v8942
        %v9024 = vpack.c.bf16 %v8949, %v8946
        %v9025 = vpack.c.bf16 %v8950, %v8947
        %v9026 = vpack.c.bf16 %v8951, %v8948
        %v9027 = vpack.c.bf16 %v8955, %v8952
        %v9028 = vpack.c.bf16 %v8956, %v8953
        %v9029 = vpack.c.bf16 %v8957, %v8954
        %v9030 = vpack.c.bf16 %v8961, %v8958
        %v9031 = vpack.c.bf16 %v8962, %v8959
        %v9032 = vpack.c.bf16 %v8963, %v8960
        %v9033 = vpack.c.bf16 %v8967, %v8964
        %v9034 = vpack.c.bf16 %v8968, %v8965
        %v9035 = vpack.c.bf16 %v8969, %v8966
        %v9036 = vpack.c.bf16 %v8973, %v8970
        %v9037 = vpack.c.bf16 %v8974, %v8971
        %v9038 = vpack.c.bf16 %v8975, %v8972
        %v9039 = vpack.c.bf16 %v8979, %v8976
        %v9040 = vpack.c.bf16 %v8980, %v8977
        %v9041 = vpack.c.bf16 %v8981, %v8978
        %v9042 = vpack.c.bf16 %v8985, %v8982
        %v9043 = vpack.c.bf16 %v8986, %v8983
        %v9044 = vpack.c.bf16 %v8987, %v8984
        %v9045 = vpack.c.bf16 %v8991, %v8988
        %v9046 = vpack.c.bf16 %v8992, %v8989
        %v9047 = vpack.c.bf16 %v8993, %v8990
        %v9048 = vpack.c.bf16 %v8997, %v8994
        %v9049 = vpack.c.bf16 %v8998, %v8995
        %v9050 = vpack.c.bf16 %v8999, %v8996
        %v9051 = vpack.c.bf16 %v9003, %v9000
        %v9052 = vpack.c.bf16 %v9004, %v9001
        %v9053 = vpack.c.bf16 %v9005, %v9002
        %v9054 = vunpack.c.h.b16 %v3100
        %v9055 = vunpack.c.h.b16 %v3102
        %v9056 = vunpack.c.h.b16 %v3104
        %v9057 = vunpack.c.h.b16 %v3106
        %v9058 = vunpack.c.h.b16 %v3108
        %v9059 = vunpack.c.h.b16 %v3110
        %v9060 = vunpack.c.h.b16 %v3112
        %v9061 = vunpack.c.h.b16 %v3114
        %v9062 = vunpack.c.h.b16 %v3116
        %v9063 = vunpack.c.h.b16 %v3118
        %v9064 = vunpack.c.h.b16 %v3120
        %v9065 = vunpack.c.h.b16 %v3122
        %v9066 = vunpack.c.h.b16 %v3124
        %v9067 = vunpack.c.h.b16 %v3126
        %v9068 = vunpack.c.h.b16 %v3128
        %v9069 = vunpack.c.h.b16 %v3130
        %v9070 = vunpack.c.h.b16 %v3132
        %v9071 = vunpack.c.h.b16 %v3134
        %v9072 = vunpack.c.h.b16 %v3136
        %v9073 = vunpack.c.h.b16 %v3138
        %v9074 = vunpack.c.h.b16 %v3140
        %v9075 = vunpack.c.h.b16 %v3142
        %v9076 = vunpack.c.h.b16 %v3144
        %v9077 = vunpack.c.h.b16 %v3146
        %v9078 = vunpack.c.h.b16 %v3148
        %v9079 = vunpack.c.h.b16 %v3150
        %v9080 = vunpack.c.h.b16 %v3152
        %v9081 = vunpack.c.h.b16 %v3154
        %v9082 = vunpack.c.h.b16 %v3156
        %v9083 = vunpack.c.h.b16 %v3158
        %v9084 = vunpack.c.h.b16 %v3160
        %v9085 = vunpack.c.h.b16 %v3162
        %v9086 = vunpack.c.h.b16 %v3164
        %v9087 = vunpack.c.h.b16 %v3166
        %v9088 = vunpack.c.h.b16 %v3168
        %v9089 = vunpack.c.h.b16 %v3170
        %v9090 = vunpack.c.h.b16 %v3172
        %v9091 = vunpack.c.h.b16 %v3174
        %v9092 = vunpack.c.h.b16 %v3176
        %v9093 = vunpack.c.h.b16 %v3178
        %v9094 = vunpack.c.h.b16 %v3180
        %v9095 = vunpack.c.h.b16 %v3182
        %v9096 = vunpack.c.h.b16 %v3184
        %v9097 = vunpack.c.h.b16 %v3186
        %v9098 = vunpack.c.h.b16 %v3188
        %v9099 = vunpack.c.h.b16 %v3190
        %v9100 = vunpack.c.h.b16 %v3192
        %v9101 = vunpack.c.h.b16 %v3194
        %v9102 = vpack.c.b16 %v9055, %v9054
        %v9103 = vpack.c.b16 %v9057, %v9056
        %v9104 = vpack.c.b16 %v9059, %v9058
        %v9105 = vpack.c.b16 %v9061, %v9060
        %v9106 = vpack.c.b16 %v9063, %v9062
        %v9107 = vpack.c.b16 %v9065, %v9064
        %v9108 = vpack.c.b16 %v9067, %v9066
        %v9109 = vpack.c.b16 %v9069, %v9068
        %v9110 = vpack.c.b16 %v9071, %v9070
        %v9111 = vpack.c.b16 %v9073, %v9072
        %v9112 = vpack.c.b16 %v9075, %v9074
        %v9113 = vpack.c.b16 %v9077, %v9076
        %v9114 = vpack.c.b16 %v9079, %v9078
        %v9115 = vpack.c.b16 %v9081, %v9080
        %v9116 = vpack.c.b16 %v9083, %v9082
        %v9117 = vpack.c.b16 %v9085, %v9084
        %v9118 = vpack.c.b16 %v9087, %v9086
        %v9119 = vpack.c.b16 %v9089, %v9088
        %v9120 = vpack.c.b16 %v9091, %v9090
        %v9121 = vpack.c.b16 %v9093, %v9092
        %v9122 = vpack.c.b16 %v9095, %v9094
        %v9123 = vpack.c.b16 %v9097, %v9096
        %v9124 = vpack.c.b16 %v9099, %v9098
        %v9125 = vpack.c.b16 %v9101, %v9100
        %9150 = vmatpush.bf16.msra.mxu0 %v9109
        %9151 = vmatpush.bf16.msra.mxu0 %v9108
        %9152 = vmatpush.bf16.msra.mxu0 %v9107
        %9153 = vmatpush.bf16.msra.mxu0 %v9106
        %9154 = vmatpush.bf16.msra.mxu0 %v9105
        %9155 = vmatpush.bf16.msra.mxu0 %v9104
        %9156 = vmatpush.bf16.msra.mxu0 %v9103
        %9157 = vmatpush.bf16.msra.mxu0 %v9102
        %9158 = vmatmul.bf16.gmra.mxu0 %v9006
        %v9159 = vpop.f32.mrf.mxu0
        %v9160 = vadd.f32 0.0, %v9159
        %v9161 = vpop.f32.mrf.mxu0
        %v9162 = vadd.f32 0.0, %v9161
        %9163 = vmatmul.bf16.gmra.mxu0 %v9009
        %v9164 = vpop.f32.mrf.mxu0
        %v9165 = vadd.f32 0.0, %v9164
        %v9166 = vpop.f32.mrf.mxu0
        %v9167 = vadd.f32 0.0, %v9166
        %9168 = vmatmul.bf16.gmra.mxu0 %v9012
        %v9169 = vpop.f32.mrf.mxu0
        %v9170 = vadd.f32 0.0, %v9169
        %v9171 = vpop.f32.mrf.mxu0
        %v9172 = vadd.f32 0.0, %v9171
        %9173 = vmatmul.bf16.gmra.mxu0 %v9015
        %v9174 = vpop.f32.mrf.mxu0
        %v9175 = vadd.f32 0.0, %v9174
        %v9176 = vpop.f32.mrf.mxu0
        %v9177 = vadd.f32 0.0, %v9176
        %9178 = vmatmul.bf16.gmra.mxu0 %v9018
        %v9179 = vpop.f32.mrf.mxu0
        %v9180 = vadd.f32 0.0, %v9179
        %v9181 = vpop.f32.mrf.mxu0
        %v9182 = vadd.f32 0.0, %v9181
        %9183 = vmatmul.bf16.gmra.mxu0 %v9021
        %v9184 = vpop.f32.mrf.mxu0
        %v9185 = vadd.f32 0.0, %v9184
        %v9186 = vpop.f32.mrf.mxu0
        %v9187 = vadd.f32 0.0, %v9186
        %9188 = vmatmul.bf16.gmra.mxu0 %v9024
        %v9189 = vpop.f32.mrf.mxu0
        %v9190 = vadd.f32 0.0, %v9189
        %v9191 = vpop.f32.mrf.mxu0
        %v9192 = vadd.f32 0.0, %v9191
        %9193 = vmatmul.bf16.gmra.mxu0 %v9027
        %v9194 = vpop.f32.mrf.mxu0
        %v9195 = vadd.f32 0.0, %v9194
        %v9196 = vpop.f32.mrf.mxu0
        %v9197 = vadd.f32 0.0, %v9196
        %9198 = vmatmul.bf16.gmra.mxu0 %v9030
        %v9199 = vpop.f32.mrf.mxu0
        %v9200 = vadd.f32 0.0, %v9199
        %v9201 = vpop.f32.mrf.mxu0
        %v9202 = vadd.f32 0.0, %v9201
        %9203 = vmatmul.bf16.gmra.mxu0 %v9033
        %v9204 = vpop.f32.mrf.mxu0
        %v9205 = vadd.f32 0.0, %v9204
        %v9206 = vpop.f32.mrf.mxu0
        %v9207 = vadd.f32 0.0, %v9206
        %9208 = vmatmul.bf16.gmra.mxu0 %v9036
        %v9209 = vpop.f32.mrf.mxu0
        %v9210 = vadd.f32 0.0, %v9209
        %v9211 = vpop.f32.mrf.mxu0
        %v9212 = vadd.f32 0.0, %v9211
        %9213 = vmatmul.bf16.gmra.mxu0 %v9039
        %v9214 = vpop.f32.mrf.mxu0
        %v9215 = vadd.f32 0.0, %v9214
        %v9216 = vpop.f32.mrf.mxu0
        %v9217 = vadd.f32 0.0, %v9216
        %9218 = vmatmul.bf16.gmra.mxu0 %v9042
        %v9219 = vpop.f32.mrf.mxu0
        %v9220 = vadd.f32 0.0, %v9219
        %v9221 = vpop.f32.mrf.mxu0
        %v9222 = vadd.f32 0.0, %v9221
        %9223 = vmatmul.bf16.gmra.mxu0 %v9045
        %v9224 = vpop.f32.mrf.mxu0
        %v9225 = vadd.f32 0.0, %v9224
        %v9226 = vpop.f32.mrf.mxu0
        %v9227 = vadd.f32 0.0, %v9226
        %9228 = vmatmul.bf16.gmra.mxu0 %v9048
        %v9229 = vpop.f32.mrf.mxu0
        %v9230 = vadd.f32 0.0, %v9229
        %v9231 = vpop.f32.mrf.mxu0
        %v9232 = vadd.f32 0.0, %v9231
        %9233 = vmatmul.bf16.gmra.mxu0 %v9051
        %v9234 = vpop.f32.mrf.mxu0
        %v9235 = vadd.f32 0.0, %v9234
        %v9236 = vpop.f32.mrf.mxu0
        %v9237 = vadd.f32 0.0, %v9236
        %9238 = vdwg.mxu0
        %9239 = vmatpush.bf16.msra.mxu0 %v9117
        %9240 = vmatpush.bf16.msra.mxu0 %v9116
        %9241 = vmatpush.bf16.msra.mxu0 %v9115
        %9242 = vmatpush.bf16.msra.mxu0 %v9114
        %9243 = vmatpush.bf16.msra.mxu0 %v9113
        %9244 = vmatpush.bf16.msra.mxu0 %v9112
        %9245 = vmatpush.bf16.msra.mxu0 %v9111
        %9246 = vmatpush.bf16.msra.mxu0 %v9110
        %9247 = vmatmul.bf16.gmra.mxu0 %v9007
        %v9248 = vpop.f32.mrf.mxu0
        %v9249 = vadd.f32 %v9160, %v9248
        %v9250 = vpop.f32.mrf.mxu0
        %v9251 = vadd.f32 %v9162, %v9250
        %9252 = vmatmul.bf16.gmra.mxu0 %v9010
        %v9253 = vpop.f32.mrf.mxu0
        %v9254 = vadd.f32 %v9165, %v9253
        %v9255 = vpop.f32.mrf.mxu0
        %v9256 = vadd.f32 %v9167, %v9255
        %9257 = vmatmul.bf16.gmra.mxu0 %v9013
        %v9258 = vpop.f32.mrf.mxu0
        %v9259 = vadd.f32 %v9170, %v9258
        %v9260 = vpop.f32.mrf.mxu0
        %v9261 = vadd.f32 %v9172, %v9260
        %9262 = vmatmul.bf16.gmra.mxu0 %v9016
        %v9263 = vpop.f32.mrf.mxu0
        %v9264 = vadd.f32 %v9175, %v9263
        %v9265 = vpop.f32.mrf.mxu0
        %v9266 = vadd.f32 %v9177, %v9265
        %9267 = vmatmul.bf16.gmra.mxu0 %v9019
        %v9268 = vpop.f32.mrf.mxu0
        %v9269 = vadd.f32 %v9180, %v9268
        %v9270 = vpop.f32.mrf.mxu0
        %v9271 = vadd.f32 %v9182, %v9270
        %9272 = vmatmul.bf16.gmra.mxu0 %v9022
        %v9273 = vpop.f32.mrf.mxu0
        %v9274 = vadd.f32 %v9185, %v9273
        %v9275 = vpop.f32.mrf.mxu0
        %v9276 = vadd.f32 %v9187, %v9275
        %9277 = vmatmul.bf16.gmra.mxu0 %v9025
        %v9278 = vpop.f32.mrf.mxu0
        %v9279 = vadd.f32 %v9190, %v9278
        %v9280 = vpop.f32.mrf.mxu0
        %v9281 = vadd.f32 %v9192, %v9280
        %9282 = vmatmul.bf16.gmra.mxu0 %v9028
        %v9283 = vpop.f32.mrf.mxu0
        %v9284 = vadd.f32 %v9195, %v9283
        %v9285 = vpop.f32.mrf.mxu0
        %v9286 = vadd.f32 %v9197, %v9285
        %9287 = vmatmul.bf16.gmra.mxu0 %v9031
        %v9288 = vpop.f32.mrf.mxu0
        %v9289 = vadd.f32 %v9200, %v9288
        %v9290 = vpop.f32.mrf.mxu0
        %v9291 = vadd.f32 %v9202, %v9290
        %9292 = vmatmul.bf16.gmra.mxu0 %v9034
        %v9293 = vpop.f32.mrf.mxu0
        %v9294 = vadd.f32 %v9205, %v9293
        %v9295 = vpop.f32.mrf.mxu0
        %v9296 = vadd.f32 %v9207, %v9295
        %9297 = vmatmul.bf16.gmra.mxu0 %v9037
        %v9298 = vpop.f32.mrf.mxu0
        %v9299 = vadd.f32 %v9210, %v9298
        %v9300 = vpop.f32.mrf.mxu0
        %v9301 = vadd.f32 %v9212, %v9300
        %9302 = vmatmul.bf16.gmra.mxu0 %v9040
        %v9303 = vpop.f32.mrf.mxu0
        %v9304 = vadd.f32 %v9215, %v9303
        %v9305 = vpop.f32.mrf.mxu0
        %v9306 = vadd.f32 %v9217, %v9305
        %9307 = vmatmul.bf16.gmra.mxu0 %v9043
        %v9308 = vpop.f32.mrf.mxu0
        %v9309 = vadd.f32 %v9220, %v9308
        %v9310 = vpop.f32.mrf.mxu0
        %v9311 = vadd.f32 %v9222, %v9310
        %9312 = vmatmul.bf16.gmra.mxu0 %v9046
        %v9313 = vpop.f32.mrf.mxu0
        %v9314 = vadd.f32 %v9225, %v9313
        %v9315 = vpop.f32.mrf.mxu0
        %v9316 = vadd.f32 %v9227, %v9315
        %9317 = vmatmul.bf16.gmra.mxu0 %v9049
        %v9318 = vpop.f32.mrf.mxu0
        %v9319 = vadd.f32 %v9230, %v9318
        %v9320 = vpop.f32.mrf.mxu0
        %v9321 = vadd.f32 %v9232, %v9320
        %9322 = vmatmul.bf16.gmra.mxu0 %v9052
        %v9323 = vpop.f32.mrf.mxu0
        %v9324 = vadd.f32 %v9235, %v9323
        %v9325 = vpop.f32.mrf.mxu0
        %v9326 = vadd.f32 %v9237, %v9325
        %9327 = vdwg.mxu0
        %9328 = vmatpush.bf16.msra.mxu0 %v9125
        %9329 = vmatpush.bf16.msra.mxu0 %v9124
        %9330 = vmatpush.bf16.msra.mxu0 %v9123
        %9331 = vmatpush.bf16.msra.mxu0 %v9122
        %9332 = vmatpush.bf16.msra.mxu0 %v9121
        %9333 = vmatpush.bf16.msra.mxu0 %v9120
        %9334 = vmatpush.bf16.msra.mxu0 %v9119
        %9335 = vmatpush.bf16.msra.mxu0 %v9118
        %9336 = vmatmul.bf16.gmra.mxu0 %v9008
        %v9337 = vpop.f32.mrf.mxu0
        %v9338 = vadd.f32 %v9249, %v9337
        %v9339 = vpop.f32.mrf.mxu0
        %v9340 = vadd.f32 %v9251, %v9339
        %9341 = vmatmul.bf16.gmra.mxu0 %v9011
        %v9342 = vpop.f32.mrf.mxu0
        %v9343 = vadd.f32 %v9254, %v9342
        %v9344 = vpop.f32.mrf.mxu0
        %v9345 = vadd.f32 %v9256, %v9344
        %9346 = vmatmul.bf16.gmra.mxu0 %v9014
        %v9347 = vpop.f32.mrf.mxu0
        %v9348 = vadd.f32 %v9259, %v9347
        %v9349 = vpop.f32.mrf.mxu0
        %v9350 = vadd.f32 %v9261, %v9349
        %9351 = vmatmul.bf16.gmra.mxu0 %v9017
        %v9352 = vpop.f32.mrf.mxu0
        %v9353 = vadd.f32 %v9264, %v9352
        %v9354 = vpop.f32.mrf.mxu0
        %v9355 = vadd.f32 %v9266, %v9354
        %9356 = vmatmul.bf16.gmra.mxu0 %v9020
        %v9357 = vpop.f32.mrf.mxu0
        %v9358 = vadd.f32 %v9269, %v9357
        %v9359 = vpop.f32.mrf.mxu0
        %v9360 = vadd.f32 %v9271, %v9359
        %9361 = vmatmul.bf16.gmra.mxu0 %v9023
        %v9362 = vpop.f32.mrf.mxu0
        %v9363 = vadd.f32 %v9274, %v9362
        %v9364 = vpop.f32.mrf.mxu0
        %v9365 = vadd.f32 %v9276, %v9364
        %9366 = vmatmul.bf16.gmra.mxu0 %v9026
        %v9367 = vpop.f32.mrf.mxu0
        %v9368 = vadd.f32 %v9279, %v9367
        %v9369 = vpop.f32.mrf.mxu0
        %v9370 = vadd.f32 %v9281, %v9369
        %9371 = vmatmul.bf16.gmra.mxu0 %v9029
        %v9372 = vpop.f32.mrf.mxu0
        %v9373 = vadd.f32 %v9284, %v9372
        %v9374 = vpop.f32.mrf.mxu0
        %v9375 = vadd.f32 %v9286, %v9374
        %9376 = vmatmul.bf16.gmra.mxu0 %v9032
        %v9377 = vpop.f32.mrf.mxu0
        %v9378 = vadd.f32 %v9289, %v9377
        %v9379 = vpop.f32.mrf.mxu0
        %v9380 = vadd.f32 %v9291, %v9379
        %9381 = vmatmul.bf16.gmra.mxu0 %v9035
        %v9382 = vpop.f32.mrf.mxu0
        %v9383 = vadd.f32 %v9294, %v9382
        %v9384 = vpop.f32.mrf.mxu0
        %v9385 = vadd.f32 %v9296, %v9384
        %9386 = vmatmul.bf16.gmra.mxu0 %v9038
        %v9387 = vpop.f32.mrf.mxu0
        %v9388 = vadd.f32 %v9299, %v9387
        %v9389 = vpop.f32.mrf.mxu0
        %v9390 = vadd.f32 %v9301, %v9389
        %9391 = vmatmul.bf16.gmra.mxu0 %v9041
        %v9392 = vpop.f32.mrf.mxu0
        %v9393 = vadd.f32 %v9304, %v9392
        %v9394 = vpop.f32.mrf.mxu0
        %v9395 = vadd.f32 %v9306, %v9394
        %9396 = vmatmul.bf16.gmra.mxu0 %v9044
        %v9397 = vpop.f32.mrf.mxu0
        %v9398 = vadd.f32 %v9309, %v9397
        %v9399 = vpop.f32.mrf.mxu0
        %v9400 = vadd.f32 %v9311, %v9399
        %9401 = vmatmul.bf16.gmra.mxu0 %v9047
        %v9402 = vpop.f32.mrf.mxu0
        %v9403 = vadd.f32 %v9314, %v9402
        %v9404 = vpop.f32.mrf.mxu0
        %v9405 = vadd.f32 %v9316, %v9404
        %9406 = vmatmul.bf16.gmra.mxu0 %v9050
        %v9407 = vpop.f32.mrf.mxu0
        %v9408 = vadd.f32 %v9319, %v9407
        %v9409 = vpop.f32.mrf.mxu0
        %v9410 = vadd.f32 %v9321, %v9409
        %9411 = vmatmul.bf16.gmra.mxu0 %v9053
        %v9412 = vpop.f32.mrf.mxu0
        %v9413 = vadd.f32 %v9324, %v9412
        %v9414 = vpop.f32.mrf.mxu0
        %v9415 = vadd.f32 %v9326, %v9414
        %9416 = vdwg.mxu0
        %v9417 = vmul.f32 %v9338, %v3446
        %v9418 = vmul.f32 %v9340, %v3446
        %v9419 = vmul.f32 %v9343, %v3446
        %v9420 = vmul.f32 %v9345, %v3446
        %v9421 = vmul.f32 %v9348, %v3447
        %v9422 = vmul.f32 %v9350, %v3447
        %v9423 = vmul.f32 %v9353, %v3447
        %v9424 = vmul.f32 %v9355, %v3447
        %v9425 = vmul.f32 %v9358, %v3448
        %v9426 = vmul.f32 %v9360, %v3448
        %v9427 = vmul.f32 %v9363, %v3448
        %v9428 = vmul.f32 %v9365, %v3448
        %v9429 = vmul.f32 %v9368, %v3449
        %v9430 = vmul.f32 %v9370, %v3449
        %v9431 = vmul.f32 %v9373, %v3449
        %v9432 = vmul.f32 %v9375, %v3449
        %v9433 = vmul.f32 %v9378, %v3450
        %v9434 = vmul.f32 %v9380, %v3450
        %v9435 = vmul.f32 %v9383, %v3450
        %v9436 = vmul.f32 %v9385, %v3450
        %v9437 = vmul.f32 %v9388, %v3451
        %v9438 = vmul.f32 %v9390, %v3451
        %v9439 = vmul.f32 %v9393, %v3451
        %v9440 = vmul.f32 %v9395, %v3451
        %v9441 = vmul.f32 %v9398, %v3452
        %v9442 = vmul.f32 %v9400, %v3452
        %v9443 = vmul.f32 %v9403, %v3452
        %v9444 = vmul.f32 %v9405, %v3452
        %v9445 = vmul.f32 %v9408, %v3453
        %v9446 = vmul.f32 %v9410, %v3453
        %v9447 = vmul.f32 %v9413, %v3453
        %v9448 = vmul.f32 %v9415, %v3453
        %v9449 = vadd.f32 %v9417, %v9421
        %v9450 = vadd.f32 %v9449, %v9425
        %v9451 = vadd.f32 %v9450, %v9429
        %v9452 = vadd.f32 %v9451, %v9433
        %v9453 = vadd.f32 %v9452, %v9437
        %v9454 = vadd.f32 %v9453, %v9441
        %v9455 = vadd.f32 %v9454, %v9445
        %v9456 = vadd.f32 %v9418, %v9422
        %v9457 = vadd.f32 %v9456, %v9426
        %v9458 = vadd.f32 %v9457, %v9430
        %v9459 = vadd.f32 %v9458, %v9434
        %v9460 = vadd.f32 %v9459, %v9438
        %v9461 = vadd.f32 %v9460, %v9442
        %v9462 = vadd.f32 %v9461, %v9446
        %v9463 = vadd.f32 %v9419, %v9423
        %v9464 = vadd.f32 %v9463, %v9427
        %v9465 = vadd.f32 %v9464, %v9431
        %v9466 = vadd.f32 %v9465, %v9435
        %v9467 = vadd.f32 %v9466, %v9439
        %v9468 = vadd.f32 %v9467, %v9443
        %v9469 = vadd.f32 %v9468, %v9447
        %v9470 = vadd.f32 %v9420, %v9424
        %v9471 = vadd.f32 %v9470, %v9428
        %v9472 = vadd.f32 %v9471, %v9432
        %v9473 = vadd.f32 %v9472, %v9436
        %v9474 = vadd.f32 %v9473, %v9440
        %v9475 = vadd.f32 %v9474, %v9444
        %v9476 = vadd.f32 %v9475, %v9448
        %s9477 = scalar_lea.vmem [#allocation26], 64
        %v9478 = vld [vmem:[%s9477] sm:$0xf]
        %v9479 = vld [vmem:[%s9477 + $0x4] sm:$0xf]
        %v9480 = vld [vmem:[%s9477 + $0x8] sm:$0xf]
        %v9481 = vld [vmem:[%s9477 + $0xc] sm:$0xf]
        %v9482 = vld [vmem:[%s9477 + $0x10] sm:$0xf]
        %v9483 = vld [vmem:[%s9477 + $0x14] sm:$0xf]
        %v9484 = vld [vmem:[%s9477 + $0x18] sm:$0xf]
        %v9485 = vld [vmem:[%s9477 + $0x1c] sm:$0xf]
        %v9486 = vld [vmem:[%s9477 + $0x20] sm:$0xf]
        %v9487 = vld [vmem:[%s9477 + $0x24] sm:$0xf]
        %v9488 = vld [vmem:[%s9477 + $0x28] sm:$0xf]
        %v9489 = vld [vmem:[%s9477 + $0x2c] sm:$0xf]
        %v9490 = vld [vmem:[%s9477 + $0x30] sm:$0xf]
        %v9491 = vld [vmem:[%s9477 + $0x34] sm:$0xf]
        %v9492 = vld [vmem:[%s9477 + $0x38] sm:$0xf]
        %v9493 = vld [vmem:[%s9477 + $0x3c] sm:$0xf]
        %s9494 = scalar_lea.vmem %s49, 1
        %v9495 = vld [vmem:[%s9494] sm:$0x1]
        %v9496 = vpack.c.bf16 %v9462, %v9455
        %v9497 = vpack.c.bf16 %v9476, %v9469
        %v9499 = vperm.slane %v9495, 0
        %v9517 = vunpack.c.l.b16 %v9478
        %v9518 = vunpack.c.l.b16 %v9479
        %v9519 = vunpack.c.l.b16 %v9480
        %v9520 = vunpack.c.l.b16 %v9481
        %v9521 = vunpack.c.l.b16 %v9482
        %v9522 = vunpack.c.l.b16 %v9483
        %v9523 = vunpack.c.l.b16 %v9484
        %v9524 = vunpack.c.l.b16 %v9485
        %v9525 = vunpack.c.l.b16 %v9486
        %v9526 = vunpack.c.l.b16 %v9487
        %v9527 = vunpack.c.l.b16 %v9488
        %v9528 = vunpack.c.l.b16 %v9489
        %v9529 = vunpack.c.l.b16 %v9490
        %v9530 = vunpack.c.l.b16 %v9491
        %v9531 = vunpack.c.l.b16 %v9492
        %v9532 = vunpack.c.l.b16 %v9493
        %v9533 = vpack.c.b16 %v9518, %v9517
        %v9534 = vpack.c.b16 %v9520, %v9519
        %v9535 = vpack.c.b16 %v9522, %v9521
        %v9536 = vpack.c.b16 %v9524, %v9523
        %v9537 = vpack.c.b16 %v9526, %v9525
        %v9538 = vpack.c.b16 %v9528, %v9527
        %v9539 = vpack.c.b16 %v9530, %v9529
        %v9540 = vpack.c.b16 %v9532, %v9531
        %9549 = vmatpush.bf16.msra.mxu0 %v9540
        %9550 = vmatpush.bf16.msra.mxu0 %v9539
        %9551 = vmatpush.bf16.msra.mxu0 %v9538
        %9552 = vmatpush.bf16.msra.mxu0 %v9537
        %9553 = vmatpush.bf16.msra.mxu0 %v9536
        %9554 = vmatpush.bf16.msra.mxu0 %v9535
        %9555 = vmatpush.bf16.msra.mxu0 %v9534
        %9556 = vmatpush.bf16.msra.mxu0 %v9533
        %9557 = vmatmul.bf16.gmra.mxu0 %v9496
        %v9558 = vpop.f32.mrf.mxu0
        %v9559 = vadd.f32 %v9499, %v9558
        %v9560 = vpop.f32.mrf.mxu0
        %v9561 = vadd.f32 %v9499, %v9560
        %9562 = vmatmul.bf16.gmra.mxu0 %v9497
        %v9563 = vpop.f32.mrf.mxu0
        %v9564 = vadd.f32 %v9499, %v9563
        %v9565 = vpop.f32.mrf.mxu0
        %v9566 = vadd.f32 %v9499, %v9565
        %9567 = vdwg.mxu0
        %v9568 = vadd.f32 %v7780, %v9559
        %v9569 = vadd.f32 %v7781, %v9561
        %v9570 = vadd.f32 %v7782, %v9564
        %v9571 = vadd.f32 %v7783, %v9566
        %9572 = vadd.xlane.f32.xlu0 %v9568
        %v9573 = vpop.xlane.xlu0 %9572
        %9574 = vadd.xlane.f32.xlu0 %v9569
        %v9575 = vpop.xlane.xlu0 %9574
        %9576 = vadd.xlane.f32.xlu0 %v9570
        %v9577 = vpop.xlane.xlu0 %9576
        %9578 = vadd.xlane.f32.xlu0 %v9571
        %v9579 = vpop.xlane.xlu0 %9578
        %v9580 = vmul.f32 %v9573, %v4274
        %v9581 = vmul.f32 %v9575, %v4274
        %v9582 = vmul.f32 %v9577, %v4274
        %v9583 = vmul.f32 %v9579, %v4274
        %v9584 = vsub.f32 %v9568, %v9580
        %v9585 = vsub.f32 %v9569, %v9581
        %v9586 = vsub.f32 %v9570, %v9582
        %v9587 = vsub.f32 %v9571, %v9583
        %v9588 = vmul.f32 %v9584, %v9584
        %v9589 = vmul.f32 %v9585, %v9585
        %v9590 = vmul.f32 %v9586, %v9586
        %v9591 = vmul.f32 %v9587, %v9587
        %9592 = vadd.xlane.f32.xlu0 %v9588
        %v9593 = vpop.xlane.xlu0 %9592
        %9594 = vadd.xlane.f32.xlu0 %v9589
        %v9595 = vpop.xlane.xlu0 %9594
        %9596 = vadd.xlane.f32.xlu0 %v9590
        %v9597 = vpop.xlane.xlu0 %9596
        %9598 = vadd.xlane.f32.xlu0 %v9591
        %v9599 = vpop.xlane.xlu0 %9598
        %v9600 = vmul.f32 %v9593, %v4274
        %v9601 = vmul.f32 %v9595, %v4274
        %v9602 = vmul.f32 %v9597, %v4274
        %v9603 = vmul.f32 %v9599, %v4274
        %v9604 = vadd.f32 %v9600, 1e-05
        %v9605 = vadd.f32 %v9601, 1e-05
        %v9606 = vadd.f32 %v9602, 1e-05
        %v9607 = vadd.f32 %v9603, 1e-05
        %v9608 = vrsqrt.pop %v9604
        %v9609 = vmul.f32 %v9608, %v9604
        %v9610 = vmul.f32 %v9609, %v9608
        %v9611 = vmul.f32 0.5, %v9610
        %v9612 = vsub.f32 1.5, %v9611
        %v9613 = vmul.f32 %v9608, %v9612
        %vm9614 = vweird.f32 %v9604
        %vm9615 = vweird.f32 %v9608
        %vm9616 = vmor %vm9614, %vm9615
        %v9617 = vsel %vm9616, %v9608, %v9613
        %v9618 = vrsqrt.pop %v9605
        %v9619 = vmul.f32 %v9618, %v9605
        %v9620 = vmul.f32 %v9619, %v9618
        %v9621 = vmul.f32 0.5, %v9620
        %v9622 = vsub.f32 1.5, %v9621
        %v9623 = vmul.f32 %v9618, %v9622
        %vm9624 = vweird.f32 %v9605
        %vm9625 = vweird.f32 %v9618
        %vm9626 = vmor %vm9624, %vm9625
        %v9627 = vsel %vm9626, %v9618, %v9623
        %v9628 = vrsqrt.pop %v9606
        %v9629 = vmul.f32 %v9628, %v9606
        %v9630 = vmul.f32 %v9629, %v9628
        %v9631 = vmul.f32 0.5, %v9630
        %v9632 = vsub.f32 1.5, %v9631
        %v9633 = vmul.f32 %v9628, %v9632
        %vm9634 = vweird.f32 %v9606
        %vm9635 = vweird.f32 %v9628
        %vm9636 = vmor %vm9634, %vm9635
        %v9637 = vsel %vm9636, %v9628, %v9633
        %v9638 = vrsqrt.pop %v9607
        %v9639 = vmul.f32 %v9638, %v9607
        %v9640 = vmul.f32 %v9639, %v9638
        %v9641 = vmul.f32 0.5, %v9640
        %v9642 = vsub.f32 1.5, %v9641
        %v9643 = vmul.f32 %v9638, %v9642
        %vm9644 = vweird.f32 %v9607
        %vm9645 = vweird.f32 %v9638
        %vm9646 = vmor %vm9644, %vm9645
        %v9647 = vsel %vm9646, %v9638, %v9643
        %v9648 = vmul.f32 %v9584, %v9617
        %v9649 = vmul.f32 %v9585, %v9627
        %v9650 = vmul.f32 %v9586, %v9637
        %v9651 = vmul.f32 %v9587, %v9647
        %v9652 = vperm.slane %v6657, 1
        %v9653 = vmul.f32 %v9648, %v9652
        %v9654 = vmul.f32 %v9649, %v9652
        %v9655 = vmul.f32 %v9650, %v9652
        %v9656 = vmul.f32 %v9651, %v9652
        %v9657 = vperm.slane %v6659, 1
        %v9658 = vadd.f32 %v9653, %v9657
        %v9659 = vadd.f32 %v9654, %v9657
        %v9660 = vadd.f32 %v9655, %v9657
        %v9661 = vadd.f32 %v9656, %v9657
        %s9662 = scalar_lea.vmem [#allocation27], 128
        %v9663 = vld [vmem:[%s9662] sm:$0xff]
        %v9664 = vld [vmem:[%s9662 + $0x8] sm:$0xff]
        %v9665 = vld [vmem:[%s9662 + $0x10] sm:$0xff]
        %v9666 = vld [vmem:[%s9662 + $0x18] sm:$0xff]
        %v9667 = vld [vmem:[%s9662 + $0x20] sm:$0xff]
        %v9668 = vld [vmem:[%s9662 + $0x28] sm:$0xff]
        %v9669 = vld [vmem:[%s9662 + $0x30] sm:$0xff]
        %v9670 = vld [vmem:[%s9662 + $0x38] sm:$0xff]
        %v9671 = vld [vmem:[%s9662 + $0x40] sm:$0xff]
        %v9672 = vld [vmem:[%s9662 + $0x48] sm:$0xff]
        %v9673 = vld [vmem:[%s9662 + $0x50] sm:$0xff]
        %v9674 = vld [vmem:[%s9662 + $0x58] sm:$0xff]
        %v9675 = vld [vmem:[%s9662 + $0x60] sm:$0xff]
        %v9676 = vld [vmem:[%s9662 + $0x68] sm:$0xff]
        %v9677 = vld [vmem:[%s9662 + $0x70] sm:$0xff]
        %v9678 = vld [vmem:[%s9662 + $0x78] sm:$0xff]
        %s9679 = scalar_lea.vmem %s53, 2
        %v9680 = vld [vmem:[%s9679] sm:$0x3]
        %v9681 = vpack.c.bf16 %v9659, %v9658
        %v9682 = vpack.c.bf16 %v9661, %v9660
        %v9684 = vperm.slane %v9680, 0
        %v9685 = vperm.slane %v9680, 1
        %v9704 = vunpack.c.l.b16 %v9663
        %v9705 = vunpack.c.h.b16 %v9663
        %v9706 = vunpack.c.l.b16 %v9664
        %v9707 = vunpack.c.h.b16 %v9664
        %v9708 = vunpack.c.l.b16 %v9665
        %v9709 = vunpack.c.h.b16 %v9665
        %v9710 = vunpack.c.l.b16 %v9666
        %v9711 = vunpack.c.h.b16 %v9666
        %v9712 = vunpack.c.l.b16 %v9667
        %v9713 = vunpack.c.h.b16 %v9667
        %v9714 = vunpack.c.l.b16 %v9668
        %v9715 = vunpack.c.h.b16 %v9668
        %v9716 = vunpack.c.l.b16 %v9669
        %v9717 = vunpack.c.h.b16 %v9669
        %v9718 = vunpack.c.l.b16 %v9670
        %v9719 = vunpack.c.h.b16 %v9670
        %v9720 = vunpack.c.l.b16 %v9671
        %v9721 = vunpack.c.h.b16 %v9671
        %v9722 = vunpack.c.l.b16 %v9672
        %v9723 = vunpack.c.h.b16 %v9672
        %v9724 = vunpack.c.l.b16 %v9673
        %v9725 = vunpack.c.h.b16 %v9673
        %v9726 = vunpack.c.l.b16 %v9674
        %v9727 = vunpack.c.h.b16 %v9674
        %v9728 = vunpack.c.l.b16 %v9675
        %v9729 = vunpack.c.h.b16 %v9675
        %v9730 = vunpack.c.l.b16 %v9676
        %v9731 = vunpack.c.h.b16 %v9676
        %v9732 = vunpack.c.l.b16 %v9677
        %v9733 = vunpack.c.h.b16 %v9677
        %v9734 = vunpack.c.l.b16 %v9678
        %v9735 = vunpack.c.h.b16 %v9678
        %v9736 = vpack.c.b16 %v9706, %v9704
        %v9737 = vpack.c.b16 %v9707, %v9705
        %v9738 = vpack.c.b16 %v9710, %v9708
        %v9739 = vpack.c.b16 %v9711, %v9709
        %v9740 = vpack.c.b16 %v9714, %v9712
        %v9741 = vpack.c.b16 %v9715, %v9713
        %v9742 = vpack.c.b16 %v9718, %v9716
        %v9743 = vpack.c.b16 %v9719, %v9717
        %v9744 = vpack.c.b16 %v9722, %v9720
        %v9745 = vpack.c.b16 %v9723, %v9721
        %v9746 = vpack.c.b16 %v9726, %v9724
        %v9747 = vpack.c.b16 %v9727, %v9725
        %v9748 = vpack.c.b16 %v9730, %v9728
        %v9749 = vpack.c.b16 %v9731, %v9729
        %v9750 = vpack.c.b16 %v9734, %v9732
        %v9751 = vpack.c.b16 %v9735, %v9733
        %9768 = vmatpush.bf16.msra.mxu0 %v9750
        %9769 = vmatpush.bf16.msra.mxu0 %v9748
        %9770 = vmatpush.bf16.msra.mxu0 %v9746
        %9771 = vmatpush.bf16.msra.mxu0 %v9744
        %9772 = vmatpush.bf16.msra.mxu0 %v9742
        %9773 = vmatpush.bf16.msra.mxu0 %v9740
        %9774 = vmatpush.bf16.msra.mxu0 %v9738
        %9775 = vmatpush.bf16.msra.mxu0 %v9736
        %9776 = vmatmul.bf16.gmra.mxu0 %v9681
        %v9777 = vpop.f32.mrf.mxu0
        %v9778 = vadd.f32 %v9684, %v9777
        %v9779 = vpop.f32.mrf.mxu0
        %v9780 = vadd.f32 %v9684, %v9779
        %9781 = vmatmul.bf16.gmra.mxu0 %v9682
        %v9782 = vpop.f32.mrf.mxu0
        %v9783 = vadd.f32 %v9684, %v9782
        %v9784 = vpop.f32.mrf.mxu0
        %v9785 = vadd.f32 %v9684, %v9784
        %9786 = vdwg.mxu0
        %9787 = vmatpush.bf16.msra.mxu0 %v9751
        %9788 = vmatpush.bf16.msra.mxu0 %v9749
        %9789 = vmatpush.bf16.msra.mxu0 %v9747
        %9790 = vmatpush.bf16.msra.mxu0 %v9745
        %9791 = vmatpush.bf16.msra.mxu0 %v9743
        %9792 = vmatpush.bf16.msra.mxu0 %v9741
        %9793 = vmatpush.bf16.msra.mxu0 %v9739
        %9794 = vmatpush.bf16.msra.mxu0 %v9737
        %9795 = vmatmul.bf16.gmra.mxu0 %v9681
        %v9796 = vpop.f32.mrf.mxu0
        %v9797 = vadd.f32 %v9685, %v9796
        %v9798 = vpop.f32.mrf.mxu0
        %v9799 = vadd.f32 %v9685, %v9798
        %9800 = vmatmul.bf16.gmra.mxu0 %v9682
        %v9801 = vpop.f32.mrf.mxu0
        %v9802 = vadd.f32 %v9685, %v9801
        %v9803 = vpop.f32.mrf.mxu0
        %v9804 = vadd.f32 %v9685, %v9803
        %9805 = vdwg.mxu0
        %v9806 = vmax.f32 %v9778, 0.0
        %v9807 = vmax.f32 %v9797, 0.0
        %v9808 = vmax.f32 %v9780, 0.0
        %v9809 = vmax.f32 %v9799, 0.0
        %v9810 = vmax.f32 %v9783, 0.0
        %v9811 = vmax.f32 %v9802, 0.0
        %v9812 = vmax.f32 %v9785, 0.0
        %v9813 = vmax.f32 %v9804, 0.0
        %s9814 = scalar_lea.vmem [#allocation29], 128
        %v9815 = vld [vmem:[%s9814] sm:$0xf]
        %v9816 = vld [vmem:[%s9814 + $0x4] sm:$0xf]
        %v9817 = vld [vmem:[%s9814 + $0x8] sm:$0xf]
        %v9818 = vld [vmem:[%s9814 + $0xc] sm:$0xf]
        %v9819 = vld [vmem:[%s9814 + $0x10] sm:$0xf]
        %v9820 = vld [vmem:[%s9814 + $0x14] sm:$0xf]
        %v9821 = vld [vmem:[%s9814 + $0x18] sm:$0xf]
        %v9822 = vld [vmem:[%s9814 + $0x1c] sm:$0xf]
        %v9823 = vld [vmem:[%s9814 + $0x20] sm:$0xf]
        %v9824 = vld [vmem:[%s9814 + $0x24] sm:$0xf]
        %v9825 = vld [vmem:[%s9814 + $0x28] sm:$0xf]
        %v9826 = vld [vmem:[%s9814 + $0x2c] sm:$0xf]
        %v9827 = vld [vmem:[%s9814 + $0x30] sm:$0xf]
        %v9828 = vld [vmem:[%s9814 + $0x34] sm:$0xf]
        %v9829 = vld [vmem:[%s9814 + $0x38] sm:$0xf]
        %v9830 = vld [vmem:[%s9814 + $0x3c] sm:$0xf]
        %v9831 = vld [vmem:[%s9814 + $0x40] sm:$0xf]
        %v9832 = vld [vmem:[%s9814 + $0x44] sm:$0xf]
        %v9833 = vld [vmem:[%s9814 + $0x48] sm:$0xf]
        %v9834 = vld [vmem:[%s9814 + $0x4c] sm:$0xf]
        %v9835 = vld [vmem:[%s9814 + $0x50] sm:$0xf]
        %v9836 = vld [vmem:[%s9814 + $0x54] sm:$0xf]
        %v9837 = vld [vmem:[%s9814 + $0x58] sm:$0xf]
        %v9838 = vld [vmem:[%s9814 + $0x5c] sm:$0xf]
        %v9839 = vld [vmem:[%s9814 + $0x60] sm:$0xf]
        %v9840 = vld [vmem:[%s9814 + $0x64] sm:$0xf]
        %v9841 = vld [vmem:[%s9814 + $0x68] sm:$0xf]
        %v9842 = vld [vmem:[%s9814 + $0x6c] sm:$0xf]
        %v9843 = vld [vmem:[%s9814 + $0x70] sm:$0xf]
        %v9844 = vld [vmem:[%s9814 + $0x74] sm:$0xf]
        %v9845 = vld [vmem:[%s9814 + $0x78] sm:$0xf]
        %v9846 = vld [vmem:[%s9814 + $0x7c] sm:$0xf]
        %s9847 = scalar_lea.vmem %s57, 1
        %v9848 = vld [vmem:[%s9847] sm:$0x1]
        %v9849 = vpack.c.bf16 %v9808, %v9806
        %v9850 = vpack.c.bf16 %v9809, %v9807
        %v9851 = vpack.c.bf16 %v9812, %v9810
        %v9852 = vpack.c.bf16 %v9813, %v9811
        %v9854 = vperm.slane %v9848, 0
        %v9888 = vunpack.c.l.b16 %v9815
        %v9889 = vunpack.c.l.b16 %v9816
        %v9890 = vunpack.c.l.b16 %v9817
        %v9891 = vunpack.c.l.b16 %v9818
        %v9892 = vunpack.c.l.b16 %v9819
        %v9893 = vunpack.c.l.b16 %v9820
        %v9894 = vunpack.c.l.b16 %v9821
        %v9895 = vunpack.c.l.b16 %v9822
        %v9896 = vunpack.c.l.b16 %v9823
        %v9897 = vunpack.c.l.b16 %v9824
        %v9898 = vunpack.c.l.b16 %v9825
        %v9899 = vunpack.c.l.b16 %v9826
        %v9900 = vunpack.c.l.b16 %v9827
        %v9901 = vunpack.c.l.b16 %v9828
        %v9902 = vunpack.c.l.b16 %v9829
        %v9903 = vunpack.c.l.b16 %v9830
        %v9904 = vunpack.c.l.b16 %v9831
        %v9905 = vunpack.c.l.b16 %v9832
        %v9906 = vunpack.c.l.b16 %v9833
        %v9907 = vunpack.c.l.b16 %v9834
        %v9908 = vunpack.c.l.b16 %v9835
        %v9909 = vunpack.c.l.b16 %v9836
        %v9910 = vunpack.c.l.b16 %v9837
        %v9911 = vunpack.c.l.b16 %v9838
        %v9912 = vunpack.c.l.b16 %v9839
        %v9913 = vunpack.c.l.b16 %v9840
        %v9914 = vunpack.c.l.b16 %v9841
        %v9915 = vunpack.c.l.b16 %v9842
        %v9916 = vunpack.c.l.b16 %v9843
        %v9917 = vunpack.c.l.b16 %v9844
        %v9918 = vunpack.c.l.b16 %v9845
        %v9919 = vunpack.c.l.b16 %v9846
        %v9920 = vpack.c.b16 %v9889, %v9888
        %v9921 = vpack.c.b16 %v9891, %v9890
        %v9922 = vpack.c.b16 %v9893, %v9892
        %v9923 = vpack.c.b16 %v9895, %v9894
        %v9924 = vpack.c.b16 %v9897, %v9896
        %v9925 = vpack.c.b16 %v9899, %v9898
        %v9926 = vpack.c.b16 %v9901, %v9900
        %v9927 = vpack.c.b16 %v9903, %v9902
        %v9928 = vpack.c.b16 %v9905, %v9904
        %v9929 = vpack.c.b16 %v9907, %v9906
        %v9930 = vpack.c.b16 %v9909, %v9908
        %v9931 = vpack.c.b16 %v9911, %v9910
        %v9932 = vpack.c.b16 %v9913, %v9912
        %v9933 = vpack.c.b16 %v9915, %v9914
        %v9934 = vpack.c.b16 %v9917, %v9916
        %v9935 = vpack.c.b16 %v9919, %v9918
        %9952 = vmatpush.bf16.msra.mxu0 %v9927
        %9953 = vmatpush.bf16.msra.mxu0 %v9926
        %9954 = vmatpush.bf16.msra.mxu0 %v9925
        %9955 = vmatpush.bf16.msra.mxu0 %v9924
        %9956 = vmatpush.bf16.msra.mxu0 %v9923
        %9957 = vmatpush.bf16.msra.mxu0 %v9922
        %9958 = vmatpush.bf16.msra.mxu0 %v9921
        %9959 = vmatpush.bf16.msra.mxu0 %v9920
        %9960 = vmatmul.bf16.gmra.mxu0 %v9849
        %v9961 = vpop.f32.mrf.mxu0
        %v9962 = vadd.f32 %v9854, %v9961
        %v9963 = vpop.f32.mrf.mxu0
        %v9964 = vadd.f32 %v9854, %v9963
        %9965 = vmatmul.bf16.gmra.mxu0 %v9851
        %v9966 = vpop.f32.mrf.mxu0
        %v9967 = vadd.f32 %v9854, %v9966
        %v9968 = vpop.f32.mrf.mxu0
        %v9969 = vadd.f32 %v9854, %v9968
        %9970 = vdwg.mxu0
        %9971 = vmatpush.bf16.msra.mxu0 %v9935
        %9972 = vmatpush.bf16.msra.mxu0 %v9934
        %9973 = vmatpush.bf16.msra.mxu0 %v9933
        %9974 = vmatpush.bf16.msra.mxu0 %v9932
        %9975 = vmatpush.bf16.msra.mxu0 %v9931
        %9976 = vmatpush.bf16.msra.mxu0 %v9930
        %9977 = vmatpush.bf16.msra.mxu0 %v9929
        %9978 = vmatpush.bf16.msra.mxu0 %v9928
        %9979 = vmatmul.bf16.gmra.mxu0 %v9850
        %v9980 = vpop.f32.mrf.mxu0
        %v9981 = vadd.f32 %v9962, %v9980
        %v9982 = vpop.f32.mrf.mxu0
        %v9983 = vadd.f32 %v9964, %v9982
        %9984 = vmatmul.bf16.gmra.mxu0 %v9852
        %v9985 = vpop.f32.mrf.mxu0
        %v9986 = vadd.f32 %v9967, %v9985
        %v9987 = vpop.f32.mrf.mxu0
        %v9988 = vadd.f32 %v9969, %v9987
        %9989 = vdwg.mxu0
        %v9990 = vadd.f32 %v9658, %v9981
        %v9991 = vadd.f32 %v9659, %v9983
        %v9992 = vadd.f32 %v9660, %v9986
        %v9993 = vadd.f32 %v9661, %v9988
        %9994 = vadd.xlane.f32.xlu0 %v9990
        %v9995 = vpop.xlane.xlu0 %9994
        %9996 = vadd.xlane.f32.xlu0 %v9991
        %v9997 = vpop.xlane.xlu0 %9996
        %9998 = vadd.xlane.f32.xlu0 %v9992
        %v9999 = vpop.xlane.xlu0 %9998
        %10000 = vadd.xlane.f32.xlu0 %v9993
        %v10001 = vpop.xlane.xlu0 %10000
        %v10002 = vmul.f32 %v9995, %v4274
        %v10003 = vmul.f32 %v9997, %v4274
        %v10004 = vmul.f32 %v9999, %v4274
        %v10005 = vmul.f32 %v10001, %v4274
        %v10006 = vsub.f32 %v9990, %v10002
        %v10007 = vsub.f32 %v9991, %v10003
        %v10008 = vsub.f32 %v9992, %v10004
        %v10009 = vsub.f32 %v9993, %v10005
        %v10010 = vmul.f32 %v10006, %v10006
        %v10011 = vmul.f32 %v10007, %v10007
        %v10012 = vmul.f32 %v10008, %v10008
        %v10013 = vmul.f32 %v10009, %v10009
        %10014 = vadd.xlane.f32.xlu0 %v10010
        %v10015 = vpop.xlane.xlu0 %10014
        %10016 = vadd.xlane.f32.xlu0 %v10011
        %v10017 = vpop.xlane.xlu0 %10016
        %10018 = vadd.xlane.f32.xlu0 %v10012
        %v10019 = vpop.xlane.xlu0 %10018
        %10020 = vadd.xlane.f32.xlu0 %v10013
        %v10021 = vpop.xlane.xlu0 %10020
        %v10022 = vmul.f32 %v10015, %v4274
        %v10023 = vmul.f32 %v10017, %v4274
        %v10024 = vmul.f32 %v10019, %v4274
        %v10025 = vmul.f32 %v10021, %v4274
        %v10026 = vadd.f32 %v10022, 1e-05
        %v10027 = vadd.f32 %v10023, 1e-05
        %v10028 = vadd.f32 %v10024, 1e-05
        %v10029 = vadd.f32 %v10025, 1e-05
        %v10030 = vrsqrt.pop %v10026
        %v10031 = vmul.f32 %v10030, %v10026
        %v10032 = vmul.f32 %v10031, %v10030
        %v10033 = vmul.f32 0.5, %v10032
        %v10034 = vsub.f32 1.5, %v10033
        %v10035 = vmul.f32 %v10030, %v10034
        %vm10036 = vweird.f32 %v10026
        %vm10037 = vweird.f32 %v10030
        %vm10038 = vmor %vm10036, %vm10037
        %v10039 = vsel %vm10038, %v10030, %v10035
        %v10040 = vrsqrt.pop %v10027
        %v10041 = vmul.f32 %v10040, %v10027
        %v10042 = vmul.f32 %v10041, %v10040
        %v10043 = vmul.f32 0.5, %v10042
        %v10044 = vsub.f32 1.5, %v10043
        %v10045 = vmul.f32 %v10040, %v10044
        %vm10046 = vweird.f32 %v10027
        %vm10047 = vweird.f32 %v10040
        %vm10048 = vmor %vm10046, %vm10047
        %v10049 = vsel %vm10048, %v10040, %v10045
        %v10050 = vrsqrt.pop %v10028
        %v10051 = vmul.f32 %v10050, %v10028
        %v10052 = vmul.f32 %v10051, %v10050
        %v10053 = vmul.f32 0.5, %v10052
        %v10054 = vsub.f32 1.5, %v10053
        %v10055 = vmul.f32 %v10050, %v10054
        %vm10056 = vweird.f32 %v10028
        %vm10057 = vweird.f32 %v10050
        %vm10058 = vmor %vm10056, %vm10057
        %v10059 = vsel %vm10058, %v10050, %v10055
        %v10060 = vrsqrt.pop %v10029
        %v10061 = vmul.f32 %v10060, %v10029
        %v10062 = vmul.f32 %v10061, %v10060
        %v10063 = vmul.f32 0.5, %v10062
        %v10064 = vsub.f32 1.5, %v10063
        %v10065 = vmul.f32 %v10060, %v10064
        %vm10066 = vweird.f32 %v10029
        %vm10067 = vweird.f32 %v10060
        %vm10068 = vmor %vm10066, %vm10067
        %v10069 = vsel %vm10068, %v10060, %v10065
        %v10070 = vmul.f32 %v10006, %v10039
        %v10071 = vmul.f32 %v10007, %v10049
        %v10072 = vmul.f32 %v10008, %v10059
        %v10073 = vmul.f32 %v10009, %v10069
        %v10074 = vperm.slane %v6657, 2
        %v10075 = vmul.f32 %v10070, %v10074
        %v10076 = vmul.f32 %v10071, %v10074
        %v10077 = vmul.f32 %v10072, %v10074
        %v10078 = vmul.f32 %v10073, %v10074
        %v10079 = vperm.slane %v6659, 2
        %v10080 = vadd.f32 %v10075, %v10079
        %v10081 = vadd.f32 %v10076, %v10079
        %v10082 = vadd.f32 %v10077, %v10079
        %v10083 = vadd.f32 %v10078, %v10079
        %v10084 = vld [vmem:[%s63] sm:$0x1]
        %v10085 = vld [vmem:[%s65] sm:$0x1]
        %10086 = vadd.xlane.f32.xlu0 %v10080
        %v10087 = vpop.xlane.xlu0 %10086
        %10088 = vadd.xlane.f32.xlu0 %v10081
        %v10089 = vpop.xlane.xlu0 %10088
        %10090 = vadd.xlane.f32.xlu0 %v10082
        %v10091 = vpop.xlane.xlu0 %10090
        %10092 = vadd.xlane.f32.xlu0 %v10083
        %v10093 = vpop.xlane.xlu0 %10092
        %v10094 = vmul.f32 %v10087, %v4274
        %v10095 = vmul.f32 %v10089, %v4274
        %v10096 = vmul.f32 %v10091, %v4274
        %v10097 = vmul.f32 %v10093, %v4274
        %v10098 = vsub.f32 %v10080, %v10094
        %v10099 = vsub.f32 %v10081, %v10095
        %v10100 = vsub.f32 %v10082, %v10096
        %v10101 = vsub.f32 %v10083, %v10097
        %v10102 = vmul.f32 %v10098, %v10098
        %v10103 = vmul.f32 %v10099, %v10099
        %v10104 = vmul.f32 %v10100, %v10100
        %v10105 = vmul.f32 %v10101, %v10101
        %10106 = vadd.xlane.f32.xlu0 %v10102
        %v10107 = vpop.xlane.xlu0 %10106
        %10108 = vadd.xlane.f32.xlu0 %v10103
        %v10109 = vpop.xlane.xlu0 %10108
        %10110 = vadd.xlane.f32.xlu0 %v10104
        %v10111 = vpop.xlane.xlu0 %10110
        %10112 = vadd.xlane.f32.xlu0 %v10105
        %v10113 = vpop.xlane.xlu0 %10112
        %v10114 = vmul.f32 %v10107, %v4274
        %v10115 = vmul.f32 %v10109, %v4274
        %v10116 = vmul.f32 %v10111, %v4274
        %v10117 = vmul.f32 %v10113, %v4274
        %v10118 = vadd.f32 %v10114, 1e-05
        %v10119 = vadd.f32 %v10115, 1e-05
        %v10120 = vadd.f32 %v10116, 1e-05
        %v10121 = vadd.f32 %v10117, 1e-05
        %v10122 = vrsqrt.pop %v10118
        %v10123 = vmul.f32 %v10122, %v10118
        %v10124 = vmul.f32 %v10123, %v10122
        %v10125 = vmul.f32 0.5, %v10124
        %v10126 = vsub.f32 1.5, %v10125
        %v10127 = vmul.f32 %v10122, %v10126
        %vm10128 = vweird.f32 %v10118
        %vm10129 = vweird.f32 %v10122
        %vm10130 = vmor %vm10128, %vm10129
        %v10131 = vsel %vm10130, %v10122, %v10127
        %v10132 = vrsqrt.pop %v10119
        %v10133 = vmul.f32 %v10132, %v10119
        %v10134 = vmul.f32 %v10133, %v10132
        %v10135 = vmul.f32 0.5, %v10134
        %v10136 = vsub.f32 1.5, %v10135
        %v10137 = vmul.f32 %v10132, %v10136
        %vm10138 = vweird.f32 %v10119
        %vm10139 = vweird.f32 %v10132
        %vm10140 = vmor %vm10138, %vm10139
        %v10141 = vsel %vm10140, %v10132, %v10137
        %v10142 = vrsqrt.pop %v10120
        %v10143 = vmul.f32 %v10142, %v10120
        %v10144 = vmul.f32 %v10143, %v10142
        %v10145 = vmul.f32 0.5, %v10144
        %v10146 = vsub.f32 1.5, %v10145
        %v10147 = vmul.f32 %v10142, %v10146
        %vm10148 = vweird.f32 %v10120
        %vm10149 = vweird.f32 %v10142
        %vm10150 = vmor %vm10148, %vm10149
        %v10151 = vsel %vm10150, %v10142, %v10147
        %v10152 = vrsqrt.pop %v10121
        %v10153 = vmul.f32 %v10152, %v10121
        %v10154 = vmul.f32 %v10153, %v10152
        %v10155 = vmul.f32 0.5, %v10154
        %v10156 = vsub.f32 1.5, %v10155
        %v10157 = vmul.f32 %v10152, %v10156
        %vm10158 = vweird.f32 %v10121
        %vm10159 = vweird.f32 %v10152
        %vm10160 = vmor %vm10158, %vm10159
        %v10161 = vsel %vm10160, %v10152, %v10157
        %v10162 = vmul.f32 %v10098, %v10131
        %v10163 = vmul.f32 %v10099, %v10141
        %v10164 = vmul.f32 %v10100, %v10151
        %v10165 = vmul.f32 %v10101, %v10161
        %v10167 = vperm.slane %v10084, 0
        %v10169 = vmul.f32 %v10162, %v10167
        %v10170 = vmul.f32 %v10163, %v10167
        %v10171 = vmul.f32 %v10164, %v10167
        %v10172 = vmul.f32 %v10165, %v10167
        %v10174 = vperm.slane %v10085, 0
        %v10176 = vadd.f32 %v10169, %v10174
        %v10177 = vadd.f32 %v10170, %v10174
        %v10178 = vadd.f32 %v10171, %v10174
        %v10179 = vadd.f32 %v10172, %v10174
        %10180 = vst [vmem:[%s1328] sm:$0xff] %v10176
        %10181 = vst [vmem:[%s1328 + $0x8] sm:$0xff] %v10177
        %10182 = vst [vmem:[%s1328 + $0x10] sm:$0xff] %v10178
        %10183 = vst [vmem:[%s1328 + $0x18] sm:$0xff] %v10179
        %s10184 = sand.u32 %s813, 1
        %s10185 = scalar_lea.sflag [#allocation5], %s10184
        %s10186 = sand.u32 %s813, 1
        %s10187 = smul.addr %s10186, 32
        %s10188 = scalar_lea.vmem [#allocation30], %s10187
        // Predicated region
        $region221: #{tpu_custom_call.1} parent=151 // pred_check
          %p10189 = pneg %p823
        $region222: #{tpu_custom_call.1} parent=151 // pred_check_branch
          %10191 = sbr.rel (%p10189) target = $region224
        $region223: #{tpu_custom_call.1} parent=151 // pred_region
          %10193 = vsyncadd %s10185, 0
          %s10194 = smul.addr %s92, 4
          %s10195 = smul.addr %s10194, 8
          %s10196 = scalar_lea.hbm %s67, %s10195
          %s10197 = sshll.u32 %s10188, 4
          %s10198 = int_to_ptr.vmem [resolvable:$true] %s10197
          %s10199 = sshll.u32 %s10196, 4
          %s10200 = int_to_ptr.hbm [resolvable:$true] %s10199
          %10205 = dma.vmem_to_hbm [thread:$0]  %s10198, 512, %s10200, %s10185, 128, 128, 8
        $region224: #{tpu_custom_call.1} parent=151 // pred_fallthru
          _
      $region152: #{tpu_custom_call.1} parent=5 // pred_fallthru
        _
      %p10206 = scmp.le.s32.totalorder 2, %s87
      // Predicated region
      $region225: #{tpu_custom_call.1} parent=5 // pred_check
        %p10207 = pneg %p10206
      $region226: #{tpu_custom_call.1} parent=5 // pred_check_branch
        %10209 = sbr.rel (%p10207) target = $region228
      $region227: #{tpu_custom_call.1} parent=5 // pred_region
        %s10210 = ssub.s32 %s87, 2
        // Predicated region
        $region229: #{tpu_custom_call.1} parent=227 // pred_check
          %p10211 = pneg %p829
        $region230: #{tpu_custom_call.1} parent=227 // pred_check_branch
          %10213 = sbr.rel (%p10211) target = $region232
        $region231: #{tpu_custom_call.1} parent=227 // pred_region
          %s10214 = sand.u32 %s814, 1
          %s10215 = scalar_lea.sflag [#allocation5], %s10214
          %s10216 = sand.u32 %s814, 1
          %s10217 = smul.addr %s10216, 32
          %s10218 = scalar_lea.vmem [#allocation30], %s10217
          %10220 = dma.done %s10215, 512
        $region232: #{tpu_custom_call.1} parent=227 // pred_fallthru
          _
      $region228: #{tpu_custom_call.1} parent=5 // pred_fallthru
        _
    $region6: #{tpu_custom_call.1} parent=1 // loop_footer
      %s91 = sadd.s32 1, %s87
    $region7: #{tpu_custom_call.1} parent=1 // loop_footer_branch
      %86 = sbr.rel target = $region3
    $region8: #{tpu_custom_call.1} parent=1 // loop_exit
      _
    %10221 = vsyncpa [#allocation4], 1
    %s10222 = scalar_lea.sflag [#allocation4], 1
    %10223 = vsyncpa %s10222, 1
    %10224 = vsyncpa [#allocation7], 1
    %10225 = vsyncpa [#allocation10], 1
    %10226 = vsyncpa [#allocation13], 1
    %10227 = vsyncpa [#allocation16], 1
    %10228 = vsyncpa [#allocation19], 1
    %10229 = vsyncpa [#allocation22], 1
    %10230 = vsyncpa [#allocation25], 1
    %10231 = vsyncpa [#allocation28], 1
    %10232 = vsyncpa [#allocation5], 1
    %s10233 = scalar_lea.sflag [#allocation5], 1
    %10234 = vsyncpa %s10233, 1

</llo_original>
